<compile_context>
chip_gen: v5e
topology: v5e:2x2
jax: 0.10.0
libtpu: 0.0.40
codegen_flags: <defaults>
</compile_context>

<pallas_src>
import functools

import jax
import jax.numpy as jnp
from jax import lax
from jax.experimental import pallas as pl
from jax.experimental.pallas import tpu as pltpu

LANE = 128   # lane width (last-dim alignment)


# ------------------------------ small helpers --------------------------------
def _round_up(x, m):
    return (x + m - 1) // m * m


def _pad2(x, row_mult, col_mult):
    r, c = x.shape
    rp = _round_up(r, row_mult) - r
    cp = _round_up(c, col_mult) - c
    if rp or cp:
        x = jnp.pad(x, ((0, rp), (0, cp)))
    return x


def _pick_tile(n):
    # 512-wide tiles sit closer to the HBM roofline (~85% vs ~63% at 256) and
    # amortise the ~0.35us/grid-step overhead; 256 for small dims avoids
    # padding tiny graphs up to 512.
    return 512 if _round_up(n, 256) >= 512 else 256


@functools.lru_cache(maxsize=None)
def _vmem_capacity_bytes():
    try:
        return int(pltpu.get_tpu_info().vmem_capacity_bytes)
    except Exception:
        return 64 * 1024 * 1024   # conservative (v7x-sized) default


def _vmem_budgets():
    cap = _vmem_capacity_bytes()
    vmem_limit = (3 * cap) // 4        # ~48 MiB on v7x, ~96 MiB on v5e/v6e
    resident_budget = cap // 2         # ~32 MiB on v7x, ~64 MiB on v5e/v6e
    return vmem_limit, resident_budget


def _probe_copy_kernel(x_ref, c_ref, o_ref):
    o_ref[...] = x_ref[...] + c_ref[...]


@functools.lru_cache(maxsize=None)
def _buffered_one_supported():
    """True iff pipeline_mode=pl.Buffered(1) lowers and runs on this backend."""
    try:
        x = jnp.arange(16 * 128, dtype=jnp.float32).reshape(16, 128)
        c = jnp.full((8, 128), 1.0, jnp.float32)
        out = pl.pallas_call(
            _probe_copy_kernel,
            out_shape=jax.ShapeDtypeStruct((16, 128), jnp.float32),
            grid=(2,),
            in_specs=[pl.BlockSpec((8, 128), lambda i: (i, 0)),
                      pl.BlockSpec((8, 128), lambda i: (0, 0),
                                   pipeline_mode=pl.Buffered(1))],
            out_specs=pl.BlockSpec((8, 128), lambda i: (i, 0)),
        )(x, c)
        out = jax.block_until_ready(out)
        return bool(jnp.allclose(out, x + 1.0))
    except Exception:
        return False


def _const_spec(shape, buffered_ok):
    # Constant-index (resident) block; single-buffered when supported.
    if buffered_ok:
        return pl.BlockSpec(shape, lambda u, i: (0, 0),
                            pipeline_mode=pl.Buffered(1))
    return pl.BlockSpec(shape, lambda u, i: (0, 0))


# ------------------ fused per-layer propagation (adj read once) --------------
def _fused_prop_kernel(adj_ref, ei_ref, eu_ref, su_ref, si_ref,
                       zu_ref, nsu_ref, zi_ref, nsi_ref,
                       *, ti, ei_resident):
    u = pl.program_id(0)
    i = pl.program_id(1)
    nu = pl.num_programs(0)
    ni = pl.num_programs(1)

    adj = adj_ref[...]
    ioff = pl.multiple_of(i * ti, ti)

    # ---- user side: Z_u[u] = sum_i adj[u, i] @ E_i[i] ----
    if ei_resident:
        b_i = ei_ref[pl.ds(ioff, ti), :]
    else:
        b_i = ei_ref[...]
    part_u = jnp.dot(adj, b_i, preferred_element_type=jnp.float32)

    @pl.when(i == 0)
    def _():
        nsu_ref[...] = su_ref[...] + part_u

    @pl.when(i != 0)
    def _():
        nsu_ref[...] += part_u

    @pl.when(i == ni - 1)
    def _():
        zu_ref[...] = (nsu_ref[...] - su_ref[...]).astype(zu_ref.dtype)

    # ---- item side: Z_i[i] = sum_u adj[u, i]^T @ E_u[u] ----
    # Contract adj's row axis: no HBM-materialised transpose.
    part_i = lax.dot_general(adj, eu_ref[...], (((0,), (0,)), ((), ())),
                             preferred_element_type=jnp.float32)

    @pl.when(u == 0)
    def _():
        nsi_ref[pl.ds(ioff, ti), :] = si_ref[pl.ds(ioff, ti), :] + part_i

    @pl.when(u != 0)
    def _():
        nsi_ref[pl.ds(ioff, ti), :] += part_i

    @pl.when(u == nu - 1)
    def _():
        zi_ref[pl.ds(ioff, ti), :] = (
            nsi_ref[pl.ds(ioff, ti), :] - si_ref[pl.ds(ioff, ti), :]
        ).astype(zi_ref.dtype)


def _pallas_propagate_fused(adj, cur_u, cur_i, sum_u, sum_i, *, tu, ti,
                            vmem_limit, ei_resident, buffered_ok):
    MU, MI = adj.shape
    N = cur_u.shape[1]
    assert cur_u.shape == (MU, N) and cur_i.shape == (MI, N)
    assert sum_u.shape == (MU, N) and sum_i.shape == (MI, N)
    assert MU % tu == 0 and MI % ti == 0 and N % LANE == 0

    gu, gi = MU // tu, MI // ti

    if ei_resident:
        ei_spec = _const_spec((MI, N), buffered_ok)
        ei_read = MI * N * 2
    else:
        ei_spec = pl.BlockSpec((ti, N), lambda u, i: (i, 0))
        ei_read = gu * MI * N * 2
    si_spec = _const_spec((MI, N), buffered_ok)

    kernel = functools.partial(_fused_prop_kernel, ti=ti,
                               ei_resident=ei_resident)

    cost = pl.CostEstimate(
        flops=4 * MU * MI * N,
        transcendentals=0,
        bytes_accessed=int(MU * MI * 2 + ei_read
                           + MU * N * (2 + 4)          # cur_u + sum_u reads
                           + MI * N * 4                # sum_i read
                           + MU * N * (2 + 4)          # z_u + new_sum_u writes
                           + MI * N * (2 + 4)))        # z_i + new_sum_i writes

    zu, nsu, zi, nsi = pl.pallas_call(
        kernel,
        out_shape=(jax.ShapeDtypeStruct((MU, N), jnp.bfloat16),
                   jax.ShapeDtypeStruct((MU, N), jnp.float32),
                   jax.ShapeDtypeStruct((MI, N), jnp.bfloat16),
                   jax.ShapeDtypeStruct((MI, N), jnp.float32)),
        grid=(gu, gi),
        in_specs=[pl.BlockSpec((tu, ti), lambda u, i: (u, i)),   # adj tile
                  ei_spec,                                       # cur_i
                  pl.BlockSpec((tu, N), lambda u, i: (u, 0)),    # cur_u
                  pl.BlockSpec((tu, N), lambda u, i: (u, 0)),    # sum_u
                  si_spec],                                      # sum_i
        out_specs=(pl.BlockSpec((tu, N), lambda u, i: (u, 0)),   # z_u
                   pl.BlockSpec((tu, N), lambda u, i: (u, 0)),   # new_sum_u
                   pl.BlockSpec((MI, N), lambda u, i: (0, 0)),   # z_i
                   pl.BlockSpec((MI, N), lambda u, i: (0, 0))),  # new_sum_i
        # running sums alias their new-sum outputs (kernel fully rewrites them)
        input_output_aliases={3: 1, 4: 3},
        compiler_params=pltpu.CompilerParams(
            # The user-row axis is a reduction for the item-side accumulator,
            # so both axes must be "arbitrary" (no megacore split).
            dimension_semantics=("arbitrary", "arbitrary"),
            vmem_limit_bytes=vmem_limit),
        cost_estimate=cost,
    )(adj, cur_i, cur_u, sum_u, sum_i)
    return zu, zi, nsu, nsi


# ------------- fallback: single-sided propagation (+ fused layer-sum) --------
def _prop_kernel(a_ref, b_ref, s_ref, z_ref, e_ref, *, tk, contract_rows,
                 b_resident):
    k = pl.program_id(1)

    if b_resident:
        koff = pl.multiple_of(k * tk, tk)
        b = b_ref[pl.ds(koff, tk), :]
    else:
        b = b_ref[...]

    a = a_ref[...]
    if contract_rows:
        # (tk, tm) tile of adj contracted over adj's ROW axis -> adj^T @ b tile
        part = lax.dot_general(a, b, (((0,), (0,)), ((), ())),
                               preferred_element_type=jnp.float32)
    else:
        part = jnp.dot(a, b, preferred_element_type=jnp.float32)

    @pl.when(k == 0)
    def _():
        e_ref[...] = s_ref[...] + part      # init merged into first accumulate

    @pl.when(k != 0)
    def _():
        e_ref[...] += part

    @pl.when(k == pl.num_programs(1) - 1)
    def _():
        z_ref[...] = (e_ref[...] - s_ref[...]).astype(z_ref.dtype)


def pallas_propagate(adj, b, s, *, transpose_a, tm, tk, vmem_limit,
                     resident_budget, buffered_ok):
    """z = adj @ b (or adj^T @ b), e = s + z.  Returns (z bf16, e f32)."""
    if transpose_a:
        K, M = adj.shape
        a_spec = pl.BlockSpec((tk, tm), lambda i, k: (k, i))
    else:
        M, K = adj.shape
        a_spec = pl.BlockSpec((tm, tk), lambda i, k: (i, k))
    Kb, N = b.shape
    assert Kb == K and s.shape == (M, N)
    assert M % tm == 0 and K % tk == 0 and N % LANE == 0

    nbuf = 1 if buffered_ok else 2
    b_resident = nbuf * K * N * 2 <= resident_budget
    if b_resident:
        b_spec = _const_spec((K, N), buffered_ok)
        b_read_bytes = K * N * 2
    else:
        b_spec = pl.BlockSpec((tk, N), lambda i, k: (k, 0))
        b_read_bytes = (M // tm) * K * N * 2

    kernel = functools.partial(_prop_kernel, tk=tk, contract_rows=transpose_a,
                               b_resident=b_resident)

    cost = pl.CostEstimate(
        flops=2 * M * K * N,
        transcendentals=0,
        bytes_accessed=int(M * K * 2 + b_read_bytes
                           + M * N * 4 + M * N * 2 + M * N * 4))

    z, e = pl.pallas_call(
        kernel,
        out_shape=(jax.ShapeDtypeStruct((M, N), jnp.bfloat16),
                   jax.ShapeDtypeStruct((M, N), jnp.float32)),
        grid=(M // tm, K // tk),
        in_specs=[a_spec, b_spec,
                  pl.BlockSpec((tm, N), lambda i, k: (i, 0))],
        out_specs=(pl.BlockSpec((tm, N), lambda i, k: (i, 0)),
                   pl.BlockSpec((tm, N), lambda i, k: (i, 0))),
        input_output_aliases={2: 1},
        compiler_params=pltpu.CompilerParams(
            dimension_semantics=("parallel", "arbitrary"),
            vmem_limit_bytes=vmem_limit),
        cost_estimate=cost,
    )(adj, b, s)
    return z, e


# --------------------------- per-layer dispatcher -----------------------------
def pallas_propagate_layer(adj, cur_u, cur_i, sum_u, sum_i, *, tu, ti):
    MU, MI = adj.shape
    N = cur_u.shape[1]
    vmem_limit, resident_budget = _vmem_budgets()
    buffered_ok = _buffered_one_supported()
    nbuf = 1 if buffered_ok else 2

    ei_resident = nbuf * MI * N * 2 <= resident_budget
    fused_bytes = (
        2 * tu * ti * 2                                            # adj tiles
        + (nbuf * MI * N * 2 if ei_resident else 2 * ti * N * 2)   # cur_i
        + 2 * tu * N * 2                                           # cur_u
        + 2 * tu * N * 4                                           # sum_u
        + nbuf * MI * N * 4                                        # sum_i
        + 2 * tu * N * (2 + 4)                                     # z_u, nsum_u
        + 2 * MI * N * (2 + 4))                                    # z_i, nsum_i
    if fused_bytes <= vmem_limit - (4 << 20):
        return _pallas_propagate_fused(
            adj, cur_u, cur_i, sum_u, sum_i, tu=tu, ti=ti,
            vmem_limit=vmem_limit, ei_resident=ei_resident,
            buffered_ok=buffered_ok)

    # Fallback: two single-sided propagations (adj streamed twice per layer).
    z_u, nsu = pallas_propagate(adj, cur_i, sum_u, transpose_a=False,
                                tm=tu, tk=ti, vmem_limit=vmem_limit,
                                resident_budget=resident_budget,
                                buffered_ok=buffered_ok)
    z_i, nsi = pallas_propagate(adj, cur_u, sum_i, transpose_a=True,
                                tm=ti, tk=tu, vmem_limit=vmem_limit,
                                resident_budget=resident_budget,
                                buffered_ok=buffered_ok)
    return z_u, z_i, nsu, nsi


# ----------------------- blocked BPR loss + reg kernel ------------------------
def _bpr_loss_kernel(u_ref, p_ref, n_ref, u0_ref, p0_ref, n0_ref,
                     loss_ref, loss_r_ref, acc_r_ref, acc_reg_ref,
                     *, batch, lambda_1, tb):
    step = pl.program_id(0)

    @pl.when(step == 0)
    def _():
        acc_r_ref[...] = jnp.zeros_like(acc_r_ref)
        acc_reg_ref[...] = jnp.zeros_like(acc_reg_ref)

    row = step * tb + lax.broadcasted_iota(jnp.int32, (tb, 1), 0)
    valid = row < batch

    u = u_ref[...]
    diff = jnp.sum(u * (p_ref[...] - n_ref[...]), axis=-1, keepdims=True)
    # numerically stable log(sigmoid(x)) = min(x, 0) - log(1 + exp(-|x|))
    log_sig = jnp.minimum(diff, 0.0) - jnp.log(1.0 + jnp.exp(-jnp.abs(diff)))
    log_sig = jnp.where(valid, log_sig, 0.0)

    sq = u0_ref[...] ** 2 + p0_ref[...] ** 2 + n0_ref[...] ** 2
    sq_rows = jnp.where(valid, jnp.sum(sq, axis=-1, keepdims=True), 0.0)

    acc_r_ref[...] += jnp.sum(-log_sig, axis=0, keepdims=True)
    acc_reg_ref[...] += jnp.sum(sq_rows, axis=0, keepdims=True)

    @pl.when(step == pl.num_programs(0) - 1)
    def _():
        inv_b = 1.0 / batch
        loss_r = acc_r_ref[...] * inv_b
        loss_reg = acc_reg_ref[...] * (0.5 * inv_b * lambda_1)
        loss_r_ref[...] = loss_r
        loss_ref[...] = loss_r + loss_reg


def pallas_bpr_loss(u_emb, pos_emb, neg_emb, u0, p0, n0, *, lambda_1):
    batch, dp = u_emb.shape
    tb = min(512, _round_up(batch, 8))
    b_pad = _round_up(batch, tb)

    def pad_rows(x):
        if b_pad != batch:
            x = jnp.pad(x, ((0, b_pad - batch), (0, 0)))
        return x

    ops = [pad_rows(x) for x in (u_emb, pos_emb, neg_emb, u0, p0, n0)]

    kernel = functools.partial(_bpr_loss_kernel, batch=batch,
                               lambda_1=lambda_1, tb=tb)
    row_spec = pl.BlockSpec((tb, dp), lambda i: (i, 0))
    scal_spec = pl.BlockSpec((1, 1), lambda i: (0, 0))

    loss, loss_r = pl.pallas_call(
        kernel,
        out_shape=(jax.ShapeDtypeStruct((1, 1), jnp.float32),
                   jax.ShapeDtypeStruct((1, 1), jnp.float32)),
        grid=(b_pad // tb,),
        in_specs=[row_spec] * 6,
        out_specs=(scal_spec, scal_spec),
        scratch_shapes=[pltpu.VMEM((1, 1), jnp.float32),
                        pltpu.VMEM((1, 1), jnp.float32)],
        compiler_params=pltpu.CompilerParams(
            dimension_semantics=("arbitrary",)),
    )(*ops)
    return loss[0, 0], loss_r[0, 0]


# ------------------------------- full forward ---------------------------------
def lightgcn_forward(E_u_0, E_i_0, adj_norm, uids, pos, neg, *, l, lambda_1):
    # TODO(synk): sparse_dropout on a torch sparse adjacency has no clean dense
    # Pallas equivalent; adj_norm is dense here and dropout is fixed to 0.
    # TODO(synk): real LightGCN graphs need a blocked SpMM (CSR offsets via
    # scalar prefetch) instead of this dense [n_u, n_i] adjacency.
    # TODO(synk): the test/ranking branch and the 'ssm' loss type of the
    # reference module are not implemented (training 'bpr' path only).
    # TODO(synk): on v7x, evaluate an fp8-e4m3 adjacency to halve the dominant
    # HBM stream once the bf16 x fp8 MXU operand mix is validated.
    n_u = E_u_0.shape[0]
    n_i = E_i_0.shape[0]
    tu = _pick_tile(n_u)
    ti = _pick_tile(n_i)

    # Pad once to tile multiples; one bf16 copy of adj feeds both adj @ E_i and
    # adj^T @ E_u (no materialized transpose).
    adj_p = _pad2(adj_norm, tu, ti).astype(jnp.bfloat16)
    Eu0_p = _pad2(E_u_0, tu, LANE).astype(jnp.float32)
    Ei0_p = _pad2(E_i_0, ti, LANE).astype(jnp.float32)

    sum_u, sum_i = Eu0_p, Ei0_p                     # running layer sums (f32)
    cur_u = Eu0_p.astype(jnp.bfloat16)              # current layer emb (bf16)
    cur_i = Ei0_p.astype(jnp.bfloat16)

    for _ in range(l):
        cur_u, cur_i, sum_u, sum_i = pallas_propagate_layer(
            adj_p, cur_u, cur_i, sum_u, sum_i, tu=tu, ti=ti)

    # Row gathers stay as XLA glue.
    # TODO(synk): fuse these gathers into the loss kernel (scalar prefetch +
    # pl.Element(1) row blocks or a manual DMA gather) to skip the [B, d]
    # HBM round-trips at production batch sizes.
    u_emb = sum_u[uids]
    pos_emb = sum_i[pos]
    neg_emb = sum_i[neg]
    u0 = Eu0_p[uids]
    p0 = Ei0_p[pos]
    n0 = Ei0_p[neg]

    return pallas_bpr_loss(u_emb, pos_emb, neg_emb, u0, p0, n0,
                           lambda_1=lambda_1)


if __name__ == "__main__":
    n_u, n_i, d = 256, 512, 128
    n_layers = 2
    lambda_1 = 1e-4
    B = 128

    # Warm the (eager, cached) backend-capability probes outside any trace.
    _vmem_capacity_bytes()
    _buffered_one_supported()

    key = jax.random.PRNGKey(0)
    k_u, k_i, k_adj, k_uid, k_pos, k_neg = jax.random.split(key, 6)

    # xavier_uniform_: U(-a, a) with a = sqrt(6 / (fan_in + fan_out))
    a_u = (6.0 / (n_u + d)) ** 0.5
    a_i = (6.0 / (n_i + d)) ** 0.5
    E_u_0 = jax.random.uniform(k_u, (n_u, d), jnp.float32, -a_u, a_u)
    E_i_0 = jax.random.uniform(k_i, (n_i, d), jnp.float32, -a_i, a_i)

    # Deterministic synthetic bipartite interactions + symmetric normalization
    R = (jax.random.uniform(k_adj, (n_u, n_i)) < 0.05).astype(jnp.float32)
    d_u = jnp.maximum(R.sum(axis=1, keepdims=True), 1.0)
    d_i = jnp.maximum(R.sum(axis=0, keepdims=True), 1.0)
    adj_norm = R / jnp.sqrt(d_u) / jnp.sqrt(d_i)

    uids = jax.random.randint(k_uid, (B,), 0, n_u)
    pos = jax.random.randint(k_pos, (B,), 0, n_i)
    neg = jax.random.randint(k_neg, (B,), 0, n_i)

    fwd = jax.jit(functools.partial(lightgcn_forward, l=n_layers,
                                    lambda_1=lambda_1))
    loss, loss_r = fwd(E_u_0, E_i_0, adj_norm, uids, pos, neg)
    jax.block_until_ready((loss, loss_r))
    assert bool(jnp.isfinite(loss)) and bool(jnp.isfinite(loss_r))
    print("KERNEL_OK")
</pallas_src>

<mosaic_0001>
module attributes {stable_mosaic.version = 11 : i64} {
  func.func @_probe_copy_kernel(%arg0: i32, %arg1: memref<8x128xf32, #tpu.memory_space<vmem>>, %arg2: memref<8x128xf32, #tpu.memory_space<vmem>>, %arg3: memref<8x128xf32, #tpu.memory_space<vmem>>) attributes {dimension_semantics = [#tpu.dimension_semantics<arbitrary>], iteration_bounds = array<i64: 2>, scalar_prefetch = 0 : i64, scratch_operands = 0 : i64, tpu.core_type = #tpu.core_type<tc>, window_params = [{transform_indices = @transform_0, window_bounds = array<i64: 8, 128>}, {pipeline_mode = #tpu.pipeline_mode<synchronous>, transform_indices = @transform_1, window_bounds = array<i64: 8, 128>}, {transform_indices = @transform_2, window_bounds = array<i64: 8, 128>}]} {
    %c0 = arith.constant 0 : index
    %c0_0 = arith.constant 0 : index
    %0 = vector.load %arg1[%c0, %c0_0] : memref<8x128xf32, #tpu.memory_space<vmem>>, vector<8x128xf32>
    %c0_1 = arith.constant 0 : index
    %c0_2 = arith.constant 0 : index
    %1 = vector.load %arg2[%c0_1, %c0_2] : memref<8x128xf32, #tpu.memory_space<vmem>>, vector<8x128xf32>
    %2 = arith.addf %0, %1 : vector<8x128xf32>
    %c0_3 = arith.constant 0 : index
    %c0_4 = arith.constant 0 : index
    %3 = vector.load %arg3[%c0_3, %c0_4] : memref<8x128xf32, #tpu.memory_space<vmem>>, vector<8x128xf32>
    tpu.vector_store %arg3[%c0_3, %c0_4], %2 {strides = array<i32>} : memref<8x128xf32, #tpu.memory_space<vmem>>, vector<8x128xf32>,
    return
  }
  func.func @transform_0(%arg0: i32) -> (i32, i32) {
    %c0_i32 = arith.constant 0 : i32
    %c0_i32_0 = arith.constant 0 : i32
    return %arg0, %c0_i32 : i32, i32
  }
  func.func @transform_1(%arg0: i32) -> (i32, i32) {
    %c0_i32 = arith.constant 0 : i32
    %c0_i32_0 = arith.constant 0 : i32
    %c0_i32_1 = arith.constant 0 : i32
    return %c0_i32, %c0_i32_0 : i32, i32
  }
  func.func @transform_2(%arg0: i32) -> (i32, i32) {
    %c0_i32 = arith.constant 0 : i32
    %c0_i32_0 = arith.constant 0 : i32
    return %arg0, %c0_i32 : i32, i32
  }
}

module attributes {stable_mosaic.version = 11 : i64} {
  func.func @_fused_prop_kernel(%arg0: i32, %arg1: i32, %arg2: memref<256x512xbf16, #tpu.memory_space<vmem>>, %arg3: memref<512x128xbf16, #tpu.memory_space<vmem>>, %arg4: memref<256x128xbf16, #tpu.memory_space<vmem>>, %arg5: memref<256x128xf32, #tpu.memory_space<vmem>>, %arg6: memref<512x128xf32, #tpu.memory_space<vmem>>, %arg7: memref<256x128xbf16, #tpu.memory_space<vmem>>, %arg8: memref<256x128xf32, #tpu.memory_space<vmem>>, %arg9: memref<512x128xbf16, #tpu.memory_space<vmem>>, %arg10: memref<512x128xf32, #tpu.memory_space<vmem>>) attributes {dimension_semantics = [#tpu.dimension_semantics<arbitrary>, #tpu.dimension_semantics<arbitrary>], iteration_bounds = array<i64: 1, 1>, scalar_prefetch = 0 : i64, scratch_operands = 0 : i64, tpu.core_type = #tpu.core_type<tc>, window_params = [{transform_indices = @transform_0, window_bounds = array<i64: 256, 512>}, {pipeline_mode = #tpu.pipeline_mode<synchronous>, transform_indices = @transform_1, window_bounds = array<i64: 512, 128>}, {transform_indices = @transform_2, window_bounds = array<i64: 256, 128>}, {transform_indices = @transform_3, window_bounds = array<i64: 256, 128>}, {pipeline_mode = #tpu.pipeline_mode<synchronous>, transform_indices = @transform_4, window_bounds = array<i64: 512, 128>}, {transform_indices = @transform_5, window_bounds = array<i64: 256, 128>}, {transform_indices = @transform_6, window_bounds = array<i64: 256, 128>}, {pipeline_mode = #tpu.pipeline_mode<synchronous>, transform_indices = @transform_7, window_bounds = array<i64: 512, 128>}, {pipeline_mode = #tpu.pipeline_mode<synchronous>, transform_indices = @transform_8, window_bounds = array<i64: 512, 128>}]} {
    %c0 = arith.constant 0 : index
    %c0_0 = arith.constant 0 : index
    %0 = vector.load %arg2[%c0, %c0_0] : memref<256x512xbf16, #tpu.memory_space<vmem>>, vector<256x512xbf16>
    %c512_i32 = arith.constant 512 : i32
    %1 = arith.muli %arg1, %c512_i32 : i32
    %2 = tpu.assume_multiple %1, 512 : i32
    %3 = arith.index_cast %2 : i32 to index
    %c0_1 = arith.constant 0 : index
    %4 = vector.load %arg3[%3, %c0_1] : memref<512x128xbf16, #tpu.memory_space<vmem>>, vector<512x128xbf16>
    %cst = arith.constant dense<0.000000e+00> : vector<256x128xf32>
    %5 = tpu.matmul %0, %4, %cst {dimension_numbers = #tpu.dot_dimension_numbers<[1], [0], [0], [1], [0, 0, 1, 1], [], []>} : vector<256x512xbf16>, vector<512x128xbf16>, vector<256x128xf32> -> vector<256x128xf32>
    %c0_i32 = arith.constant 0 : i32
    %6 = arith.cmpi eq, %arg1, %c0_i32 : i32
    %7 = arith.extui %6 : i1 to i32
    %c0_i32_2 = arith.constant 0 : i32
    %8 = arith.cmpi ne, %7, %c0_i32_2 : i32
    scf.if %8 {
      %c0_16 = arith.constant 0 : index
      %c0_17 = arith.constant 0 : index
      %26 = vector.load %arg5[%c0_16, %c0_17] : memref<256x128xf32, #tpu.memory_space<vmem>>, vector<256x128xf32>
      %27 = arith.addf %26, %5 : vector<256x128xf32>
      %c0_18 = arith.constant 0 : index
      %c0_19 = arith.constant 0 : index
      %28 = vector.load %arg8[%c0_18, %c0_19] : memref<256x128xf32, #tpu.memory_space<vmem>>, vector<256x128xf32>
      tpu.vector_store %arg8[%c0_18, %c0_19], %27 {strides = array<i32>} : memref<256x128xf32, #tpu.memory_space<vmem>>, vector<256x128xf32>,
    } else {
    }
    %c0_i32_3 = arith.constant 0 : i32
    %9 = arith.cmpi ne, %arg1, %c0_i32_3 : i32
    %10 = arith.extui %9 : i1 to i32
    %c0_i32_4 = arith.constant 0 : i32
    %11 = arith.cmpi ne, %10, %c0_i32_4 : i32
    scf.if %11 {
      %c0_16 = arith.constant 0 : index
      %c0_17 = arith.constant 0 : index
      %26 = vector.load %arg8[%c0_16, %c0_17] : memref<256x128xf32, #tpu.memory_space<vmem>>, vector<256x128xf32>
      %27 = arith.addf %26, %5 : vector<256x128xf32>
      %c0_18 = arith.constant 0 : index
      %c0_19 = arith.constant 0 : index
      %28 = vector.load %arg8[%c0_18, %c0_19] : memref<256x128xf32, #tpu.memory_space<vmem>>, vector<256x128xf32>
      tpu.vector_store %arg8[%c0_18, %c0_19], %27 {strides = array<i32>} : memref<256x128xf32, #tpu.memory_space<vmem>>, vector<256x128xf32>,
    } else {
    }
    %c0_i32_5 = arith.constant 0 : i32
    %12 = arith.cmpi eq, %arg1, %c0_i32_5 : i32
    %13 = arith.extui %12 : i1 to i32
    %c0_i32_6 = arith.constant 0 : i32
    %14 = arith.cmpi ne, %13, %c0_i32_6 : i32
    scf.if %14 {
      %c0_16 = arith.constant 0 : index
      %c0_17 = arith.constant 0 : index
      %26 = vector.load %arg8[%c0_16, %c0_17] : memref<256x128xf32, #tpu.memory_space<vmem>>, vector<256x128xf32>
      %c0_18 = arith.constant 0 : index
      %c0_19 = arith.constant 0 : index
      %27 = vector.load %arg5[%c0_18, %c0_19] : memref<256x128xf32, #tpu.memory_space<vmem>>, vector<256x128xf32>
      %28 = arith.subf %26, %27 : vector<256x128xf32>
      %29 = arith.truncf %28 : vector<256x128xf32> to vector<256x128xbf16>
      %c0_20 = arith.constant 0 : index
      %c0_21 = arith.constant 0 : index
      %30 = vector.load %arg7[%c0_20, %c0_21] : memref<256x128xbf16, #tpu.memory_space<vmem>>, vector<256x128xbf16>
      tpu.vector_store %arg7[%c0_20, %c0_21], %29 {strides = array<i32>} : memref<256x128xbf16, #tpu.memory_space<vmem>>, vector<256x128xbf16>,
    } else {
    }
    %c0_7 = arith.constant 0 : index
    %c0_8 = arith.constant 0 : index
    %15 = vector.load %arg4[%c0_7, %c0_8] : memref<256x128xbf16, #tpu.memory_space<vmem>>, vector<256x128xbf16>
    %cst_9 = arith.constant dense<0.000000e+00> : vector<512x128xf32>
    %16 = tpu.matmul %0, %15, %cst_9 {dimension_numbers = #tpu.dot_dimension_numbers<[0], [0], [1], [1], [0, 1, 1, 1], [], []>} : vector<256x512xbf16>, vector<256x128xbf16>, vector<512x128xf32> -> vector<512x128xf32>
    %c0_i32_10 = arith.constant 0 : i32
    %17 = arith.cmpi eq, %arg0, %c0_i32_10 : i32
    %18 = arith.extui %17 : i1 to i32
    %c0_i32_11 = arith.constant 0 : i32
    %19 = arith.cmpi ne, %18, %c0_i32_11 : i32
    scf.if %19 {
      %26 = arith.index_cast %2 : i32 to index
      %c0_16 = arith.constant 0 : index
      %27 = vector.load %arg6[%26, %c0_16] : memref<512x128xf32, #tpu.memory_space<vmem>>, vector<512x128xf32>
      %28 = arith.addf %27, %16 : vector<512x128xf32>
      %29 = arith.index_cast %2 : i32 to index
      %c0_17 = arith.constant 0 : index
      %30 = vector.load %arg10[%29, %c0_17] : memref<512x128xf32, #tpu.memory_space<vmem>>, vector<512x128xf32>
      tpu.vector_store %arg10[%29, %c0_17], %28 {strides = array<i32>} : memref<512x128xf32, #tpu.memory_space<vmem>>, vector<512x128xf32>,
    } else {
    }
    %c0_i32_12 = arith.constant 0 : i32
    %20 = arith.cmpi ne, %arg0, %c0_i32_12 : i32
    %21 = arith.extui %20 : i1 to i32
    %c0_i32_13 = arith.constant 0 : i32
    %22 = arith.cmpi ne, %21, %c0_i32_13 : i32
    scf.if %22 {
      %26 = arith.index_cast %2 : i32 to index
      %c0_16 = arith.constant 0 : index
      %27 = vector.load %arg10[%26, %c0_16] : memref<512x128xf32, #tpu.memory_space<vmem>>, vector<512x128xf32>
      %28 = arith.addf %27, %16 : vector<512x128xf32>
      %29 = arith.index_cast %2 : i32 to index
      %c0_17 = arith.constant 0 : index
      %30 = vector.load %arg10[%29, %c0_17] : memref<512x128xf32, #tpu.memory_space<vmem>>, vector<512x128xf32>
      tpu.vector_store %arg10[%29, %c0_17], %28 {strides = array<i32>} : memref<512x128xf32, #tpu.memory_space<vmem>>, vector<512x128xf32>,
    } else {
    }
    %c0_i32_14 = arith.constant 0 : i32
    %23 = arith.cmpi eq, %arg0, %c0_i32_14 : i32
    %24 = arith.extui %23 : i1 to i32
    %c0_i32_15 = arith.constant 0 : i32
    %25 = arith.cmpi ne, %24, %c0_i32_15 : i32
    scf.if %25 {
      %26 = arith.index_cast %2 : i32 to index
      %c0_16 = arith.constant 0 : index
      %27 = vector.load %arg10[%26, %c0_16] : memref<512x128xf32, #tpu.memory_space<vmem>>, vector<512x128xf32>
      %28 = arith.index_cast %2 : i32 to index
      %c0_17 = arith.constant 0 : index
      %29 = vector.load %arg6[%28, %c0_17] : memref<512x128xf32, #tpu.memory_space<vmem>>, vector<512x128xf32>
      %30 = arith.subf %27, %29 : vector<512x128xf32>
      %31 = arith.truncf %30 : vector<512x128xf32> to vector<512x128xbf16>
      %32 = arith.index_cast %2 : i32 to index
      %c0_18 = arith.constant 0 : index
      %33 = vector.load %arg9[%32, %c0_18] : memref<512x128xbf16, #tpu.memory_space<vmem>>, vector<512x128xbf16>
      tpu.vector_store %arg9[%32, %c0_18], %31 {strides = array<i32>} : memref<512x128xbf16, #tpu.memory_space<vmem>>, vector<512x128xbf16>,
    } else {
    }
    return
  }
  func.func @transform_0(%arg0: i32, %arg1: i32) -> (i32, i32) {
    %c0_i32 = arith.constant 0 : i32
    return %arg0, %arg1 : i32, i32
  }
  func.func @transform_1(%arg0: i32, %arg1: i32) -> (i32, i32) {
    %c0_i32 = arith.constant 0 : i32
    %c0_i32_0 = arith.constant 0 : i32
    %c0_i32_1 = arith.constant 0 : i32
    return %c0_i32, %c0_i32_0 : i32, i32
  }
  func.func @transform_2(%arg0: i32, %arg1: i32) -> (i32, i32) {
    %c0_i32 = arith.constant 0 : i32
    %c0_i32_0 = arith.constant 0 : i32
    return %arg0, %c0_i32 : i32, i32
  }
  func.func @transform_3(%arg0: i32, %arg1: i32) -> (i32, i32) {
    %c0_i32 = arith.constant 0 : i32
    %c0_i32_0 = arith.constant 0 : i32
    return %arg0, %c0_i32 : i32, i32
  }
  func.func @transform_4(%arg0: i32, %arg1: i32) -> (i32, i32) {
    %c0_i32 = arith.constant 0 : i32
    %c0_i32_0 = arith.constant 0 : i32
    %c0_i32_1 = arith.constant 0 : i32
    return %c0_i32, %c0_i32_0 : i32, i32
  }
  func.func @transform_5(%arg0: i32, %arg1: i32) -> (i32, i32) {
    %c0_i32 = arith.constant 0 : i32
    %c0_i32_0 = arith.constant 0 : i32
    return %arg0, %c0_i32 : i32, i32
  }
  func.func @transform_6(%arg0: i32, %arg1: i32) -> (i32, i32) {
    %c0_i32 = arith.constant 0 : i32
    %c0_i32_0 = arith.constant 0 : i32
    return %arg0, %c0_i32 : i32, i32
  }
  func.func @transform_7(%arg0: i32, %arg1: i32) -> (i32, i32) {
    %c0_i32 = arith.constant 0 : i32
    %c0_i32_0 = arith.constant 0 : i32
    %c0_i32_1 = arith.constant 0 : i32
    return %c0_i32, %c0_i32_0 : i32, i32
  }
  func.func @transform_8(%arg0: i32, %arg1: i32) -> (i32, i32) {
    %c0_i32 = arith.constant 0 : i32
    %c0_i32_0 = arith.constant 0 : i32
    %c0_i32_1 = arith.constant 0 : i32
    return %c0_i32, %c0_i32_0 : i32, i32
  }
}

module attributes {stable_mosaic.version = 11 : i64} {
  func.func @_fused_prop_kernel(%arg0: i32, %arg1: i32, %arg2: memref<256x512xbf16, #tpu.memory_space<vmem>>, %arg3: memref<512x128xbf16, #tpu.memory_space<vmem>>, %arg4: memref<256x128xbf16, #tpu.memory_space<vmem>>, %arg5: memref<256x128xf32, #tpu.memory_space<vmem>>, %arg6: memref<512x128xf32, #tpu.memory_space<vmem>>, %arg7: memref<256x128xbf16, #tpu.memory_space<vmem>>, %arg8: memref<256x128xf32, #tpu.memory_space<vmem>>, %arg9: memref<512x128xbf16, #tpu.memory_space<vmem>>, %arg10: memref<512x128xf32, #tpu.memory_space<vmem>>) attributes {dimension_semantics = [#tpu.dimension_semantics<arbitrary>, #tpu.dimension_semantics<arbitrary>], iteration_bounds = array<i64: 1, 1>, scalar_prefetch = 0 : i64, scratch_operands = 0 : i64, tpu.core_type = #tpu.core_type<tc>, window_params = [{transform_indices = @transform_0, window_bounds = array<i64: 256, 512>}, {pipeline_mode = #tpu.pipeline_mode<synchronous>, transform_indices = @transform_1, window_bounds = array<i64: 512, 128>}, {transform_indices = @transform_2, window_bounds = array<i64: 256, 128>}, {transform_indices = @transform_3, window_bounds = array<i64: 256, 128>}, {pipeline_mode = #tpu.pipeline_mode<synchronous>, transform_indices = @transform_4, window_bounds = array<i64: 512, 128>}, {transform_indices = @transform_5, window_bounds = array<i64: 256, 128>}, {transform_indices = @transform_6, window_bounds = array<i64: 256, 128>}, {pipeline_mode = #tpu.pipeline_mode<synchronous>, transform_indices = @transform_7, window_bounds = array<i64: 512, 128>}, {pipeline_mode = #tpu.pipeline_mode<synchronous>, transform_indices = @transform_8, window_bounds = array<i64: 512, 128>}]} {
    %c0 = arith.constant 0 : index
    %c0_0 = arith.constant 0 : index
    %0 = vector.load %arg2[%c0, %c0_0] : memref<256x512xbf16, #tpu.memory_space<vmem>>, vector<256x512xbf16>
    %c512_i32 = arith.constant 512 : i32
    %1 = arith.muli %arg1, %c512_i32 : i32
    %2 = tpu.assume_multiple %1, 512 : i32
    %3 = arith.index_cast %2 : i32 to index
    %c0_1 = arith.constant 0 : index
    %4 = vector.load %arg3[%3, %c0_1] : memref<512x128xbf16, #tpu.memory_space<vmem>>, vector<512x128xbf16>
    %cst = arith.constant dense<0.000000e+00> : vector<256x128xf32>
    %5 = tpu.matmul %0, %4, %cst {dimension_numbers = #tpu.dot_dimension_numbers<[1], [0], [0], [1], [0, 0, 1, 1], [], []>} : vector<256x512xbf16>, vector<512x128xbf16>, vector<256x128xf32> -> vector<256x128xf32>
    %c0_i32 = arith.constant 0 : i32
    %6 = arith.cmpi eq, %arg1, %c0_i32 : i32
    %7 = arith.extui %6 : i1 to i32
    %c0_i32_2 = arith.constant 0 : i32
    %8 = arith.cmpi ne, %7, %c0_i32_2 : i32
    scf.if %8 {
      %c0_16 = arith.constant 0 : index
      %c0_17 = arith.constant 0 : index
      %26 = vector.load %arg5[%c0_16, %c0_17] : memref<256x128xf32, #tpu.memory_space<vmem>>, vector<256x128xf32>
      %27 = arith.addf %26, %5 : vector<256x128xf32>
      %c0_18 = arith.constant 0 : index
      %c0_19 = arith.constant 0 : index
      %28 = vector.load %arg8[%c0_18, %c0_19] : memref<256x128xf32, #tpu.memory_space<vmem>>, vector<256x128xf32>
      tpu.vector_store %arg8[%c0_18, %c0_19], %27 {strides = array<i32>} : memref<256x128xf32, #tpu.memory_space<vmem>>, vector<256x128xf32>,
    } else {
    }
    %c0_i32_3 = arith.constant 0 : i32
    %9 = arith.cmpi ne, %arg1, %c0_i32_3 : i32
    %10 = arith.extui %9 : i1 to i32
    %c0_i32_4 = arith.constant 0 : i32
    %11 = arith.cmpi ne, %10, %c0_i32_4 : i32
    scf.if %11 {
      %c0_16 = arith.constant 0 : index
      %c0_17 = arith.constant 0 : index
      %26 = vector.load %arg8[%c0_16, %c0_17] : memref<256x128xf32, #tpu.memory_space<vmem>>, vector<256x128xf32>
      %27 = arith.addf %26, %5 : vector<256x128xf32>
      %c0_18 = arith.constant 0 : index
      %c0_19 = arith.constant 0 : index
      %28 = vector.load %arg8[%c0_18, %c0_19] : memref<256x128xf32, #tpu.memory_space<vmem>>, vector<256x128xf32>
      tpu.vector_store %arg8[%c0_18, %c0_19], %27 {strides = array<i32>} : memref<256x128xf32, #tpu.memory_space<vmem>>, vector<256x128xf32>,
    } else {
    }
    %c0_i32_5 = arith.constant 0 : i32
    %12 = arith.cmpi eq, %arg1, %c0_i32_5 : i32
    %13 = arith.extui %12 : i1 to i32
    %c0_i32_6 = arith.constant 0 : i32
    %14 = arith.cmpi ne, %13, %c0_i32_6 : i32
    scf.if %14 {
      %c0_16 = arith.constant 0 : index
      %c0_17 = arith.constant 0 : index
      %26 = vector.load %arg8[%c0_16, %c0_17] : memref<256x128xf32, #tpu.memory_space<vmem>>, vector<256x128xf32>
      %c0_18 = arith.constant 0 : index
      %c0_19 = arith.constant 0 : index
      %27 = vector.load %arg5[%c0_18, %c0_19] : memref<256x128xf32, #tpu.memory_space<vmem>>, vector<256x128xf32>
      %28 = arith.subf %26, %27 : vector<256x128xf32>
      %29 = arith.truncf %28 : vector<256x128xf32> to vector<256x128xbf16>
      %c0_20 = arith.constant 0 : index
      %c0_21 = arith.constant 0 : index
      %30 = vector.load %arg7[%c0_20, %c0_21] : memref<256x128xbf16, #tpu.memory_space<vmem>>, vector<256x128xbf16>
      tpu.vector_store %arg7[%c0_20, %c0_21], %29 {strides = array<i32>} : memref<256x128xbf16, #tpu.memory_space<vmem>>, vector<256x128xbf16>,
    } else {
    }
    %c0_7 = arith.constant 0 : index
    %c0_8 = arith.constant 0 : index
    %15 = vector.load %arg4[%c0_7, %c0_8] : memref<256x128xbf16, #tpu.memory_space<vmem>>, vector<256x128xbf16>
    %cst_9 = arith.constant dense<0.000000e+00> : vector<512x128xf32>
    %16 = tpu.matmul %0, %15, %cst_9 {dimension_numbers = #tpu.dot_dimension_numbers<[0], [0], [1], [1], [0, 1, 1, 1], [], []>} : vector<256x512xbf16>, vector<256x128xbf16>, vector<512x128xf32> -> vector<512x128xf32>
    %c0_i32_10 = arith.constant 0 : i32
    %17 = arith.cmpi eq, %arg0, %c0_i32_10 : i32
    %18 = arith.extui %17 : i1 to i32
    %c0_i32_11 = arith.constant 0 : i32
    %19 = arith.cmpi ne, %18, %c0_i32_11 : i32
    scf.if %19 {
      %26 = arith.index_cast %2 : i32 to index
      %c0_16 = arith.constant 0 : index
      %27 = vector.load %arg6[%26, %c0_16] : memref<512x128xf32, #tpu.memory_space<vmem>>, vector<512x128xf32>
      %28 = arith.addf %27, %16 : vector<512x128xf32>
      %29 = arith.index_cast %2 : i32 to index
      %c0_17 = arith.constant 0 : index
      %30 = vector.load %arg10[%29, %c0_17] : memref<512x128xf32, #tpu.memory_space<vmem>>, vector<512x128xf32>
      tpu.vector_store %arg10[%29, %c0_17], %28 {strides = array<i32>} : memref<512x128xf32, #tpu.memory_space<vmem>>, vector<512x128xf32>,
    } else {
    }
    %c0_i32_12 = arith.constant 0 : i32
    %20 = arith.cmpi ne, %arg0, %c0_i32_12 : i32
    %21 = arith.extui %20 : i1 to i32
    %c0_i32_13 = arith.constant 0 : i32
    %22 = arith.cmpi ne, %21, %c0_i32_13 : i32
    scf.if %22 {
      %26 = arith.index_cast %2 : i32 to index
      %c0_16 = arith.constant 0 : index
      %27 = vector.load %arg10[%26, %c0_16] : memref<512x128xf32, #tpu.memory_space<vmem>>, vector<512x128xf32>
      %28 = arith.addf %27, %16 : vector<512x128xf32>
      %29 = arith.index_cast %2 : i32 to index
      %c0_17 = arith.constant 0 : index
      %30 = vector.load %arg10[%29, %c0_17] : memref<512x128xf32, #tpu.memory_space<vmem>>, vector<512x128xf32>
      tpu.vector_store %arg10[%29, %c0_17], %28 {strides = array<i32>} : memref<512x128xf32, #tpu.memory_space<vmem>>, vector<512x128xf32>,
    } else {
    }
    %c0_i32_14 = arith.constant 0 : i32
    %23 = arith.cmpi eq, %arg0, %c0_i32_14 : i32
    %24 = arith.extui %23 : i1 to i32
    %c0_i32_15 = arith.constant 0 : i32
    %25 = arith.cmpi ne, %24, %c0_i32_15 : i32
    scf.if %25 {
      %26 = arith.index_cast %2 : i32 to index
      %c0_16 = arith.constant 0 : index
      %27 = vector.load %arg10[%26, %c0_16] : memref<512x128xf32, #tpu.memory_space<vmem>>, vector<512x128xf32>
      %28 = arith.index_cast %2 : i32 to index
      %c0_17 = arith.constant 0 : index
      %29 = vector.load %arg6[%28, %c0_17] : memref<512x128xf32, #tpu.memory_space<vmem>>, vector<512x128xf32>
      %30 = arith.subf %27, %29 : vector<512x128xf32>
      %31 = arith.truncf %30 : vector<512x128xf32> to vector<512x128xbf16>
      %32 = arith.index_cast %2 : i32 to index
      %c0_18 = arith.constant 0 : index
      %33 = vector.load %arg9[%32, %c0_18] : memref<512x128xbf16, #tpu.memory_space<vmem>>, vector<512x128xbf16>
      tpu.vector_store %arg9[%32, %c0_18], %31 {strides = array<i32>} : memref<512x128xbf16, #tpu.memory_space<vmem>>, vector<512x128xbf16>,
    } else {
    }
    return
  }
  func.func @transform_0(%arg0: i32, %arg1: i32) -> (i32, i32) {
    %c0_i32 = arith.constant 0 : i32
    return %arg0, %arg1 : i32, i32
  }
  func.func @transform_1(%arg0: i32, %arg1: i32) -> (i32, i32) {
    %c0_i32 = arith.constant 0 : i32
    %c0_i32_0 = arith.constant 0 : i32
    %c0_i32_1 = arith.constant 0 : i32
    return %c0_i32, %c0_i32_0 : i32, i32
  }
  func.func @transform_2(%arg0: i32, %arg1: i32) -> (i32, i32) {
    %c0_i32 = arith.constant 0 : i32
    %c0_i32_0 = arith.constant 0 : i32
    return %arg0, %c0_i32 : i32, i32
  }
  func.func @transform_3(%arg0: i32, %arg1: i32) -> (i32, i32) {
    %c0_i32 = arith.constant 0 : i32
    %c0_i32_0 = arith.constant 0 : i32
    return %arg0, %c0_i32 : i32, i32
  }
  func.func @transform_4(%arg0: i32, %arg1: i32) -> (i32, i32) {
    %c0_i32 = arith.constant 0 : i32
    %c0_i32_0 = arith.constant 0 : i32
    %c0_i32_1 = arith.constant 0 : i32
    return %c0_i32, %c0_i32_0 : i32, i32
  }
  func.func @transform_5(%arg0: i32, %arg1: i32) -> (i32, i32) {
    %c0_i32 = arith.constant 0 : i32
    %c0_i32_0 = arith.constant 0 : i32
    return %arg0, %c0_i32 : i32, i32
  }
  func.func @transform_6(%arg0: i32, %arg1: i32) -> (i32, i32) {
    %c0_i32 = arith.constant 0 : i32
    %c0_i32_0 = arith.constant 0 : i32
    return %arg0, %c0_i32 : i32, i32
  }
  func.func @transform_7(%arg0: i32, %arg1: i32) -> (i32, i32) {
    %c0_i32 = arith.constant 0 : i32
    %c0_i32_0 = arith.constant 0 : i32
    %c0_i32_1 = arith.constant 0 : i32
    return %c0_i32, %c0_i32_0 : i32, i32
  }
  func.func @transform_8(%arg0: i32, %arg1: i32) -> (i32, i32) {
    %c0_i32 = arith.constant 0 : i32
    %c0_i32_0 = arith.constant 0 : i32
    %c0_i32_1 = arith.constant 0 : i32
    return %c0_i32, %c0_i32_0 : i32, i32
  }
}

module attributes {stable_mosaic.version = 11 : i64} {
  func.func @_bpr_loss_kernel(%arg0: i32, %arg1: memref<128x128xf32, #tpu.memory_space<vmem>>, %arg2: memref<128x128xf32, #tpu.memory_space<vmem>>, %arg3: memref<128x128xf32, #tpu.memory_space<vmem>>, %arg4: memref<128x128xf32, #tpu.memory_space<vmem>>, %arg5: memref<128x128xf32, #tpu.memory_space<vmem>>, %arg6: memref<128x128xf32, #tpu.memory_space<vmem>>, %arg7: memref<1x1xf32, #tpu.memory_space<vmem>>, %arg8: memref<1x1xf32, #tpu.memory_space<vmem>>, %arg9: memref<1x1xf32, #tpu.memory_space<vmem>>, %arg10: memref<1x1xf32, #tpu.memory_space<vmem>>) attributes {dimension_semantics = [#tpu.dimension_semantics<arbitrary>], iteration_bounds = array<i64: 1>, scalar_prefetch = 0 : i64, scratch_operands = 2 : i64, tpu.core_type = #tpu.core_type<tc>, window_params = [{transform_indices = @transform_0, window_bounds = array<i64: 128, 128>}, {transform_indices = @transform_1, window_bounds = array<i64: 128, 128>}, {transform_indices = @transform_2, window_bounds = array<i64: 128, 128>}, {transform_indices = @transform_3, window_bounds = array<i64: 128, 128>}, {transform_indices = @transform_4, window_bounds = array<i64: 128, 128>}, {transform_indices = @transform_5, window_bounds = array<i64: 128, 128>}, {pipeline_mode = #tpu.pipeline_mode<synchronous>, transform_indices = @transform_6, window_bounds = array<i64: 1, 1>}, {pipeline_mode = #tpu.pipeline_mode<synchronous>, transform_indices = @transform_7, window_bounds = array<i64: 1, 1>}]} {
    %c0_i32 = arith.constant 0 : i32
    %0 = arith.cmpi eq, %arg0, %c0_i32 : i32
    %1 = arith.extui %0 : i1 to i32
    %c0_i32_0 = arith.constant 0 : i32
    %2 = arith.cmpi ne, %1, %c0_i32_0 : i32
    scf.if %2 {
      %cst_32 = arith.constant 0.000000e+00 : f32
      %55 = vector.broadcast %cst_32 : f32 to vector<1x1xf32>
      %c0_33 = arith.constant 0 : index
      %c0_34 = arith.constant 0 : index
      %56 = vector.load %arg9[%c0_33, %c0_34] : memref<1x1xf32, #tpu.memory_space<vmem>>, vector<1x1xf32>
      tpu.vector_store %arg9[%c0_33, %c0_34], %55 {strides = array<i32>} : memref<1x1xf32, #tpu.memory_space<vmem>>, vector<1x1xf32>,
      %cst_35 = arith.constant 0.000000e+00 : f32
      %57 = vector.broadcast %cst_35 : f32 to vector<1x1xf32>
      %c0_36 = arith.constant 0 : index
      %c0_37 = arith.constant 0 : index
      %58 = vector.load %arg10[%c0_36, %c0_37] : memref<1x1xf32, #tpu.memory_space<vmem>>, vector<1x1xf32>
      tpu.vector_store %arg10[%c0_36, %c0_37], %57 {strides = array<i32>} : memref<1x1xf32, #tpu.memory_space<vmem>>, vector<1x1xf32>,
    } else {
    }
    %c128_i32 = arith.constant 128 : i32
    %3 = arith.muli %arg0, %c128_i32 : i32
    %4 = tpu.iota {dimensions = array<i32: 0>} : vector<128x1xi32>
    %5 = vector.broadcast %3 : i32 to vector<128x1xi32>
    %6 = arith.addi %5, %4 : vector<128x1xi32>
    %c128_i32_1 = arith.constant 128 : i32
    %7 = vector.broadcast %c128_i32_1 : i32 to vector<128x1xi32>
    %8 = arith.cmpi slt, %6, %7 : vector<128x1xi32>
    %c0 = arith.constant 0 : index
    %c0_2 = arith.constant 0 : index
    %9 = vector.load %arg1[%c0, %c0_2] : memref<128x128xf32, #tpu.memory_space<vmem>>, vector<128x128xf32>
    %c0_3 = arith.constant 0 : index
    %c0_4 = arith.constant 0 : index
    %10 = vector.load %arg2[%c0_3, %c0_4] : memref<128x128xf32, #tpu.memory_space<vmem>>, vector<128x128xf32>
    %c0_5 = arith.constant 0 : index
    %c0_6 = arith.constant 0 : index
    %11 = vector.load %arg3[%c0_5, %c0_6] : memref<128x128xf32, #tpu.memory_space<vmem>>, vector<128x128xf32>
    %12 = arith.subf %10, %11 : vector<128x128xf32>
    %13 = arith.mulf %9, %12 : vector<128x128xf32>
    %cst = arith.constant dense<0.000000e+00> : vector<128xf32>
    %14 = vector.multi_reduction <add>, %13, %cst [1] : vector<128x128xf32> to vector<128xf32>
    %15 = vector.shape_cast %14 : vector<128xf32> to vector<128x1xf32>
    %cst_7 = arith.constant 0.000000e+00 : f32
    %16 = vector.broadcast %cst_7 : f32 to vector<128x1xf32>
    %17 = arith.minimumf %15, %16 : vector<128x1xf32>
    %18 = math.absf %15 : vector<128x1xf32>
    %cst_8 = arith.constant 0.000000e+00 : f32
    %19 = vector.broadcast %cst_8 : f32 to vector<128x1xf32>
    %20 = arith.subf %19, %18 : vector<128x1xf32>
    %21 = math.exp %20 : vector<128x1xf32>
    %cst_9 = arith.constant 1.000000e+00 : f32
    %22 = vector.broadcast %cst_9 : f32 to vector<128x1xf32>
    %23 = arith.addf %22, %21 : vector<128x1xf32>
    %24 = math.log %23 : vector<128x1xf32>
    %25 = arith.subf %17, %24 : vector<128x1xf32>
    %cst_10 = arith.constant 0.000000e+00 : f32
    %26 = vector.broadcast %cst_10 : f32 to vector<128x1xf32>
    %27 = arith.select %8, %25, %26 : vector<128x1xi1>, vector<128x1xf32>
    %c0_11 = arith.constant 0 : index
    %c0_12 = arith.constant 0 : index
    %28 = vector.load %arg4[%c0_11, %c0_12] : memref<128x128xf32, #tpu.memory_space<vmem>>, vector<128x128xf32>
    %29 = arith.mulf %28, %28 : vector<128x128xf32>
    %c0_13 = arith.constant 0 : index
    %c0_14 = arith.constant 0 : index
    %30 = vector.load %arg5[%c0_13, %c0_14] : memref<128x128xf32, #tpu.memory_space<vmem>>, vector<128x128xf32>
    %31 = arith.mulf %30, %30 : vector<128x128xf32>
    %32 = arith.addf %29, %31 : vector<128x128xf32>
    %c0_15 = arith.constant 0 : index
    %c0_16 = arith.constant 0 : index
    %33 = vector.load %arg6[%c0_15, %c0_16] : memref<128x128xf32, #tpu.memory_space<vmem>>, vector<128x128xf32>
    %34 = arith.mulf %33, %33 : vector<128x128xf32>
    %35 = arith.addf %32, %34 : vector<128x128xf32>
    %cst_17 = arith.constant dense<0.000000e+00> : vector<128xf32>
    %36 = vector.multi_reduction <add>, %35, %cst_17 [1] : vector<128x128xf32> to vector<128xf32>
    %37 = vector.shape_cast %36 : vector<128xf32> to vector<128x1xf32>
    %cst_18 = arith.constant 0.000000e+00 : f32
    %38 = vector.broadcast %cst_18 : f32 to vector<128x1xf32>
    %39 = arith.select %8, %37, %38 : vector<128x1xi1>, vector<128x1xf32>
    %c0_19 = arith.constant 0 : index
    %c0_20 = arith.constant 0 : index
    %40 = vector.load %arg9[%c0_19, %c0_20] : memref<1x1xf32, #tpu.memory_space<vmem>>, vector<1x1xf32>
    %cst_21 = arith.constant 0.000000e+00 : f32
    %41 = vector.broadcast %cst_21 : f32 to vector<128x1xf32>
    %42 = arith.subf %41, %27 : vector<128x1xf32>
    %cst_22 = arith.constant dense<0.000000e+00> : vector<1xf32>
    %43 = vector.multi_reduction <add>, %42, %cst_22 [0] : vector<128x1xf32> to vector<1xf32>
    %44 = vector.shape_cast %43 : vector<1xf32> to vector<1x1xf32>
    %45 = arith.addf %40, %44 : vector<1x1xf32>
    %c0_23 = arith.constant 0 : index
    %c0_24 = arith.constant 0 : index
    %46 = vector.load %arg9[%c0_23, %c0_24] : memref<1x1xf32, #tpu.memory_space<vmem>>, vector<1x1xf32>
    tpu.vector_store %arg9[%c0_23, %c0_24], %45 {strides = array<i32>} : memref<1x1xf32, #tpu.memory_space<vmem>>, vector<1x1xf32>,
    %c0_25 = arith.constant 0 : index
    %c0_26 = arith.constant 0 : index
    %47 = vector.load %arg10[%c0_25, %c0_26] : memref<1x1xf32, #tpu.memory_space<vmem>>, vector<1x1xf32>
    %cst_27 = arith.constant dense<0.000000e+00> : vector<1xf32>
    %48 = vector.multi_reduction <add>, %39, %cst_27 [0] : vector<128x1xf32> to vector<1xf32>
    %49 = vector.shape_cast %48 : vector<1xf32> to vector<1x1xf32>
    %50 = arith.addf %47, %49 : vector<1x1xf32>
    %c0_28 = arith.constant 0 : index
    %c0_29 = arith.constant 0 : index
    %51 = vector.load %arg10[%c0_28, %c0_29] : memref<1x1xf32, #tpu.memory_space<vmem>>, vector<1x1xf32>
    tpu.vector_store %arg10[%c0_28, %c0_29], %50 {strides = array<i32>} : memref<1x1xf32, #tpu.memory_space<vmem>>, vector<1x1xf32>,
    %c0_i32_30 = arith.constant 0 : i32
    %52 = arith.cmpi eq, %arg0, %c0_i32_30 : i32
    %53 = arith.extui %52 : i1 to i32
    %c0_i32_31 = arith.constant 0 : i32
    %54 = arith.cmpi ne, %53, %c0_i32_31 : i32
    scf.if %54 {
      %c0_32 = arith.constant 0 : index
      %c0_33 = arith.constant 0 : index
      %55 = vector.load %arg9[%c0_32, %c0_33] : memref<1x1xf32, #tpu.memory_space<vmem>>, vector<1x1xf32>
      %cst_34 = arith.constant 7.812500e-03 : f32
      %56 = vector.broadcast %cst_34 : f32 to vector<1x1xf32>
      %57 = arith.mulf %55, %56 : vector<1x1xf32>
      %c0_35 = arith.constant 0 : index
      %c0_36 = arith.constant 0 : index
      %58 = vector.load %arg10[%c0_35, %c0_36] : memref<1x1xf32, #tpu.memory_space<vmem>>, vector<1x1xf32>
      %cst_37 = arith.constant 3.906250e-07 : f32
      %59 = vector.broadcast %cst_37 : f32 to vector<1x1xf32>
      %60 = arith.mulf %58, %59 : vector<1x1xf32>
      %c0_38 = arith.constant 0 : index
      %c0_39 = arith.constant 0 : index
      %61 = vector.load %arg8[%c0_38, %c0_39] : memref<1x1xf32, #tpu.memory_space<vmem>>, vector<1x1xf32>
      tpu.vector_store %arg8[%c0_38, %c0_39], %57 {strides = array<i32>} : memref<1x1xf32, #tpu.memory_space<vmem>>, vector<1x1xf32>,
      %62 = arith.addf %57, %60 : vector<1x1xf32>
      %c0_40 = arith.constant 0 : index
      %c0_41 = arith.constant 0 : index
      %63 = vector.load %arg7[%c0_40, %c0_41] : memref<1x1xf32, #tpu.memory_space<vmem>>, vector<1x1xf32>
      tpu.vector_store %arg7[%c0_40, %c0_41], %62 {strides = array<i32>} : memref<1x1xf32, #tpu.memory_space<vmem>>, vector<1x1xf32>,
    } else {
    }
    return
  }
  func.func @transform_0(%arg0: i32) -> (i32, i32) {
    %c0_i32 = arith.constant 0 : i32
    %c0_i32_0 = arith.constant 0 : i32
    return %arg0, %c0_i32 : i32, i32
  }
  func.func @transform_1(%arg0: i32) -> (i32, i32) {
    %c0_i32 = arith.constant 0 : i32
    %c0_i32_0 = arith.constant 0 : i32
    return %arg0, %c0_i32 : i32, i32
  }
  func.func @transform_2(%arg0: i32) -> (i32, i32) {
    %c0_i32 = arith.constant 0 : i32
    %c0_i32_0 = arith.constant 0 : i32
    return %arg0, %c0_i32 : i32, i32
  }
  func.func @transform_3(%arg0: i32) -> (i32, i32) {
    %c0_i32 = arith.constant 0 : i32
    %c0_i32_0 = arith.constant 0 : i32
    return %arg0, %c0_i32 : i32, i32
  }
  func.func @transform_4(%arg0: i32) -> (i32, i32) {
    %c0_i32 = arith.constant 0 : i32
    %c0_i32_0 = arith.constant 0 : i32
    return %arg0, %c0_i32 : i32, i32
  }
  func.func @transform_5(%arg0: i32) -> (i32, i32) {
    %c0_i32 = arith.constant 0 : i32
    %c0_i32_0 = arith.constant 0 : i32
    return %arg0, %c0_i32 : i32, i32
  }
  func.func @transform_6(%arg0: i32) -> (i32, i32) {
    %c0_i32 = arith.constant 0 : i32
    %c0_i32_0 = arith.constant 0 : i32
    %c0_i32_1 = arith.constant 0 : i32
    return %c0_i32, %c0_i32_0 : i32, i32
  }
  func.func @transform_7(%arg0: i32) -> (i32, i32) {
    %c0_i32 = arith.constant 0 : i32
    %c0_i32_0 = arith.constant 0 : i32
    %c0_i32_1 = arith.constant 0 : i32
    return %c0_i32, %c0_i32_0 : i32, i32
  }
}

</mosaic_0001>

<llo_original>
// kernel: tpu_custom_call.1
$region0: #{tpu_custom_call.1}
  #allocation0 [shape = 'u32[]', space=smem, size = 0x4, offset = 0x4, fixed_abs, tag = 'smem constant byte address 0x4 - core index']
  #allocation1 [shape = 'u32[72,128]{1,0:T(1,128)}', space=vmem, size = 0x9000, scoped, tag = 'internal scratch']
  %s0 = inlined_call_operand.hbm [shape: f32[16,128], index: 0, kind: input, shape index: {}]
  %s1 = inlined_call_operand.hbm [shape: f32[8,128], index: 1, kind: input, shape index: {}]
  %s2 = inlined_call_operand.hbm [shape: f32[16,128], index: 2, kind: output, shape index: {}]
  %s3 = sld [smem:[#allocation0]]
  $region49: #{tpu_custom_call.1} parent=0
    _
  %s5 = ssub.s32 1, %s3
  %s6 = scalar_select 0, %s5, %s3
  $region1: #{tpu_custom_call.1} parent=0
    #allocation2 [shape = 'u8[8192]{0}', space=vmem, size = 0x2000, scoped, tag = 'input window, operand 0']
    #allocation3 [shape = 's32[2]{0}', space=sflag, size = 0x8, scoped, tag = 'scoped memory for tpu_custom_call.1']
    #allocation4 [shape = 's32[2]{0}', space=sflag, size = 0x8, scoped, tag = 'scoped memory for tpu_custom_call.1']
    #allocation5 [shape = 'u8[4096]{0}', space=vmem, size = 0x1000, scoped, tag = 'input window, operand 1, single buffered']
    #allocation6 [shape = 's32[1]{0}', space=sflag, size = 0x4, scoped, tag = 'scoped memory for tpu_custom_call.1']
    #allocation7 [shape = 'u8[8192]{0}', space=vmem, size = 0x2000, scoped, tag = 'output window, operand 0']
    %7 = vsyncpa [#allocation3], 0
    %s8 = scalar_lea.sflag [#allocation3], 1
    %9 = vsyncpa %s8, 0
    %10 = vsyncpa [#allocation6], 0
    %11 = vsyncpa [#allocation4], 0
    %s12 = scalar_lea.sflag [#allocation4], 1
    %13 = vsyncpa %s12, 0
    loop: start=0, step=1, limit=4
    $region2: #{tpu_custom_call.1} parent=1 // loop_pre_header
      _
    $region3: #{tpu_custom_call.1} parent=1 // loop_header
      %s15 = sphi 0, %s19
      %p16 = scmp.ge.s32.totalorder %s15, 4
      %s25 = sphi 0, %s27
      %s28 = sphi 0, %s25
      %s29 = sphi 0, %s28
      %s45 = sphi 0, %s29
      %s49 = sphi 0, %s49
      %s51 = sphi 0, %s49
      %s52 = sphi 0, %s51
      %s66 = sphi 0, %s52
      %s72 = sphi 0, %s74
      %s75 = sphi 0, %s72
      %s76 = sphi 0, %s75
      %s92 = sphi 0, %s76
    $region4: #{tpu_custom_call.1} parent=1 // loop_header_branch
      %18 = sbr.rel (%p16) target = $region8
    $region5: #{tpu_custom_call.1} parent=1 // loop_body
      %s20 = ssub.s32 %s15, 1
      %s21 = ssub.s32 %s15, 2
      %s22 = sadd.s32 %s15, 1
      %s23 = ssub.s32 %s15, %s22
      %p24 = scmp.eq.s32.totalorder %s23, 0
      %s26 = sadd.s32 %s25, 1
      %s27 = scalar_select %p24, %s25, %s26
      %p30 = pneg %p24
      %p31 = scmp.eq.s32.totalorder %s15, 1
      %p32 = por %p30, %p31
      %p33 = scmp.ne.s32.totalorder %s25, %s28
      %p34 = scmp.eq.s32.totalorder %s15, 0
      %p35 = por %p33, %p34
      %p36 = scmp.ne.s32.totalorder %s25, %s28
      %p37 = scmp.eq.s32.totalorder %s20, 1
      %p38 = por %p36, %p37
      %p39 = scmp.ne.s32.totalorder %s28, %s29
      %p40 = scmp.eq.s32.totalorder %s20, 0
      %p41 = por %p39, %p40
      %p42 = scmp.ne.s32.totalorder %s28, %s29
      %p43 = scmp.eq.s32.totalorder %s21, 1
      %p44 = por %p42, %p43
      %p46 = scmp.ne.s32.totalorder %s29, %s45
      %p47 = scmp.eq.s32.totalorder %s21, 0
      %p48 = por %p46, %p47
      %s50 = sadd.s32 %s49, 1
      %p53 = scmp.eq.s32.totalorder %s15, 1
      %p54 = scmp.ne.s32.totalorder %s49, %s51
      %p55 = scmp.eq.s32.totalorder %s15, 0
      %p56 = por %p54, %p55
      %p57 = scmp.ne.s32.totalorder %s49, %s51
      %p58 = scmp.eq.s32.totalorder %s20, 1
      %p59 = por %p57, %p58
      %p60 = scmp.ne.s32.totalorder %s51, %s52
      %p61 = scmp.eq.s32.totalorder %s20, 0
      %p62 = por %p60, %p61
      %p63 = scmp.ne.s32.totalorder %s51, %s52
      %p64 = scmp.eq.s32.totalorder %s21, 1
      %p65 = por %p63, %p64
      %p67 = scmp.ne.s32.totalorder %s52, %s66
      %p68 = scmp.eq.s32.totalorder %s21, 0
      %p69 = por %p67, %p68
      %s70 = ssub.s32 %s15, %s22
      %p71 = scmp.eq.s32.totalorder %s70, 0
      %s73 = sadd.s32 %s72, 1
      %s74 = scalar_select %p71, %s72, %s73
      %p77 = pneg %p71
      %p78 = scmp.eq.s32.totalorder %s15, 1
      %p79 = por %p77, %p78
      %p80 = scmp.ne.s32.totalorder %s72, %s75
      %p81 = scmp.eq.s32.totalorder %s15, 0
      %p82 = por %p80, %p81
      %p83 = scmp.ne.s32.totalorder %s72, %s75
      %p84 = scmp.eq.s32.totalorder %s20, 1
      %p85 = por %p83, %p84
      %p86 = scmp.ne.s32.totalorder %s75, %s76
      %p87 = scmp.eq.s32.totalorder %s20, 0
      %p88 = por %p86, %p87
      %p89 = scmp.ne.s32.totalorder %s75, %s76
      %p90 = scmp.eq.s32.totalorder %s21, 1
      %p91 = por %p89, %p90
      %p93 = scmp.ne.s32.totalorder %s76, %s92
      %p94 = scmp.eq.s32.totalorder %s21, 0
      %p95 = por %p93, %p94
      %p96 = scmp.le.s32.totalorder 1, %s15
      %p97 = scmp.lt.s32.totalorder %s15, 3
      %p98 = pnand %p96, %p97
      %p99 = pneg %p98
      // Predicated region
      $region9: #{tpu_custom_call.1} parent=5 // pred_check
        _
      $region10: #{tpu_custom_call.1} parent=5 // pred_check_branch
        %101 = sbr.rel (%p98) target = $region12
      $region11: #{tpu_custom_call.1} parent=5 // pred_region
        %s102 = ssub.s32 %s15, 1
        // Predicated region
        $region13: #{tpu_custom_call.1} parent=11 // pred_check
          %p103 = pneg %p62
        $region14: #{tpu_custom_call.1} parent=11 // pred_check_branch
          %105 = sbr.rel (%p103) target = $region16
        $region15: #{tpu_custom_call.1} parent=11 // pred_region
          %107 = vsyncadd [#allocation6], 0
          %s109 = sshll.u32 %s1, 4
          %s110 = int_to_ptr.hbm [resolvable:$true] %s109
          %s111 = sshll.u32 [#allocation5], 4
          %s112 = int_to_ptr.vmem [resolvable:$true] %s111
          %114 = dma.hbm_to_vmem [thread:$0]  %s110, 128, %s112, [#allocation6]
        $region16: #{tpu_custom_call.1} parent=11 // pred_fallthru
          _
      $region12: #{tpu_custom_call.1} parent=5 // pred_fallthru
        _
      %p115 = scmp.lt.s32.totalorder %s15, 2
      // Predicated region
      $region17: #{tpu_custom_call.1} parent=5 // pred_check
        %p116 = pneg %p115
      $region18: #{tpu_custom_call.1} parent=5 // pred_check_branch
        %118 = sbr.rel (%p116) target = $region20
      $region19: #{tpu_custom_call.1} parent=5 // pred_region
        // Predicated region
        $region21: #{tpu_custom_call.1} parent=19 // pred_check
          %p119 = pneg %p35
        $region22: #{tpu_custom_call.1} parent=19 // pred_check_branch
          %121 = sbr.rel (%p119) target = $region24
        $region23: #{tpu_custom_call.1} parent=19 // pred_region
          %s122 = sand.u32 %s25, 1
          %s123 = scalar_lea.sflag [#allocation3], %s122
          %s124 = sand.u32 %s25, 1
          %s125 = smul.addr %s124, 8
          %s126 = scalar_lea.vmem [#allocation2], %s125
          %128 = vsyncadd %s123, 0
          %s129 = smul.addr %s15, 8
          %s130 = scalar_lea.hbm %s0, %s129
          %s132 = sshll.u32 %s130, 4
          %s133 = int_to_ptr.hbm [resolvable:$true] %s132
          %s134 = sshll.u32 %s126, 4
          %s135 = int_to_ptr.vmem [resolvable:$true] %s134
          %137 = dma.hbm_to_vmem [thread:$0]  %s133, 128, %s135, %s123
        $region24: #{tpu_custom_call.1} parent=19 // pred_fallthru
          _
      $region20: #{tpu_custom_call.1} parent=5 // pred_fallthru
        _
      %p138 = scmp.le.s32.totalorder 1, %s15
      %p139 = scmp.lt.s32.totalorder %s15, 3
      %p140 = pnand %p138, %p139
      %p141 = pneg %p140
      // Predicated region
      $region25: #{tpu_custom_call.1} parent=5 // pred_check
        _
      $region26: #{tpu_custom_call.1} parent=5 // pred_check_branch
        %143 = sbr.rel (%p140) target = $region28
      $region27: #{tpu_custom_call.1} parent=5 // pred_region
        %s144 = ssub.s32 %s15, 1
        %s145 = sand.u32 %s28, 1
        %s146 = scalar_lea.sflag [#allocation3], %s145
        %s147 = sand.u32 %s28, 1
        %s148 = smul.addr %s147, 8
        %s149 = scalar_lea.vmem [#allocation2], %s148
        // Predicated region
        $region29: #{tpu_custom_call.1} parent=27 // pred_check
          %p150 = pneg %p41
        $region30: #{tpu_custom_call.1} parent=27 // pred_check_branch
          %152 = sbr.rel (%p150) target = $region32
        $region31: #{tpu_custom_call.1} parent=27 // pred_region
          %154 = dma.done %s146, 128
        $region32: #{tpu_custom_call.1} parent=27 // pred_fallthru
          _
        // Predicated region
        $region33: #{tpu_custom_call.1} parent=27 // pred_check
          %p155 = pneg %p62
        $region34: #{tpu_custom_call.1} parent=27 // pred_check_branch
          %157 = sbr.rel (%p155) target = $region36
        $region35: #{tpu_custom_call.1} parent=27 // pred_region
          %159 = dma.done [#allocation6], 128
        $region36: #{tpu_custom_call.1} parent=27 // pred_fallthru
          _
        %s160 = sand.u32 %s28, 1
        %s161 = scalar_lea.sflag [#allocation3], %s160
        %s162 = sand.u32 %s28, 1
        %s163 = smul.addr %s162, 8
        %s164 = scalar_lea.vmem [#allocation2], %s163
        %p165 = pneg %p41
        %p166 = pneg %p38
        %p167 = pneg %p62
        %p168 = pneg %p59
        %p169 = pneg %p88
        %p170 = pneg %p85
        %s171 = sand.u32 %s75, 1
        %s172 = scalar_lea.sflag [#allocation4], %s171
        %s173 = sand.u32 %s75, 1
        %s174 = smul.addr %s173, 8
        %s175 = scalar_lea.vmem [#allocation7], %s174
        %v176 = vld [vmem:[%s149] sm:$0xff]
        %v177 = vld [vmem:[#allocation5] sm:$0xff]
        %v178 = vadd.f32 %v176, %v177
        %179 = vst [vmem:[%s175] sm:$0xff] %v178
        %s180 = sand.u32 %s75, 1
        %s181 = scalar_lea.sflag [#allocation4], %s180
        %s182 = sand.u32 %s75, 1
        %s183 = smul.addr %s182, 8
        %s184 = scalar_lea.vmem [#allocation7], %s183
        // Predicated region
        $region37: #{tpu_custom_call.1} parent=27 // pred_check
          %p185 = pneg %p85
        $region38: #{tpu_custom_call.1} parent=27 // pred_check_branch
          %187 = sbr.rel (%p185) target = $region40
        $region39: #{tpu_custom_call.1} parent=27 // pred_region
          %189 = vsyncadd %s181, 0
          %s190 = smul.addr %s20, 8
          %s191 = scalar_lea.hbm %s2, %s190
          %s193 = sshll.u32 %s184, 4
          %s194 = int_to_ptr.vmem [resolvable:$true] %s193
          %s195 = sshll.u32 %s191, 4
          %s196 = int_to_ptr.hbm [resolvable:$true] %s195
          %198 = dma.vmem_to_hbm [thread:$0]  %s194, 128, %s196, %s181
        $region40: #{tpu_custom_call.1} parent=27 // pred_fallthru
          _
      $region28: #{tpu_custom_call.1} parent=5 // pred_fallthru
        _
      %p199 = scmp.le.s32.totalorder 2, %s15
      // Predicated region
      $region41: #{tpu_custom_call.1} parent=5 // pred_check
        %p200 = pneg %p199
      $region42: #{tpu_custom_call.1} parent=5 // pred_check_branch
        %202 = sbr.rel (%p200) target = $region44
      $region43: #{tpu_custom_call.1} parent=5 // pred_region
        %s203 = ssub.s32 %s15, 2
        // Predicated region
        $region45: #{tpu_custom_call.1} parent=43 // pred_check
          %p204 = pneg %p91
        $region46: #{tpu_custom_call.1} parent=43 // pred_check_branch
          %206 = sbr.rel (%p204) target = $region48
        $region47: #{tpu_custom_call.1} parent=43 // pred_region
          %s207 = sand.u32 %s76, 1
          %s208 = scalar_lea.sflag [#allocation4], %s207
          %s209 = sand.u32 %s76, 1
          %s210 = smul.addr %s209, 8
          %s211 = scalar_lea.vmem [#allocation7], %s210
          %213 = dma.done %s208, 128
        $region48: #{tpu_custom_call.1} parent=43 // pred_fallthru
          _
      $region44: #{tpu_custom_call.1} parent=5 // pred_fallthru
        _
    $region6: #{tpu_custom_call.1} parent=1 // loop_footer
      %s19 = sadd.s32 1, %s15
    $region7: #{tpu_custom_call.1} parent=1 // loop_footer_branch
      %14 = sbr.rel target = $region3
    $region8: #{tpu_custom_call.1} parent=1 // loop_exit
      _
    %214 = vsyncpa [#allocation3], 1
    %s215 = scalar_lea.sflag [#allocation3], 1
    %216 = vsyncpa %s215, 1
    %217 = vsyncpa [#allocation6], 1
    %218 = vsyncpa [#allocation4], 1
    %s219 = scalar_lea.sflag [#allocation4], 1
    %220 = vsyncpa %s219, 1

// kernel: lightgcn_forward.5
$region0: #{lightgcn_forward.5}
  #allocation0 [shape = 'u32[]', space=smem, size = 0x4, offset = 0x4, fixed_abs, tag = 'smem constant byte address 0x4 - core index']
  #allocation1 [shape = 'u32[72,128]{1,0:T(1,128)}', space=vmem, size = 0x9000, scoped, tag = 'internal scratch']
  #allocation2 [shape = 'f32[1,1]{1,0:T(1,128)}', space=vmem, size = 0x200, scoped, tag = 'scratch operand']
  #allocation3 [shape = 'f32[1,1]{1,0:T(1,128)}', space=vmem, size = 0x200, scoped, tag = 'scratch operand']
  %s0 = inlined_call_operand.vmem [shape: f32[128,128], index: 0, kind: input, shape index: {}]
  %s1 = inlined_call_operand.vmem [shape: f32[128,128], index: 1, kind: input, shape index: {}]
  %s2 = inlined_call_operand.vmem [shape: f32[128,128], index: 2, kind: input, shape index: {}]
  %s3 = inlined_call_operand.vmem [shape: f32[128,128], index: 3, kind: input, shape index: {}]
  %s4 = inlined_call_operand.vmem [shape: f32[128,128], index: 4, kind: input, shape index: {}]
  %s5 = inlined_call_operand.vmem [shape: f32[128,128], index: 5, kind: input, shape index: {}]
  %s6 = inlined_call_operand.hbm [shape: f32[1,1], index: 6, kind: output, shape index: {0}]
  %s7 = inlined_call_operand.hbm [shape: f32[1,1], index: 7, kind: output, shape index: {1}]
  %8 = xla_tuple %s6, %s7
  %s9 = sld [smem:[#allocation0]]
  $region50: #{lightgcn_forward.5} parent=0
    _
  %s11 = ssub.s32 1, %s9
  %s12 = scalar_select 0, %s11, %s9
  $region1: #{lightgcn_forward.5} parent=0
    #allocation4 [shape = 'u8[512]{0}', space=vmem, size = 0x400, scoped, tag = 'output window, operand 0, single buffered']
    #allocation5 [shape = 's32[1]{0}', space=sflag, size = 0x4, scoped, tag = 'scoped memory for lightgcn_forward.5']
    #allocation6 [shape = 'u8[512]{0}', space=vmem, size = 0x400, scoped, tag = 'output window, operand 1, single buffered']
    #allocation7 [shape = 's32[1]{0}', space=sflag, size = 0x4, scoped, tag = 'scoped memory for lightgcn_forward.5']
    %13 = vsyncpa [#allocation5], 0
    %14 = vsyncpa [#allocation7], 0
    // Predicated region
    $region2: #{lightgcn_forward.5} parent=1 // pred_check
      _
    $region3: #{lightgcn_forward.5} parent=1 // pred_check_branch
      %16 = sbr.rel (0) target = $region5
    $region4: #{lightgcn_forward.5} parent=1 // pred_region
      _
    $region5: #{lightgcn_forward.5} parent=1 // pred_fallthru
      _
    // Predicated region
    $region6: #{lightgcn_forward.5} parent=1 // pred_check
      _
    $region7: #{lightgcn_forward.5} parent=1 // pred_check_branch
      %18 = sbr.rel (0) target = $region9
    $region8: #{lightgcn_forward.5} parent=1 // pred_region
      _
    $region9: #{lightgcn_forward.5} parent=1 // pred_fallthru
      _
    // Predicated region
    $region10: #{lightgcn_forward.5} parent=1 // pred_check
      _
    $region11: #{lightgcn_forward.5} parent=1 // pred_check_branch
      %20 = sbr.rel (0) target = $region13
    $region12: #{lightgcn_forward.5} parent=1 // pred_region
      _
    $region13: #{lightgcn_forward.5} parent=1 // pred_fallthru
      _
    // Predicated region
    $region14: #{lightgcn_forward.5} parent=1 // pred_check
      _
    $region15: #{lightgcn_forward.5} parent=1 // pred_check_branch
      %22 = sbr.rel (0) target = $region17
    $region16: #{lightgcn_forward.5} parent=1 // pred_region
      _
    $region17: #{lightgcn_forward.5} parent=1 // pred_fallthru
      _
    // Predicated region
    $region18: #{lightgcn_forward.5} parent=1 // pred_check
      _
    $region19: #{lightgcn_forward.5} parent=1 // pred_check_branch
      %24 = sbr.rel (0) target = $region21
    $region20: #{lightgcn_forward.5} parent=1 // pred_region
      _
    $region21: #{lightgcn_forward.5} parent=1 // pred_fallthru
      _
    // Predicated region
    $region22: #{lightgcn_forward.5} parent=1 // pred_check
      _
    $region23: #{lightgcn_forward.5} parent=1 // pred_check_branch
      %26 = sbr.rel (0) target = $region25
    $region24: #{lightgcn_forward.5} parent=1 // pred_region
      _
    $region25: #{lightgcn_forward.5} parent=1 // pred_fallthru
      _
    %p27 = scmp.eq.s32.totalorder 0, 0
    // Predicated region
    $region26: #{lightgcn_forward.5} parent=1 // pred_check
      %p28 = pneg %p27
    $region27: #{lightgcn_forward.5} parent=1 // pred_check_branch
      %30 = sbr.rel (%p28) target = $region29
    $region28: #{lightgcn_forward.5} parent=1 // pred_region
      %vm31 = vcmask 0
      %32 = vst.msk [vmem:[#allocation2] sm:$0x1] %vm31, 0.0
      %33 = vst.msk [vmem:[#allocation3] sm:$0x1] %vm31, 0.0
    $region29: #{lightgcn_forward.5} parent=1 // pred_fallthru
      _
    %s34 = smul.u32 0, 128
    %v35 = vlaneseq
    %v36 = vshrl.u32 %v35, 7
    %v37 = vadd.s32 %v36, 8
    %v38 = vadd.s32 %v36, 16
    %v39 = vadd.s32 %v36, 24
    %v40 = vadd.s32 %v36, 32
    %v41 = vadd.s32 %v36, 40
    %v42 = vadd.s32 %v36, 48
    %v43 = vadd.s32 %v36, 56
    %v44 = vadd.s32 %v36, 64
    %v45 = vadd.s32 %v36, 72
    %v46 = vadd.s32 %v36, 80
    %v47 = vadd.s32 %v36, 88
    %v48 = vadd.s32 %v36, 96
    %v49 = vadd.s32 %v36, 104
    %v50 = vadd.s32 %v36, 112
    %v51 = vadd.s32 %v36, 120
    %v52 = vstv %s34
    %v53 = vadd.s32 %v52, %v36
    %v54 = vadd.s32 %v52, %v37
    %v55 = vadd.s32 %v52, %v38
    %v56 = vadd.s32 %v52, %v39
    %v57 = vadd.s32 %v52, %v40
    %v58 = vadd.s32 %v52, %v41
    %v59 = vadd.s32 %v52, %v42
    %v60 = vadd.s32 %v52, %v43
    %v61 = vadd.s32 %v52, %v44
    %v62 = vadd.s32 %v52, %v45
    %v63 = vadd.s32 %v52, %v46
    %v64 = vadd.s32 %v52, %v47
    %v65 = vadd.s32 %v52, %v48
    %v66 = vadd.s32 %v52, %v49
    %v67 = vadd.s32 %v52, %v50
    %v68 = vadd.s32 %v52, %v51
    %vm69 = vcmp.lt.s32.totalorder %v53, 128
    %vm70 = vcmp.lt.s32.totalorder %v54, 128
    %vm71 = vcmp.lt.s32.totalorder %v55, 128
    %vm72 = vcmp.lt.s32.totalorder %v56, 128
    %vm73 = vcmp.lt.s32.totalorder %v57, 128
    %vm74 = vcmp.lt.s32.totalorder %v58, 128
    %vm75 = vcmp.lt.s32.totalorder %v59, 128
    %vm76 = vcmp.lt.s32.totalorder %v60, 128
    %vm77 = vcmp.lt.s32.totalorder %v61, 128
    %vm78 = vcmp.lt.s32.totalorder %v62, 128
    %vm79 = vcmp.lt.s32.totalorder %v63, 128
    %vm80 = vcmp.lt.s32.totalorder %v64, 128
    %vm81 = vcmp.lt.s32.totalorder %v65, 128
    %vm82 = vcmp.lt.s32.totalorder %v66, 128
    %vm83 = vcmp.lt.s32.totalorder %v67, 128
    %vm84 = vcmp.lt.s32.totalorder %v68, 128
    %v85 = vld [vmem:[%s0] sm:$0xff]
    %v86 = vld [vmem:[%s0 + $0x8] sm:$0xff]
    %v87 = vld [vmem:[%s0 + $0x10] sm:$0xff]
    %v88 = vld [vmem:[%s0 + $0x18] sm:$0xff]
    %v89 = vld [vmem:[%s0 + $0x20] sm:$0xff]
    %v90 = vld [vmem:[%s0 + $0x28] sm:$0xff]
    %v91 = vld [vmem:[%s0 + $0x30] sm:$0xff]
    %v92 = vld [vmem:[%s0 + $0x38] sm:$0xff]
    %v93 = vld [vmem:[%s0 + $0x40] sm:$0xff]
    %v94 = vld [vmem:[%s0 + $0x48] sm:$0xff]
    %v95 = vld [vmem:[%s0 + $0x50] sm:$0xff]
    %v96 = vld [vmem:[%s0 + $0x58] sm:$0xff]
    %v97 = vld [vmem:[%s0 + $0x60] sm:$0xff]
    %v98 = vld [vmem:[%s0 + $0x68] sm:$0xff]
    %v99 = vld [vmem:[%s0 + $0x70] sm:$0xff]
    %v100 = vld [vmem:[%s0 + $0x78] sm:$0xff]
    %v101 = vld [vmem:[%s1] sm:$0xff]
    %v102 = vld [vmem:[%s1 + $0x8] sm:$0xff]
    %v103 = vld [vmem:[%s1 + $0x10] sm:$0xff]
    %v104 = vld [vmem:[%s1 + $0x18] sm:$0xff]
    %v105 = vld [vmem:[%s1 + $0x20] sm:$0xff]
    %v106 = vld [vmem:[%s1 + $0x28] sm:$0xff]
    %v107 = vld [vmem:[%s1 + $0x30] sm:$0xff]
    %v108 = vld [vmem:[%s1 + $0x38] sm:$0xff]
    %v109 = vld [vmem:[%s1 + $0x40] sm:$0xff]
    %v110 = vld [vmem:[%s1 + $0x48] sm:$0xff]
    %v111 = vld [vmem:[%s1 + $0x50] sm:$0xff]
    %v112 = vld [vmem:[%s1 + $0x58] sm:$0xff]
    %v113 = vld [vmem:[%s1 + $0x60] sm:$0xff]
    %v114 = vld [vmem:[%s1 + $0x68] sm:$0xff]
    %v115 = vld [vmem:[%s1 + $0x70] sm:$0xff]
    %v116 = vld [vmem:[%s1 + $0x78] sm:$0xff]
    %v117 = vld [vmem:[%s2] sm:$0xff]
    %v118 = vld [vmem:[%s2 + $0x8] sm:$0xff]
    %v119 = vld [vmem:[%s2 + $0x10] sm:$0xff]
    %v120 = vld [vmem:[%s2 + $0x18] sm:$0xff]
    %v121 = vld [vmem:[%s2 + $0x20] sm:$0xff]
    %v122 = vld [vmem:[%s2 + $0x28] sm:$0xff]
    %v123 = vld [vmem:[%s2 + $0x30] sm:$0xff]
    %v124 = vld [vmem:[%s2 + $0x38] sm:$0xff]
    %v125 = vld [vmem:[%s2 + $0x40] sm:$0xff]
    %v126 = vld [vmem:[%s2 + $0x48] sm:$0xff]
    %v127 = vld [vmem:[%s2 + $0x50] sm:$0xff]
    %v128 = vld [vmem:[%s2 + $0x58] sm:$0xff]
    %v129 = vld [vmem:[%s2 + $0x60] sm:$0xff]
    %v130 = vld [vmem:[%s2 + $0x68] sm:$0xff]
    %v131 = vld [vmem:[%s2 + $0x70] sm:$0xff]
    %v132 = vld [vmem:[%s2 + $0x78] sm:$0xff]
    %v133 = vsub.f32 %v101, %v117
    %v134 = vsub.f32 %v102, %v118
    %v135 = vsub.f32 %v103, %v119
    %v136 = vsub.f32 %v104, %v120
    %v137 = vsub.f32 %v105, %v121
    %v138 = vsub.f32 %v106, %v122
    %v139 = vsub.f32 %v107, %v123
    %v140 = vsub.f32 %v108, %v124
    %v141 = vsub.f32 %v109, %v125
    %v142 = vsub.f32 %v110, %v126
    %v143 = vsub.f32 %v111, %v127
    %v144 = vsub.f32 %v112, %v128
    %v145 = vsub.f32 %v113, %v129
    %v146 = vsub.f32 %v114, %v130
    %v147 = vsub.f32 %v115, %v131
    %v148 = vsub.f32 %v116, %v132
    %v149 = vmul.f32 %v85, %v133
    %v150 = vmul.f32 %v86, %v134
    %v151 = vmul.f32 %v87, %v135
    %v152 = vmul.f32 %v88, %v136
    %v153 = vmul.f32 %v89, %v137
    %v154 = vmul.f32 %v90, %v138
    %v155 = vmul.f32 %v91, %v139
    %v156 = vmul.f32 %v92, %v140
    %v157 = vmul.f32 %v93, %v141
    %v158 = vmul.f32 %v94, %v142
    %v159 = vmul.f32 %v95, %v143
    %v160 = vmul.f32 %v96, %v144
    %v161 = vmul.f32 %v97, %v145
    %v162 = vmul.f32 %v98, %v146
    %v163 = vmul.f32 %v99, %v147
    %v164 = vmul.f32 %v100, %v148
    %165 = vadd.xlane.f32.xlu0 %v149
    %v166 = vpop.xlane.xlu0 %165
    %167 = vadd.xlane.f32.xlu0 %v150
    %v168 = vpop.xlane.xlu0 %167
    %169 = vadd.xlane.f32.xlu0 %v151
    %v170 = vpop.xlane.xlu0 %169
    %171 = vadd.xlane.f32.xlu0 %v152
    %v172 = vpop.xlane.xlu0 %171
    %173 = vadd.xlane.f32.xlu0 %v153
    %v174 = vpop.xlane.xlu0 %173
    %175 = vadd.xlane.f32.xlu0 %v154
    %v176 = vpop.xlane.xlu0 %175
    %177 = vadd.xlane.f32.xlu0 %v155
    %v178 = vpop.xlane.xlu0 %177
    %179 = vadd.xlane.f32.xlu0 %v156
    %v180 = vpop.xlane.xlu0 %179
    %181 = vadd.xlane.f32.xlu0 %v157
    %v182 = vpop.xlane.xlu0 %181
    %183 = vadd.xlane.f32.xlu0 %v158
    %v184 = vpop.xlane.xlu0 %183
    %185 = vadd.xlane.f32.xlu0 %v159
    %v186 = vpop.xlane.xlu0 %185
    %187 = vadd.xlane.f32.xlu0 %v160
    %v188 = vpop.xlane.xlu0 %187
    %189 = vadd.xlane.f32.xlu0 %v161
    %v190 = vpop.xlane.xlu0 %189
    %191 = vadd.xlane.f32.xlu0 %v162
    %v192 = vpop.xlane.xlu0 %191
    %193 = vadd.xlane.f32.xlu0 %v163
    %v194 = vpop.xlane.xlu0 %193
    %195 = vadd.xlane.f32.xlu0 %v164
    %v196 = vpop.xlane.xlu0 %195
    %v197 = vmin.f32 %v166, 0.0
    %v198 = vmin.f32 %v168, 0.0
    %v199 = vmin.f32 %v170, 0.0
    %v200 = vmin.f32 %v172, 0.0
    %v201 = vmin.f32 %v174, 0.0
    %v202 = vmin.f32 %v176, 0.0
    %v203 = vmin.f32 %v178, 0.0
    %v204 = vmin.f32 %v180, 0.0
    %v205 = vmin.f32 %v182, 0.0
    %v206 = vmin.f32 %v184, 0.0
    %v207 = vmin.f32 %v186, 0.0
    %v208 = vmin.f32 %v188, 0.0
    %v209 = vmin.f32 %v190, 0.0
    %v210 = vmin.f32 %v192, 0.0
    %v211 = vmin.f32 %v194, 0.0
    %v212 = vmin.f32 %v196, 0.0
    %v213 = vand.u32 2147483647, %v166
    %v214 = vand.u32 2147483647, %v168
    %v215 = vand.u32 2147483647, %v170
    %v216 = vand.u32 2147483647, %v172
    %v217 = vand.u32 2147483647, %v174
    %v218 = vand.u32 2147483647, %v176
    %v219 = vand.u32 2147483647, %v178
    %v220 = vand.u32 2147483647, %v180
    %v221 = vand.u32 2147483647, %v182
    %v222 = vand.u32 2147483647, %v184
    %v223 = vand.u32 2147483647, %v186
    %v224 = vand.u32 2147483647, %v188
    %v225 = vand.u32 2147483647, %v190
    %v226 = vand.u32 2147483647, %v192
    %v227 = vand.u32 2147483647, %v194
    %v228 = vand.u32 2147483647, %v196
    %v229 = vsub.f32 0.0, %v213
    %v230 = vsub.f32 0.0, %v214
    %v231 = vsub.f32 0.0, %v215
    %v232 = vsub.f32 0.0, %v216
    %v233 = vsub.f32 0.0, %v217
    %v234 = vsub.f32 0.0, %v218
    %v235 = vsub.f32 0.0, %v219
    %v236 = vsub.f32 0.0, %v220
    %v237 = vsub.f32 0.0, %v221
    %v238 = vsub.f32 0.0, %v222
    %v239 = vsub.f32 0.0, %v223
    %v240 = vsub.f32 0.0, %v224
    %v241 = vsub.f32 0.0, %v225
    %v242 = vsub.f32 0.0, %v226
    %v243 = vsub.f32 0.0, %v227
    %v244 = vsub.f32 0.0, %v228
    %v245 = vmul.f32 %v229, 1.442695
    %v246 = vpow.pop %v245
    %v247 = vmul.f32 %v230, 1.442695
    %v248 = vpow.pop %v247
    %v249 = vmul.f32 %v231, 1.442695
    %v250 = vpow.pop %v249
    %v251 = vmul.f32 %v232, 1.442695
    %v252 = vpow.pop %v251
    %v253 = vmul.f32 %v233, 1.442695
    %v254 = vpow.pop %v253
    %v255 = vmul.f32 %v234, 1.442695
    %v256 = vpow.pop %v255
    %v257 = vmul.f32 %v235, 1.442695
    %v258 = vpow.pop %v257
    %v259 = vmul.f32 %v236, 1.442695
    %v260 = vpow.pop %v259
    %v261 = vmul.f32 %v237, 1.442695
    %v262 = vpow.pop %v261
    %v263 = vmul.f32 %v238, 1.442695
    %v264 = vpow.pop %v263
    %v265 = vmul.f32 %v239, 1.442695
    %v266 = vpow.pop %v265
    %v267 = vmul.f32 %v240, 1.442695
    %v268 = vpow.pop %v267
    %v269 = vmul.f32 %v241, 1.442695
    %v270 = vpow.pop %v269
    %v271 = vmul.f32 %v242, 1.442695
    %v272 = vpow.pop %v271
    %v273 = vmul.f32 %v243, 1.442695
    %v274 = vpow.pop %v273
    %v275 = vmul.f32 %v244, 1.442695
    %v276 = vpow.pop %v275
    %v277 = vadd.f32 %v246, 1.0
    %v278 = vadd.f32 %v248, 1.0
    %v279 = vadd.f32 %v250, 1.0
    %v280 = vadd.f32 %v252, 1.0
    %v281 = vadd.f32 %v254, 1.0
    %v282 = vadd.f32 %v256, 1.0
    %v283 = vadd.f32 %v258, 1.0
    %v284 = vadd.f32 %v260, 1.0
    %v285 = vadd.f32 %v262, 1.0
    %v286 = vadd.f32 %v264, 1.0
    %v287 = vadd.f32 %v266, 1.0
    %v288 = vadd.f32 %v268, 1.0
    %v289 = vadd.f32 %v270, 1.0
    %v290 = vadd.f32 %v272, 1.0
    %v291 = vadd.f32 %v274, 1.0
    %v292 = vadd.f32 %v276, 1.0
    %v293 = vlog2.pop %v277
    %v294 = vmul.f32 %v293, 0.6931472
    %v295 = vlog2.pop %v278
    %v296 = vmul.f32 %v295, 0.6931472
    %v297 = vlog2.pop %v279
    %v298 = vmul.f32 %v297, 0.6931472
    %v299 = vlog2.pop %v280
    %v300 = vmul.f32 %v299, 0.6931472
    %v301 = vlog2.pop %v281
    %v302 = vmul.f32 %v301, 0.6931472
    %v303 = vlog2.pop %v282
    %v304 = vmul.f32 %v303, 0.6931472
    %v305 = vlog2.pop %v283
    %v306 = vmul.f32 %v305, 0.6931472
    %v307 = vlog2.pop %v284
    %v308 = vmul.f32 %v307, 0.6931472
    %v309 = vlog2.pop %v285
    %v310 = vmul.f32 %v309, 0.6931472
    %v311 = vlog2.pop %v286
    %v312 = vmul.f32 %v311, 0.6931472
    %v313 = vlog2.pop %v287
    %v314 = vmul.f32 %v313, 0.6931472
    %v315 = vlog2.pop %v288
    %v316 = vmul.f32 %v315, 0.6931472
    %v317 = vlog2.pop %v289
    %v318 = vmul.f32 %v317, 0.6931472
    %v319 = vlog2.pop %v290
    %v320 = vmul.f32 %v319, 0.6931472
    %v321 = vlog2.pop %v291
    %v322 = vmul.f32 %v321, 0.6931472
    %v323 = vlog2.pop %v292
    %v324 = vmul.f32 %v323, 0.6931472
    %v325 = vsub.f32 %v197, %v294
    %v326 = vsub.f32 %v198, %v296
    %v327 = vsub.f32 %v199, %v298
    %v328 = vsub.f32 %v200, %v300
    %v329 = vsub.f32 %v201, %v302
    %v330 = vsub.f32 %v202, %v304
    %v331 = vsub.f32 %v203, %v306
    %v332 = vsub.f32 %v204, %v308
    %v333 = vsub.f32 %v205, %v310
    %v334 = vsub.f32 %v206, %v312
    %v335 = vsub.f32 %v207, %v314
    %v336 = vsub.f32 %v208, %v316
    %v337 = vsub.f32 %v209, %v318
    %v338 = vsub.f32 %v210, %v320
    %v339 = vsub.f32 %v211, %v322
    %v340 = vsub.f32 %v212, %v324
    %v341 = vsel %vm69, %v325, 0.0
    %v342 = vsel %vm70, %v326, 0.0
    %v343 = vsel %vm71, %v327, 0.0
    %v344 = vsel %vm72, %v328, 0.0
    %v345 = vsel %vm73, %v329, 0.0
    %v346 = vsel %vm74, %v330, 0.0
    %v347 = vsel %vm75, %v331, 0.0
    %v348 = vsel %vm76, %v332, 0.0
    %v349 = vsel %vm77, %v333, 0.0
    %v350 = vsel %vm78, %v334, 0.0
    %v351 = vsel %vm79, %v335, 0.0
    %v352 = vsel %vm80, %v336, 0.0
    %v353 = vsel %vm81, %v337, 0.0
    %v354 = vsel %vm82, %v338, 0.0
    %v355 = vsel %vm83, %v339, 0.0
    %v356 = vsel %vm84, %v340, 0.0
    %v357 = vld [vmem:[%s3] sm:$0xff]
    %v358 = vld [vmem:[%s3 + $0x8] sm:$0xff]
    %v359 = vld [vmem:[%s3 + $0x10] sm:$0xff]
    %v360 = vld [vmem:[%s3 + $0x18] sm:$0xff]
    %v361 = vld [vmem:[%s3 + $0x20] sm:$0xff]
    %v362 = vld [vmem:[%s3 + $0x28] sm:$0xff]
    %v363 = vld [vmem:[%s3 + $0x30] sm:$0xff]
    %v364 = vld [vmem:[%s3 + $0x38] sm:$0xff]
    %v365 = vld [vmem:[%s3 + $0x40] sm:$0xff]
    %v366 = vld [vmem:[%s3 + $0x48] sm:$0xff]
    %v367 = vld [vmem:[%s3 + $0x50] sm:$0xff]
    %v368 = vld [vmem:[%s3 + $0x58] sm:$0xff]
    %v369 = vld [vmem:[%s3 + $0x60] sm:$0xff]
    %v370 = vld [vmem:[%s3 + $0x68] sm:$0xff]
    %v371 = vld [vmem:[%s3 + $0x70] sm:$0xff]
    %v372 = vld [vmem:[%s3 + $0x78] sm:$0xff]
    %v373 = vmul.f32 %v357, %v357
    %v374 = vmul.f32 %v358, %v358
    %v375 = vmul.f32 %v359, %v359
    %v376 = vmul.f32 %v360, %v360
    %v377 = vmul.f32 %v361, %v361
    %v378 = vmul.f32 %v362, %v362
    %v379 = vmul.f32 %v363, %v363
    %v380 = vmul.f32 %v364, %v364
    %v381 = vmul.f32 %v365, %v365
    %v382 = vmul.f32 %v366, %v366
    %v383 = vmul.f32 %v367, %v367
    %v384 = vmul.f32 %v368, %v368
    %v385 = vmul.f32 %v369, %v369
    %v386 = vmul.f32 %v370, %v370
    %v387 = vmul.f32 %v371, %v371
    %v388 = vmul.f32 %v372, %v372
    %v389 = vld [vmem:[%s4] sm:$0xff]
    %v390 = vld [vmem:[%s4 + $0x8] sm:$0xff]
    %v391 = vld [vmem:[%s4 + $0x10] sm:$0xff]
    %v392 = vld [vmem:[%s4 + $0x18] sm:$0xff]
    %v393 = vld [vmem:[%s4 + $0x20] sm:$0xff]
    %v394 = vld [vmem:[%s4 + $0x28] sm:$0xff]
    %v395 = vld [vmem:[%s4 + $0x30] sm:$0xff]
    %v396 = vld [vmem:[%s4 + $0x38] sm:$0xff]
    %v397 = vld [vmem:[%s4 + $0x40] sm:$0xff]
    %v398 = vld [vmem:[%s4 + $0x48] sm:$0xff]
    %v399 = vld [vmem:[%s4 + $0x50] sm:$0xff]
    %v400 = vld [vmem:[%s4 + $0x58] sm:$0xff]
    %v401 = vld [vmem:[%s4 + $0x60] sm:$0xff]
    %v402 = vld [vmem:[%s4 + $0x68] sm:$0xff]
    %v403 = vld [vmem:[%s4 + $0x70] sm:$0xff]
    %v404 = vld [vmem:[%s4 + $0x78] sm:$0xff]
    %v405 = vmul.f32 %v389, %v389
    %v406 = vmul.f32 %v390, %v390
    %v407 = vmul.f32 %v391, %v391
    %v408 = vmul.f32 %v392, %v392
    %v409 = vmul.f32 %v393, %v393
    %v410 = vmul.f32 %v394, %v394
    %v411 = vmul.f32 %v395, %v395
    %v412 = vmul.f32 %v396, %v396
    %v413 = vmul.f32 %v397, %v397
    %v414 = vmul.f32 %v398, %v398
    %v415 = vmul.f32 %v399, %v399
    %v416 = vmul.f32 %v400, %v400
    %v417 = vmul.f32 %v401, %v401
    %v418 = vmul.f32 %v402, %v402
    %v419 = vmul.f32 %v403, %v403
    %v420 = vmul.f32 %v404, %v404
    %v421 = vadd.f32 %v373, %v405
    %v422 = vadd.f32 %v374, %v406
    %v423 = vadd.f32 %v375, %v407
    %v424 = vadd.f32 %v376, %v408
    %v425 = vadd.f32 %v377, %v409
    %v426 = vadd.f32 %v378, %v410
    %v427 = vadd.f32 %v379, %v411
    %v428 = vadd.f32 %v380, %v412
    %v429 = vadd.f32 %v381, %v413
    %v430 = vadd.f32 %v382, %v414
    %v431 = vadd.f32 %v383, %v415
    %v432 = vadd.f32 %v384, %v416
    %v433 = vadd.f32 %v385, %v417
    %v434 = vadd.f32 %v386, %v418
    %v435 = vadd.f32 %v387, %v419
    %v436 = vadd.f32 %v388, %v420
    %v437 = vld [vmem:[%s5] sm:$0xff]
    %v438 = vld [vmem:[%s5 + $0x8] sm:$0xff]
    %v439 = vld [vmem:[%s5 + $0x10] sm:$0xff]
    %v440 = vld [vmem:[%s5 + $0x18] sm:$0xff]
    %v441 = vld [vmem:[%s5 + $0x20] sm:$0xff]
    %v442 = vld [vmem:[%s5 + $0x28] sm:$0xff]
    %v443 = vld [vmem:[%s5 + $0x30] sm:$0xff]
    %v444 = vld [vmem:[%s5 + $0x38] sm:$0xff]
    %v445 = vld [vmem:[%s5 + $0x40] sm:$0xff]
    %v446 = vld [vmem:[%s5 + $0x48] sm:$0xff]
    %v447 = vld [vmem:[%s5 + $0x50] sm:$0xff]
    %v448 = vld [vmem:[%s5 + $0x58] sm:$0xff]
    %v449 = vld [vmem:[%s5 + $0x60] sm:$0xff]
    %v450 = vld [vmem:[%s5 + $0x68] sm:$0xff]
    %v451 = vld [vmem:[%s5 + $0x70] sm:$0xff]
    %v452 = vld [vmem:[%s5 + $0x78] sm:$0xff]
    %v453 = vmul.f32 %v437, %v437
    %v454 = vmul.f32 %v438, %v438
    %v455 = vmul.f32 %v439, %v439
    %v456 = vmul.f32 %v440, %v440
    %v457 = vmul.f32 %v441, %v441
    %v458 = vmul.f32 %v442, %v442
    %v459 = vmul.f32 %v443, %v443
    %v460 = vmul.f32 %v444, %v444
    %v461 = vmul.f32 %v445, %v445
    %v462 = vmul.f32 %v446, %v446
    %v463 = vmul.f32 %v447, %v447
    %v464 = vmul.f32 %v448, %v448
    %v465 = vmul.f32 %v449, %v449
    %v466 = vmul.f32 %v450, %v450
    %v467 = vmul.f32 %v451, %v451
    %v468 = vmul.f32 %v452, %v452
    %v469 = vadd.f32 %v421, %v453
    %v470 = vadd.f32 %v422, %v454
    %v471 = vadd.f32 %v423, %v455
    %v472 = vadd.f32 %v424, %v456
    %v473 = vadd.f32 %v425, %v457
    %v474 = vadd.f32 %v426, %v458
    %v475 = vadd.f32 %v427, %v459
    %v476 = vadd.f32 %v428, %v460
    %v477 = vadd.f32 %v429, %v461
    %v478 = vadd.f32 %v430, %v462
    %v479 = vadd.f32 %v431, %v463
    %v480 = vadd.f32 %v432, %v464
    %v481 = vadd.f32 %v433, %v465
    %v482 = vadd.f32 %v434, %v466
    %v483 = vadd.f32 %v435, %v467
    %v484 = vadd.f32 %v436, %v468
    %485 = vadd.xlane.f32.xlu0 %v469
    %v486 = vpop.xlane.xlu0 %485
    %487 = vadd.xlane.f32.xlu0 %v470
    %v488 = vpop.xlane.xlu0 %487
    %489 = vadd.xlane.f32.xlu0 %v471
    %v490 = vpop.xlane.xlu0 %489
    %491 = vadd.xlane.f32.xlu0 %v472
    %v492 = vpop.xlane.xlu0 %491
    %493 = vadd.xlane.f32.xlu0 %v473
    %v494 = vpop.xlane.xlu0 %493
    %495 = vadd.xlane.f32.xlu0 %v474
    %v496 = vpop.xlane.xlu0 %495
    %497 = vadd.xlane.f32.xlu0 %v475
    %v498 = vpop.xlane.xlu0 %497
    %499 = vadd.xlane.f32.xlu0 %v476
    %v500 = vpop.xlane.xlu0 %499
    %501 = vadd.xlane.f32.xlu0 %v477
    %v502 = vpop.xlane.xlu0 %501
    %503 = vadd.xlane.f32.xlu0 %v478
    %v504 = vpop.xlane.xlu0 %503
    %505 = vadd.xlane.f32.xlu0 %v479
    %v506 = vpop.xlane.xlu0 %505
    %507 = vadd.xlane.f32.xlu0 %v480
    %v508 = vpop.xlane.xlu0 %507
    %509 = vadd.xlane.f32.xlu0 %v481
    %v510 = vpop.xlane.xlu0 %509
    %511 = vadd.xlane.f32.xlu0 %v482
    %v512 = vpop.xlane.xlu0 %511
    %513 = vadd.xlane.f32.xlu0 %v483
    %v514 = vpop.xlane.xlu0 %513
    %515 = vadd.xlane.f32.xlu0 %v484
    %v516 = vpop.xlane.xlu0 %515
    %v517 = vsel %vm69, %v486, 0.0
    %v518 = vsel %vm70, %v488, 0.0
    %v519 = vsel %vm71, %v490, 0.0
    %v520 = vsel %vm72, %v492, 0.0
    %v521 = vsel %vm73, %v494, 0.0
    %v522 = vsel %vm74, %v496, 0.0
    %v523 = vsel %vm75, %v498, 0.0
    %v524 = vsel %vm76, %v500, 0.0
    %v525 = vsel %vm77, %v502, 0.0
    %v526 = vsel %vm78, %v504, 0.0
    %v527 = vsel %vm79, %v506, 0.0
    %v528 = vsel %vm80, %v508, 0.0
    %v529 = vsel %vm81, %v510, 0.0
    %v530 = vsel %vm82, %v512, 0.0
    %v531 = vsel %vm83, %v514, 0.0
    %v532 = vsel %vm84, %v516, 0.0
    %v533 = vld [vmem:[#allocation2] sm:$0x1]
    %v534 = vsub.f32 0.0, %v341
    %v535 = vsub.f32 0.0, %v342
    %v536 = vsub.f32 0.0, %v343
    %v537 = vsub.f32 0.0, %v344
    %v538 = vsub.f32 0.0, %v345
    %v539 = vsub.f32 0.0, %v346
    %v540 = vsub.f32 0.0, %v347
    %v541 = vsub.f32 0.0, %v348
    %v542 = vsub.f32 0.0, %v349
    %v543 = vsub.f32 0.0, %v350
    %v544 = vsub.f32 0.0, %v351
    %v545 = vsub.f32 0.0, %v352
    %v546 = vsub.f32 0.0, %v353
    %v547 = vsub.f32 0.0, %v354
    %v548 = vsub.f32 0.0, %v355
    %v549 = vsub.f32 0.0, %v356
    %v550 = vadd.f32 %v534, %v535
    %v551 = vadd.f32 %v550, %v536
    %v552 = vadd.f32 %v551, %v537
    %v553 = vadd.f32 %v552, %v538
    %v554 = vadd.f32 %v553, %v539
    %v555 = vadd.f32 %v554, %v540
    %v556 = vadd.f32 %v555, %v541
    %v557 = vadd.f32 %v556, %v542
    %v558 = vadd.f32 %v557, %v543
    %v559 = vadd.f32 %v558, %v544
    %v560 = vadd.f32 %v559, %v545
    %v561 = vadd.f32 %v560, %v546
    %v562 = vadd.f32 %v561, %v547
    %v563 = vadd.f32 %v562, %v548
    %v564 = vadd.f32 %v563, %v549
    %v565 = vrot.slane %v564, 4
    %v566 = vadd.f32 %v564, %v565
    %v567 = vrot.slane %v566, 2
    %v568 = vadd.f32 %v566, %v567
    %v569 = vrot.slane %v568, 1
    %v570 = vadd.f32 %v568, %v569
    %v571 = vadd.f32 %v533, %v570
    %vm572 = vcmask 0
    %573 = vst.msk [vmem:[#allocation2] sm:$0x1] %vm572, %v571
    %v574 = vld [vmem:[#allocation3] sm:$0x1]
    %v575 = vadd.f32 %v517, %v518
    %v576 = vadd.f32 %v575, %v519
    %v577 = vadd.f32 %v576, %v520
    %v578 = vadd.f32 %v577, %v521
    %v579 = vadd.f32 %v578, %v522
    %v580 = vadd.f32 %v579, %v523
    %v581 = vadd.f32 %v580, %v524
    %v582 = vadd.f32 %v581, %v525
    %v583 = vadd.f32 %v582, %v526
    %v584 = vadd.f32 %v583, %v527
    %v585 = vadd.f32 %v584, %v528
    %v586 = vadd.f32 %v585, %v529
    %v587 = vadd.f32 %v586, %v530
    %v588 = vadd.f32 %v587, %v531
    %v589 = vadd.f32 %v588, %v532
    %v590 = vrot.slane %v589, 4
    %v591 = vadd.f32 %v589, %v590
    %v592 = vrot.slane %v591, 2
    %v593 = vadd.f32 %v591, %v592
    %v594 = vrot.slane %v593, 1
    %v595 = vadd.f32 %v593, %v594
    %v596 = vadd.f32 %v574, %v595
    %597 = vst.msk [vmem:[#allocation3] sm:$0x1] %vm572, %v596
    // Predicated region
    $region30: #{lightgcn_forward.5} parent=1 // pred_check
      %p598 = pneg %p27
    $region31: #{lightgcn_forward.5} parent=1 // pred_check_branch
      %600 = sbr.rel (%p598) target = $region33
    $region32: #{lightgcn_forward.5} parent=1 // pred_region
      %v601 = vld [vmem:[#allocation2] sm:$0x1]
      %v602 = vmul.f32 %v601, 0.0078125
      %v603 = vld [vmem:[#allocation3] sm:$0x1]
      %v604 = vmul.f32 %v603, 3.90625e-07
      %605 = vst.msk [vmem:[#allocation6] sm:$0x1] %vm572, %v602
      %v606 = vadd.f32 %v602, %v604
      %607 = vst.msk [vmem:[#allocation4] sm:$0x1] %vm572, %v606
    $region33: #{lightgcn_forward.5} parent=1 // pred_fallthru
      _
    // Predicated region
    $region34: #{lightgcn_forward.5} parent=1 // pred_check
      _
    $region35: #{lightgcn_forward.5} parent=1 // pred_check_branch
      %609 = sbr.rel (0) target = $region37
    $region36: #{lightgcn_forward.5} parent=1 // pred_region
      %611 = vsyncadd [#allocation5], 0
      %s613 = sshll.u32 [#allocation4], 4
      %s614 = int_to_ptr.vmem [resolvable:$true] %s613
      %s615 = sshll.u32 %s6, 4
      %s616 = int_to_ptr.hbm [resolvable:$true] %s615
      %618 = dma.vmem_to_hbm [thread:$0]  %s614, 16, %s616, [#allocation5]
    $region37: #{lightgcn_forward.5} parent=1 // pred_fallthru
      _
    // Predicated region
    $region38: #{lightgcn_forward.5} parent=1 // pred_check
      _
    $region39: #{lightgcn_forward.5} parent=1 // pred_check_branch
      %620 = sbr.rel (0) target = $region41
    $region40: #{lightgcn_forward.5} parent=1 // pred_region
      %622 = vsyncadd [#allocation7], 0
      %s624 = sshll.u32 [#allocation6], 4
      %s625 = int_to_ptr.vmem [resolvable:$true] %s624
      %s626 = sshll.u32 %s7, 4
      %s627 = int_to_ptr.hbm [resolvable:$true] %s626
      %629 = dma.vmem_to_hbm [thread:$0]  %s625, 16, %s627, [#allocation7]
    $region41: #{lightgcn_forward.5} parent=1 // pred_fallthru
      _
    // Predicated region
    $region42: #{lightgcn_forward.5} parent=1 // pred_check
      _
    $region43: #{lightgcn_forward.5} parent=1 // pred_check_branch
      %631 = sbr.rel (0) target = $region45
    $region44: #{lightgcn_forward.5} parent=1 // pred_region
      %633 = dma.done [#allocation5], 16
    $region45: #{lightgcn_forward.5} parent=1 // pred_fallthru
      _
    // Predicated region
    $region46: #{lightgcn_forward.5} parent=1 // pred_check
      _
    $region47: #{lightgcn_forward.5} parent=1 // pred_check_branch
      %635 = sbr.rel (0) target = $region49
    $region48: #{lightgcn_forward.5} parent=1 // pred_region
      %637 = dma.done [#allocation7], 16
    $region49: #{lightgcn_forward.5} parent=1 // pred_fallthru
      _
    %638 = vsyncpa [#allocation5], 1
    %639 = vsyncpa [#allocation7], 1

// kernel: lightgcn_forward.4
$region0: #{lightgcn_forward.4}
  #allocation0 [shape = 'u32[]', space=smem, size = 0x4, offset = 0x4, fixed_abs, tag = 'smem constant byte address 0x4 - core index']
  #allocation1 [shape = 'u32[72,128]{1,0:T(1,128)}', space=vmem, size = 0x9000, scoped, tag = 'internal scratch']
  %s0 = inlined_call_operand.vmem [shape: bf16[256,512], index: 0, kind: input, shape index: {}]
  %s1 = inlined_call_operand.vmem [shape: bf16[512,128], index: 1, kind: input, shape index: {}]
  %s2 = inlined_call_operand.vmem [shape: bf16[256,128], index: 2, kind: input, shape index: {}]
  %s3 = inlined_call_operand.vmem [shape: f32[256,128], index: 3, kind: input, shape index: {}, may-alias: {3,6}]
  %s4 = inlined_call_operand.vmem [shape: f32[512,128], index: 4, kind: input, shape index: {}, may-alias: {4,8}]
  %s5 = inlined_call_operand.hbm [shape: bf16[256,128], index: 5, kind: output, shape index: {0}]
  %s6 = inlined_call_operand.vmem [shape: f32[256,128], index: 6, kind: output, shape index: {1}, may-alias: {3,6}]
  %s7 = inlined_call_operand.hbm [shape: bf16[512,128], index: 7, kind: output, shape index: {2}]
  %s8 = inlined_call_operand.vmem [shape: f32[512,128], index: 8, kind: output, shape index: {3}, may-alias: {4,8}]
  %9 = xla_tuple %s5, %s6, %s7, %s8
  %s10 = sld [smem:[#allocation0]]
  $region78: #{lightgcn_forward.4} parent=0
    _
  %s12 = ssub.s32 1, %s10
  %s13 = scalar_select 0, %s12, %s10
  $region1: #{lightgcn_forward.4} parent=0
    #allocation2 [shape = 'u8[65536]{0}', space=vmem, size = 0x10000, scoped, tag = 'output window, operand 0, single buffered']
    #allocation3 [shape = 's32[1]{0}', space=sflag, size = 0x4, scoped, tag = 'scoped memory for lightgcn_forward.4']
    #allocation4 [shape = 'u8[131072]{0}', space=vmem, size = 0x20000, scoped, tag = 'output window, operand 2, single buffered']
    #allocation5 [shape = 's32[1]{0}', space=sflag, size = 0x4, scoped, tag = 'scoped memory for lightgcn_forward.4']
    %14 = vsyncpa [#allocation3], 0
    %15 = vsyncpa [#allocation5], 0
    // Predicated region
    $region2: #{lightgcn_forward.4} parent=1 // pred_check
      _
    $region3: #{lightgcn_forward.4} parent=1 // pred_check_branch
      %17 = sbr.rel (0) target = $region5
    $region4: #{lightgcn_forward.4} parent=1 // pred_region
      _
    $region5: #{lightgcn_forward.4} parent=1 // pred_fallthru
      _
    // Predicated region
    $region6: #{lightgcn_forward.4} parent=1 // pred_check
      _
    $region7: #{lightgcn_forward.4} parent=1 // pred_check_branch
      %19 = sbr.rel (0) target = $region9
    $region8: #{lightgcn_forward.4} parent=1 // pred_region
      _
    $region9: #{lightgcn_forward.4} parent=1 // pred_fallthru
      _
    // Predicated region
    $region10: #{lightgcn_forward.4} parent=1 // pred_check
      _
    $region11: #{lightgcn_forward.4} parent=1 // pred_check_branch
      %21 = sbr.rel (0) target = $region13
    $region12: #{lightgcn_forward.4} parent=1 // pred_region
      _
    $region13: #{lightgcn_forward.4} parent=1 // pred_fallthru
      _
    // Predicated region
    $region14: #{lightgcn_forward.4} parent=1 // pred_check
      _
    $region15: #{lightgcn_forward.4} parent=1 // pred_check_branch
      %23 = sbr.rel (0) target = $region17
    $region16: #{lightgcn_forward.4} parent=1 // pred_region
      _
    $region17: #{lightgcn_forward.4} parent=1 // pred_fallthru
      _
    // Predicated region
    $region18: #{lightgcn_forward.4} parent=1 // pred_check
      _
    $region19: #{lightgcn_forward.4} parent=1 // pred_check_branch
      %25 = sbr.rel (0) target = $region21
    $region20: #{lightgcn_forward.4} parent=1 // pred_region
      _
    $region21: #{lightgcn_forward.4} parent=1 // pred_fallthru
      _
    %v26 = vld [vmem:[%s0] sm:$0xff]
    %v27 = vld [vmem:[%s0 + $0x8] sm:$0xff]
    %v28 = vld [vmem:[%s0 + $0x10] sm:$0xff]
    %v29 = vld [vmem:[%s0 + $0x18] sm:$0xff]
    %v30 = vld [vmem:[%s0 + $0x20] sm:$0xff]
    %v31 = vld [vmem:[%s0 + $0x28] sm:$0xff]
    %v32 = vld [vmem:[%s0 + $0x30] sm:$0xff]
    %v33 = vld [vmem:[%s0 + $0x38] sm:$0xff]
    %v34 = vld [vmem:[%s0 + $0x40] sm:$0xff]
    %v35 = vld [vmem:[%s0 + $0x48] sm:$0xff]
    %v36 = vld [vmem:[%s0 + $0x50] sm:$0xff]
    %v37 = vld [vmem:[%s0 + $0x58] sm:$0xff]
    %v38 = vld [vmem:[%s0 + $0x60] sm:$0xff]
    %v39 = vld [vmem:[%s0 + $0x68] sm:$0xff]
    %v40 = vld [vmem:[%s0 + $0x70] sm:$0xff]
    %v41 = vld [vmem:[%s0 + $0x78] sm:$0xff]
    %v42 = vld [vmem:[%s0 + $0x80] sm:$0xff]
    %v43 = vld [vmem:[%s0 + $0x88] sm:$0xff]
    %v44 = vld [vmem:[%s0 + $0x90] sm:$0xff]
    %v45 = vld [vmem:[%s0 + $0x98] sm:$0xff]
    %v46 = vld [vmem:[%s0 + $0xa0] sm:$0xff]
    %v47 = vld [vmem:[%s0 + $0xa8] sm:$0xff]
    %v48 = vld [vmem:[%s0 + $0xb0] sm:$0xff]
    %v49 = vld [vmem:[%s0 + $0xb8] sm:$0xff]
    %v50 = vld [vmem:[%s0 + $0xc0] sm:$0xff]
    %v51 = vld [vmem:[%s0 + $0xc8] sm:$0xff]
    %v52 = vld [vmem:[%s0 + $0xd0] sm:$0xff]
    %v53 = vld [vmem:[%s0 + $0xd8] sm:$0xff]
    %v54 = vld [vmem:[%s0 + $0xe0] sm:$0xff]
    %v55 = vld [vmem:[%s0 + $0xe8] sm:$0xff]
    %v56 = vld [vmem:[%s0 + $0xf0] sm:$0xff]
    %v57 = vld [vmem:[%s0 + $0xf8] sm:$0xff]
    %v58 = vld [vmem:[%s0 + $0x100] sm:$0xff]
    %v59 = vld [vmem:[%s0 + $0x108] sm:$0xff]
    %v60 = vld [vmem:[%s0 + $0x110] sm:$0xff]
    %v61 = vld [vmem:[%s0 + $0x118] sm:$0xff]
    %v62 = vld [vmem:[%s0 + $0x120] sm:$0xff]
    %v63 = vld [vmem:[%s0 + $0x128] sm:$0xff]
    %v64 = vld [vmem:[%s0 + $0x130] sm:$0xff]
    %v65 = vld [vmem:[%s0 + $0x138] sm:$0xff]
    %v66 = vld [vmem:[%s0 + $0x140] sm:$0xff]
    %v67 = vld [vmem:[%s0 + $0x148] sm:$0xff]
    %v68 = vld [vmem:[%s0 + $0x150] sm:$0xff]
    %v69 = vld [vmem:[%s0 + $0x158] sm:$0xff]
    %v70 = vld [vmem:[%s0 + $0x160] sm:$0xff]
    %v71 = vld [vmem:[%s0 + $0x168] sm:$0xff]
    %v72 = vld [vmem:[%s0 + $0x170] sm:$0xff]
    %v73 = vld [vmem:[%s0 + $0x178] sm:$0xff]
    %v74 = vld [vmem:[%s0 + $0x180] sm:$0xff]
    %v75 = vld [vmem:[%s0 + $0x188] sm:$0xff]
    %v76 = vld [vmem:[%s0 + $0x190] sm:$0xff]
    %v77 = vld [vmem:[%s0 + $0x198] sm:$0xff]
    %v78 = vld [vmem:[%s0 + $0x1a0] sm:$0xff]
    %v79 = vld [vmem:[%s0 + $0x1a8] sm:$0xff]
    %v80 = vld [vmem:[%s0 + $0x1b0] sm:$0xff]
    %v81 = vld [vmem:[%s0 + $0x1b8] sm:$0xff]
    %v82 = vld [vmem:[%s0 + $0x1c0] sm:$0xff]
    %v83 = vld [vmem:[%s0 + $0x1c8] sm:$0xff]
    %v84 = vld [vmem:[%s0 + $0x1d0] sm:$0xff]
    %v85 = vld [vmem:[%s0 + $0x1d8] sm:$0xff]
    %v86 = vld [vmem:[%s0 + $0x1e0] sm:$0xff]
    %v87 = vld [vmem:[%s0 + $0x1e8] sm:$0xff]
    %v88 = vld [vmem:[%s0 + $0x1f0] sm:$0xff]
    %v89 = vld [vmem:[%s0 + $0x1f8] sm:$0xff]
    %s90 = smul.u32 0, 512
    %s91 = sshra.s32 %s90, 3
    %s92 = sand.u32 %s90, 7
    %s93 = smul.addr %s91, 4
    %s94 = scalar_lea.vmem %s1, %s93
    %v95 = vld [vmem:[%s94] sm:$0xf]
    %v96 = vld [vmem:[%s94 + $0x4] sm:$0xf]
    %v97 = vld [vmem:[%s94 + $0x8] sm:$0xf]
    %v98 = vld [vmem:[%s94 + $0xc] sm:$0xf]
    %v99 = vld [vmem:[%s94 + $0x10] sm:$0xf]
    %v100 = vld [vmem:[%s94 + $0x14] sm:$0xf]
    %v101 = vld [vmem:[%s94 + $0x18] sm:$0xf]
    %v102 = vld [vmem:[%s94 + $0x1c] sm:$0xf]
    %v103 = vld [vmem:[%s94 + $0x20] sm:$0xf]
    %v104 = vld [vmem:[%s94 + $0x24] sm:$0xf]
    %v105 = vld [vmem:[%s94 + $0x28] sm:$0xf]
    %v106 = vld [vmem:[%s94 + $0x2c] sm:$0xf]
    %v107 = vld [vmem:[%s94 + $0x30] sm:$0xf]
    %v108 = vld [vmem:[%s94 + $0x34] sm:$0xf]
    %v109 = vld [vmem:[%s94 + $0x38] sm:$0xf]
    %v110 = vld [vmem:[%s94 + $0x3c] sm:$0xf]
    %v111 = vld [vmem:[%s94 + $0x40] sm:$0xf]
    %v112 = vld [vmem:[%s94 + $0x44] sm:$0xf]
    %v113 = vld [vmem:[%s94 + $0x48] sm:$0xf]
    %v114 = vld [vmem:[%s94 + $0x4c] sm:$0xf]
    %v115 = vld [vmem:[%s94 + $0x50] sm:$0xf]
    %v116 = vld [vmem:[%s94 + $0x54] sm:$0xf]
    %v117 = vld [vmem:[%s94 + $0x58] sm:$0xf]
    %v118 = vld [vmem:[%s94 + $0x5c] sm:$0xf]
    %v119 = vld [vmem:[%s94 + $0x60] sm:$0xf]
    %v120 = vld [vmem:[%s94 + $0x64] sm:$0xf]
    %v121 = vld [vmem:[%s94 + $0x68] sm:$0xf]
    %v122 = vld [vmem:[%s94 + $0x6c] sm:$0xf]
    %v123 = vld [vmem:[%s94 + $0x70] sm:$0xf]
    %v124 = vld [vmem:[%s94 + $0x74] sm:$0xf]
    %v125 = vld [vmem:[%s94 + $0x78] sm:$0xf]
    %v126 = vld [vmem:[%s94 + $0x7c] sm:$0xf]
    %v127 = vld [vmem:[%s94 + $0x80] sm:$0xf]
    %v128 = vld [vmem:[%s94 + $0x84] sm:$0xf]
    %v129 = vld [vmem:[%s94 + $0x88] sm:$0xf]
    %v130 = vld [vmem:[%s94 + $0x8c] sm:$0xf]
    %v131 = vld [vmem:[%s94 + $0x90] sm:$0xf]
    %v132 = vld [vmem:[%s94 + $0x94] sm:$0xf]
    %v133 = vld [vmem:[%s94 + $0x98] sm:$0xf]
    %v134 = vld [vmem:[%s94 + $0x9c] sm:$0xf]
    %v135 = vld [vmem:[%s94 + $0xa0] sm:$0xf]
    %v136 = vld [vmem:[%s94 + $0xa4] sm:$0xf]
    %v137 = vld [vmem:[%s94 + $0xa8] sm:$0xf]
    %v138 = vld [vmem:[%s94 + $0xac] sm:$0xf]
    %v139 = vld [vmem:[%s94 + $0xb0] sm:$0xf]
    %v140 = vld [vmem:[%s94 + $0xb4] sm:$0xf]
    %v141 = vld [vmem:[%s94 + $0xb8] sm:$0xf]
    %v142 = vld [vmem:[%s94 + $0xbc] sm:$0xf]
    %v143 = vld [vmem:[%s94 + $0xc0] sm:$0xf]
    %v144 = vld [vmem:[%s94 + $0xc4] sm:$0xf]
    %v145 = vld [vmem:[%s94 + $0xc8] sm:$0xf]
    %v146 = vld [vmem:[%s94 + $0xcc] sm:$0xf]
    %v147 = vld [vmem:[%s94 + $0xd0] sm:$0xf]
    %v148 = vld [vmem:[%s94 + $0xd4] sm:$0xf]
    %v149 = vld [vmem:[%s94 + $0xd8] sm:$0xf]
    %v150 = vld [vmem:[%s94 + $0xdc] sm:$0xf]
    %v151 = vld [vmem:[%s94 + $0xe0] sm:$0xf]
    %v152 = vld [vmem:[%s94 + $0xe4] sm:$0xf]
    %v153 = vld [vmem:[%s94 + $0xe8] sm:$0xf]
    %v154 = vld [vmem:[%s94 + $0xec] sm:$0xf]
    %v155 = vld [vmem:[%s94 + $0xf0] sm:$0xf]
    %v156 = vld [vmem:[%s94 + $0xf4] sm:$0xf]
    %v157 = vld [vmem:[%s94 + $0xf8] sm:$0xf]
    %v158 = vld [vmem:[%s94 + $0xfc] sm:$0xf]
    %v223 = vunpack.c.l.b16 %v26
    %v224 = vunpack.c.h.b16 %v26
    %v225 = vunpack.c.l.b16 %v27
    %v226 = vunpack.c.h.b16 %v27
    %v227 = vunpack.c.l.b16 %v28
    %v228 = vunpack.c.h.b16 %v28
    %v229 = vunpack.c.l.b16 %v29
    %v230 = vunpack.c.h.b16 %v29
    %v231 = vunpack.c.l.b16 %v30
    %v232 = vunpack.c.h.b16 %v30
    %v233 = vunpack.c.l.b16 %v31
    %v234 = vunpack.c.h.b16 %v31
    %v235 = vunpack.c.l.b16 %v32
    %v236 = vunpack.c.h.b16 %v32
    %v237 = vunpack.c.l.b16 %v33
    %v238 = vunpack.c.h.b16 %v33
    %v239 = vunpack.c.l.b16 %v34
    %v240 = vunpack.c.h.b16 %v34
    %v241 = vunpack.c.l.b16 %v35
    %v242 = vunpack.c.h.b16 %v35
    %v243 = vunpack.c.l.b16 %v36
    %v244 = vunpack.c.h.b16 %v36
    %v245 = vunpack.c.l.b16 %v37
    %v246 = vunpack.c.h.b16 %v37
    %v247 = vunpack.c.l.b16 %v38
    %v248 = vunpack.c.h.b16 %v38
    %v249 = vunpack.c.l.b16 %v39
    %v250 = vunpack.c.h.b16 %v39
    %v251 = vunpack.c.l.b16 %v40
    %v252 = vunpack.c.h.b16 %v40
    %v253 = vunpack.c.l.b16 %v41
    %v254 = vunpack.c.h.b16 %v41
    %v255 = vunpack.c.l.b16 %v42
    %v256 = vunpack.c.h.b16 %v42
    %v257 = vunpack.c.l.b16 %v43
    %v258 = vunpack.c.h.b16 %v43
    %v259 = vunpack.c.l.b16 %v44
    %v260 = vunpack.c.h.b16 %v44
    %v261 = vunpack.c.l.b16 %v45
    %v262 = vunpack.c.h.b16 %v45
    %v263 = vunpack.c.l.b16 %v46
    %v264 = vunpack.c.h.b16 %v46
    %v265 = vunpack.c.l.b16 %v47
    %v266 = vunpack.c.h.b16 %v47
    %v267 = vunpack.c.l.b16 %v48
    %v268 = vunpack.c.h.b16 %v48
    %v269 = vunpack.c.l.b16 %v49
    %v270 = vunpack.c.h.b16 %v49
    %v271 = vunpack.c.l.b16 %v50
    %v272 = vunpack.c.h.b16 %v50
    %v273 = vunpack.c.l.b16 %v51
    %v274 = vunpack.c.h.b16 %v51
    %v275 = vunpack.c.l.b16 %v52
    %v276 = vunpack.c.h.b16 %v52
    %v277 = vunpack.c.l.b16 %v53
    %v278 = vunpack.c.h.b16 %v53
    %v279 = vunpack.c.l.b16 %v54
    %v280 = vunpack.c.h.b16 %v54
    %v281 = vunpack.c.l.b16 %v55
    %v282 = vunpack.c.h.b16 %v55
    %v283 = vunpack.c.l.b16 %v56
    %v284 = vunpack.c.h.b16 %v56
    %v285 = vunpack.c.l.b16 %v57
    %v286 = vunpack.c.h.b16 %v57
    %v287 = vunpack.c.l.b16 %v58
    %v288 = vunpack.c.h.b16 %v58
    %v289 = vunpack.c.l.b16 %v59
    %v290 = vunpack.c.h.b16 %v59
    %v291 = vunpack.c.l.b16 %v60
    %v292 = vunpack.c.h.b16 %v60
    %v293 = vunpack.c.l.b16 %v61
    %v294 = vunpack.c.h.b16 %v61
    %v295 = vunpack.c.l.b16 %v62
    %v296 = vunpack.c.h.b16 %v62
    %v297 = vunpack.c.l.b16 %v63
    %v298 = vunpack.c.h.b16 %v63
    %v299 = vunpack.c.l.b16 %v64
    %v300 = vunpack.c.h.b16 %v64
    %v301 = vunpack.c.l.b16 %v65
    %v302 = vunpack.c.h.b16 %v65
    %v303 = vunpack.c.l.b16 %v66
    %v304 = vunpack.c.h.b16 %v66
    %v305 = vunpack.c.l.b16 %v67
    %v306 = vunpack.c.h.b16 %v67
    %v307 = vunpack.c.l.b16 %v68
    %v308 = vunpack.c.h.b16 %v68
    %v309 = vunpack.c.l.b16 %v69
    %v310 = vunpack.c.h.b16 %v69
    %v311 = vunpack.c.l.b16 %v70
    %v312 = vunpack.c.h.b16 %v70
    %v313 = vunpack.c.l.b16 %v71
    %v314 = vunpack.c.h.b16 %v71
    %v315 = vunpack.c.l.b16 %v72
    %v316 = vunpack.c.h.b16 %v72
    %v317 = vunpack.c.l.b16 %v73
    %v318 = vunpack.c.h.b16 %v73
    %v319 = vunpack.c.l.b16 %v74
    %v320 = vunpack.c.h.b16 %v74
    %v321 = vunpack.c.l.b16 %v75
    %v322 = vunpack.c.h.b16 %v75
    %v323 = vunpack.c.l.b16 %v76
    %v324 = vunpack.c.h.b16 %v76
    %v325 = vunpack.c.l.b16 %v77
    %v326 = vunpack.c.h.b16 %v77
    %v327 = vunpack.c.l.b16 %v78
    %v328 = vunpack.c.h.b16 %v78
    %v329 = vunpack.c.l.b16 %v79
    %v330 = vunpack.c.h.b16 %v79
    %v331 = vunpack.c.l.b16 %v80
    %v332 = vunpack.c.h.b16 %v80
    %v333 = vunpack.c.l.b16 %v81
    %v334 = vunpack.c.h.b16 %v81
    %v335 = vunpack.c.l.b16 %v82
    %v336 = vunpack.c.h.b16 %v82
    %v337 = vunpack.c.l.b16 %v83
    %v338 = vunpack.c.h.b16 %v83
    %v339 = vunpack.c.l.b16 %v84
    %v340 = vunpack.c.h.b16 %v84
    %v341 = vunpack.c.l.b16 %v85
    %v342 = vunpack.c.h.b16 %v85
    %v343 = vunpack.c.l.b16 %v86
    %v344 = vunpack.c.h.b16 %v86
    %v345 = vunpack.c.l.b16 %v87
    %v346 = vunpack.c.h.b16 %v87
    %v347 = vunpack.c.l.b16 %v88
    %v348 = vunpack.c.h.b16 %v88
    %v349 = vunpack.c.l.b16 %v89
    %v350 = vunpack.c.h.b16 %v89
    %v351 = vpack.c.b16 %v227, %v223
    %v352 = vpack.c.b16 %v228, %v224
    %v353 = vpack.c.b16 %v229, %v225
    %v354 = vpack.c.b16 %v230, %v226
    %v355 = vpack.c.b16 %v235, %v231
    %v356 = vpack.c.b16 %v236, %v232
    %v357 = vpack.c.b16 %v237, %v233
    %v358 = vpack.c.b16 %v238, %v234
    %v359 = vpack.c.b16 %v243, %v239
    %v360 = vpack.c.b16 %v244, %v240
    %v361 = vpack.c.b16 %v245, %v241
    %v362 = vpack.c.b16 %v246, %v242
    %v363 = vpack.c.b16 %v251, %v247
    %v364 = vpack.c.b16 %v252, %v248
    %v365 = vpack.c.b16 %v253, %v249
    %v366 = vpack.c.b16 %v254, %v250
    %v367 = vpack.c.b16 %v259, %v255
    %v368 = vpack.c.b16 %v260, %v256
    %v369 = vpack.c.b16 %v261, %v257
    %v370 = vpack.c.b16 %v262, %v258
    %v371 = vpack.c.b16 %v267, %v263
    %v372 = vpack.c.b16 %v268, %v264
    %v373 = vpack.c.b16 %v269, %v265
    %v374 = vpack.c.b16 %v270, %v266
    %v375 = vpack.c.b16 %v275, %v271
    %v376 = vpack.c.b16 %v276, %v272
    %v377 = vpack.c.b16 %v277, %v273
    %v378 = vpack.c.b16 %v278, %v274
    %v379 = vpack.c.b16 %v283, %v279
    %v380 = vpack.c.b16 %v284, %v280
    %v381 = vpack.c.b16 %v285, %v281
    %v382 = vpack.c.b16 %v286, %v282
    %v383 = vpack.c.b16 %v291, %v287
    %v384 = vpack.c.b16 %v292, %v288
    %v385 = vpack.c.b16 %v293, %v289
    %v386 = vpack.c.b16 %v294, %v290
    %v387 = vpack.c.b16 %v299, %v295
    %v388 = vpack.c.b16 %v300, %v296
    %v389 = vpack.c.b16 %v301, %v297
    %v390 = vpack.c.b16 %v302, %v298
    %v391 = vpack.c.b16 %v307, %v303
    %v392 = vpack.c.b16 %v308, %v304
    %v393 = vpack.c.b16 %v309, %v305
    %v394 = vpack.c.b16 %v310, %v306
    %v395 = vpack.c.b16 %v315, %v311
    %v396 = vpack.c.b16 %v316, %v312
    %v397 = vpack.c.b16 %v317, %v313
    %v398 = vpack.c.b16 %v318, %v314
    %v399 = vpack.c.b16 %v323, %v319
    %v400 = vpack.c.b16 %v324, %v320
    %v401 = vpack.c.b16 %v325, %v321
    %v402 = vpack.c.b16 %v326, %v322
    %v403 = vpack.c.b16 %v331, %v327
    %v404 = vpack.c.b16 %v332, %v328
    %v405 = vpack.c.b16 %v333, %v329
    %v406 = vpack.c.b16 %v334, %v330
    %v407 = vpack.c.b16 %v339, %v335
    %v408 = vpack.c.b16 %v340, %v336
    %v409 = vpack.c.b16 %v341, %v337
    %v410 = vpack.c.b16 %v342, %v338
    %v411 = vpack.c.b16 %v347, %v343
    %v412 = vpack.c.b16 %v348, %v344
    %v413 = vpack.c.b16 %v349, %v345
    %v414 = vpack.c.b16 %v350, %v346
    %v543 = vunpack.c.l.b16 %v95
    %v544 = vunpack.c.l.b16 %v96
    %v545 = vunpack.c.l.b16 %v97
    %v546 = vunpack.c.l.b16 %v98
    %v547 = vunpack.c.l.b16 %v99
    %v548 = vunpack.c.l.b16 %v100
    %v549 = vunpack.c.l.b16 %v101
    %v550 = vunpack.c.l.b16 %v102
    %v551 = vunpack.c.l.b16 %v103
    %v552 = vunpack.c.l.b16 %v104
    %v553 = vunpack.c.l.b16 %v105
    %v554 = vunpack.c.l.b16 %v106
    %v555 = vunpack.c.l.b16 %v107
    %v556 = vunpack.c.l.b16 %v108
    %v557 = vunpack.c.l.b16 %v109
    %v558 = vunpack.c.l.b16 %v110
    %v559 = vunpack.c.l.b16 %v111
    %v560 = vunpack.c.l.b16 %v112
    %v561 = vunpack.c.l.b16 %v113
    %v562 = vunpack.c.l.b16 %v114
    %v563 = vunpack.c.l.b16 %v115
    %v564 = vunpack.c.l.b16 %v116
    %v565 = vunpack.c.l.b16 %v117
    %v566 = vunpack.c.l.b16 %v118
    %v567 = vunpack.c.l.b16 %v119
    %v568 = vunpack.c.l.b16 %v120
    %v569 = vunpack.c.l.b16 %v121
    %v570 = vunpack.c.l.b16 %v122
    %v571 = vunpack.c.l.b16 %v123
    %v572 = vunpack.c.l.b16 %v124
    %v573 = vunpack.c.l.b16 %v125
    %v574 = vunpack.c.l.b16 %v126
    %v575 = vunpack.c.l.b16 %v127
    %v576 = vunpack.c.l.b16 %v128
    %v577 = vunpack.c.l.b16 %v129
    %v578 = vunpack.c.l.b16 %v130
    %v579 = vunpack.c.l.b16 %v131
    %v580 = vunpack.c.l.b16 %v132
    %v581 = vunpack.c.l.b16 %v133
    %v582 = vunpack.c.l.b16 %v134
    %v583 = vunpack.c.l.b16 %v135
    %v584 = vunpack.c.l.b16 %v136
    %v585 = vunpack.c.l.b16 %v137
    %v586 = vunpack.c.l.b16 %v138
    %v587 = vunpack.c.l.b16 %v139
    %v588 = vunpack.c.l.b16 %v140
    %v589 = vunpack.c.l.b16 %v141
    %v590 = vunpack.c.l.b16 %v142
    %v591 = vunpack.c.l.b16 %v143
    %v592 = vunpack.c.l.b16 %v144
    %v593 = vunpack.c.l.b16 %v145
    %v594 = vunpack.c.l.b16 %v146
    %v595 = vunpack.c.l.b16 %v147
    %v596 = vunpack.c.l.b16 %v148
    %v597 = vunpack.c.l.b16 %v149
    %v598 = vunpack.c.l.b16 %v150
    %v599 = vunpack.c.l.b16 %v151
    %v600 = vunpack.c.l.b16 %v152
    %v601 = vunpack.c.l.b16 %v153
    %v602 = vunpack.c.l.b16 %v154
    %v603 = vunpack.c.l.b16 %v155
    %v604 = vunpack.c.l.b16 %v156
    %v605 = vunpack.c.l.b16 %v157
    %v606 = vunpack.c.l.b16 %v158
    %v607 = vpack.c.b16 %v544, %v543
    %v608 = vpack.c.b16 %v546, %v545
    %v609 = vpack.c.b16 %v548, %v547
    %v610 = vpack.c.b16 %v550, %v549
    %v611 = vpack.c.b16 %v552, %v551
    %v612 = vpack.c.b16 %v554, %v553
    %v613 = vpack.c.b16 %v556, %v555
    %v614 = vpack.c.b16 %v558, %v557
    %v615 = vpack.c.b16 %v560, %v559
    %v616 = vpack.c.b16 %v562, %v561
    %v617 = vpack.c.b16 %v564, %v563
    %v618 = vpack.c.b16 %v566, %v565
    %v619 = vpack.c.b16 %v568, %v567
    %v620 = vpack.c.b16 %v570, %v569
    %v621 = vpack.c.b16 %v572, %v571
    %v622 = vpack.c.b16 %v574, %v573
    %v623 = vpack.c.b16 %v576, %v575
    %v624 = vpack.c.b16 %v578, %v577
    %v625 = vpack.c.b16 %v580, %v579
    %v626 = vpack.c.b16 %v582, %v581
    %v627 = vpack.c.b16 %v584, %v583
    %v628 = vpack.c.b16 %v586, %v585
    %v629 = vpack.c.b16 %v588, %v587
    %v630 = vpack.c.b16 %v590, %v589
    %v631 = vpack.c.b16 %v592, %v591
    %v632 = vpack.c.b16 %v594, %v593
    %v633 = vpack.c.b16 %v596, %v595
    %v634 = vpack.c.b16 %v598, %v597
    %v635 = vpack.c.b16 %v600, %v599
    %v636 = vpack.c.b16 %v602, %v601
    %v637 = vpack.c.b16 %v604, %v603
    %v638 = vpack.c.b16 %v606, %v605
    %671 = vmatpush.bf16.msra.mxu0 %v614
    %672 = vmatpush.bf16.msra.mxu0 %v613
    %673 = vmatpush.bf16.msra.mxu0 %v612
    %674 = vmatpush.bf16.msra.mxu0 %v611
    %675 = vmatpush.bf16.msra.mxu0 %v610
    %676 = vmatpush.bf16.msra.mxu0 %v609
    %677 = vmatpush.bf16.msra.mxu0 %v608
    %678 = vmatpush.bf16.msra.mxu0 %v607
    %679 = vmatmul.bf16.gmra.mxu0 %v351
    %v680 = vpop.f32.mrf.mxu0
    %v681 = vadd.f32 0.0, %v680
    %v682 = vpop.f32.mrf.mxu0
    %v683 = vadd.f32 0.0, %v682
    %684 = vmatmul.bf16.gmra.mxu0 %v355
    %v685 = vpop.f32.mrf.mxu0
    %v686 = vadd.f32 0.0, %v685
    %v687 = vpop.f32.mrf.mxu0
    %v688 = vadd.f32 0.0, %v687
    %689 = vmatmul.bf16.gmra.mxu0 %v359
    %v690 = vpop.f32.mrf.mxu0
    %v691 = vadd.f32 0.0, %v690
    %v692 = vpop.f32.mrf.mxu0
    %v693 = vadd.f32 0.0, %v692
    %694 = vmatmul.bf16.gmra.mxu0 %v363
    %v695 = vpop.f32.mrf.mxu0
    %v696 = vadd.f32 0.0, %v695
    %v697 = vpop.f32.mrf.mxu0
    %v698 = vadd.f32 0.0, %v697
    %699 = vmatmul.bf16.gmra.mxu0 %v367
    %v700 = vpop.f32.mrf.mxu0
    %v701 = vadd.f32 0.0, %v700
    %v702 = vpop.f32.mrf.mxu0
    %v703 = vadd.f32 0.0, %v702
    %704 = vmatmul.bf16.gmra.mxu0 %v371
    %v705 = vpop.f32.mrf.mxu0
    %v706 = vadd.f32 0.0, %v705
    %v707 = vpop.f32.mrf.mxu0
    %v708 = vadd.f32 0.0, %v707
    %709 = vmatmul.bf16.gmra.mxu0 %v375
    %v710 = vpop.f32.mrf.mxu0
    %v711 = vadd.f32 0.0, %v710
    %v712 = vpop.f32.mrf.mxu0
    %v713 = vadd.f32 0.0, %v712
    %714 = vmatmul.bf16.gmra.mxu0 %v379
    %v715 = vpop.f32.mrf.mxu0
    %v716 = vadd.f32 0.0, %v715
    %v717 = vpop.f32.mrf.mxu0
    %v718 = vadd.f32 0.0, %v717
    %719 = vmatmul.bf16.gmra.mxu0 %v383
    %v720 = vpop.f32.mrf.mxu0
    %v721 = vadd.f32 0.0, %v720
    %v722 = vpop.f32.mrf.mxu0
    %v723 = vadd.f32 0.0, %v722
    %724 = vmatmul.bf16.gmra.mxu0 %v387
    %v725 = vpop.f32.mrf.mxu0
    %v726 = vadd.f32 0.0, %v725
    %v727 = vpop.f32.mrf.mxu0
    %v728 = vadd.f32 0.0, %v727
    %729 = vmatmul.bf16.gmra.mxu0 %v391
    %v730 = vpop.f32.mrf.mxu0
    %v731 = vadd.f32 0.0, %v730
    %v732 = vpop.f32.mrf.mxu0
    %v733 = vadd.f32 0.0, %v732
    %734 = vmatmul.bf16.gmra.mxu0 %v395
    %v735 = vpop.f32.mrf.mxu0
    %v736 = vadd.f32 0.0, %v735
    %v737 = vpop.f32.mrf.mxu0
    %v738 = vadd.f32 0.0, %v737
    %739 = vmatmul.bf16.gmra.mxu0 %v399
    %v740 = vpop.f32.mrf.mxu0
    %v741 = vadd.f32 0.0, %v740
    %v742 = vpop.f32.mrf.mxu0
    %v743 = vadd.f32 0.0, %v742
    %744 = vmatmul.bf16.gmra.mxu0 %v403
    %v745 = vpop.f32.mrf.mxu0
    %v746 = vadd.f32 0.0, %v745
    %v747 = vpop.f32.mrf.mxu0
    %v748 = vadd.f32 0.0, %v747
    %749 = vmatmul.bf16.gmra.mxu0 %v407
    %v750 = vpop.f32.mrf.mxu0
    %v751 = vadd.f32 0.0, %v750
    %v752 = vpop.f32.mrf.mxu0
    %v753 = vadd.f32 0.0, %v752
    %754 = vmatmul.bf16.gmra.mxu0 %v411
    %v755 = vpop.f32.mrf.mxu0
    %v756 = vadd.f32 0.0, %v755
    %v757 = vpop.f32.mrf.mxu0
    %v758 = vadd.f32 0.0, %v757
    %759 = vdwg.mxu0
    %760 = vmatpush.bf16.msra.mxu0 %v622
    %761 = vmatpush.bf16.msra.mxu0 %v621
    %762 = vmatpush.bf16.msra.mxu0 %v620
    %763 = vmatpush.bf16.msra.mxu0 %v619
    %764 = vmatpush.bf16.msra.mxu0 %v618
    %765 = vmatpush.bf16.msra.mxu0 %v617
    %766 = vmatpush.bf16.msra.mxu0 %v616
    %767 = vmatpush.bf16.msra.mxu0 %v615
    %768 = vmatmul.bf16.gmra.mxu0 %v352
    %v769 = vpop.f32.mrf.mxu0
    %v770 = vadd.f32 %v681, %v769
    %v771 = vpop.f32.mrf.mxu0
    %v772 = vadd.f32 %v683, %v771
    %773 = vmatmul.bf16.gmra.mxu0 %v356
    %v774 = vpop.f32.mrf.mxu0
    %v775 = vadd.f32 %v686, %v774
    %v776 = vpop.f32.mrf.mxu0
    %v777 = vadd.f32 %v688, %v776
    %778 = vmatmul.bf16.gmra.mxu0 %v360
    %v779 = vpop.f32.mrf.mxu0
    %v780 = vadd.f32 %v691, %v779
    %v781 = vpop.f32.mrf.mxu0
    %v782 = vadd.f32 %v693, %v781
    %783 = vmatmul.bf16.gmra.mxu0 %v364
    %v784 = vpop.f32.mrf.mxu0
    %v785 = vadd.f32 %v696, %v784
    %v786 = vpop.f32.mrf.mxu0
    %v787 = vadd.f32 %v698, %v786
    %788 = vmatmul.bf16.gmra.mxu0 %v368
    %v789 = vpop.f32.mrf.mxu0
    %v790 = vadd.f32 %v701, %v789
    %v791 = vpop.f32.mrf.mxu0
    %v792 = vadd.f32 %v703, %v791
    %793 = vmatmul.bf16.gmra.mxu0 %v372
    %v794 = vpop.f32.mrf.mxu0
    %v795 = vadd.f32 %v706, %v794
    %v796 = vpop.f32.mrf.mxu0
    %v797 = vadd.f32 %v708, %v796
    %798 = vmatmul.bf16.gmra.mxu0 %v376
    %v799 = vpop.f32.mrf.mxu0
    %v800 = vadd.f32 %v711, %v799
    %v801 = vpop.f32.mrf.mxu0
    %v802 = vadd.f32 %v713, %v801
    %803 = vmatmul.bf16.gmra.mxu0 %v380
    %v804 = vpop.f32.mrf.mxu0
    %v805 = vadd.f32 %v716, %v804
    %v806 = vpop.f32.mrf.mxu0
    %v807 = vadd.f32 %v718, %v806
    %808 = vmatmul.bf16.gmra.mxu0 %v384
    %v809 = vpop.f32.mrf.mxu0
    %v810 = vadd.f32 %v721, %v809
    %v811 = vpop.f32.mrf.mxu0
    %v812 = vadd.f32 %v723, %v811
    %813 = vmatmul.bf16.gmra.mxu0 %v388
    %v814 = vpop.f32.mrf.mxu0
    %v815 = vadd.f32 %v726, %v814
    %v816 = vpop.f32.mrf.mxu0
    %v817 = vadd.f32 %v728, %v816
    %818 = vmatmul.bf16.gmra.mxu0 %v392
    %v819 = vpop.f32.mrf.mxu0
    %v820 = vadd.f32 %v731, %v819
    %v821 = vpop.f32.mrf.mxu0
    %v822 = vadd.f32 %v733, %v821
    %823 = vmatmul.bf16.gmra.mxu0 %v396
    %v824 = vpop.f32.mrf.mxu0
    %v825 = vadd.f32 %v736, %v824
    %v826 = vpop.f32.mrf.mxu0
    %v827 = vadd.f32 %v738, %v826
    %828 = vmatmul.bf16.gmra.mxu0 %v400
    %v829 = vpop.f32.mrf.mxu0
    %v830 = vadd.f32 %v741, %v829
    %v831 = vpop.f32.mrf.mxu0
    %v832 = vadd.f32 %v743, %v831
    %833 = vmatmul.bf16.gmra.mxu0 %v404
    %v834 = vpop.f32.mrf.mxu0
    %v835 = vadd.f32 %v746, %v834
    %v836 = vpop.f32.mrf.mxu0
    %v837 = vadd.f32 %v748, %v836
    %838 = vmatmul.bf16.gmra.mxu0 %v408
    %v839 = vpop.f32.mrf.mxu0
    %v840 = vadd.f32 %v751, %v839
    %v841 = vpop.f32.mrf.mxu0
    %v842 = vadd.f32 %v753, %v841
    %843 = vmatmul.bf16.gmra.mxu0 %v412
    %v844 = vpop.f32.mrf.mxu0
    %v845 = vadd.f32 %v756, %v844
    %v846 = vpop.f32.mrf.mxu0
    %v847 = vadd.f32 %v758, %v846
    %848 = vdwg.mxu0
    %849 = vmatpush.bf16.msra.mxu0 %v630
    %850 = vmatpush.bf16.msra.mxu0 %v629
    %851 = vmatpush.bf16.msra.mxu0 %v628
    %852 = vmatpush.bf16.msra.mxu0 %v627
    %853 = vmatpush.bf16.msra.mxu0 %v626
    %854 = vmatpush.bf16.msra.mxu0 %v625
    %855 = vmatpush.bf16.msra.mxu0 %v624
    %856 = vmatpush.bf16.msra.mxu0 %v623
    %857 = vmatmul.bf16.gmra.mxu0 %v353
    %v858 = vpop.f32.mrf.mxu0
    %v859 = vadd.f32 %v770, %v858
    %v860 = vpop.f32.mrf.mxu0
    %v861 = vadd.f32 %v772, %v860
    %862 = vmatmul.bf16.gmra.mxu0 %v357
    %v863 = vpop.f32.mrf.mxu0
    %v864 = vadd.f32 %v775, %v863
    %v865 = vpop.f32.mrf.mxu0
    %v866 = vadd.f32 %v777, %v865
    %867 = vmatmul.bf16.gmra.mxu0 %v361
    %v868 = vpop.f32.mrf.mxu0
    %v869 = vadd.f32 %v780, %v868
    %v870 = vpop.f32.mrf.mxu0
    %v871 = vadd.f32 %v782, %v870
    %872 = vmatmul.bf16.gmra.mxu0 %v365
    %v873 = vpop.f32.mrf.mxu0
    %v874 = vadd.f32 %v785, %v873
    %v875 = vpop.f32.mrf.mxu0
    %v876 = vadd.f32 %v787, %v875
    %877 = vmatmul.bf16.gmra.mxu0 %v369
    %v878 = vpop.f32.mrf.mxu0
    %v879 = vadd.f32 %v790, %v878
    %v880 = vpop.f32.mrf.mxu0
    %v881 = vadd.f32 %v792, %v880
    %882 = vmatmul.bf16.gmra.mxu0 %v373
    %v883 = vpop.f32.mrf.mxu0
    %v884 = vadd.f32 %v795, %v883
    %v885 = vpop.f32.mrf.mxu0
    %v886 = vadd.f32 %v797, %v885
    %887 = vmatmul.bf16.gmra.mxu0 %v377
    %v888 = vpop.f32.mrf.mxu0
    %v889 = vadd.f32 %v800, %v888
    %v890 = vpop.f32.mrf.mxu0
    %v891 = vadd.f32 %v802, %v890
    %892 = vmatmul.bf16.gmra.mxu0 %v381
    %v893 = vpop.f32.mrf.mxu0
    %v894 = vadd.f32 %v805, %v893
    %v895 = vpop.f32.mrf.mxu0
    %v896 = vadd.f32 %v807, %v895
    %897 = vmatmul.bf16.gmra.mxu0 %v385
    %v898 = vpop.f32.mrf.mxu0
    %v899 = vadd.f32 %v810, %v898
    %v900 = vpop.f32.mrf.mxu0
    %v901 = vadd.f32 %v812, %v900
    %902 = vmatmul.bf16.gmra.mxu0 %v389
    %v903 = vpop.f32.mrf.mxu0
    %v904 = vadd.f32 %v815, %v903
    %v905 = vpop.f32.mrf.mxu0
    %v906 = vadd.f32 %v817, %v905
    %907 = vmatmul.bf16.gmra.mxu0 %v393
    %v908 = vpop.f32.mrf.mxu0
    %v909 = vadd.f32 %v820, %v908
    %v910 = vpop.f32.mrf.mxu0
    %v911 = vadd.f32 %v822, %v910
    %912 = vmatmul.bf16.gmra.mxu0 %v397
    %v913 = vpop.f32.mrf.mxu0
    %v914 = vadd.f32 %v825, %v913
    %v915 = vpop.f32.mrf.mxu0
    %v916 = vadd.f32 %v827, %v915
    %917 = vmatmul.bf16.gmra.mxu0 %v401
    %v918 = vpop.f32.mrf.mxu0
    %v919 = vadd.f32 %v830, %v918
    %v920 = vpop.f32.mrf.mxu0
    %v921 = vadd.f32 %v832, %v920
    %922 = vmatmul.bf16.gmra.mxu0 %v405
    %v923 = vpop.f32.mrf.mxu0
    %v924 = vadd.f32 %v835, %v923
    %v925 = vpop.f32.mrf.mxu0
    %v926 = vadd.f32 %v837, %v925
    %927 = vmatmul.bf16.gmra.mxu0 %v409
    %v928 = vpop.f32.mrf.mxu0
    %v929 = vadd.f32 %v840, %v928
    %v930 = vpop.f32.mrf.mxu0
    %v931 = vadd.f32 %v842, %v930
    %932 = vmatmul.bf16.gmra.mxu0 %v413
    %v933 = vpop.f32.mrf.mxu0
    %v934 = vadd.f32 %v845, %v933
    %v935 = vpop.f32.mrf.mxu0
    %v936 = vadd.f32 %v847, %v935
    %937 = vdwg.mxu0
    %938 = vmatpush.bf16.msra.mxu0 %v638
    %939 = vmatpush.bf16.msra.mxu0 %v637
    %940 = vmatpush.bf16.msra.mxu0 %v636
    %941 = vmatpush.bf16.msra.mxu0 %v635
    %942 = vmatpush.bf16.msra.mxu0 %v634
    %943 = vmatpush.bf16.msra.mxu0 %v633
    %944 = vmatpush.bf16.msra.mxu0 %v632
    %945 = vmatpush.bf16.msra.mxu0 %v631
    %946 = vmatmul.bf16.gmra.mxu0 %v354
    %v947 = vpop.f32.mrf.mxu0
    %v948 = vadd.f32 %v859, %v947
    %v949 = vpop.f32.mrf.mxu0
    %v950 = vadd.f32 %v861, %v949
    %951 = vmatmul.bf16.gmra.mxu0 %v358
    %v952 = vpop.f32.mrf.mxu0
    %v953 = vadd.f32 %v864, %v952
    %v954 = vpop.f32.mrf.mxu0
    %v955 = vadd.f32 %v866, %v954
    %956 = vmatmul.bf16.gmra.mxu0 %v362
    %v957 = vpop.f32.mrf.mxu0
    %v958 = vadd.f32 %v869, %v957
    %v959 = vpop.f32.mrf.mxu0
    %v960 = vadd.f32 %v871, %v959
    %961 = vmatmul.bf16.gmra.mxu0 %v366
    %v962 = vpop.f32.mrf.mxu0
    %v963 = vadd.f32 %v874, %v962
    %v964 = vpop.f32.mrf.mxu0
    %v965 = vadd.f32 %v876, %v964
    %966 = vmatmul.bf16.gmra.mxu0 %v370
    %v967 = vpop.f32.mrf.mxu0
    %v968 = vadd.f32 %v879, %v967
    %v969 = vpop.f32.mrf.mxu0
    %v970 = vadd.f32 %v881, %v969
    %971 = vmatmul.bf16.gmra.mxu0 %v374
    %v972 = vpop.f32.mrf.mxu0
    %v973 = vadd.f32 %v884, %v972
    %v974 = vpop.f32.mrf.mxu0
    %v975 = vadd.f32 %v886, %v974
    %976 = vmatmul.bf16.gmra.mxu0 %v378
    %v977 = vpop.f32.mrf.mxu0
    %v978 = vadd.f32 %v889, %v977
    %v979 = vpop.f32.mrf.mxu0
    %v980 = vadd.f32 %v891, %v979
    %981 = vmatmul.bf16.gmra.mxu0 %v382
    %v982 = vpop.f32.mrf.mxu0
    %v983 = vadd.f32 %v894, %v982
    %v984 = vpop.f32.mrf.mxu0
    %v985 = vadd.f32 %v896, %v984
    %986 = vmatmul.bf16.gmra.mxu0 %v386
    %v987 = vpop.f32.mrf.mxu0
    %v988 = vadd.f32 %v899, %v987
    %v989 = vpop.f32.mrf.mxu0
    %v990 = vadd.f32 %v901, %v989
    %991 = vmatmul.bf16.gmra.mxu0 %v390
    %v992 = vpop.f32.mrf.mxu0
    %v993 = vadd.f32 %v904, %v992
    %v994 = vpop.f32.mrf.mxu0
    %v995 = vadd.f32 %v906, %v994
    %996 = vmatmul.bf16.gmra.mxu0 %v394
    %v997 = vpop.f32.mrf.mxu0
    %v998 = vadd.f32 %v909, %v997
    %v999 = vpop.f32.mrf.mxu0
    %v1000 = vadd.f32 %v911, %v999
    %1001 = vmatmul.bf16.gmra.mxu0 %v398
    %v1002 = vpop.f32.mrf.mxu0
    %v1003 = vadd.f32 %v914, %v1002
    %v1004 = vpop.f32.mrf.mxu0
    %v1005 = vadd.f32 %v916, %v1004
    %1006 = vmatmul.bf16.gmra.mxu0 %v402
    %v1007 = vpop.f32.mrf.mxu0
    %v1008 = vadd.f32 %v919, %v1007
    %v1009 = vpop.f32.mrf.mxu0
    %v1010 = vadd.f32 %v921, %v1009
    %1011 = vmatmul.bf16.gmra.mxu0 %v406
    %v1012 = vpop.f32.mrf.mxu0
    %v1013 = vadd.f32 %v924, %v1012
    %v1014 = vpop.f32.mrf.mxu0
    %v1015 = vadd.f32 %v926, %v1014
    %1016 = vmatmul.bf16.gmra.mxu0 %v410
    %v1017 = vpop.f32.mrf.mxu0
    %v1018 = vadd.f32 %v929, %v1017
    %v1019 = vpop.f32.mrf.mxu0
    %v1020 = vadd.f32 %v931, %v1019
    %1021 = vmatmul.bf16.gmra.mxu0 %v414
    %v1022 = vpop.f32.mrf.mxu0
    %v1023 = vadd.f32 %v934, %v1022
    %v1024 = vpop.f32.mrf.mxu0
    %v1025 = vadd.f32 %v936, %v1024
    %1026 = vdwg.mxu0
    %p1027 = scmp.eq.s32.totalorder 0, 0
    // Predicated region
    $region22: #{lightgcn_forward.4} parent=1 // pred_check
      %p1028 = pneg %p1027
    $region23: #{lightgcn_forward.4} parent=1 // pred_check_branch
      %1030 = sbr.rel (%p1028) target = $region25
    $region24: #{lightgcn_forward.4} parent=1 // pred_region
      %v1031 = vld [vmem:[%s3] sm:$0xff]
      %v1032 = vld [vmem:[%s3 + $0x8] sm:$0xff]
      %v1033 = vld [vmem:[%s3 + $0x10] sm:$0xff]
      %v1034 = vld [vmem:[%s3 + $0x18] sm:$0xff]
      %v1035 = vld [vmem:[%s3 + $0x20] sm:$0xff]
      %v1036 = vld [vmem:[%s3 + $0x28] sm:$0xff]
      %v1037 = vld [vmem:[%s3 + $0x30] sm:$0xff]
      %v1038 = vld [vmem:[%s3 + $0x38] sm:$0xff]
      %v1039 = vld [vmem:[%s3 + $0x40] sm:$0xff]
      %v1040 = vld [vmem:[%s3 + $0x48] sm:$0xff]
      %v1041 = vld [vmem:[%s3 + $0x50] sm:$0xff]
      %v1042 = vld [vmem:[%s3 + $0x58] sm:$0xff]
      %v1043 = vld [vmem:[%s3 + $0x60] sm:$0xff]
      %v1044 = vld [vmem:[%s3 + $0x68] sm:$0xff]
      %v1045 = vld [vmem:[%s3 + $0x70] sm:$0xff]
      %v1046 = vld [vmem:[%s3 + $0x78] sm:$0xff]
      %v1047 = vld [vmem:[%s3 + $0x80] sm:$0xff]
      %v1048 = vld [vmem:[%s3 + $0x88] sm:$0xff]
      %v1049 = vld [vmem:[%s3 + $0x90] sm:$0xff]
      %v1050 = vld [vmem:[%s3 + $0x98] sm:$0xff]
      %v1051 = vld [vmem:[%s3 + $0xa0] sm:$0xff]
      %v1052 = vld [vmem:[%s3 + $0xa8] sm:$0xff]
      %v1053 = vld [vmem:[%s3 + $0xb0] sm:$0xff]
      %v1054 = vld [vmem:[%s3 + $0xb8] sm:$0xff]
      %v1055 = vld [vmem:[%s3 + $0xc0] sm:$0xff]
      %v1056 = vld [vmem:[%s3 + $0xc8] sm:$0xff]
      %v1057 = vld [vmem:[%s3 + $0xd0] sm:$0xff]
      %v1058 = vld [vmem:[%s3 + $0xd8] sm:$0xff]
      %v1059 = vld [vmem:[%s3 + $0xe0] sm:$0xff]
      %v1060 = vld [vmem:[%s3 + $0xe8] sm:$0xff]
      %v1061 = vld [vmem:[%s3 + $0xf0] sm:$0xff]
      %v1062 = vld [vmem:[%s3 + $0xf8] sm:$0xff]
      %v1063 = vadd.f32 %v1031, %v948
      %v1064 = vadd.f32 %v1032, %v950
      %v1065 = vadd.f32 %v1033, %v953
      %v1066 = vadd.f32 %v1034, %v955
      %v1067 = vadd.f32 %v1035, %v958
      %v1068 = vadd.f32 %v1036, %v960
      %v1069 = vadd.f32 %v1037, %v963
      %v1070 = vadd.f32 %v1038, %v965
      %v1071 = vadd.f32 %v1039, %v968
      %v1072 = vadd.f32 %v1040, %v970
      %v1073 = vadd.f32 %v1041, %v973
      %v1074 = vadd.f32 %v1042, %v975
      %v1075 = vadd.f32 %v1043, %v978
      %v1076 = vadd.f32 %v1044, %v980
      %v1077 = vadd.f32 %v1045, %v983
      %v1078 = vadd.f32 %v1046, %v985
      %v1079 = vadd.f32 %v1047, %v988
      %v1080 = vadd.f32 %v1048, %v990
      %v1081 = vadd.f32 %v1049, %v993
      %v1082 = vadd.f32 %v1050, %v995
      %v1083 = vadd.f32 %v1051, %v998
      %v1084 = vadd.f32 %v1052, %v1000
      %v1085 = vadd.f32 %v1053, %v1003
      %v1086 = vadd.f32 %v1054, %v1005
      %v1087 = vadd.f32 %v1055, %v1008
      %v1088 = vadd.f32 %v1056, %v1010
      %v1089 = vadd.f32 %v1057, %v1013
      %v1090 = vadd.f32 %v1058, %v1015
      %v1091 = vadd.f32 %v1059, %v1018
      %v1092 = vadd.f32 %v1060, %v1020
      %v1093 = vadd.f32 %v1061, %v1023
      %v1094 = vadd.f32 %v1062, %v1025
      %1095 = vst [vmem:[%s6] sm:$0xff] %v1063
      %1096 = vst [vmem:[%s6 + $0x8] sm:$0xff] %v1064
      %1097 = vst [vmem:[%s6 + $0x10] sm:$0xff] %v1065
      %1098 = vst [vmem:[%s6 + $0x18] sm:$0xff] %v1066
      %1099 = vst [vmem:[%s6 + $0x20] sm:$0xff] %v1067
      %1100 = vst [vmem:[%s6 + $0x28] sm:$0xff] %v1068
      %1101 = vst [vmem:[%s6 + $0x30] sm:$0xff] %v1069
      %1102 = vst [vmem:[%s6 + $0x38] sm:$0xff] %v1070
      %1103 = vst [vmem:[%s6 + $0x40] sm:$0xff] %v1071
      %1104 = vst [vmem:[%s6 + $0x48] sm:$0xff] %v1072
      %1105 = vst [vmem:[%s6 + $0x50] sm:$0xff] %v1073
      %1106 = vst [vmem:[%s6 + $0x58] sm:$0xff] %v1074
      %1107 = vst [vmem:[%s6 + $0x60] sm:$0xff] %v1075
      %1108 = vst [vmem:[%s6 + $0x68] sm:$0xff] %v1076
      %1109 = vst [vmem:[%s6 + $0x70] sm:$0xff] %v1077
      %1110 = vst [vmem:[%s6 + $0x78] sm:$0xff] %v1078
      %1111 = vst [vmem:[%s6 + $0x80] sm:$0xff] %v1079
      %1112 = vst [vmem:[%s6 + $0x88] sm:$0xff] %v1080
      %1113 = vst [vmem:[%s6 + $0x90] sm:$0xff] %v1081
      %1114 = vst [vmem:[%s6 + $0x98] sm:$0xff] %v1082
      %1115 = vst [vmem:[%s6 + $0xa0] sm:$0xff] %v1083
      %1116 = vst [vmem:[%s6 + $0xa8] sm:$0xff] %v1084
      %1117 = vst [vmem:[%s6 + $0xb0] sm:$0xff] %v1085
      %1118 = vst [vmem:[%s6 + $0xb8] sm:$0xff] %v1086
      %1119 = vst [vmem:[%s6 + $0xc0] sm:$0xff] %v1087
      %1120 = vst [vmem:[%s6 + $0xc8] sm:$0xff] %v1088
      %1121 = vst [vmem:[%s6 + $0xd0] sm:$0xff] %v1089
      %1122 = vst [vmem:[%s6 + $0xd8] sm:$0xff] %v1090
      %1123 = vst [vmem:[%s6 + $0xe0] sm:$0xff] %v1091
      %1124 = vst [vmem:[%s6 + $0xe8] sm:$0xff] %v1092
      %1125 = vst [vmem:[%s6 + $0xf0] sm:$0xff] %v1093
      %1126 = vst [vmem:[%s6 + $0xf8] sm:$0xff] %v1094
    $region25: #{lightgcn_forward.4} parent=1 // pred_fallthru
      _
    %p1127 = scmp.ne.s32.totalorder 0, 0
    // Predicated region
    $region26: #{lightgcn_forward.4} parent=1 // pred_check
      %p1128 = pneg %p1127
    $region27: #{lightgcn_forward.4} parent=1 // pred_check_branch
      %1130 = sbr.rel (%p1128) target = $region29
    $region28: #{lightgcn_forward.4} parent=1 // pred_region
      %v1131 = vld [vmem:[%s6] sm:$0xff]
      %v1132 = vld [vmem:[%s6 + $0x8] sm:$0xff]
      %v1133 = vld [vmem:[%s6 + $0x10] sm:$0xff]
      %v1134 = vld [vmem:[%s6 + $0x18] sm:$0xff]
      %v1135 = vld [vmem:[%s6 + $0x20] sm:$0xff]
      %v1136 = vld [vmem:[%s6 + $0x28] sm:$0xff]
      %v1137 = vld [vmem:[%s6 + $0x30] sm:$0xff]
      %v1138 = vld [vmem:[%s6 + $0x38] sm:$0xff]
      %v1139 = vld [vmem:[%s6 + $0x40] sm:$0xff]
      %v1140 = vld [vmem:[%s6 + $0x48] sm:$0xff]
      %v1141 = vld [vmem:[%s6 + $0x50] sm:$0xff]
      %v1142 = vld [vmem:[%s6 + $0x58] sm:$0xff]
      %v1143 = vld [vmem:[%s6 + $0x60] sm:$0xff]
      %v1144 = vld [vmem:[%s6 + $0x68] sm:$0xff]
      %v1145 = vld [vmem:[%s6 + $0x70] sm:$0xff]
      %v1146 = vld [vmem:[%s6 + $0x78] sm:$0xff]
      %v1147 = vld [vmem:[%s6 + $0x80] sm:$0xff]
      %v1148 = vld [vmem:[%s6 + $0x88] sm:$0xff]
      %v1149 = vld [vmem:[%s6 + $0x90] sm:$0xff]
      %v1150 = vld [vmem:[%s6 + $0x98] sm:$0xff]
      %v1151 = vld [vmem:[%s6 + $0xa0] sm:$0xff]
      %v1152 = vld [vmem:[%s6 + $0xa8] sm:$0xff]
      %v1153 = vld [vmem:[%s6 + $0xb0] sm:$0xff]
      %v1154 = vld [vmem:[%s6 + $0xb8] sm:$0xff]
      %v1155 = vld [vmem:[%s6 + $0xc0] sm:$0xff]
      %v1156 = vld [vmem:[%s6 + $0xc8] sm:$0xff]
      %v1157 = vld [vmem:[%s6 + $0xd0] sm:$0xff]
      %v1158 = vld [vmem:[%s6 + $0xd8] sm:$0xff]
      %v1159 = vld [vmem:[%s6 + $0xe0] sm:$0xff]
      %v1160 = vld [vmem:[%s6 + $0xe8] sm:$0xff]
      %v1161 = vld [vmem:[%s6 + $0xf0] sm:$0xff]
      %v1162 = vld [vmem:[%s6 + $0xf8] sm:$0xff]
      %v1163 = vadd.f32 %v1131, %v948
      %v1164 = vadd.f32 %v1132, %v950
      %v1165 = vadd.f32 %v1133, %v953
      %v1166 = vadd.f32 %v1134, %v955
      %v1167 = vadd.f32 %v1135, %v958
      %v1168 = vadd.f32 %v1136, %v960
      %v1169 = vadd.f32 %v1137, %v963
      %v1170 = vadd.f32 %v1138, %v965
      %v1171 = vadd.f32 %v1139, %v968
      %v1172 = vadd.f32 %v1140, %v970
      %v1173 = vadd.f32 %v1141, %v973
      %v1174 = vadd.f32 %v1142, %v975
      %v1175 = vadd.f32 %v1143, %v978
      %v1176 = vadd.f32 %v1144, %v980
      %v1177 = vadd.f32 %v1145, %v983
      %v1178 = vadd.f32 %v1146, %v985
      %v1179 = vadd.f32 %v1147, %v988
      %v1180 = vadd.f32 %v1148, %v990
      %v1181 = vadd.f32 %v1149, %v993
      %v1182 = vadd.f32 %v1150, %v995
      %v1183 = vadd.f32 %v1151, %v998
      %v1184 = vadd.f32 %v1152, %v1000
      %v1185 = vadd.f32 %v1153, %v1003
      %v1186 = vadd.f32 %v1154, %v1005
      %v1187 = vadd.f32 %v1155, %v1008
      %v1188 = vadd.f32 %v1156, %v1010
      %v1189 = vadd.f32 %v1157, %v1013
      %v1190 = vadd.f32 %v1158, %v1015
      %v1191 = vadd.f32 %v1159, %v1018
      %v1192 = vadd.f32 %v1160, %v1020
      %v1193 = vadd.f32 %v1161, %v1023
      %v1194 = vadd.f32 %v1162, %v1025
      %1195 = vst [vmem:[%s6] sm:$0xff] %v1163
      %1196 = vst [vmem:[%s6 + $0x8] sm:$0xff] %v1164
      %1197 = vst [vmem:[%s6 + $0x10] sm:$0xff] %v1165
      %1198 = vst [vmem:[%s6 + $0x18] sm:$0xff] %v1166
      %1199 = vst [vmem:[%s6 + $0x20] sm:$0xff] %v1167
      %1200 = vst [vmem:[%s6 + $0x28] sm:$0xff] %v1168
      %1201 = vst [vmem:[%s6 + $0x30] sm:$0xff] %v1169
      %1202 = vst [vmem:[%s6 + $0x38] sm:$0xff] %v1170
      %1203 = vst [vmem:[%s6 + $0x40] sm:$0xff] %v1171
      %1204 = vst [vmem:[%s6 + $0x48] sm:$0xff] %v1172
      %1205 = vst [vmem:[%s6 + $0x50] sm:$0xff] %v1173
      %1206 = vst [vmem:[%s6 + $0x58] sm:$0xff] %v1174
      %1207 = vst [vmem:[%s6 + $0x60] sm:$0xff] %v1175
      %1208 = vst [vmem:[%s6 + $0x68] sm:$0xff] %v1176
      %1209 = vst [vmem:[%s6 + $0x70] sm:$0xff] %v1177
      %1210 = vst [vmem:[%s6 + $0x78] sm:$0xff] %v1178
      %1211 = vst [vmem:[%s6 + $0x80] sm:$0xff] %v1179
      %1212 = vst [vmem:[%s6 + $0x88] sm:$0xff] %v1180
      %1213 = vst [vmem:[%s6 + $0x90] sm:$0xff] %v1181
      %1214 = vst [vmem:[%s6 + $0x98] sm:$0xff] %v1182
      %1215 = vst [vmem:[%s6 + $0xa0] sm:$0xff] %v1183
      %1216 = vst [vmem:[%s6 + $0xa8] sm:$0xff] %v1184
      %1217 = vst [vmem:[%s6 + $0xb0] sm:$0xff] %v1185
      %1218 = vst [vmem:[%s6 + $0xb8] sm:$0xff] %v1186
      %1219 = vst [vmem:[%s6 + $0xc0] sm:$0xff] %v1187
      %1220 = vst [vmem:[%s6 + $0xc8] sm:$0xff] %v1188
      %1221 = vst [vmem:[%s6 + $0xd0] sm:$0xff] %v1189
      %1222 = vst [vmem:[%s6 + $0xd8] sm:$0xff] %v1190
      %1223 = vst [vmem:[%s6 + $0xe0] sm:$0xff] %v1191
      %1224 = vst [vmem:[%s6 + $0xe8] sm:$0xff] %v1192
      %1225 = vst [vmem:[%s6 + $0xf0] sm:$0xff] %v1193
      %1226 = vst [vmem:[%s6 + $0xf8] sm:$0xff] %v1194
    $region29: #{lightgcn_forward.4} parent=1 // pred_fallthru
      _
    // Predicated region
    $region30: #{lightgcn_forward.4} parent=1 // pred_check
      %p1227 = pneg %p1027
    $region31: #{lightgcn_forward.4} parent=1 // pred_check_branch
      %1229 = sbr.rel (%p1227) target = $region33
    $region32: #{lightgcn_forward.4} parent=1 // pred_region
      %v1230 = vld [vmem:[%s6] sm:$0xff]
      %v1231 = vld [vmem:[%s6 + $0x8] sm:$0xff]
      %v1232 = vld [vmem:[%s6 + $0x10] sm:$0xff]
      %v1233 = vld [vmem:[%s6 + $0x18] sm:$0xff]
      %v1234 = vld [vmem:[%s6 + $0x20] sm:$0xff]
      %v1235 = vld [vmem:[%s6 + $0x28] sm:$0xff]
      %v1236 = vld [vmem:[%s6 + $0x30] sm:$0xff]
      %v1237 = vld [vmem:[%s6 + $0x38] sm:$0xff]
      %v1238 = vld [vmem:[%s6 + $0x40] sm:$0xff]
      %v1239 = vld [vmem:[%s6 + $0x48] sm:$0xff]
      %v1240 = vld [vmem:[%s6 + $0x50] sm:$0xff]
      %v1241 = vld [vmem:[%s6 + $0x58] sm:$0xff]
      %v1242 = vld [vmem:[%s6 + $0x60] sm:$0xff]
      %v1243 = vld [vmem:[%s6 + $0x68] sm:$0xff]
      %v1244 = vld [vmem:[%s6 + $0x70] sm:$0xff]
      %v1245 = vld [vmem:[%s6 + $0x78] sm:$0xff]
      %v1246 = vld [vmem:[%s6 + $0x80] sm:$0xff]
      %v1247 = vld [vmem:[%s6 + $0x88] sm:$0xff]
      %v1248 = vld [vmem:[%s6 + $0x90] sm:$0xff]
      %v1249 = vld [vmem:[%s6 + $0x98] sm:$0xff]
      %v1250 = vld [vmem:[%s6 + $0xa0] sm:$0xff]
      %v1251 = vld [vmem:[%s6 + $0xa8] sm:$0xff]
      %v1252 = vld [vmem:[%s6 + $0xb0] sm:$0xff]
      %v1253 = vld [vmem:[%s6 + $0xb8] sm:$0xff]
      %v1254 = vld [vmem:[%s6 + $0xc0] sm:$0xff]
      %v1255 = vld [vmem:[%s6 + $0xc8] sm:$0xff]
      %v1256 = vld [vmem:[%s6 + $0xd0] sm:$0xff]
      %v1257 = vld [vmem:[%s6 + $0xd8] sm:$0xff]
      %v1258 = vld [vmem:[%s6 + $0xe0] sm:$0xff]
      %v1259 = vld [vmem:[%s6 + $0xe8] sm:$0xff]
      %v1260 = vld [vmem:[%s6 + $0xf0] sm:$0xff]
      %v1261 = vld [vmem:[%s6 + $0xf8] sm:$0xff]
      %v1262 = vld [vmem:[%s3] sm:$0xff]
      %v1263 = vld [vmem:[%s3 + $0x8] sm:$0xff]
      %v1264 = vld [vmem:[%s3 + $0x10] sm:$0xff]
      %v1265 = vld [vmem:[%s3 + $0x18] sm:$0xff]
      %v1266 = vld [vmem:[%s3 + $0x20] sm:$0xff]
      %v1267 = vld [vmem:[%s3 + $0x28] sm:$0xff]
      %v1268 = vld [vmem:[%s3 + $0x30] sm:$0xff]
      %v1269 = vld [vmem:[%s3 + $0x38] sm:$0xff]
      %v1270 = vld [vmem:[%s3 + $0x40] sm:$0xff]
      %v1271 = vld [vmem:[%s3 + $0x48] sm:$0xff]
      %v1272 = vld [vmem:[%s3 + $0x50] sm:$0xff]
      %v1273 = vld [vmem:[%s3 + $0x58] sm:$0xff]
      %v1274 = vld [vmem:[%s3 + $0x60] sm:$0xff]
      %v1275 = vld [vmem:[%s3 + $0x68] sm:$0xff]
      %v1276 = vld [vmem:[%s3 + $0x70] sm:$0xff]
      %v1277 = vld [vmem:[%s3 + $0x78] sm:$0xff]
      %v1278 = vld [vmem:[%s3 + $0x80] sm:$0xff]
      %v1279 = vld [vmem:[%s3 + $0x88] sm:$0xff]
      %v1280 = vld [vmem:[%s3 + $0x90] sm:$0xff]
      %v1281 = vld [vmem:[%s3 + $0x98] sm:$0xff]
      %v1282 = vld [vmem:[%s3 + $0xa0] sm:$0xff]
      %v1283 = vld [vmem:[%s3 + $0xa8] sm:$0xff]
      %v1284 = vld [vmem:[%s3 + $0xb0] sm:$0xff]
      %v1285 = vld [vmem:[%s3 + $0xb8] sm:$0xff]
      %v1286 = vld [vmem:[%s3 + $0xc0] sm:$0xff]
      %v1287 = vld [vmem:[%s3 + $0xc8] sm:$0xff]
      %v1288 = vld [vmem:[%s3 + $0xd0] sm:$0xff]
      %v1289 = vld [vmem:[%s3 + $0xd8] sm:$0xff]
      %v1290 = vld [vmem:[%s3 + $0xe0] sm:$0xff]
      %v1291 = vld [vmem:[%s3 + $0xe8] sm:$0xff]
      %v1292 = vld [vmem:[%s3 + $0xf0] sm:$0xff]
      %v1293 = vld [vmem:[%s3 + $0xf8] sm:$0xff]
      %v1294 = vsub.f32 %v1230, %v1262
      %v1295 = vsub.f32 %v1231, %v1263
      %v1296 = vsub.f32 %v1232, %v1264
      %v1297 = vsub.f32 %v1233, %v1265
      %v1298 = vsub.f32 %v1234, %v1266
      %v1299 = vsub.f32 %v1235, %v1267
      %v1300 = vsub.f32 %v1236, %v1268
      %v1301 = vsub.f32 %v1237, %v1269
      %v1302 = vsub.f32 %v1238, %v1270
      %v1303 = vsub.f32 %v1239, %v1271
      %v1304 = vsub.f32 %v1240, %v1272
      %v1305 = vsub.f32 %v1241, %v1273
      %v1306 = vsub.f32 %v1242, %v1274
      %v1307 = vsub.f32 %v1243, %v1275
      %v1308 = vsub.f32 %v1244, %v1276
      %v1309 = vsub.f32 %v1245, %v1277
      %v1310 = vsub.f32 %v1246, %v1278
      %v1311 = vsub.f32 %v1247, %v1279
      %v1312 = vsub.f32 %v1248, %v1280
      %v1313 = vsub.f32 %v1249, %v1281
      %v1314 = vsub.f32 %v1250, %v1282
      %v1315 = vsub.f32 %v1251, %v1283
      %v1316 = vsub.f32 %v1252, %v1284
      %v1317 = vsub.f32 %v1253, %v1285
      %v1318 = vsub.f32 %v1254, %v1286
      %v1319 = vsub.f32 %v1255, %v1287
      %v1320 = vsub.f32 %v1256, %v1288
      %v1321 = vsub.f32 %v1257, %v1289
      %v1322 = vsub.f32 %v1258, %v1290
      %v1323 = vsub.f32 %v1259, %v1291
      %v1324 = vsub.f32 %v1260, %v1292
      %v1325 = vsub.f32 %v1261, %v1293
      %v1326 = vpack.c.bf16 %v1294, %v1294
      %v1327 = vpack.c.bf16 %v1295, %v1295
      %v1328 = vpack.c.bf16 %v1296, %v1296
      %v1329 = vpack.c.bf16 %v1297, %v1297
      %v1330 = vpack.c.bf16 %v1298, %v1298
      %v1331 = vpack.c.bf16 %v1299, %v1299
      %v1332 = vpack.c.bf16 %v1300, %v1300
      %v1333 = vpack.c.bf16 %v1301, %v1301
      %v1334 = vpack.c.bf16 %v1302, %v1302
      %v1335 = vpack.c.bf16 %v1303, %v1303
      %v1336 = vpack.c.bf16 %v1304, %v1304
      %v1337 = vpack.c.bf16 %v1305, %v1305
      %v1338 = vpack.c.bf16 %v1306, %v1306
      %v1339 = vpack.c.bf16 %v1307, %v1307
      %v1340 = vpack.c.bf16 %v1308, %v1308
      %v1341 = vpack.c.bf16 %v1309, %v1309
      %v1342 = vpack.c.bf16 %v1310, %v1310
      %v1343 = vpack.c.bf16 %v1311, %v1311
      %v1344 = vpack.c.bf16 %v1312, %v1312
      %v1345 = vpack.c.bf16 %v1313, %v1313
      %v1346 = vpack.c.bf16 %v1314, %v1314
      %v1347 = vpack.c.bf16 %v1315, %v1315
      %v1348 = vpack.c.bf16 %v1316, %v1316
      %v1349 = vpack.c.bf16 %v1317, %v1317
      %v1350 = vpack.c.bf16 %v1318, %v1318
      %v1351 = vpack.c.bf16 %v1319, %v1319
      %v1352 = vpack.c.bf16 %v1320, %v1320
      %v1353 = vpack.c.bf16 %v1321, %v1321
      %v1354 = vpack.c.bf16 %v1322, %v1322
      %v1355 = vpack.c.bf16 %v1323, %v1323
      %v1356 = vpack.c.bf16 %v1324, %v1324
      %v1357 = vpack.c.bf16 %v1325, %v1325
      %1358 = vst [vmem:[#allocation2] sm:$0xf] %v1326
      %1359 = vst [vmem:[#allocation2 + $0x4] sm:$0xf] %v1327
      %1360 = vst [vmem:[#allocation2 + $0x8] sm:$0xf] %v1328
      %1361 = vst [vmem:[#allocation2 + $0xc] sm:$0xf] %v1329
      %1362 = vst [vmem:[#allocation2 + $0x10] sm:$0xf] %v1330
      %1363 = vst [vmem:[#allocation2 + $0x14] sm:$0xf] %v1331
      %1364 = vst [vmem:[#allocation2 + $0x18] sm:$0xf] %v1332
      %1365 = vst [vmem:[#allocation2 + $0x1c] sm:$0xf] %v1333
      %1366 = vst [vmem:[#allocation2 + $0x20] sm:$0xf] %v1334
      %1367 = vst [vmem:[#allocation2 + $0x24] sm:$0xf] %v1335
      %1368 = vst [vmem:[#allocation2 + $0x28] sm:$0xf] %v1336
      %1369 = vst [vmem:[#allocation2 + $0x2c] sm:$0xf] %v1337
      %1370 = vst [vmem:[#allocation2 + $0x30] sm:$0xf] %v1338
      %1371 = vst [vmem:[#allocation2 + $0x34] sm:$0xf] %v1339
      %1372 = vst [vmem:[#allocation2 + $0x38] sm:$0xf] %v1340
      %1373 = vst [vmem:[#allocation2 + $0x3c] sm:$0xf] %v1341
      %1374 = vst [vmem:[#allocation2 + $0x40] sm:$0xf] %v1342
      %1375 = vst [vmem:[#allocation2 + $0x44] sm:$0xf] %v1343
      %1376 = vst [vmem:[#allocation2 + $0x48] sm:$0xf] %v1344
      %1377 = vst [vmem:[#allocation2 + $0x4c] sm:$0xf] %v1345
      %1378 = vst [vmem:[#allocation2 + $0x50] sm:$0xf] %v1346
      %1379 = vst [vmem:[#allocation2 + $0x54] sm:$0xf] %v1347
      %1380 = vst [vmem:[#allocation2 + $0x58] sm:$0xf] %v1348
      %1381 = vst [vmem:[#allocation2 + $0x5c] sm:$0xf] %v1349
      %1382 = vst [vmem:[#allocation2 + $0x60] sm:$0xf] %v1350
      %1383 = vst [vmem:[#allocation2 + $0x64] sm:$0xf] %v1351
      %1384 = vst [vmem:[#allocation2 + $0x68] sm:$0xf] %v1352
      %1385 = vst [vmem:[#allocation2 + $0x6c] sm:$0xf] %v1353
      %1386 = vst [vmem:[#allocation2 + $0x70] sm:$0xf] %v1354
      %1387 = vst [vmem:[#allocation2 + $0x74] sm:$0xf] %v1355
      %1388 = vst [vmem:[#allocation2 + $0x78] sm:$0xf] %v1356
      %1389 = vst [vmem:[#allocation2 + $0x7c] sm:$0xf] %v1357
    $region33: #{lightgcn_forward.4} parent=1 // pred_fallthru
      _
    %v1390 = vld [vmem:[%s2] sm:$0xf]
    %v1391 = vld [vmem:[%s2 + $0x4] sm:$0xf]
    %v1392 = vld [vmem:[%s2 + $0x8] sm:$0xf]
    %v1393 = vld [vmem:[%s2 + $0xc] sm:$0xf]
    %v1394 = vld [vmem:[%s2 + $0x10] sm:$0xf]
    %v1395 = vld [vmem:[%s2 + $0x14] sm:$0xf]
    %v1396 = vld [vmem:[%s2 + $0x18] sm:$0xf]
    %v1397 = vld [vmem:[%s2 + $0x1c] sm:$0xf]
    %v1398 = vld [vmem:[%s2 + $0x20] sm:$0xf]
    %v1399 = vld [vmem:[%s2 + $0x24] sm:$0xf]
    %v1400 = vld [vmem:[%s2 + $0x28] sm:$0xf]
    %v1401 = vld [vmem:[%s2 + $0x2c] sm:$0xf]
    %v1402 = vld [vmem:[%s2 + $0x30] sm:$0xf]
    %v1403 = vld [vmem:[%s2 + $0x34] sm:$0xf]
    %v1404 = vld [vmem:[%s2 + $0x38] sm:$0xf]
    %v1405 = vld [vmem:[%s2 + $0x3c] sm:$0xf]
    %v1406 = vld [vmem:[%s2 + $0x40] sm:$0xf]
    %v1407 = vld [vmem:[%s2 + $0x44] sm:$0xf]
    %v1408 = vld [vmem:[%s2 + $0x48] sm:$0xf]
    %v1409 = vld [vmem:[%s2 + $0x4c] sm:$0xf]
    %v1410 = vld [vmem:[%s2 + $0x50] sm:$0xf]
    %v1411 = vld [vmem:[%s2 + $0x54] sm:$0xf]
    %v1412 = vld [vmem:[%s2 + $0x58] sm:$0xf]
    %v1413 = vld [vmem:[%s2 + $0x5c] sm:$0xf]
    %v1414 = vld [vmem:[%s2 + $0x60] sm:$0xf]
    %v1415 = vld [vmem:[%s2 + $0x64] sm:$0xf]
    %v1416 = vld [vmem:[%s2 + $0x68] sm:$0xf]
    %v1417 = vld [vmem:[%s2 + $0x6c] sm:$0xf]
    %v1418 = vld [vmem:[%s2 + $0x70] sm:$0xf]
    %v1419 = vld [vmem:[%s2 + $0x74] sm:$0xf]
    %v1420 = vld [vmem:[%s2 + $0x78] sm:$0xf]
    %v1421 = vld [vmem:[%s2 + $0x7c] sm:$0xf]
    %1422 = vxpose.binary.xlu0.c.b16.start [1/16] %v352, %v351, 128
    %1423 = vxpose.binary.xlu0.c.b16.cont [2/16] %v356, %v355, 128
    %1424 = vxpose.binary.xlu0.c.b16.cont [3/16] %v360, %v359, 128
    %1425 = vxpose.binary.xlu0.c.b16.cont [4/16] %v364, %v363, 128
    %1426 = vxpose.binary.xlu0.c.b16.cont [5/16] %v368, %v367, 128
    %1427 = vxpose.binary.xlu0.c.b16.cont [6/16] %v372, %v371, 128
    %1428 = vxpose.binary.xlu0.c.b16.cont [7/16] %v376, %v375, 128
    %1429 = vxpose.binary.xlu0.c.b16.end [8/16] %v380, %v379, 128
    %v1430 = vpop.trf.xlu0
    %v1431 = vpop.trf.xlu0
    %v1432 = vpop.trf.xlu0
    %v1433 = vpop.trf.xlu0
    %v1434 = vpop.trf.xlu0
    %v1435 = vpop.trf.xlu0
    %v1436 = vpop.trf.xlu0
    %v1437 = vpop.trf.xlu0
    %v1438 = vpop.trf.xlu0
    %v1439 = vpop.trf.xlu0
    %v1440 = vpop.trf.xlu0
    %v1441 = vpop.trf.xlu0
    %v1442 = vpop.trf.xlu0
    %v1443 = vpop.trf.xlu0
    %v1444 = vpop.trf.xlu0
    %v1445 = vpop.trf.xlu0
    %1446 = vxpose.binary.xlu0.c.b16.start [1/16] %v354, %v353, 128
    %1447 = vxpose.binary.xlu0.c.b16.cont [2/16] %v358, %v357, 128
    %1448 = vxpose.binary.xlu0.c.b16.cont [3/16] %v362, %v361, 128
    %1449 = vxpose.binary.xlu0.c.b16.cont [4/16] %v366, %v365, 128
    %1450 = vxpose.binary.xlu0.c.b16.cont [5/16] %v370, %v369, 128
    %1451 = vxpose.binary.xlu0.c.b16.cont [6/16] %v374, %v373, 128
    %1452 = vxpose.binary.xlu0.c.b16.cont [7/16] %v378, %v377, 128
    %1453 = vxpose.binary.xlu0.c.b16.end [8/16] %v382, %v381, 128
    %v1454 = vpop.trf.xlu0
    %v1455 = vpop.trf.xlu0
    %v1456 = vpop.trf.xlu0
    %v1457 = vpop.trf.xlu0
    %v1458 = vpop.trf.xlu0
    %v1459 = vpop.trf.xlu0
    %v1460 = vpop.trf.xlu0
    %v1461 = vpop.trf.xlu0
    %v1462 = vpop.trf.xlu0
    %v1463 = vpop.trf.xlu0
    %v1464 = vpop.trf.xlu0
    %v1465 = vpop.trf.xlu0
    %v1466 = vpop.trf.xlu0
    %v1467 = vpop.trf.xlu0
    %v1468 = vpop.trf.xlu0
    %v1469 = vpop.trf.xlu0
    %1470 = vxpose.binary.xlu0.c.b16.start [1/16] %v384, %v383, 128
    %1471 = vxpose.binary.xlu0.c.b16.cont [2/16] %v388, %v387, 128
    %1472 = vxpose.binary.xlu0.c.b16.cont [3/16] %v392, %v391, 128
    %1473 = vxpose.binary.xlu0.c.b16.cont [4/16] %v396, %v395, 128
    %1474 = vxpose.binary.xlu0.c.b16.cont [5/16] %v400, %v399, 128
    %1475 = vxpose.binary.xlu0.c.b16.cont [6/16] %v404, %v403, 128
    %1476 = vxpose.binary.xlu0.c.b16.cont [7/16] %v408, %v407, 128
    %1477 = vxpose.binary.xlu0.c.b16.end [8/16] %v412, %v411, 128
    %v1478 = vpop.trf.xlu0
    %v1479 = vpop.trf.xlu0
    %v1480 = vpop.trf.xlu0
    %v1481 = vpop.trf.xlu0
    %v1482 = vpop.trf.xlu0
    %v1483 = vpop.trf.xlu0
    %v1484 = vpop.trf.xlu0
    %v1485 = vpop.trf.xlu0
    %v1486 = vpop.trf.xlu0
    %v1487 = vpop.trf.xlu0
    %v1488 = vpop.trf.xlu0
    %v1489 = vpop.trf.xlu0
    %v1490 = vpop.trf.xlu0
    %v1491 = vpop.trf.xlu0
    %v1492 = vpop.trf.xlu0
    %v1493 = vpop.trf.xlu0
    %1494 = vxpose.binary.xlu0.c.b16.start [1/16] %v386, %v385, 128
    %1495 = vxpose.binary.xlu0.c.b16.cont [2/16] %v390, %v389, 128
    %1496 = vxpose.binary.xlu0.c.b16.cont [3/16] %v394, %v393, 128
    %1497 = vxpose.binary.xlu0.c.b16.cont [4/16] %v398, %v397, 128
    %1498 = vxpose.binary.xlu0.c.b16.cont [5/16] %v402, %v401, 128
    %1499 = vxpose.binary.xlu0.c.b16.cont [6/16] %v406, %v405, 128
    %1500 = vxpose.binary.xlu0.c.b16.cont [7/16] %v410, %v409, 128
    %1501 = vxpose.binary.xlu0.c.b16.end [8/16] %v414, %v413, 128
    %v1502 = vpop.trf.xlu0
    %v1503 = vpop.trf.xlu0
    %v1504 = vpop.trf.xlu0
    %v1505 = vpop.trf.xlu0
    %v1506 = vpop.trf.xlu0
    %v1507 = vpop.trf.xlu0
    %v1508 = vpop.trf.xlu0
    %v1509 = vpop.trf.xlu0
    %v1510 = vpop.trf.xlu0
    %v1511 = vpop.trf.xlu0
    %v1512 = vpop.trf.xlu0
    %v1513 = vpop.trf.xlu0
    %v1514 = vpop.trf.xlu0
    %v1515 = vpop.trf.xlu0
    %v1516 = vpop.trf.xlu0
    %v1517 = vpop.trf.xlu0
    %v1550 = vunpack.c.l.b16 %v1390
    %v1551 = vunpack.c.l.b16 %v1391
    %v1552 = vunpack.c.l.b16 %v1392
    %v1553 = vunpack.c.l.b16 %v1393
    %v1554 = vunpack.c.l.b16 %v1394
    %v1555 = vunpack.c.l.b16 %v1395
    %v1556 = vunpack.c.l.b16 %v1396
    %v1557 = vunpack.c.l.b16 %v1397
    %v1558 = vunpack.c.l.b16 %v1398
    %v1559 = vunpack.c.l.b16 %v1399
    %v1560 = vunpack.c.l.b16 %v1400
    %v1561 = vunpack.c.l.b16 %v1401
    %v1562 = vunpack.c.l.b16 %v1402
    %v1563 = vunpack.c.l.b16 %v1403
    %v1564 = vunpack.c.l.b16 %v1404
    %v1565 = vunpack.c.l.b16 %v1405
    %v1566 = vunpack.c.l.b16 %v1406
    %v1567 = vunpack.c.l.b16 %v1407
    %v1568 = vunpack.c.l.b16 %v1408
    %v1569 = vunpack.c.l.b16 %v1409
    %v1570 = vunpack.c.l.b16 %v1410
    %v1571 = vunpack.c.l.b16 %v1411
    %v1572 = vunpack.c.l.b16 %v1412
    %v1573 = vunpack.c.l.b16 %v1413
    %v1574 = vunpack.c.l.b16 %v1414
    %v1575 = vunpack.c.l.b16 %v1415
    %v1576 = vunpack.c.l.b16 %v1416
    %v1577 = vunpack.c.l.b16 %v1417
    %v1578 = vunpack.c.l.b16 %v1418
    %v1579 = vunpack.c.l.b16 %v1419
    %v1580 = vunpack.c.l.b16 %v1420
    %v1581 = vunpack.c.l.b16 %v1421
    %v1582 = vpack.c.b16 %v1551, %v1550
    %v1583 = vpack.c.b16 %v1553, %v1552
    %v1584 = vpack.c.b16 %v1555, %v1554
    %v1585 = vpack.c.b16 %v1557, %v1556
    %v1586 = vpack.c.b16 %v1559, %v1558
    %v1587 = vpack.c.b16 %v1561, %v1560
    %v1588 = vpack.c.b16 %v1563, %v1562
    %v1589 = vpack.c.b16 %v1565, %v1564
    %v1590 = vpack.c.b16 %v1567, %v1566
    %v1591 = vpack.c.b16 %v1569, %v1568
    %v1592 = vpack.c.b16 %v1571, %v1570
    %v1593 = vpack.c.b16 %v1573, %v1572
    %v1594 = vpack.c.b16 %v1575, %v1574
    %v1595 = vpack.c.b16 %v1577, %v1576
    %v1596 = vpack.c.b16 %v1579, %v1578
    %v1597 = vpack.c.b16 %v1581, %v1580
    %1614 = vmatpush.bf16.msra.mxu0 %v1589
    %1615 = vmatpush.bf16.msra.mxu0 %v1588
    %1616 = vmatpush.bf16.msra.mxu0 %v1587
    %1617 = vmatpush.bf16.msra.mxu0 %v1586
    %1618 = vmatpush.bf16.msra.mxu0 %v1585
    %1619 = vmatpush.bf16.msra.mxu0 %v1584
    %1620 = vmatpush.bf16.msra.mxu0 %v1583
    %1621 = vmatpush.bf16.msra.mxu0 %v1582
    %1622 = vmatmul.bf16.gmra.mxu0 %v1430
    %v1623 = vpop.f32.mrf.mxu0
    %v1624 = vadd.f32 0.0, %v1623
    %v1625 = vpop.f32.mrf.mxu0
    %v1626 = vadd.f32 0.0, %v1625
    %1627 = vmatmul.bf16.gmra.mxu0 %v1432
    %v1628 = vpop.f32.mrf.mxu0
    %v1629 = vadd.f32 0.0, %v1628
    %v1630 = vpop.f32.mrf.mxu0
    %v1631 = vadd.f32 0.0, %v1630
    %1632 = vmatmul.bf16.gmra.mxu0 %v1434
    %v1633 = vpop.f32.mrf.mxu0
    %v1634 = vadd.f32 0.0, %v1633
    %v1635 = vpop.f32.mrf.mxu0
    %v1636 = vadd.f32 0.0, %v1635
    %1637 = vmatmul.bf16.gmra.mxu0 %v1436
    %v1638 = vpop.f32.mrf.mxu0
    %v1639 = vadd.f32 0.0, %v1638
    %v1640 = vpop.f32.mrf.mxu0
    %v1641 = vadd.f32 0.0, %v1640
    %1642 = vmatmul.bf16.gmra.mxu0 %v1438
    %v1643 = vpop.f32.mrf.mxu0
    %v1644 = vadd.f32 0.0, %v1643
    %v1645 = vpop.f32.mrf.mxu0
    %v1646 = vadd.f32 0.0, %v1645
    %1647 = vmatmul.bf16.gmra.mxu0 %v1440
    %v1648 = vpop.f32.mrf.mxu0
    %v1649 = vadd.f32 0.0, %v1648
    %v1650 = vpop.f32.mrf.mxu0
    %v1651 = vadd.f32 0.0, %v1650
    %1652 = vmatmul.bf16.gmra.mxu0 %v1442
    %v1653 = vpop.f32.mrf.mxu0
    %v1654 = vadd.f32 0.0, %v1653
    %v1655 = vpop.f32.mrf.mxu0
    %v1656 = vadd.f32 0.0, %v1655
    %1657 = vmatmul.bf16.gmra.mxu0 %v1444
    %v1658 = vpop.f32.mrf.mxu0
    %v1659 = vadd.f32 0.0, %v1658
    %v1660 = vpop.f32.mrf.mxu0
    %v1661 = vadd.f32 0.0, %v1660
    %1662 = vmatmul.bf16.gmra.mxu0 %v1431
    %v1663 = vpop.f32.mrf.mxu0
    %v1664 = vadd.f32 0.0, %v1663
    %v1665 = vpop.f32.mrf.mxu0
    %v1666 = vadd.f32 0.0, %v1665
    %1667 = vmatmul.bf16.gmra.mxu0 %v1433
    %v1668 = vpop.f32.mrf.mxu0
    %v1669 = vadd.f32 0.0, %v1668
    %v1670 = vpop.f32.mrf.mxu0
    %v1671 = vadd.f32 0.0, %v1670
    %1672 = vmatmul.bf16.gmra.mxu0 %v1435
    %v1673 = vpop.f32.mrf.mxu0
    %v1674 = vadd.f32 0.0, %v1673
    %v1675 = vpop.f32.mrf.mxu0
    %v1676 = vadd.f32 0.0, %v1675
    %1677 = vmatmul.bf16.gmra.mxu0 %v1437
    %v1678 = vpop.f32.mrf.mxu0
    %v1679 = vadd.f32 0.0, %v1678
    %v1680 = vpop.f32.mrf.mxu0
    %v1681 = vadd.f32 0.0, %v1680
    %1682 = vmatmul.bf16.gmra.mxu0 %v1439
    %v1683 = vpop.f32.mrf.mxu0
    %v1684 = vadd.f32 0.0, %v1683
    %v1685 = vpop.f32.mrf.mxu0
    %v1686 = vadd.f32 0.0, %v1685
    %1687 = vmatmul.bf16.gmra.mxu0 %v1441
    %v1688 = vpop.f32.mrf.mxu0
    %v1689 = vadd.f32 0.0, %v1688
    %v1690 = vpop.f32.mrf.mxu0
    %v1691 = vadd.f32 0.0, %v1690
    %1692 = vmatmul.bf16.gmra.mxu0 %v1443
    %v1693 = vpop.f32.mrf.mxu0
    %v1694 = vadd.f32 0.0, %v1693
    %v1695 = vpop.f32.mrf.mxu0
    %v1696 = vadd.f32 0.0, %v1695
    %1697 = vmatmul.bf16.gmra.mxu0 %v1445
    %v1698 = vpop.f32.mrf.mxu0
    %v1699 = vadd.f32 0.0, %v1698
    %v1700 = vpop.f32.mrf.mxu0
    %v1701 = vadd.f32 0.0, %v1700
    %1702 = vmatmul.bf16.gmra.mxu0 %v1454
    %v1703 = vpop.f32.mrf.mxu0
    %v1704 = vadd.f32 0.0, %v1703
    %v1705 = vpop.f32.mrf.mxu0
    %v1706 = vadd.f32 0.0, %v1705
    %1707 = vmatmul.bf16.gmra.mxu0 %v1456
    %v1708 = vpop.f32.mrf.mxu0
    %v1709 = vadd.f32 0.0, %v1708
    %v1710 = vpop.f32.mrf.mxu0
    %v1711 = vadd.f32 0.0, %v1710
    %1712 = vmatmul.bf16.gmra.mxu0 %v1458
    %v1713 = vpop.f32.mrf.mxu0
    %v1714 = vadd.f32 0.0, %v1713
    %v1715 = vpop.f32.mrf.mxu0
    %v1716 = vadd.f32 0.0, %v1715
    %1717 = vmatmul.bf16.gmra.mxu0 %v1460
    %v1718 = vpop.f32.mrf.mxu0
    %v1719 = vadd.f32 0.0, %v1718
    %v1720 = vpop.f32.mrf.mxu0
    %v1721 = vadd.f32 0.0, %v1720
    %1722 = vmatmul.bf16.gmra.mxu0 %v1462
    %v1723 = vpop.f32.mrf.mxu0
    %v1724 = vadd.f32 0.0, %v1723
    %v1725 = vpop.f32.mrf.mxu0
    %v1726 = vadd.f32 0.0, %v1725
    %1727 = vmatmul.bf16.gmra.mxu0 %v1464
    %v1728 = vpop.f32.mrf.mxu0
    %v1729 = vadd.f32 0.0, %v1728
    %v1730 = vpop.f32.mrf.mxu0
    %v1731 = vadd.f32 0.0, %v1730
    %1732 = vmatmul.bf16.gmra.mxu0 %v1466
    %v1733 = vpop.f32.mrf.mxu0
    %v1734 = vadd.f32 0.0, %v1733
    %v1735 = vpop.f32.mrf.mxu0
    %v1736 = vadd.f32 0.0, %v1735
    %1737 = vmatmul.bf16.gmra.mxu0 %v1468
    %v1738 = vpop.f32.mrf.mxu0
    %v1739 = vadd.f32 0.0, %v1738
    %v1740 = vpop.f32.mrf.mxu0
    %v1741 = vadd.f32 0.0, %v1740
    %1742 = vmatmul.bf16.gmra.mxu0 %v1455
    %v1743 = vpop.f32.mrf.mxu0
    %v1744 = vadd.f32 0.0, %v1743
    %v1745 = vpop.f32.mrf.mxu0
    %v1746 = vadd.f32 0.0, %v1745
    %1747 = vmatmul.bf16.gmra.mxu0 %v1457
    %v1748 = vpop.f32.mrf.mxu0
    %v1749 = vadd.f32 0.0, %v1748
    %v1750 = vpop.f32.mrf.mxu0
    %v1751 = vadd.f32 0.0, %v1750
    %1752 = vmatmul.bf16.gmra.mxu0 %v1459
    %v1753 = vpop.f32.mrf.mxu0
    %v1754 = vadd.f32 0.0, %v1753
    %v1755 = vpop.f32.mrf.mxu0
    %v1756 = vadd.f32 0.0, %v1755
    %1757 = vmatmul.bf16.gmra.mxu0 %v1461
    %v1758 = vpop.f32.mrf.mxu0
    %v1759 = vadd.f32 0.0, %v1758
    %v1760 = vpop.f32.mrf.mxu0
    %v1761 = vadd.f32 0.0, %v1760
    %1762 = vmatmul.bf16.gmra.mxu0 %v1463
    %v1763 = vpop.f32.mrf.mxu0
    %v1764 = vadd.f32 0.0, %v1763
    %v1765 = vpop.f32.mrf.mxu0
    %v1766 = vadd.f32 0.0, %v1765
    %1767 = vmatmul.bf16.gmra.mxu0 %v1465
    %v1768 = vpop.f32.mrf.mxu0
    %v1769 = vadd.f32 0.0, %v1768
    %v1770 = vpop.f32.mrf.mxu0
    %v1771 = vadd.f32 0.0, %v1770
    %1772 = vmatmul.bf16.gmra.mxu0 %v1467
    %v1773 = vpop.f32.mrf.mxu0
    %v1774 = vadd.f32 0.0, %v1773
    %v1775 = vpop.f32.mrf.mxu0
    %v1776 = vadd.f32 0.0, %v1775
    %1777 = vmatmul.bf16.gmra.mxu0 %v1469
    %v1778 = vpop.f32.mrf.mxu0
    %v1779 = vadd.f32 0.0, %v1778
    %v1780 = vpop.f32.mrf.mxu0
    %v1781 = vadd.f32 0.0, %v1780
    %1782 = vdwg.mxu0
    %1783 = vmatpush.bf16.msra.mxu0 %v1597
    %1784 = vmatpush.bf16.msra.mxu0 %v1596
    %1785 = vmatpush.bf16.msra.mxu0 %v1595
    %1786 = vmatpush.bf16.msra.mxu0 %v1594
    %1787 = vmatpush.bf16.msra.mxu0 %v1593
    %1788 = vmatpush.bf16.msra.mxu0 %v1592
    %1789 = vmatpush.bf16.msra.mxu0 %v1591
    %1790 = vmatpush.bf16.msra.mxu0 %v1590
    %1791 = vmatmul.bf16.gmra.mxu0 %v1478
    %v1792 = vpop.f32.mrf.mxu0
    %v1793 = vadd.f32 %v1624, %v1792
    %v1794 = vpop.f32.mrf.mxu0
    %v1795 = vadd.f32 %v1626, %v1794
    %1796 = vmatmul.bf16.gmra.mxu0 %v1480
    %v1797 = vpop.f32.mrf.mxu0
    %v1798 = vadd.f32 %v1629, %v1797
    %v1799 = vpop.f32.mrf.mxu0
    %v1800 = vadd.f32 %v1631, %v1799
    %1801 = vmatmul.bf16.gmra.mxu0 %v1482
    %v1802 = vpop.f32.mrf.mxu0
    %v1803 = vadd.f32 %v1634, %v1802
    %v1804 = vpop.f32.mrf.mxu0
    %v1805 = vadd.f32 %v1636, %v1804
    %1806 = vmatmul.bf16.gmra.mxu0 %v1484
    %v1807 = vpop.f32.mrf.mxu0
    %v1808 = vadd.f32 %v1639, %v1807
    %v1809 = vpop.f32.mrf.mxu0
    %v1810 = vadd.f32 %v1641, %v1809
    %1811 = vmatmul.bf16.gmra.mxu0 %v1486
    %v1812 = vpop.f32.mrf.mxu0
    %v1813 = vadd.f32 %v1644, %v1812
    %v1814 = vpop.f32.mrf.mxu0
    %v1815 = vadd.f32 %v1646, %v1814
    %1816 = vmatmul.bf16.gmra.mxu0 %v1488
    %v1817 = vpop.f32.mrf.mxu0
    %v1818 = vadd.f32 %v1649, %v1817
    %v1819 = vpop.f32.mrf.mxu0
    %v1820 = vadd.f32 %v1651, %v1819
    %1821 = vmatmul.bf16.gmra.mxu0 %v1490
    %v1822 = vpop.f32.mrf.mxu0
    %v1823 = vadd.f32 %v1654, %v1822
    %v1824 = vpop.f32.mrf.mxu0
    %v1825 = vadd.f32 %v1656, %v1824
    %1826 = vmatmul.bf16.gmra.mxu0 %v1492
    %v1827 = vpop.f32.mrf.mxu0
    %v1828 = vadd.f32 %v1659, %v1827
    %v1829 = vpop.f32.mrf.mxu0
    %v1830 = vadd.f32 %v1661, %v1829
    %1831 = vmatmul.bf16.gmra.mxu0 %v1479
    %v1832 = vpop.f32.mrf.mxu0
    %v1833 = vadd.f32 %v1664, %v1832
    %v1834 = vpop.f32.mrf.mxu0
    %v1835 = vadd.f32 %v1666, %v1834
    %1836 = vmatmul.bf16.gmra.mxu0 %v1481
    %v1837 = vpop.f32.mrf.mxu0
    %v1838 = vadd.f32 %v1669, %v1837
    %v1839 = vpop.f32.mrf.mxu0
    %v1840 = vadd.f32 %v1671, %v1839
    %1841 = vmatmul.bf16.gmra.mxu0 %v1483
    %v1842 = vpop.f32.mrf.mxu0
    %v1843 = vadd.f32 %v1674, %v1842
    %v1844 = vpop.f32.mrf.mxu0
    %v1845 = vadd.f32 %v1676, %v1844
    %1846 = vmatmul.bf16.gmra.mxu0 %v1485
    %v1847 = vpop.f32.mrf.mxu0
    %v1848 = vadd.f32 %v1679, %v1847
    %v1849 = vpop.f32.mrf.mxu0
    %v1850 = vadd.f32 %v1681, %v1849
    %1851 = vmatmul.bf16.gmra.mxu0 %v1487
    %v1852 = vpop.f32.mrf.mxu0
    %v1853 = vadd.f32 %v1684, %v1852
    %v1854 = vpop.f32.mrf.mxu0
    %v1855 = vadd.f32 %v1686, %v1854
    %1856 = vmatmul.bf16.gmra.mxu0 %v1489
    %v1857 = vpop.f32.mrf.mxu0
    %v1858 = vadd.f32 %v1689, %v1857
    %v1859 = vpop.f32.mrf.mxu0
    %v1860 = vadd.f32 %v1691, %v1859
    %1861 = vmatmul.bf16.gmra.mxu0 %v1491
    %v1862 = vpop.f32.mrf.mxu0
    %v1863 = vadd.f32 %v1694, %v1862
    %v1864 = vpop.f32.mrf.mxu0
    %v1865 = vadd.f32 %v1696, %v1864
    %1866 = vmatmul.bf16.gmra.mxu0 %v1493
    %v1867 = vpop.f32.mrf.mxu0
    %v1868 = vadd.f32 %v1699, %v1867
    %v1869 = vpop.f32.mrf.mxu0
    %v1870 = vadd.f32 %v1701, %v1869
    %1871 = vmatmul.bf16.gmra.mxu0 %v1502
    %v1872 = vpop.f32.mrf.mxu0
    %v1873 = vadd.f32 %v1704, %v1872
    %v1874 = vpop.f32.mrf.mxu0
    %v1875 = vadd.f32 %v1706, %v1874
    %1876 = vmatmul.bf16.gmra.mxu0 %v1504
    %v1877 = vpop.f32.mrf.mxu0
    %v1878 = vadd.f32 %v1709, %v1877
    %v1879 = vpop.f32.mrf.mxu0
    %v1880 = vadd.f32 %v1711, %v1879
    %1881 = vmatmul.bf16.gmra.mxu0 %v1506
    %v1882 = vpop.f32.mrf.mxu0
    %v1883 = vadd.f32 %v1714, %v1882
    %v1884 = vpop.f32.mrf.mxu0
    %v1885 = vadd.f32 %v1716, %v1884
    %1886 = vmatmul.bf16.gmra.mxu0 %v1508
    %v1887 = vpop.f32.mrf.mxu0
    %v1888 = vadd.f32 %v1719, %v1887
    %v1889 = vpop.f32.mrf.mxu0
    %v1890 = vadd.f32 %v1721, %v1889
    %1891 = vmatmul.bf16.gmra.mxu0 %v1510
    %v1892 = vpop.f32.mrf.mxu0
    %v1893 = vadd.f32 %v1724, %v1892
    %v1894 = vpop.f32.mrf.mxu0
    %v1895 = vadd.f32 %v1726, %v1894
    %1896 = vmatmul.bf16.gmra.mxu0 %v1512
    %v1897 = vpop.f32.mrf.mxu0
    %v1898 = vadd.f32 %v1729, %v1897
    %v1899 = vpop.f32.mrf.mxu0
    %v1900 = vadd.f32 %v1731, %v1899
    %1901 = vmatmul.bf16.gmra.mxu0 %v1514
    %v1902 = vpop.f32.mrf.mxu0
    %v1903 = vadd.f32 %v1734, %v1902
    %v1904 = vpop.f32.mrf.mxu0
    %v1905 = vadd.f32 %v1736, %v1904
    %1906 = vmatmul.bf16.gmra.mxu0 %v1516
    %v1907 = vpop.f32.mrf.mxu0
    %v1908 = vadd.f32 %v1739, %v1907
    %v1909 = vpop.f32.mrf.mxu0
    %v1910 = vadd.f32 %v1741, %v1909
    %1911 = vmatmul.bf16.gmra.mxu0 %v1503
    %v1912 = vpop.f32.mrf.mxu0
    %v1913 = vadd.f32 %v1744, %v1912
    %v1914 = vpop.f32.mrf.mxu0
    %v1915 = vadd.f32 %v1746, %v1914
    %1916 = vmatmul.bf16.gmra.mxu0 %v1505
    %v1917 = vpop.f32.mrf.mxu0
    %v1918 = vadd.f32 %v1749, %v1917
    %v1919 = vpop.f32.mrf.mxu0
    %v1920 = vadd.f32 %v1751, %v1919
    %1921 = vmatmul.bf16.gmra.mxu0 %v1507
    %v1922 = vpop.f32.mrf.mxu0
    %v1923 = vadd.f32 %v1754, %v1922
    %v1924 = vpop.f32.mrf.mxu0
    %v1925 = vadd.f32 %v1756, %v1924
    %1926 = vmatmul.bf16.gmra.mxu0 %v1509
    %v1927 = vpop.f32.mrf.mxu0
    %v1928 = vadd.f32 %v1759, %v1927
    %v1929 = vpop.f32.mrf.mxu0
    %v1930 = vadd.f32 %v1761, %v1929
    %1931 = vmatmul.bf16.gmra.mxu0 %v1511
    %v1932 = vpop.f32.mrf.mxu0
    %v1933 = vadd.f32 %v1764, %v1932
    %v1934 = vpop.f32.mrf.mxu0
    %v1935 = vadd.f32 %v1766, %v1934
    %1936 = vmatmul.bf16.gmra.mxu0 %v1513
    %v1937 = vpop.f32.mrf.mxu0
    %v1938 = vadd.f32 %v1769, %v1937
    %v1939 = vpop.f32.mrf.mxu0
    %v1940 = vadd.f32 %v1771, %v1939
    %1941 = vmatmul.bf16.gmra.mxu0 %v1515
    %v1942 = vpop.f32.mrf.mxu0
    %v1943 = vadd.f32 %v1774, %v1942
    %v1944 = vpop.f32.mrf.mxu0
    %v1945 = vadd.f32 %v1776, %v1944
    %1946 = vmatmul.bf16.gmra.mxu0 %v1517
    %v1947 = vpop.f32.mrf.mxu0
    %v1948 = vadd.f32 %v1779, %v1947
    %v1949 = vpop.f32.mrf.mxu0
    %v1950 = vadd.f32 %v1781, %v1949
    %1951 = vdwg.mxu0
    %p1952 = scmp.eq.s32.totalorder 0, 0
    // Predicated region
    $region34: #{lightgcn_forward.4} parent=1 // pred_check
      %p1953 = pneg %p1952
    $region35: #{lightgcn_forward.4} parent=1 // pred_check_branch
      %1955 = sbr.rel (%p1953) target = $region37
    $region36: #{lightgcn_forward.4} parent=1 // pred_region
      %s1956 = scalar_lea.vmem %s4, %s90
      %v1957 = vld [vmem:[%s1956] sm:$0xff]
      %v1958 = vld [vmem:[%s1956 + $0x8] sm:$0xff]
      %v1959 = vld [vmem:[%s1956 + $0x10] sm:$0xff]
      %v1960 = vld [vmem:[%s1956 + $0x18] sm:$0xff]
      %v1961 = vld [vmem:[%s1956 + $0x20] sm:$0xff]
      %v1962 = vld [vmem:[%s1956 + $0x28] sm:$0xff]
      %v1963 = vld [vmem:[%s1956 + $0x30] sm:$0xff]
      %v1964 = vld [vmem:[%s1956 + $0x38] sm:$0xff]
      %v1965 = vld [vmem:[%s1956 + $0x40] sm:$0xff]
      %v1966 = vld [vmem:[%s1956 + $0x48] sm:$0xff]
      %v1967 = vld [vmem:[%s1956 + $0x50] sm:$0xff]
      %v1968 = vld [vmem:[%s1956 + $0x58] sm:$0xff]
      %v1969 = vld [vmem:[%s1956 + $0x60] sm:$0xff]
      %v1970 = vld [vmem:[%s1956 + $0x68] sm:$0xff]
      %v1971 = vld [vmem:[%s1956 + $0x70] sm:$0xff]
      %v1972 = vld [vmem:[%s1956 + $0x78] sm:$0xff]
      %v1973 = vld [vmem:[%s1956 + $0x80] sm:$0xff]
      %v1974 = vld [vmem:[%s1956 + $0x88] sm:$0xff]
      %v1975 = vld [vmem:[%s1956 + $0x90] sm:$0xff]
      %v1976 = vld [vmem:[%s1956 + $0x98] sm:$0xff]
      %v1977 = vld [vmem:[%s1956 + $0xa0] sm:$0xff]
      %v1978 = vld [vmem:[%s1956 + $0xa8] sm:$0xff]
      %v1979 = vld [vmem:[%s1956 + $0xb0] sm:$0xff]
      %v1980 = vld [vmem:[%s1956 + $0xb8] sm:$0xff]
      %v1981 = vld [vmem:[%s1956 + $0xc0] sm:$0xff]
      %v1982 = vld [vmem:[%s1956 + $0xc8] sm:$0xff]
      %v1983 = vld [vmem:[%s1956 + $0xd0] sm:$0xff]
      %v1984 = vld [vmem:[%s1956 + $0xd8] sm:$0xff]
      %v1985 = vld [vmem:[%s1956 + $0xe0] sm:$0xff]
      %v1986 = vld [vmem:[%s1956 + $0xe8] sm:$0xff]
      %v1987 = vld [vmem:[%s1956 + $0xf0] sm:$0xff]
      %v1988 = vld [vmem:[%s1956 + $0xf8] sm:$0xff]
      %v1989 = vld [vmem:[%s1956 + $0x100] sm:$0xff]
      %v1990 = vld [vmem:[%s1956 + $0x108] sm:$0xff]
      %v1991 = vld [vmem:[%s1956 + $0x110] sm:$0xff]
      %v1992 = vld [vmem:[%s1956 + $0x118] sm:$0xff]
      %v1993 = vld [vmem:[%s1956 + $0x120] sm:$0xff]
      %v1994 = vld [vmem:[%s1956 + $0x128] sm:$0xff]
      %v1995 = vld [vmem:[%s1956 + $0x130] sm:$0xff]
      %v1996 = vld [vmem:[%s1956 + $0x138] sm:$0xff]
      %v1997 = vld [vmem:[%s1956 + $0x140] sm:$0xff]
      %v1998 = vld [vmem:[%s1956 + $0x148] sm:$0xff]
      %v1999 = vld [vmem:[%s1956 + $0x150] sm:$0xff]
      %v2000 = vld [vmem:[%s1956 + $0x158] sm:$0xff]
      %v2001 = vld [vmem:[%s1956 + $0x160] sm:$0xff]
      %v2002 = vld [vmem:[%s1956 + $0x168] sm:$0xff]
      %v2003 = vld [vmem:[%s1956 + $0x170] sm:$0xff]
      %v2004 = vld [vmem:[%s1956 + $0x178] sm:$0xff]
      %v2005 = vld [vmem:[%s1956 + $0x180] sm:$0xff]
      %v2006 = vld [vmem:[%s1956 + $0x188] sm:$0xff]
      %v2007 = vld [vmem:[%s1956 + $0x190] sm:$0xff]
      %v2008 = vld [vmem:[%s1956 + $0x198] sm:$0xff]
      %v2009 = vld [vmem:[%s1956 + $0x1a0] sm:$0xff]
      %v2010 = vld [vmem:[%s1956 + $0x1a8] sm:$0xff]
      %v2011 = vld [vmem:[%s1956 + $0x1b0] sm:$0xff]
      %v2012 = vld [vmem:[%s1956 + $0x1b8] sm:$0xff]
      %v2013 = vld [vmem:[%s1956 + $0x1c0] sm:$0xff]
      %v2014 = vld [vmem:[%s1956 + $0x1c8] sm:$0xff]
      %v2015 = vld [vmem:[%s1956 + $0x1d0] sm:$0xff]
      %v2016 = vld [vmem:[%s1956 + $0x1d8] sm:$0xff]
      %v2017 = vld [vmem:[%s1956 + $0x1e0] sm:$0xff]
      %v2018 = vld [vmem:[%s1956 + $0x1e8] sm:$0xff]
      %v2019 = vld [vmem:[%s1956 + $0x1f0] sm:$0xff]
      %v2020 = vld [vmem:[%s1956 + $0x1f8] sm:$0xff]
      %v2021 = vadd.f32 %v1957, %v1793
      %v2022 = vadd.f32 %v1958, %v1795
      %v2023 = vadd.f32 %v1959, %v1798
      %v2024 = vadd.f32 %v1960, %v1800
      %v2025 = vadd.f32 %v1961, %v1803
      %v2026 = vadd.f32 %v1962, %v1805
      %v2027 = vadd.f32 %v1963, %v1808
      %v2028 = vadd.f32 %v1964, %v1810
      %v2029 = vadd.f32 %v1965, %v1813
      %v2030 = vadd.f32 %v1966, %v1815
      %v2031 = vadd.f32 %v1967, %v1818
      %v2032 = vadd.f32 %v1968, %v1820
      %v2033 = vadd.f32 %v1969, %v1823
      %v2034 = vadd.f32 %v1970, %v1825
      %v2035 = vadd.f32 %v1971, %v1828
      %v2036 = vadd.f32 %v1972, %v1830
      %v2037 = vadd.f32 %v1973, %v1833
      %v2038 = vadd.f32 %v1974, %v1835
      %v2039 = vadd.f32 %v1975, %v1838
      %v2040 = vadd.f32 %v1976, %v1840
      %v2041 = vadd.f32 %v1977, %v1843
      %v2042 = vadd.f32 %v1978, %v1845
      %v2043 = vadd.f32 %v1979, %v1848
      %v2044 = vadd.f32 %v1980, %v1850
      %v2045 = vadd.f32 %v1981, %v1853
      %v2046 = vadd.f32 %v1982, %v1855
      %v2047 = vadd.f32 %v1983, %v1858
      %v2048 = vadd.f32 %v1984, %v1860
      %v2049 = vadd.f32 %v1985, %v1863
      %v2050 = vadd.f32 %v1986, %v1865
      %v2051 = vadd.f32 %v1987, %v1868
      %v2052 = vadd.f32 %v1988, %v1870
      %v2053 = vadd.f32 %v1989, %v1873
      %v2054 = vadd.f32 %v1990, %v1875
      %v2055 = vadd.f32 %v1991, %v1878
      %v2056 = vadd.f32 %v1992, %v1880
      %v2057 = vadd.f32 %v1993, %v1883
      %v2058 = vadd.f32 %v1994, %v1885
      %v2059 = vadd.f32 %v1995, %v1888
      %v2060 = vadd.f32 %v1996, %v1890
      %v2061 = vadd.f32 %v1997, %v1893
      %v2062 = vadd.f32 %v1998, %v1895
      %v2063 = vadd.f32 %v1999, %v1898
      %v2064 = vadd.f32 %v2000, %v1900
      %v2065 = vadd.f32 %v2001, %v1903
      %v2066 = vadd.f32 %v2002, %v1905
      %v2067 = vadd.f32 %v2003, %v1908
      %v2068 = vadd.f32 %v2004, %v1910
      %v2069 = vadd.f32 %v2005, %v1913
      %v2070 = vadd.f32 %v2006, %v1915
      %v2071 = vadd.f32 %v2007, %v1918
      %v2072 = vadd.f32 %v2008, %v1920
      %v2073 = vadd.f32 %v2009, %v1923
      %v2074 = vadd.f32 %v2010, %v1925
      %v2075 = vadd.f32 %v2011, %v1928
      %v2076 = vadd.f32 %v2012, %v1930
      %v2077 = vadd.f32 %v2013, %v1933
      %v2078 = vadd.f32 %v2014, %v1935
      %v2079 = vadd.f32 %v2015, %v1938
      %v2080 = vadd.f32 %v2016, %v1940
      %v2081 = vadd.f32 %v2017, %v1943
      %v2082 = vadd.f32 %v2018, %v1945
      %v2083 = vadd.f32 %v2019, %v1948
      %v2084 = vadd.f32 %v2020, %v1950
      %s2085 = scalar_lea.vmem %s8, %s90
      %2086 = vst [vmem:[%s2085] sm:$0xff] %v2021
      %2087 = vst [vmem:[%s2085 + $0x8] sm:$0xff] %v2022
      %2088 = vst [vmem:[%s2085 + $0x10] sm:$0xff] %v2023
      %2089 = vst [vmem:[%s2085 + $0x18] sm:$0xff] %v2024
      %2090 = vst [vmem:[%s2085 + $0x20] sm:$0xff] %v2025
      %2091 = vst [vmem:[%s2085 + $0x28] sm:$0xff] %v2026
      %2092 = vst [vmem:[%s2085 + $0x30] sm:$0xff] %v2027
      %2093 = vst [vmem:[%s2085 + $0x38] sm:$0xff] %v2028
      %2094 = vst [vmem:[%s2085 + $0x40] sm:$0xff] %v2029
      %2095 = vst [vmem:[%s2085 + $0x48] sm:$0xff] %v2030
      %2096 = vst [vmem:[%s2085 + $0x50] sm:$0xff] %v2031
      %2097 = vst [vmem:[%s2085 + $0x58] sm:$0xff] %v2032
      %2098 = vst [vmem:[%s2085 + $0x60] sm:$0xff] %v2033
      %2099 = vst [vmem:[%s2085 + $0x68] sm:$0xff] %v2034
      %2100 = vst [vmem:[%s2085 + $0x70] sm:$0xff] %v2035
      %2101 = vst [vmem:[%s2085 + $0x78] sm:$0xff] %v2036
      %2102 = vst [vmem:[%s2085 + $0x80] sm:$0xff] %v2037
      %2103 = vst [vmem:[%s2085 + $0x88] sm:$0xff] %v2038
      %2104 = vst [vmem:[%s2085 + $0x90] sm:$0xff] %v2039
      %2105 = vst [vmem:[%s2085 + $0x98] sm:$0xff] %v2040
      %2106 = vst [vmem:[%s2085 + $0xa0] sm:$0xff] %v2041
      %2107 = vst [vmem:[%s2085 + $0xa8] sm:$0xff] %v2042
      %2108 = vst [vmem:[%s2085 + $0xb0] sm:$0xff] %v2043
      %2109 = vst [vmem:[%s2085 + $0xb8] sm:$0xff] %v2044
      %2110 = vst [vmem:[%s2085 + $0xc0] sm:$0xff] %v2045
      %2111 = vst [vmem:[%s2085 + $0xc8] sm:$0xff] %v2046
      %2112 = vst [vmem:[%s2085 + $0xd0] sm:$0xff] %v2047
      %2113 = vst [vmem:[%s2085 + $0xd8] sm:$0xff] %v2048
      %2114 = vst [vmem:[%s2085 + $0xe0] sm:$0xff] %v2049
      %2115 = vst [vmem:[%s2085 + $0xe8] sm:$0xff] %v2050
      %2116 = vst [vmem:[%s2085 + $0xf0] sm:$0xff] %v2051
      %2117 = vst [vmem:[%s2085 + $0xf8] sm:$0xff] %v2052
      %2118 = vst [vmem:[%s2085 + $0x100] sm:$0xff] %v2053
      %2119 = vst [vmem:[%s2085 + $0x108] sm:$0xff] %v2054
      %2120 = vst [vmem:[%s2085 + $0x110] sm:$0xff] %v2055
      %2121 = vst [vmem:[%s2085 + $0x118] sm:$0xff] %v2056
      %2122 = vst [vmem:[%s2085 + $0x120] sm:$0xff] %v2057
      %2123 = vst [vmem:[%s2085 + $0x128] sm:$0xff] %v2058
      %2124 = vst [vmem:[%s2085 + $0x130] sm:$0xff] %v2059
      %2125 = vst [vmem:[%s2085 + $0x138] sm:$0xff] %v2060
      %2126 = vst [vmem:[%s2085 + $0x140] sm:$0xff] %v2061
      %2127 = vst [vmem:[%s2085 + $0x148] sm:$0xff] %v2062
      %2128 = vst [vmem:[%s2085 + $0x150] sm:$0xff] %v2063
      %2129 = vst [vmem:[%s2085 + $0x158] sm:$0xff] %v2064
      %2130 = vst [vmem:[%s2085 + $0x160] sm:$0xff] %v2065
      %2131 = vst [vmem:[%s2085 + $0x168] sm:$0xff] %v2066
      %2132 = vst [vmem:[%s2085 + $0x170] sm:$0xff] %v2067
      %2133 = vst [vmem:[%s2085 + $0x178] sm:$0xff] %v2068
      %2134 = vst [vmem:[%s2085 + $0x180] sm:$0xff] %v2069
      %2135 = vst [vmem:[%s2085 + $0x188] sm:$0xff] %v2070
      %2136 = vst [vmem:[%s2085 + $0x190] sm:$0xff] %v2071
      %2137 = vst [vmem:[%s2085 + $0x198] sm:$0xff] %v2072
      %2138 = vst [vmem:[%s2085 + $0x1a0] sm:$0xff] %v2073
      %2139 = vst [vmem:[%s2085 + $0x1a8] sm:$0xff] %v2074
      %2140 = vst [vmem:[%s2085 + $0x1b0] sm:$0xff] %v2075
      %2141 = vst [vmem:[%s2085 + $0x1b8] sm:$0xff] %v2076
      %2142 = vst [vmem:[%s2085 + $0x1c0] sm:$0xff] %v2077
      %2143 = vst [vmem:[%s2085 + $0x1c8] sm:$0xff] %v2078
      %2144 = vst [vmem:[%s2085 + $0x1d0] sm:$0xff] %v2079
      %2145 = vst [vmem:[%s2085 + $0x1d8] sm:$0xff] %v2080
      %2146 = vst [vmem:[%s2085 + $0x1e0] sm:$0xff] %v2081
      %2147 = vst [vmem:[%s2085 + $0x1e8] sm:$0xff] %v2082
      %2148 = vst [vmem:[%s2085 + $0x1f0] sm:$0xff] %v2083
      %2149 = vst [vmem:[%s2085 + $0x1f8] sm:$0xff] %v2084
    $region37: #{lightgcn_forward.4} parent=1 // pred_fallthru
      _
    %p2150 = scmp.ne.s32.totalorder 0, 0
    // Predicated region
    $region38: #{lightgcn_forward.4} parent=1 // pred_check
      %p2151 = pneg %p2150
    $region39: #{lightgcn_forward.4} parent=1 // pred_check_branch
      %2153 = sbr.rel (%p2151) target = $region41
    $region40: #{lightgcn_forward.4} parent=1 // pred_region
      %s2154 = scalar_lea.vmem %s8, %s90
      %v2155 = vld [vmem:[%s2154] sm:$0xff]
      %v2156 = vld [vmem:[%s2154 + $0x8] sm:$0xff]
      %v2157 = vld [vmem:[%s2154 + $0x10] sm:$0xff]
      %v2158 = vld [vmem:[%s2154 + $0x18] sm:$0xff]
      %v2159 = vld [vmem:[%s2154 + $0x20] sm:$0xff]
      %v2160 = vld [vmem:[%s2154 + $0x28] sm:$0xff]
      %v2161 = vld [vmem:[%s2154 + $0x30] sm:$0xff]
      %v2162 = vld [vmem:[%s2154 + $0x38] sm:$0xff]
      %v2163 = vld [vmem:[%s2154 + $0x40] sm:$0xff]
      %v2164 = vld [vmem:[%s2154 + $0x48] sm:$0xff]
      %v2165 = vld [vmem:[%s2154 + $0x50] sm:$0xff]
      %v2166 = vld [vmem:[%s2154 + $0x58] sm:$0xff]
      %v2167 = vld [vmem:[%s2154 + $0x60] sm:$0xff]
      %v2168 = vld [vmem:[%s2154 + $0x68] sm:$0xff]
      %v2169 = vld [vmem:[%s2154 + $0x70] sm:$0xff]
      %v2170 = vld [vmem:[%s2154 + $0x78] sm:$0xff]
      %v2171 = vld [vmem:[%s2154 + $0x80] sm:$0xff]
      %v2172 = vld [vmem:[%s2154 + $0x88] sm:$0xff]
      %v2173 = vld [vmem:[%s2154 + $0x90] sm:$0xff]
      %v2174 = vld [vmem:[%s2154 + $0x98] sm:$0xff]
      %v2175 = vld [vmem:[%s2154 + $0xa0] sm:$0xff]
      %v2176 = vld [vmem:[%s2154 + $0xa8] sm:$0xff]
      %v2177 = vld [vmem:[%s2154 + $0xb0] sm:$0xff]
      %v2178 = vld [vmem:[%s2154 + $0xb8] sm:$0xff]
      %v2179 = vld [vmem:[%s2154 + $0xc0] sm:$0xff]
      %v2180 = vld [vmem:[%s2154 + $0xc8] sm:$0xff]
      %v2181 = vld [vmem:[%s2154 + $0xd0] sm:$0xff]
      %v2182 = vld [vmem:[%s2154 + $0xd8] sm:$0xff]
      %v2183 = vld [vmem:[%s2154 + $0xe0] sm:$0xff]
      %v2184 = vld [vmem:[%s2154 + $0xe8] sm:$0xff]
      %v2185 = vld [vmem:[%s2154 + $0xf0] sm:$0xff]
      %v2186 = vld [vmem:[%s2154 + $0xf8] sm:$0xff]
      %v2187 = vld [vmem:[%s2154 + $0x100] sm:$0xff]
      %v2188 = vld [vmem:[%s2154 + $0x108] sm:$0xff]
      %v2189 = vld [vmem:[%s2154 + $0x110] sm:$0xff]
      %v2190 = vld [vmem:[%s2154 + $0x118] sm:$0xff]
      %v2191 = vld [vmem:[%s2154 + $0x120] sm:$0xff]
      %v2192 = vld [vmem:[%s2154 + $0x128] sm:$0xff]
      %v2193 = vld [vmem:[%s2154 + $0x130] sm:$0xff]
      %v2194 = vld [vmem:[%s2154 + $0x138] sm:$0xff]
      %v2195 = vld [vmem:[%s2154 + $0x140] sm:$0xff]
      %v2196 = vld [vmem:[%s2154 + $0x148] sm:$0xff]
      %v2197 = vld [vmem:[%s2154 + $0x150] sm:$0xff]
      %v2198 = vld [vmem:[%s2154 + $0x158] sm:$0xff]
      %v2199 = vld [vmem:[%s2154 + $0x160] sm:$0xff]
      %v2200 = vld [vmem:[%s2154 + $0x168] sm:$0xff]
      %v2201 = vld [vmem:[%s2154 + $0x170] sm:$0xff]
      %v2202 = vld [vmem:[%s2154 + $0x178] sm:$0xff]
      %v2203 = vld [vmem:[%s2154 + $0x180] sm:$0xff]
      %v2204 = vld [vmem:[%s2154 + $0x188] sm:$0xff]
      %v2205 = vld [vmem:[%s2154 + $0x190] sm:$0xff]
      %v2206 = vld [vmem:[%s2154 + $0x198] sm:$0xff]
      %v2207 = vld [vmem:[%s2154 + $0x1a0] sm:$0xff]
      %v2208 = vld [vmem:[%s2154 + $0x1a8] sm:$0xff]
      %v2209 = vld [vmem:[%s2154 + $0x1b0] sm:$0xff]
      %v2210 = vld [vmem:[%s2154 + $0x1b8] sm:$0xff]
      %v2211 = vld [vmem:[%s2154 + $0x1c0] sm:$0xff]
      %v2212 = vld [vmem:[%s2154 + $0x1c8] sm:$0xff]
      %v2213 = vld [vmem:[%s2154 + $0x1d0] sm:$0xff]
      %v2214 = vld [vmem:[%s2154 + $0x1d8] sm:$0xff]
      %v2215 = vld [vmem:[%s2154 + $0x1e0] sm:$0xff]
      %v2216 = vld [vmem:[%s2154 + $0x1e8] sm:$0xff]
      %v2217 = vld [vmem:[%s2154 + $0x1f0] sm:$0xff]
      %v2218 = vld [vmem:[%s2154 + $0x1f8] sm:$0xff]
      %v2219 = vadd.f32 %v2155, %v1793
      %v2220 = vadd.f32 %v2156, %v1795
      %v2221 = vadd.f32 %v2157, %v1798
      %v2222 = vadd.f32 %v2158, %v1800
      %v2223 = vadd.f32 %v2159, %v1803
      %v2224 = vadd.f32 %v2160, %v1805
      %v2225 = vadd.f32 %v2161, %v1808
      %v2226 = vadd.f32 %v2162, %v1810
      %v2227 = vadd.f32 %v2163, %v1813
      %v2228 = vadd.f32 %v2164, %v1815
      %v2229 = vadd.f32 %v2165, %v1818
      %v2230 = vadd.f32 %v2166, %v1820
      %v2231 = vadd.f32 %v2167, %v1823
      %v2232 = vadd.f32 %v2168, %v1825
      %v2233 = vadd.f32 %v2169, %v1828
      %v2234 = vadd.f32 %v2170, %v1830
      %v2235 = vadd.f32 %v2171, %v1833
      %v2236 = vadd.f32 %v2172, %v1835
      %v2237 = vadd.f32 %v2173, %v1838
      %v2238 = vadd.f32 %v2174, %v1840
      %v2239 = vadd.f32 %v2175, %v1843
      %v2240 = vadd.f32 %v2176, %v1845
      %v2241 = vadd.f32 %v2177, %v1848
      %v2242 = vadd.f32 %v2178, %v1850
      %v2243 = vadd.f32 %v2179, %v1853
      %v2244 = vadd.f32 %v2180, %v1855
      %v2245 = vadd.f32 %v2181, %v1858
      %v2246 = vadd.f32 %v2182, %v1860
      %v2247 = vadd.f32 %v2183, %v1863
      %v2248 = vadd.f32 %v2184, %v1865
      %v2249 = vadd.f32 %v2185, %v1868
      %v2250 = vadd.f32 %v2186, %v1870
      %v2251 = vadd.f32 %v2187, %v1873
      %v2252 = vadd.f32 %v2188, %v1875
      %v2253 = vadd.f32 %v2189, %v1878
      %v2254 = vadd.f32 %v2190, %v1880
      %v2255 = vadd.f32 %v2191, %v1883
      %v2256 = vadd.f32 %v2192, %v1885
      %v2257 = vadd.f32 %v2193, %v1888
      %v2258 = vadd.f32 %v2194, %v1890
      %v2259 = vadd.f32 %v2195, %v1893
      %v2260 = vadd.f32 %v2196, %v1895
      %v2261 = vadd.f32 %v2197, %v1898
      %v2262 = vadd.f32 %v2198, %v1900
      %v2263 = vadd.f32 %v2199, %v1903
      %v2264 = vadd.f32 %v2200, %v1905
      %v2265 = vadd.f32 %v2201, %v1908
      %v2266 = vadd.f32 %v2202, %v1910
      %v2267 = vadd.f32 %v2203, %v1913
      %v2268 = vadd.f32 %v2204, %v1915
      %v2269 = vadd.f32 %v2205, %v1918
      %v2270 = vadd.f32 %v2206, %v1920
      %v2271 = vadd.f32 %v2207, %v1923
      %v2272 = vadd.f32 %v2208, %v1925
      %v2273 = vadd.f32 %v2209, %v1928
      %v2274 = vadd.f32 %v2210, %v1930
      %v2275 = vadd.f32 %v2211, %v1933
      %v2276 = vadd.f32 %v2212, %v1935
      %v2277 = vadd.f32 %v2213, %v1938
      %v2278 = vadd.f32 %v2214, %v1940
      %v2279 = vadd.f32 %v2215, %v1943
      %v2280 = vadd.f32 %v2216, %v1945
      %v2281 = vadd.f32 %v2217, %v1948
      %v2282 = vadd.f32 %v2218, %v1950
      %2283 = vst [vmem:[%s2154] sm:$0xff] %v2219
      %2284 = vst [vmem:[%s2154 + $0x8] sm:$0xff] %v2220
      %2285 = vst [vmem:[%s2154 + $0x10] sm:$0xff] %v2221
      %2286 = vst [vmem:[%s2154 + $0x18] sm:$0xff] %v2222
      %2287 = vst [vmem:[%s2154 + $0x20] sm:$0xff] %v2223
      %2288 = vst [vmem:[%s2154 + $0x28] sm:$0xff] %v2224
      %2289 = vst [vmem:[%s2154 + $0x30] sm:$0xff] %v2225
      %2290 = vst [vmem:[%s2154 + $0x38] sm:$0xff] %v2226
      %2291 = vst [vmem:[%s2154 + $0x40] sm:$0xff] %v2227
      %2292 = vst [vmem:[%s2154 + $0x48] sm:$0xff] %v2228
      %2293 = vst [vmem:[%s2154 + $0x50] sm:$0xff] %v2229
      %2294 = vst [vmem:[%s2154 + $0x58] sm:$0xff] %v2230
      %2295 = vst [vmem:[%s2154 + $0x60] sm:$0xff] %v2231
      %2296 = vst [vmem:[%s2154 + $0x68] sm:$0xff] %v2232
      %2297 = vst [vmem:[%s2154 + $0x70] sm:$0xff] %v2233
      %2298 = vst [vmem:[%s2154 + $0x78] sm:$0xff] %v2234
      %2299 = vst [vmem:[%s2154 + $0x80] sm:$0xff] %v2235
      %2300 = vst [vmem:[%s2154 + $0x88] sm:$0xff] %v2236
      %2301 = vst [vmem:[%s2154 + $0x90] sm:$0xff] %v2237
      %2302 = vst [vmem:[%s2154 + $0x98] sm:$0xff] %v2238
      %2303 = vst [vmem:[%s2154 + $0xa0] sm:$0xff] %v2239
      %2304 = vst [vmem:[%s2154 + $0xa8] sm:$0xff] %v2240
      %2305 = vst [vmem:[%s2154 + $0xb0] sm:$0xff] %v2241
      %2306 = vst [vmem:[%s2154 + $0xb8] sm:$0xff] %v2242
      %2307 = vst [vmem:[%s2154 + $0xc0] sm:$0xff] %v2243
      %2308 = vst [vmem:[%s2154 + $0xc8] sm:$0xff] %v2244
      %2309 = vst [vmem:[%s2154 + $0xd0] sm:$0xff] %v2245
      %2310 = vst [vmem:[%s2154 + $0xd8] sm:$0xff] %v2246
      %2311 = vst [vmem:[%s2154 + $0xe0] sm:$0xff] %v2247
      %2312 = vst [vmem:[%s2154 + $0xe8] sm:$0xff] %v2248
      %2313 = vst [vmem:[%s2154 + $0xf0] sm:$0xff] %v2249
      %2314 = vst [vmem:[%s2154 + $0xf8] sm:$0xff] %v2250
      %2315 = vst [vmem:[%s2154 + $0x100] sm:$0xff] %v2251
      %2316 = vst [vmem:[%s2154 + $0x108] sm:$0xff] %v2252
      %2317 = vst [vmem:[%s2154 + $0x110] sm:$0xff] %v2253
      %2318 = vst [vmem:[%s2154 + $0x118] sm:$0xff] %v2254
      %2319 = vst [vmem:[%s2154 + $0x120] sm:$0xff] %v2255
      %2320 = vst [vmem:[%s2154 + $0x128] sm:$0xff] %v2256
      %2321 = vst [vmem:[%s2154 + $0x130] sm:$0xff] %v2257
      %2322 = vst [vmem:[%s2154 + $0x138] sm:$0xff] %v2258
      %2323 = vst [vmem:[%s2154 + $0x140] sm:$0xff] %v2259
      %2324 = vst [vmem:[%s2154 + $0x148] sm:$0xff] %v2260
      %2325 = vst [vmem:[%s2154 + $0x150] sm:$0xff] %v2261
      %2326 = vst [vmem:[%s2154 + $0x158] sm:$0xff] %v2262
      %2327 = vst [vmem:[%s2154 + $0x160] sm:$0xff] %v2263
      %2328 = vst [vmem:[%s2154 + $0x168] sm:$0xff] %v2264
      %2329 = vst [vmem:[%s2154 + $0x170] sm:$0xff] %v2265
      %2330 = vst [vmem:[%s2154 + $0x178] sm:$0xff] %v2266
      %2331 = vst [vmem:[%s2154 + $0x180] sm:$0xff] %v2267
      %2332 = vst [vmem:[%s2154 + $0x188] sm:$0xff] %v2268
      %2333 = vst [vmem:[%s2154 + $0x190] sm:$0xff] %v2269
      %2334 = vst [vmem:[%s2154 + $0x198] sm:$0xff] %v2270
      %2335 = vst [vmem:[%s2154 + $0x1a0] sm:$0xff] %v2271
      %2336 = vst [vmem:[%s2154 + $0x1a8] sm:$0xff] %v2272
      %2337 = vst [vmem:[%s2154 + $0x1b0] sm:$0xff] %v2273
      %2338 = vst [vmem:[%s2154 + $0x1b8] sm:$0xff] %v2274
      %2339 = vst [vmem:[%s2154 + $0x1c0] sm:$0xff] %v2275
      %2340 = vst [vmem:[%s2154 + $0x1c8] sm:$0xff] %v2276
      %2341 = vst [vmem:[%s2154 + $0x1d0] sm:$0xff] %v2277
      %2342 = vst [vmem:[%s2154 + $0x1d8] sm:$0xff] %v2278
      %2343 = vst [vmem:[%s2154 + $0x1e0] sm:$0xff] %v2279
      %2344 = vst [vmem:[%s2154 + $0x1e8] sm:$0xff] %v2280
      %2345 = vst [vmem:[%s2154 + $0x1f0] sm:$0xff] %v2281
      %2346 = vst [vmem:[%s2154 + $0x1f8] sm:$0xff] %v2282
    $region41: #{lightgcn_forward.4} parent=1 // pred_fallthru
      _
    // Predicated region
    $region42: #{lightgcn_forward.4} parent=1 // pred_check
      %p2347 = pneg %p1952
    $region43: #{lightgcn_forward.4} parent=1 // pred_check_branch
      %2349 = sbr.rel (%p2347) target = $region45
    $region44: #{lightgcn_forward.4} parent=1 // pred_region
      %s2350 = scalar_lea.vmem %s8, %s90
      %v2351 = vld [vmem:[%s2350] sm:$0xff]
      %v2352 = vld [vmem:[%s2350 + $0x8] sm:$0xff]
      %v2353 = vld [vmem:[%s2350 + $0x10] sm:$0xff]
      %v2354 = vld [vmem:[%s2350 + $0x18] sm:$0xff]
      %v2355 = vld [vmem:[%s2350 + $0x20] sm:$0xff]
      %v2356 = vld [vmem:[%s2350 + $0x28] sm:$0xff]
      %v2357 = vld [vmem:[%s2350 + $0x30] sm:$0xff]
      %v2358 = vld [vmem:[%s2350 + $0x38] sm:$0xff]
      %v2359 = vld [vmem:[%s2350 + $0x40] sm:$0xff]
      %v2360 = vld [vmem:[%s2350 + $0x48] sm:$0xff]
      %v2361 = vld [vmem:[%s2350 + $0x50] sm:$0xff]
      %v2362 = vld [vmem:[%s2350 + $0x58] sm:$0xff]
      %v2363 = vld [vmem:[%s2350 + $0x60] sm:$0xff]
      %v2364 = vld [vmem:[%s2350 + $0x68] sm:$0xff]
      %v2365 = vld [vmem:[%s2350 + $0x70] sm:$0xff]
      %v2366 = vld [vmem:[%s2350 + $0x78] sm:$0xff]
      %v2367 = vld [vmem:[%s2350 + $0x80] sm:$0xff]
      %v2368 = vld [vmem:[%s2350 + $0x88] sm:$0xff]
      %v2369 = vld [vmem:[%s2350 + $0x90] sm:$0xff]
      %v2370 = vld [vmem:[%s2350 + $0x98] sm:$0xff]
      %v2371 = vld [vmem:[%s2350 + $0xa0] sm:$0xff]
      %v2372 = vld [vmem:[%s2350 + $0xa8] sm:$0xff]
      %v2373 = vld [vmem:[%s2350 + $0xb0] sm:$0xff]
      %v2374 = vld [vmem:[%s2350 + $0xb8] sm:$0xff]
      %v2375 = vld [vmem:[%s2350 + $0xc0] sm:$0xff]
      %v2376 = vld [vmem:[%s2350 + $0xc8] sm:$0xff]
      %v2377 = vld [vmem:[%s2350 + $0xd0] sm:$0xff]
      %v2378 = vld [vmem:[%s2350 + $0xd8] sm:$0xff]
      %v2379 = vld [vmem:[%s2350 + $0xe0] sm:$0xff]
      %v2380 = vld [vmem:[%s2350 + $0xe8] sm:$0xff]
      %v2381 = vld [vmem:[%s2350 + $0xf0] sm:$0xff]
      %v2382 = vld [vmem:[%s2350 + $0xf8] sm:$0xff]
      %v2383 = vld [vmem:[%s2350 + $0x100] sm:$0xff]
      %v2384 = vld [vmem:[%s2350 + $0x108] sm:$0xff]
      %v2385 = vld [vmem:[%s2350 + $0x110] sm:$0xff]
      %v2386 = vld [vmem:[%s2350 + $0x118] sm:$0xff]
      %v2387 = vld [vmem:[%s2350 + $0x120] sm:$0xff]
      %v2388 = vld [vmem:[%s2350 + $0x128] sm:$0xff]
      %v2389 = vld [vmem:[%s2350 + $0x130] sm:$0xff]
      %v2390 = vld [vmem:[%s2350 + $0x138] sm:$0xff]
      %v2391 = vld [vmem:[%s2350 + $0x140] sm:$0xff]
      %v2392 = vld [vmem:[%s2350 + $0x148] sm:$0xff]
      %v2393 = vld [vmem:[%s2350 + $0x150] sm:$0xff]
      %v2394 = vld [vmem:[%s2350 + $0x158] sm:$0xff]
      %v2395 = vld [vmem:[%s2350 + $0x160] sm:$0xff]
      %v2396 = vld [vmem:[%s2350 + $0x168] sm:$0xff]
      %v2397 = vld [vmem:[%s2350 + $0x170] sm:$0xff]
      %v2398 = vld [vmem:[%s2350 + $0x178] sm:$0xff]
      %v2399 = vld [vmem:[%s2350 + $0x180] sm:$0xff]
      %v2400 = vld [vmem:[%s2350 + $0x188] sm:$0xff]
      %v2401 = vld [vmem:[%s2350 + $0x190] sm:$0xff]
      %v2402 = vld [vmem:[%s2350 + $0x198] sm:$0xff]
      %v2403 = vld [vmem:[%s2350 + $0x1a0] sm:$0xff]
      %v2404 = vld [vmem:[%s2350 + $0x1a8] sm:$0xff]
      %v2405 = vld [vmem:[%s2350 + $0x1b0] sm:$0xff]
      %v2406 = vld [vmem:[%s2350 + $0x1b8] sm:$0xff]
      %v2407 = vld [vmem:[%s2350 + $0x1c0] sm:$0xff]
      %v2408 = vld [vmem:[%s2350 + $0x1c8] sm:$0xff]
      %v2409 = vld [vmem:[%s2350 + $0x1d0] sm:$0xff]
      %v2410 = vld [vmem:[%s2350 + $0x1d8] sm:$0xff]
      %v2411 = vld [vmem:[%s2350 + $0x1e0] sm:$0xff]
      %v2412 = vld [vmem:[%s2350 + $0x1e8] sm:$0xff]
      %v2413 = vld [vmem:[%s2350 + $0x1f0] sm:$0xff]
      %v2414 = vld [vmem:[%s2350 + $0x1f8] sm:$0xff]
      %s2415 = scalar_lea.vmem %s4, %s90
      %v2416 = vld [vmem:[%s2415] sm:$0xff]
      %v2417 = vld [vmem:[%s2415 + $0x8] sm:$0xff]
      %v2418 = vld [vmem:[%s2415 + $0x10] sm:$0xff]
      %v2419 = vld [vmem:[%s2415 + $0x18] sm:$0xff]
      %v2420 = vld [vmem:[%s2415 + $0x20] sm:$0xff]
      %v2421 = vld [vmem:[%s2415 + $0x28] sm:$0xff]
      %v2422 = vld [vmem:[%s2415 + $0x30] sm:$0xff]
      %v2423 = vld [vmem:[%s2415 + $0x38] sm:$0xff]
      %v2424 = vld [vmem:[%s2415 + $0x40] sm:$0xff]
      %v2425 = vld [vmem:[%s2415 + $0x48] sm:$0xff]
      %v2426 = vld [vmem:[%s2415 + $0x50] sm:$0xff]
      %v2427 = vld [vmem:[%s2415 + $0x58] sm:$0xff]
      %v2428 = vld [vmem:[%s2415 + $0x60] sm:$0xff]
      %v2429 = vld [vmem:[%s2415 + $0x68] sm:$0xff]
      %v2430 = vld [vmem:[%s2415 + $0x70] sm:$0xff]
      %v2431 = vld [vmem:[%s2415 + $0x78] sm:$0xff]
      %v2432 = vld [vmem:[%s2415 + $0x80] sm:$0xff]
      %v2433 = vld [vmem:[%s2415 + $0x88] sm:$0xff]
      %v2434 = vld [vmem:[%s2415 + $0x90] sm:$0xff]
      %v2435 = vld [vmem:[%s2415 + $0x98] sm:$0xff]
      %v2436 = vld [vmem:[%s2415 + $0xa0] sm:$0xff]
      %v2437 = vld [vmem:[%s2415 + $0xa8] sm:$0xff]
      %v2438 = vld [vmem:[%s2415 + $0xb0] sm:$0xff]
      %v2439 = vld [vmem:[%s2415 + $0xb8] sm:$0xff]
      %v2440 = vld [vmem:[%s2415 + $0xc0] sm:$0xff]
      %v2441 = vld [vmem:[%s2415 + $0xc8] sm:$0xff]
      %v2442 = vld [vmem:[%s2415 + $0xd0] sm:$0xff]
      %v2443 = vld [vmem:[%s2415 + $0xd8] sm:$0xff]
      %v2444 = vld [vmem:[%s2415 + $0xe0] sm:$0xff]
      %v2445 = vld [vmem:[%s2415 + $0xe8] sm:$0xff]
      %v2446 = vld [vmem:[%s2415 + $0xf0] sm:$0xff]
      %v2447 = vld [vmem:[%s2415 + $0xf8] sm:$0xff]
      %v2448 = vld [vmem:[%s2415 + $0x100] sm:$0xff]
      %v2449 = vld [vmem:[%s2415 + $0x108] sm:$0xff]
      %v2450 = vld [vmem:[%s2415 + $0x110] sm:$0xff]
      %v2451 = vld [vmem:[%s2415 + $0x118] sm:$0xff]
      %v2452 = vld [vmem:[%s2415 + $0x120] sm:$0xff]
      %v2453 = vld [vmem:[%s2415 + $0x128] sm:$0xff]
      %v2454 = vld [vmem:[%s2415 + $0x130] sm:$0xff]
      %v2455 = vld [vmem:[%s2415 + $0x138] sm:$0xff]
      %v2456 = vld [vmem:[%s2415 + $0x140] sm:$0xff]
      %v2457 = vld [vmem:[%s2415 + $0x148] sm:$0xff]
      %v2458 = vld [vmem:[%s2415 + $0x150] sm:$0xff]
      %v2459 = vld [vmem:[%s2415 + $0x158] sm:$0xff]
      %v2460 = vld [vmem:[%s2415 + $0x160] sm:$0xff]
      %v2461 = vld [vmem:[%s2415 + $0x168] sm:$0xff]
      %v2462 = vld [vmem:[%s2415 + $0x170] sm:$0xff]
      %v2463 = vld [vmem:[%s2415 + $0x178] sm:$0xff]
      %v2464 = vld [vmem:[%s2415 + $0x180] sm:$0xff]
      %v2465 = vld [vmem:[%s2415 + $0x188] sm:$0xff]
      %v2466 = vld [vmem:[%s2415 + $0x190] sm:$0xff]
      %v2467 = vld [vmem:[%s2415 + $0x198] sm:$0xff]
      %v2468 = vld [vmem:[%s2415 + $0x1a0] sm:$0xff]
      %v2469 = vld [vmem:[%s2415 + $0x1a8] sm:$0xff]
      %v2470 = vld [vmem:[%s2415 + $0x1b0] sm:$0xff]
      %v2471 = vld [vmem:[%s2415 + $0x1b8] sm:$0xff]
      %v2472 = vld [vmem:[%s2415 + $0x1c0] sm:$0xff]
      %v2473 = vld [vmem:[%s2415 + $0x1c8] sm:$0xff]
      %v2474 = vld [vmem:[%s2415 + $0x1d0] sm:$0xff]
      %v2475 = vld [vmem:[%s2415 + $0x1d8] sm:$0xff]
      %v2476 = vld [vmem:[%s2415 + $0x1e0] sm:$0xff]
      %v2477 = vld [vmem:[%s2415 + $0x1e8] sm:$0xff]
      %v2478 = vld [vmem:[%s2415 + $0x1f0] sm:$0xff]
      %v2479 = vld [vmem:[%s2415 + $0x1f8] sm:$0xff]
      %v2480 = vsub.f32 %v2351, %v2416
      %v2481 = vsub.f32 %v2352, %v2417
      %v2482 = vsub.f32 %v2353, %v2418
      %v2483 = vsub.f32 %v2354, %v2419
      %v2484 = vsub.f32 %v2355, %v2420
      %v2485 = vsub.f32 %v2356, %v2421
      %v2486 = vsub.f32 %v2357, %v2422
      %v2487 = vsub.f32 %v2358, %v2423
      %v2488 = vsub.f32 %v2359, %v2424
      %v2489 = vsub.f32 %v2360, %v2425
      %v2490 = vsub.f32 %v2361, %v2426
      %v2491 = vsub.f32 %v2362, %v2427
      %v2492 = vsub.f32 %v2363, %v2428
      %v2493 = vsub.f32 %v2364, %v2429
      %v2494 = vsub.f32 %v2365, %v2430
      %v2495 = vsub.f32 %v2366, %v2431
      %v2496 = vsub.f32 %v2367, %v2432
      %v2497 = vsub.f32 %v2368, %v2433
      %v2498 = vsub.f32 %v2369, %v2434
      %v2499 = vsub.f32 %v2370, %v2435
      %v2500 = vsub.f32 %v2371, %v2436
      %v2501 = vsub.f32 %v2372, %v2437
      %v2502 = vsub.f32 %v2373, %v2438
      %v2503 = vsub.f32 %v2374, %v2439
      %v2504 = vsub.f32 %v2375, %v2440
      %v2505 = vsub.f32 %v2376, %v2441
      %v2506 = vsub.f32 %v2377, %v2442
      %v2507 = vsub.f32 %v2378, %v2443
      %v2508 = vsub.f32 %v2379, %v2444
      %v2509 = vsub.f32 %v2380, %v2445
      %v2510 = vsub.f32 %v2381, %v2446
      %v2511 = vsub.f32 %v2382, %v2447
      %v2512 = vsub.f32 %v2383, %v2448
      %v2513 = vsub.f32 %v2384, %v2449
      %v2514 = vsub.f32 %v2385, %v2450
      %v2515 = vsub.f32 %v2386, %v2451
      %v2516 = vsub.f32 %v2387, %v2452
      %v2517 = vsub.f32 %v2388, %v2453
      %v2518 = vsub.f32 %v2389, %v2454
      %v2519 = vsub.f32 %v2390, %v2455
      %v2520 = vsub.f32 %v2391, %v2456
      %v2521 = vsub.f32 %v2392, %v2457
      %v2522 = vsub.f32 %v2393, %v2458
      %v2523 = vsub.f32 %v2394, %v2459
      %v2524 = vsub.f32 %v2395, %v2460
      %v2525 = vsub.f32 %v2396, %v2461
      %v2526 = vsub.f32 %v2397, %v2462
      %v2527 = vsub.f32 %v2398, %v2463
      %v2528 = vsub.f32 %v2399, %v2464
      %v2529 = vsub.f32 %v2400, %v2465
      %v2530 = vsub.f32 %v2401, %v2466
      %v2531 = vsub.f32 %v2402, %v2467
      %v2532 = vsub.f32 %v2403, %v2468
      %v2533 = vsub.f32 %v2404, %v2469
      %v2534 = vsub.f32 %v2405, %v2470
      %v2535 = vsub.f32 %v2406, %v2471
      %v2536 = vsub.f32 %v2407, %v2472
      %v2537 = vsub.f32 %v2408, %v2473
      %v2538 = vsub.f32 %v2409, %v2474
      %v2539 = vsub.f32 %v2410, %v2475
      %v2540 = vsub.f32 %v2411, %v2476
      %v2541 = vsub.f32 %v2412, %v2477
      %v2542 = vsub.f32 %v2413, %v2478
      %v2543 = vsub.f32 %v2414, %v2479
      %v2544 = vpack.c.bf16 %v2480, %v2480
      %v2545 = vpack.c.bf16 %v2481, %v2481
      %v2546 = vpack.c.bf16 %v2482, %v2482
      %v2547 = vpack.c.bf16 %v2483, %v2483
      %v2548 = vpack.c.bf16 %v2484, %v2484
      %v2549 = vpack.c.bf16 %v2485, %v2485
      %v2550 = vpack.c.bf16 %v2486, %v2486
      %v2551 = vpack.c.bf16 %v2487, %v2487
      %v2552 = vpack.c.bf16 %v2488, %v2488
      %v2553 = vpack.c.bf16 %v2489, %v2489
      %v2554 = vpack.c.bf16 %v2490, %v2490
      %v2555 = vpack.c.bf16 %v2491, %v2491
      %v2556 = vpack.c.bf16 %v2492, %v2492
      %v2557 = vpack.c.bf16 %v2493, %v2493
      %v2558 = vpack.c.bf16 %v2494, %v2494
      %v2559 = vpack.c.bf16 %v2495, %v2495
      %v2560 = vpack.c.bf16 %v2496, %v2496
      %v2561 = vpack.c.bf16 %v2497, %v2497
      %v2562 = vpack.c.bf16 %v2498, %v2498
      %v2563 = vpack.c.bf16 %v2499, %v2499
      %v2564 = vpack.c.bf16 %v2500, %v2500
      %v2565 = vpack.c.bf16 %v2501, %v2501
      %v2566 = vpack.c.bf16 %v2502, %v2502
      %v2567 = vpack.c.bf16 %v2503, %v2503
      %v2568 = vpack.c.bf16 %v2504, %v2504
      %v2569 = vpack.c.bf16 %v2505, %v2505
      %v2570 = vpack.c.bf16 %v2506, %v2506
      %v2571 = vpack.c.bf16 %v2507, %v2507
      %v2572 = vpack.c.bf16 %v2508, %v2508
      %v2573 = vpack.c.bf16 %v2509, %v2509
      %v2574 = vpack.c.bf16 %v2510, %v2510
      %v2575 = vpack.c.bf16 %v2511, %v2511
      %v2576 = vpack.c.bf16 %v2512, %v2512
      %v2577 = vpack.c.bf16 %v2513, %v2513
      %v2578 = vpack.c.bf16 %v2514, %v2514
      %v2579 = vpack.c.bf16 %v2515, %v2515
      %v2580 = vpack.c.bf16 %v2516, %v2516
      %v2581 = vpack.c.bf16 %v2517, %v2517
      %v2582 = vpack.c.bf16 %v2518, %v2518
      %v2583 = vpack.c.bf16 %v2519, %v2519
      %v2584 = vpack.c.bf16 %v2520, %v2520
      %v2585 = vpack.c.bf16 %v2521, %v2521
      %v2586 = vpack.c.bf16 %v2522, %v2522
      %v2587 = vpack.c.bf16 %v2523, %v2523
      %v2588 = vpack.c.bf16 %v2524, %v2524
      %v2589 = vpack.c.bf16 %v2525, %v2525
      %v2590 = vpack.c.bf16 %v2526, %v2526
      %v2591 = vpack.c.bf16 %v2527, %v2527
      %v2592 = vpack.c.bf16 %v2528, %v2528
      %v2593 = vpack.c.bf16 %v2529, %v2529
      %v2594 = vpack.c.bf16 %v2530, %v2530
      %v2595 = vpack.c.bf16 %v2531, %v2531
      %v2596 = vpack.c.bf16 %v2532, %v2532
      %v2597 = vpack.c.bf16 %v2533, %v2533
      %v2598 = vpack.c.bf16 %v2534, %v2534
      %v2599 = vpack.c.bf16 %v2535, %v2535
      %v2600 = vpack.c.bf16 %v2536, %v2536
      %v2601 = vpack.c.bf16 %v2537, %v2537
      %v2602 = vpack.c.bf16 %v2538, %v2538
      %v2603 = vpack.c.bf16 %v2539, %v2539
      %v2604 = vpack.c.bf16 %v2540, %v2540
      %v2605 = vpack.c.bf16 %v2541, %v2541
      %v2606 = vpack.c.bf16 %v2542, %v2542
      %v2607 = vpack.c.bf16 %v2543, %v2543
      %s2608 = smul.addr %s91, 4
      %s2609 = scalar_lea.vmem [#allocation4], %s2608
      %2610 = vst [vmem:[%s2609] sm:$0xf] %v2544
      %2611 = vst [vmem:[%s2609 + $0x4] sm:$0xf] %v2545
      %2612 = vst [vmem:[%s2609 + $0x8] sm:$0xf] %v2546
      %2613 = vst [vmem:[%s2609 + $0xc] sm:$0xf] %v2547
      %2614 = vst [vmem:[%s2609 + $0x10] sm:$0xf] %v2548
      %2615 = vst [vmem:[%s2609 + $0x14] sm:$0xf] %v2549
      %2616 = vst [vmem:[%s2609 + $0x18] sm:$0xf] %v2550
      %2617 = vst [vmem:[%s2609 + $0x1c] sm:$0xf] %v2551
      %2618 = vst [vmem:[%s2609 + $0x20] sm:$0xf] %v2552
      %2619 = vst [vmem:[%s2609 + $0x24] sm:$0xf] %v2553
      %2620 = vst [vmem:[%s2609 + $0x28] sm:$0xf] %v2554
      %2621 = vst [vmem:[%s2609 + $0x2c] sm:$0xf] %v2555
      %2622 = vst [vmem:[%s2609 + $0x30] sm:$0xf] %v2556
      %2623 = vst [vmem:[%s2609 + $0x34] sm:$0xf] %v2557
      %2624 = vst [vmem:[%s2609 + $0x38] sm:$0xf] %v2558
      %2625 = vst [vmem:[%s2609 + $0x3c] sm:$0xf] %v2559
      %2626 = vst [vmem:[%s2609 + $0x40] sm:$0xf] %v2560
      %2627 = vst [vmem:[%s2609 + $0x44] sm:$0xf] %v2561
      %2628 = vst [vmem:[%s2609 + $0x48] sm:$0xf] %v2562
      %2629 = vst [vmem:[%s2609 + $0x4c] sm:$0xf] %v2563
      %2630 = vst [vmem:[%s2609 + $0x50] sm:$0xf] %v2564
      %2631 = vst [vmem:[%s2609 + $0x54] sm:$0xf] %v2565
      %2632 = vst [vmem:[%s2609 + $0x58] sm:$0xf] %v2566
      %2633 = vst [vmem:[%s2609 + $0x5c] sm:$0xf] %v2567
      %2634 = vst [vmem:[%s2609 + $0x60] sm:$0xf] %v2568
      %2635 = vst [vmem:[%s2609 + $0x64] sm:$0xf] %v2569
      %2636 = vst [vmem:[%s2609 + $0x68] sm:$0xf] %v2570
      %2637 = vst [vmem:[%s2609 + $0x6c] sm:$0xf] %v2571
      %2638 = vst [vmem:[%s2609 + $0x70] sm:$0xf] %v2572
      %2639 = vst [vmem:[%s2609 + $0x74] sm:$0xf] %v2573
      %2640 = vst [vmem:[%s2609 + $0x78] sm:$0xf] %v2574
      %2641 = vst [vmem:[%s2609 + $0x7c] sm:$0xf] %v2575
      %2642 = vst [vmem:[%s2609 + $0x80] sm:$0xf] %v2576
      %2643 = vst [vmem:[%s2609 + $0x84] sm:$0xf] %v2577
      %2644 = vst [vmem:[%s2609 + $0x88] sm:$0xf] %v2578
      %2645 = vst [vmem:[%s2609 + $0x8c] sm:$0xf] %v2579
      %2646 = vst [vmem:[%s2609 + $0x90] sm:$0xf] %v2580
      %2647 = vst [vmem:[%s2609 + $0x94] sm:$0xf] %v2581
      %2648 = vst [vmem:[%s2609 + $0x98] sm:$0xf] %v2582
      %2649 = vst [vmem:[%s2609 + $0x9c] sm:$0xf] %v2583
      %2650 = vst [vmem:[%s2609 + $0xa0] sm:$0xf] %v2584
      %2651 = vst [vmem:[%s2609 + $0xa4] sm:$0xf] %v2585
      %2652 = vst [vmem:[%s2609 + $0xa8] sm:$0xf] %v2586
      %2653 = vst [vmem:[%s2609 + $0xac] sm:$0xf] %v2587
      %2654 = vst [vmem:[%s2609 + $0xb0] sm:$0xf] %v2588
      %2655 = vst [vmem:[%s2609 + $0xb4] sm:$0xf] %v2589
      %2656 = vst [vmem:[%s2609 + $0xb8] sm:$0xf] %v2590
      %2657 = vst [vmem:[%s2609 + $0xbc] sm:$0xf] %v2591
      %2658 = vst [vmem:[%s2609 + $0xc0] sm:$0xf] %v2592
      %2659 = vst [vmem:[%s2609 + $0xc4] sm:$0xf] %v2593
      %2660 = vst [vmem:[%s2609 + $0xc8] sm:$0xf] %v2594
      %2661 = vst [vmem:[%s2609 + $0xcc] sm:$0xf] %v2595
      %2662 = vst [vmem:[%s2609 + $0xd0] sm:$0xf] %v2596
      %2663 = vst [vmem:[%s2609 + $0xd4] sm:$0xf] %v2597
      %2664 = vst [vmem:[%s2609 + $0xd8] sm:$0xf] %v2598
      %2665 = vst [vmem:[%s2609 + $0xdc] sm:$0xf] %v2599
      %2666 = vst [vmem:[%s2609 + $0xe0] sm:$0xf] %v2600
      %2667 = vst [vmem:[%s2609 + $0xe4] sm:$0xf] %v2601
      %2668 = vst [vmem:[%s2609 + $0xe8] sm:$0xf] %v2602
      %2669 = vst [vmem:[%s2609 + $0xec] sm:$0xf] %v2603
      %2670 = vst [vmem:[%s2609 + $0xf0] sm:$0xf] %v2604
      %2671 = vst [vmem:[%s2609 + $0xf4] sm:$0xf] %v2605
      %2672 = vst [vmem:[%s2609 + $0xf8] sm:$0xf] %v2606
      %2673 = vst [vmem:[%s2609 + $0xfc] sm:$0xf] %v2607
    $region45: #{lightgcn_forward.4} parent=1 // pred_fallthru
      _
    // Predicated region
    $region46: #{lightgcn_forward.4} parent=1 // pred_check
      _
    $region47: #{lightgcn_forward.4} parent=1 // pred_check_branch
      %2675 = sbr.rel (0) target = $region49
    $region48: #{lightgcn_forward.4} parent=1 // pred_region
      %2677 = vsyncadd [#allocation3], 0
      %s2678 = sshll.u32 [#allocation2], 4
      %s2679 = int_to_ptr.vmem [resolvable:$true] %s2678
      %s2680 = sshll.u32 %s5, 4
      %s2681 = int_to_ptr.hbm [resolvable:$true] %s2680
      %2686 = dma.vmem_to_hbm [thread:$0]  %s2679, 2048, %s2681, [#allocation3], 64, 64, 4
    $region49: #{lightgcn_forward.4} parent=1 // pred_fallthru
      _
    // Predicated region
    $region50: #{lightgcn_forward.4} parent=1 // pred_check
      _
    $region51: #{lightgcn_forward.4} parent=1 // pred_check_branch
      %2688 = sbr.rel (0) target = $region53
    $region52: #{lightgcn_forward.4} parent=1 // pred_region
      _
    $region53: #{lightgcn_forward.4} parent=1 // pred_fallthru
      _
    // Predicated region
    $region54: #{lightgcn_forward.4} parent=1 // pred_check
      _
    $region55: #{lightgcn_forward.4} parent=1 // pred_check_branch
      %2690 = sbr.rel (0) target = $region57
    $region56: #{lightgcn_forward.4} parent=1 // pred_region
      %2692 = vsyncadd [#allocation5], 0
      %s2693 = sshll.u32 [#allocation4], 4
      %s2694 = int_to_ptr.vmem [resolvable:$true] %s2693
      %s2695 = sshll.u32 %s7, 4
      %s2696 = int_to_ptr.hbm [resolvable:$true] %s2695
      %2701 = dma.vmem_to_hbm [thread:$0]  %s2694, 4096, %s2696, [#allocation5], 64, 64, 4
    $region57: #{lightgcn_forward.4} parent=1 // pred_fallthru
      _
    // Predicated region
    $region58: #{lightgcn_forward.4} parent=1 // pred_check
      _
    $region59: #{lightgcn_forward.4} parent=1 // pred_check_branch
      %2703 = sbr.rel (0) target = $region61
    $region60: #{lightgcn_forward.4} parent=1 // pred_region
      _
    $region61: #{lightgcn_forward.4} parent=1 // pred_fallthru
      _
    // Predicated region
    $region62: #{lightgcn_forward.4} parent=1 // pred_check
      _
    $region63: #{lightgcn_forward.4} parent=1 // pred_check_branch
      %2705 = sbr.rel (0) target = $region65
    $region64: #{lightgcn_forward.4} parent=1 // pred_region
      %2707 = dma.done [#allocation3], 2048
    $region65: #{lightgcn_forward.4} parent=1 // pred_fallthru
      _
    // Predicated region
    $region66: #{lightgcn_forward.4} parent=1 // pred_check
      _
    $region67: #{lightgcn_forward.4} parent=1 // pred_check_branch
      %2709 = sbr.rel (0) target = $region69
    $region68: #{lightgcn_forward.4} parent=1 // pred_region
      _
    $region69: #{lightgcn_forward.4} parent=1 // pred_fallthru
      _
    // Predicated region
    $region70: #{lightgcn_forward.4} parent=1 // pred_check
      _
    $region71: #{lightgcn_forward.4} parent=1 // pred_check_branch
      %2711 = sbr.rel (0) target = $region73
    $region72: #{lightgcn_forward.4} parent=1 // pred_region
      %2713 = dma.done [#allocation5], 4096
    $region73: #{lightgcn_forward.4} parent=1 // pred_fallthru
      _
    // Predicated region
    $region74: #{lightgcn_forward.4} parent=1 // pred_check
      _
    $region75: #{lightgcn_forward.4} parent=1 // pred_check_branch
      %2715 = sbr.rel (0) target = $region77
    $region76: #{lightgcn_forward.4} parent=1 // pred_region
      _
    $region77: #{lightgcn_forward.4} parent=1 // pred_fallthru
      _
    %2716 = vsyncpa [#allocation3], 1
    %2717 = vsyncpa [#allocation5], 1

// kernel: lightgcn_forward.3
$region0: #{lightgcn_forward.3}
  #allocation0 [shape = 'u32[]', space=smem, size = 0x4, offset = 0x4, fixed_abs, tag = 'smem constant byte address 0x4 - core index']
  #allocation1 [shape = 'u32[72,128]{1,0:T(1,128)}', space=vmem, size = 0x9000, scoped, tag = 'internal scratch']
  %s0 = inlined_call_operand.vmem [shape: bf16[256,512], index: 0, kind: input, shape index: {}]
  %s1 = inlined_call_operand.vmem [shape: bf16[512,128], index: 1, kind: input, shape index: {}]
  %s2 = inlined_call_operand.vmem [shape: bf16[256,128], index: 2, kind: input, shape index: {}]
  %s3 = inlined_call_operand.vmem [shape: f32[256,128], index: 3, kind: input, shape index: {}, may-alias: {3,6}]
  %s4 = inlined_call_operand.vmem [shape: f32[512,128], index: 4, kind: input, shape index: {}, may-alias: {4,8}]
  %s5 = inlined_call_operand.vmem [shape: bf16[256,128], index: 5, kind: output, shape index: {0}]
  %s6 = inlined_call_operand.vmem [shape: f32[256,128], index: 6, kind: output, shape index: {1}, may-alias: {3,6}]
  %s7 = inlined_call_operand.vmem [shape: bf16[512,128], index: 7, kind: output, shape index: {2}]
  %s8 = inlined_call_operand.vmem [shape: f32[512,128], index: 8, kind: output, shape index: {3}, may-alias: {4,8}]
  %9 = xla_tuple %s5, %s6, %s7, %s8
  %s10 = sld [smem:[#allocation0]]
  $region78: #{lightgcn_forward.3} parent=0
    _
  %s12 = ssub.s32 1, %s10
  %s13 = scalar_select 0, %s12, %s10
  // Predicated region
  $region2: #{lightgcn_forward.3} parent=0 // pred_check
    _
  $region3: #{lightgcn_forward.3} parent=0 // pred_check_branch
    %15 = sbr.rel (0) target = $region5
  $region4: #{lightgcn_forward.3} parent=0 // pred_region
    _
  $region5: #{lightgcn_forward.3} parent=0 // pred_fallthru
    _
  // Predicated region
  $region6: #{lightgcn_forward.3} parent=0 // pred_check
    _
  $region7: #{lightgcn_forward.3} parent=0 // pred_check_branch
    %17 = sbr.rel (0) target = $region9
  $region8: #{lightgcn_forward.3} parent=0 // pred_region
    _
  $region9: #{lightgcn_forward.3} parent=0 // pred_fallthru
    _
  // Predicated region
  $region10: #{lightgcn_forward.3} parent=0 // pred_check
    _
  $region11: #{lightgcn_forward.3} parent=0 // pred_check_branch
    %19 = sbr.rel (0) target = $region13
  $region12: #{lightgcn_forward.3} parent=0 // pred_region
    _
  $region13: #{lightgcn_forward.3} parent=0 // pred_fallthru
    _
  // Predicated region
  $region14: #{lightgcn_forward.3} parent=0 // pred_check
    _
  $region15: #{lightgcn_forward.3} parent=0 // pred_check_branch
    %21 = sbr.rel (0) target = $region17
  $region16: #{lightgcn_forward.3} parent=0 // pred_region
    _
  $region17: #{lightgcn_forward.3} parent=0 // pred_fallthru
    _
  // Predicated region
  $region18: #{lightgcn_forward.3} parent=0 // pred_check
    _
  $region19: #{lightgcn_forward.3} parent=0 // pred_check_branch
    %23 = sbr.rel (0) target = $region21
  $region20: #{lightgcn_forward.3} parent=0 // pred_region
    _
  $region21: #{lightgcn_forward.3} parent=0 // pred_fallthru
    _
  %v24 = vld [vmem:[%s0] sm:$0xff]
  %v25 = vld [vmem:[%s0 + $0x8] sm:$0xff]
  %v26 = vld [vmem:[%s0 + $0x10] sm:$0xff]
  %v27 = vld [vmem:[%s0 + $0x18] sm:$0xff]
  %v28 = vld [vmem:[%s0 + $0x20] sm:$0xff]
  %v29 = vld [vmem:[%s0 + $0x28] sm:$0xff]
  %v30 = vld [vmem:[%s0 + $0x30] sm:$0xff]
  %v31 = vld [vmem:[%s0 + $0x38] sm:$0xff]
  %v32 = vld [vmem:[%s0 + $0x40] sm:$0xff]
  %v33 = vld [vmem:[%s0 + $0x48] sm:$0xff]
  %v34 = vld [vmem:[%s0 + $0x50] sm:$0xff]
  %v35 = vld [vmem:[%s0 + $0x58] sm:$0xff]
  %v36 = vld [vmem:[%s0 + $0x60] sm:$0xff]
  %v37 = vld [vmem:[%s0 + $0x68] sm:$0xff]
  %v38 = vld [vmem:[%s0 + $0x70] sm:$0xff]
  %v39 = vld [vmem:[%s0 + $0x78] sm:$0xff]
  %v40 = vld [vmem:[%s0 + $0x80] sm:$0xff]
  %v41 = vld [vmem:[%s0 + $0x88] sm:$0xff]
  %v42 = vld [vmem:[%s0 + $0x90] sm:$0xff]
  %v43 = vld [vmem:[%s0 + $0x98] sm:$0xff]
  %v44 = vld [vmem:[%s0 + $0xa0] sm:$0xff]
  %v45 = vld [vmem:[%s0 + $0xa8] sm:$0xff]
  %v46 = vld [vmem:[%s0 + $0xb0] sm:$0xff]
  %v47 = vld [vmem:[%s0 + $0xb8] sm:$0xff]
  %v48 = vld [vmem:[%s0 + $0xc0] sm:$0xff]
  %v49 = vld [vmem:[%s0 + $0xc8] sm:$0xff]
  %v50 = vld [vmem:[%s0 + $0xd0] sm:$0xff]
  %v51 = vld [vmem:[%s0 + $0xd8] sm:$0xff]
  %v52 = vld [vmem:[%s0 + $0xe0] sm:$0xff]
  %v53 = vld [vmem:[%s0 + $0xe8] sm:$0xff]
  %v54 = vld [vmem:[%s0 + $0xf0] sm:$0xff]
  %v55 = vld [vmem:[%s0 + $0xf8] sm:$0xff]
  %v56 = vld [vmem:[%s0 + $0x100] sm:$0xff]
  %v57 = vld [vmem:[%s0 + $0x108] sm:$0xff]
  %v58 = vld [vmem:[%s0 + $0x110] sm:$0xff]
  %v59 = vld [vmem:[%s0 + $0x118] sm:$0xff]
  %v60 = vld [vmem:[%s0 + $0x120] sm:$0xff]
  %v61 = vld [vmem:[%s0 + $0x128] sm:$0xff]
  %v62 = vld [vmem:[%s0 + $0x130] sm:$0xff]
  %v63 = vld [vmem:[%s0 + $0x138] sm:$0xff]
  %v64 = vld [vmem:[%s0 + $0x140] sm:$0xff]
  %v65 = vld [vmem:[%s0 + $0x148] sm:$0xff]
  %v66 = vld [vmem:[%s0 + $0x150] sm:$0xff]
  %v67 = vld [vmem:[%s0 + $0x158] sm:$0xff]
  %v68 = vld [vmem:[%s0 + $0x160] sm:$0xff]
  %v69 = vld [vmem:[%s0 + $0x168] sm:$0xff]
  %v70 = vld [vmem:[%s0 + $0x170] sm:$0xff]
  %v71 = vld [vmem:[%s0 + $0x178] sm:$0xff]
  %v72 = vld [vmem:[%s0 + $0x180] sm:$0xff]
  %v73 = vld [vmem:[%s0 + $0x188] sm:$0xff]
  %v74 = vld [vmem:[%s0 + $0x190] sm:$0xff]
  %v75 = vld [vmem:[%s0 + $0x198] sm:$0xff]
  %v76 = vld [vmem:[%s0 + $0x1a0] sm:$0xff]
  %v77 = vld [vmem:[%s0 + $0x1a8] sm:$0xff]
  %v78 = vld [vmem:[%s0 + $0x1b0] sm:$0xff]
  %v79 = vld [vmem:[%s0 + $0x1b8] sm:$0xff]
  %v80 = vld [vmem:[%s0 + $0x1c0] sm:$0xff]
  %v81 = vld [vmem:[%s0 + $0x1c8] sm:$0xff]
  %v82 = vld [vmem:[%s0 + $0x1d0] sm:$0xff]
  %v83 = vld [vmem:[%s0 + $0x1d8] sm:$0xff]
  %v84 = vld [vmem:[%s0 + $0x1e0] sm:$0xff]
  %v85 = vld [vmem:[%s0 + $0x1e8] sm:$0xff]
  %v86 = vld [vmem:[%s0 + $0x1f0] sm:$0xff]
  %v87 = vld [vmem:[%s0 + $0x1f8] sm:$0xff]
  %s88 = smul.u32 0, 512
  %s89 = sshra.s32 %s88, 3
  %s90 = sand.u32 %s88, 7
  %s91 = smul.addr %s89, 4
  %s92 = scalar_lea.vmem %s1, %s91
  %v93 = vld [vmem:[%s92] sm:$0xf]
  %v94 = vld [vmem:[%s92 + $0x4] sm:$0xf]
  %v95 = vld [vmem:[%s92 + $0x8] sm:$0xf]
  %v96 = vld [vmem:[%s92 + $0xc] sm:$0xf]
  %v97 = vld [vmem:[%s92 + $0x10] sm:$0xf]
  %v98 = vld [vmem:[%s92 + $0x14] sm:$0xf]
  %v99 = vld [vmem:[%s92 + $0x18] sm:$0xf]
  %v100 = vld [vmem:[%s92 + $0x1c] sm:$0xf]
  %v101 = vld [vmem:[%s92 + $0x20] sm:$0xf]
  %v102 = vld [vmem:[%s92 + $0x24] sm:$0xf]
  %v103 = vld [vmem:[%s92 + $0x28] sm:$0xf]
  %v104 = vld [vmem:[%s92 + $0x2c] sm:$0xf]
  %v105 = vld [vmem:[%s92 + $0x30] sm:$0xf]
  %v106 = vld [vmem:[%s92 + $0x34] sm:$0xf]
  %v107 = vld [vmem:[%s92 + $0x38] sm:$0xf]
  %v108 = vld [vmem:[%s92 + $0x3c] sm:$0xf]
  %v109 = vld [vmem:[%s92 + $0x40] sm:$0xf]
  %v110 = vld [vmem:[%s92 + $0x44] sm:$0xf]
  %v111 = vld [vmem:[%s92 + $0x48] sm:$0xf]
  %v112 = vld [vmem:[%s92 + $0x4c] sm:$0xf]
  %v113 = vld [vmem:[%s92 + $0x50] sm:$0xf]
  %v114 = vld [vmem:[%s92 + $0x54] sm:$0xf]
  %v115 = vld [vmem:[%s92 + $0x58] sm:$0xf]
  %v116 = vld [vmem:[%s92 + $0x5c] sm:$0xf]
  %v117 = vld [vmem:[%s92 + $0x60] sm:$0xf]
  %v118 = vld [vmem:[%s92 + $0x64] sm:$0xf]
  %v119 = vld [vmem:[%s92 + $0x68] sm:$0xf]
  %v120 = vld [vmem:[%s92 + $0x6c] sm:$0xf]
  %v121 = vld [vmem:[%s92 + $0x70] sm:$0xf]
  %v122 = vld [vmem:[%s92 + $0x74] sm:$0xf]
  %v123 = vld [vmem:[%s92 + $0x78] sm:$0xf]
  %v124 = vld [vmem:[%s92 + $0x7c] sm:$0xf]
  %v125 = vld [vmem:[%s92 + $0x80] sm:$0xf]
  %v126 = vld [vmem:[%s92 + $0x84] sm:$0xf]
  %v127 = vld [vmem:[%s92 + $0x88] sm:$0xf]
  %v128 = vld [vmem:[%s92 + $0x8c] sm:$0xf]
  %v129 = vld [vmem:[%s92 + $0x90] sm:$0xf]
  %v130 = vld [vmem:[%s92 + $0x94] sm:$0xf]
  %v131 = vld [vmem:[%s92 + $0x98] sm:$0xf]
  %v132 = vld [vmem:[%s92 + $0x9c] sm:$0xf]
  %v133 = vld [vmem:[%s92 + $0xa0] sm:$0xf]
  %v134 = vld [vmem:[%s92 + $0xa4] sm:$0xf]
  %v135 = vld [vmem:[%s92 + $0xa8] sm:$0xf]
  %v136 = vld [vmem:[%s92 + $0xac] sm:$0xf]
  %v137 = vld [vmem:[%s92 + $0xb0] sm:$0xf]
  %v138 = vld [vmem:[%s92 + $0xb4] sm:$0xf]
  %v139 = vld [vmem:[%s92 + $0xb8] sm:$0xf]
  %v140 = vld [vmem:[%s92 + $0xbc] sm:$0xf]
  %v141 = vld [vmem:[%s92 + $0xc0] sm:$0xf]
  %v142 = vld [vmem:[%s92 + $0xc4] sm:$0xf]
  %v143 = vld [vmem:[%s92 + $0xc8] sm:$0xf]
  %v144 = vld [vmem:[%s92 + $0xcc] sm:$0xf]
  %v145 = vld [vmem:[%s92 + $0xd0] sm:$0xf]
  %v146 = vld [vmem:[%s92 + $0xd4] sm:$0xf]
  %v147 = vld [vmem:[%s92 + $0xd8] sm:$0xf]
  %v148 = vld [vmem:[%s92 + $0xdc] sm:$0xf]
  %v149 = vld [vmem:[%s92 + $0xe0] sm:$0xf]
  %v150 = vld [vmem:[%s92 + $0xe4] sm:$0xf]
  %v151 = vld [vmem:[%s92 + $0xe8] sm:$0xf]
  %v152 = vld [vmem:[%s92 + $0xec] sm:$0xf]
  %v153 = vld [vmem:[%s92 + $0xf0] sm:$0xf]
  %v154 = vld [vmem:[%s92 + $0xf4] sm:$0xf]
  %v155 = vld [vmem:[%s92 + $0xf8] sm:$0xf]
  %v156 = vld [vmem:[%s92 + $0xfc] sm:$0xf]
  %v221 = vunpack.c.l.b16 %v24
  %v222 = vunpack.c.h.b16 %v24
  %v223 = vunpack.c.l.b16 %v25
  %v224 = vunpack.c.h.b16 %v25
  %v225 = vunpack.c.l.b16 %v26
  %v226 = vunpack.c.h.b16 %v26
  %v227 = vunpack.c.l.b16 %v27
  %v228 = vunpack.c.h.b16 %v27
  %v229 = vunpack.c.l.b16 %v28
  %v230 = vunpack.c.h.b16 %v28
  %v231 = vunpack.c.l.b16 %v29
  %v232 = vunpack.c.h.b16 %v29
  %v233 = vunpack.c.l.b16 %v30
  %v234 = vunpack.c.h.b16 %v30
  %v235 = vunpack.c.l.b16 %v31
  %v236 = vunpack.c.h.b16 %v31
  %v237 = vunpack.c.l.b16 %v32
  %v238 = vunpack.c.h.b16 %v32
  %v239 = vunpack.c.l.b16 %v33
  %v240 = vunpack.c.h.b16 %v33
  %v241 = vunpack.c.l.b16 %v34
  %v242 = vunpack.c.h.b16 %v34
  %v243 = vunpack.c.l.b16 %v35
  %v244 = vunpack.c.h.b16 %v35
  %v245 = vunpack.c.l.b16 %v36
  %v246 = vunpack.c.h.b16 %v36
  %v247 = vunpack.c.l.b16 %v37
  %v248 = vunpack.c.h.b16 %v37
  %v249 = vunpack.c.l.b16 %v38
  %v250 = vunpack.c.h.b16 %v38
  %v251 = vunpack.c.l.b16 %v39
  %v252 = vunpack.c.h.b16 %v39
  %v253 = vunpack.c.l.b16 %v40
  %v254 = vunpack.c.h.b16 %v40
  %v255 = vunpack.c.l.b16 %v41
  %v256 = vunpack.c.h.b16 %v41
  %v257 = vunpack.c.l.b16 %v42
  %v258 = vunpack.c.h.b16 %v42
  %v259 = vunpack.c.l.b16 %v43
  %v260 = vunpack.c.h.b16 %v43
  %v261 = vunpack.c.l.b16 %v44
  %v262 = vunpack.c.h.b16 %v44
  %v263 = vunpack.c.l.b16 %v45
  %v264 = vunpack.c.h.b16 %v45
  %v265 = vunpack.c.l.b16 %v46
  %v266 = vunpack.c.h.b16 %v46
  %v267 = vunpack.c.l.b16 %v47
  %v268 = vunpack.c.h.b16 %v47
  %v269 = vunpack.c.l.b16 %v48
  %v270 = vunpack.c.h.b16 %v48
  %v271 = vunpack.c.l.b16 %v49
  %v272 = vunpack.c.h.b16 %v49
  %v273 = vunpack.c.l.b16 %v50
  %v274 = vunpack.c.h.b16 %v50
  %v275 = vunpack.c.l.b16 %v51
  %v276 = vunpack.c.h.b16 %v51
  %v277 = vunpack.c.l.b16 %v52
  %v278 = vunpack.c.h.b16 %v52
  %v279 = vunpack.c.l.b16 %v53
  %v280 = vunpack.c.h.b16 %v53
  %v281 = vunpack.c.l.b16 %v54
  %v282 = vunpack.c.h.b16 %v54
  %v283 = vunpack.c.l.b16 %v55
  %v284 = vunpack.c.h.b16 %v55
  %v285 = vunpack.c.l.b16 %v56
  %v286 = vunpack.c.h.b16 %v56
  %v287 = vunpack.c.l.b16 %v57
  %v288 = vunpack.c.h.b16 %v57
  %v289 = vunpack.c.l.b16 %v58
  %v290 = vunpack.c.h.b16 %v58
  %v291 = vunpack.c.l.b16 %v59
  %v292 = vunpack.c.h.b16 %v59
  %v293 = vunpack.c.l.b16 %v60
  %v294 = vunpack.c.h.b16 %v60
  %v295 = vunpack.c.l.b16 %v61
  %v296 = vunpack.c.h.b16 %v61
  %v297 = vunpack.c.l.b16 %v62
  %v298 = vunpack.c.h.b16 %v62
  %v299 = vunpack.c.l.b16 %v63
  %v300 = vunpack.c.h.b16 %v63
  %v301 = vunpack.c.l.b16 %v64
  %v302 = vunpack.c.h.b16 %v64
  %v303 = vunpack.c.l.b16 %v65
  %v304 = vunpack.c.h.b16 %v65
  %v305 = vunpack.c.l.b16 %v66
  %v306 = vunpack.c.h.b16 %v66
  %v307 = vunpack.c.l.b16 %v67
  %v308 = vunpack.c.h.b16 %v67
  %v309 = vunpack.c.l.b16 %v68
  %v310 = vunpack.c.h.b16 %v68
  %v311 = vunpack.c.l.b16 %v69
  %v312 = vunpack.c.h.b16 %v69
  %v313 = vunpack.c.l.b16 %v70
  %v314 = vunpack.c.h.b16 %v70
  %v315 = vunpack.c.l.b16 %v71
  %v316 = vunpack.c.h.b16 %v71
  %v317 = vunpack.c.l.b16 %v72
  %v318 = vunpack.c.h.b16 %v72
  %v319 = vunpack.c.l.b16 %v73
  %v320 = vunpack.c.h.b16 %v73
  %v321 = vunpack.c.l.b16 %v74
  %v322 = vunpack.c.h.b16 %v74
  %v323 = vunpack.c.l.b16 %v75
  %v324 = vunpack.c.h.b16 %v75
  %v325 = vunpack.c.l.b16 %v76
  %v326 = vunpack.c.h.b16 %v76
  %v327 = vunpack.c.l.b16 %v77
  %v328 = vunpack.c.h.b16 %v77
  %v329 = vunpack.c.l.b16 %v78
  %v330 = vunpack.c.h.b16 %v78
  %v331 = vunpack.c.l.b16 %v79
  %v332 = vunpack.c.h.b16 %v79
  %v333 = vunpack.c.l.b16 %v80
  %v334 = vunpack.c.h.b16 %v80
  %v335 = vunpack.c.l.b16 %v81
  %v336 = vunpack.c.h.b16 %v81
  %v337 = vunpack.c.l.b16 %v82
  %v338 = vunpack.c.h.b16 %v82
  %v339 = vunpack.c.l.b16 %v83
  %v340 = vunpack.c.h.b16 %v83
  %v341 = vunpack.c.l.b16 %v84
  %v342 = vunpack.c.h.b16 %v84
  %v343 = vunpack.c.l.b16 %v85
  %v344 = vunpack.c.h.b16 %v85
  %v345 = vunpack.c.l.b16 %v86
  %v346 = vunpack.c.h.b16 %v86
  %v347 = vunpack.c.l.b16 %v87
  %v348 = vunpack.c.h.b16 %v87
  %v349 = vpack.c.b16 %v225, %v221
  %v350 = vpack.c.b16 %v226, %v222
  %v351 = vpack.c.b16 %v227, %v223
  %v352 = vpack.c.b16 %v228, %v224
  %v353 = vpack.c.b16 %v233, %v229
  %v354 = vpack.c.b16 %v234, %v230
  %v355 = vpack.c.b16 %v235, %v231
  %v356 = vpack.c.b16 %v236, %v232
  %v357 = vpack.c.b16 %v241, %v237
  %v358 = vpack.c.b16 %v242, %v238
  %v359 = vpack.c.b16 %v243, %v239
  %v360 = vpack.c.b16 %v244, %v240
  %v361 = vpack.c.b16 %v249, %v245
  %v362 = vpack.c.b16 %v250, %v246
  %v363 = vpack.c.b16 %v251, %v247
  %v364 = vpack.c.b16 %v252, %v248
  %v365 = vpack.c.b16 %v257, %v253
  %v366 = vpack.c.b16 %v258, %v254
  %v367 = vpack.c.b16 %v259, %v255
  %v368 = vpack.c.b16 %v260, %v256
  %v369 = vpack.c.b16 %v265, %v261
  %v370 = vpack.c.b16 %v266, %v262
  %v371 = vpack.c.b16 %v267, %v263
  %v372 = vpack.c.b16 %v268, %v264
  %v373 = vpack.c.b16 %v273, %v269
  %v374 = vpack.c.b16 %v274, %v270
  %v375 = vpack.c.b16 %v275, %v271
  %v376 = vpack.c.b16 %v276, %v272
  %v377 = vpack.c.b16 %v281, %v277
  %v378 = vpack.c.b16 %v282, %v278
  %v379 = vpack.c.b16 %v283, %v279
  %v380 = vpack.c.b16 %v284, %v280
  %v381 = vpack.c.b16 %v289, %v285
  %v382 = vpack.c.b16 %v290, %v286
  %v383 = vpack.c.b16 %v291, %v287
  %v384 = vpack.c.b16 %v292, %v288
  %v385 = vpack.c.b16 %v297, %v293
  %v386 = vpack.c.b16 %v298, %v294
  %v387 = vpack.c.b16 %v299, %v295
  %v388 = vpack.c.b16 %v300, %v296
  %v389 = vpack.c.b16 %v305, %v301
  %v390 = vpack.c.b16 %v306, %v302
  %v391 = vpack.c.b16 %v307, %v303
  %v392 = vpack.c.b16 %v308, %v304
  %v393 = vpack.c.b16 %v313, %v309
  %v394 = vpack.c.b16 %v314, %v310
  %v395 = vpack.c.b16 %v315, %v311
  %v396 = vpack.c.b16 %v316, %v312
  %v397 = vpack.c.b16 %v321, %v317
  %v398 = vpack.c.b16 %v322, %v318
  %v399 = vpack.c.b16 %v323, %v319
  %v400 = vpack.c.b16 %v324, %v320
  %v401 = vpack.c.b16 %v329, %v325
  %v402 = vpack.c.b16 %v330, %v326
  %v403 = vpack.c.b16 %v331, %v327
  %v404 = vpack.c.b16 %v332, %v328
  %v405 = vpack.c.b16 %v337, %v333
  %v406 = vpack.c.b16 %v338, %v334
  %v407 = vpack.c.b16 %v339, %v335
  %v408 = vpack.c.b16 %v340, %v336
  %v409 = vpack.c.b16 %v345, %v341
  %v410 = vpack.c.b16 %v346, %v342
  %v411 = vpack.c.b16 %v347, %v343
  %v412 = vpack.c.b16 %v348, %v344
  %v541 = vunpack.c.l.b16 %v93
  %v542 = vunpack.c.l.b16 %v94
  %v543 = vunpack.c.l.b16 %v95
  %v544 = vunpack.c.l.b16 %v96
  %v545 = vunpack.c.l.b16 %v97
  %v546 = vunpack.c.l.b16 %v98
  %v547 = vunpack.c.l.b16 %v99
  %v548 = vunpack.c.l.b16 %v100
  %v549 = vunpack.c.l.b16 %v101
  %v550 = vunpack.c.l.b16 %v102
  %v551 = vunpack.c.l.b16 %v103
  %v552 = vunpack.c.l.b16 %v104
  %v553 = vunpack.c.l.b16 %v105
  %v554 = vunpack.c.l.b16 %v106
  %v555 = vunpack.c.l.b16 %v107
  %v556 = vunpack.c.l.b16 %v108
  %v557 = vunpack.c.l.b16 %v109
  %v558 = vunpack.c.l.b16 %v110
  %v559 = vunpack.c.l.b16 %v111
  %v560 = vunpack.c.l.b16 %v112
  %v561 = vunpack.c.l.b16 %v113
  %v562 = vunpack.c.l.b16 %v114
  %v563 = vunpack.c.l.b16 %v115
  %v564 = vunpack.c.l.b16 %v116
  %v565 = vunpack.c.l.b16 %v117
  %v566 = vunpack.c.l.b16 %v118
  %v567 = vunpack.c.l.b16 %v119
  %v568 = vunpack.c.l.b16 %v120
  %v569 = vunpack.c.l.b16 %v121
  %v570 = vunpack.c.l.b16 %v122
  %v571 = vunpack.c.l.b16 %v123
  %v572 = vunpack.c.l.b16 %v124
  %v573 = vunpack.c.l.b16 %v125
  %v574 = vunpack.c.l.b16 %v126
  %v575 = vunpack.c.l.b16 %v127
  %v576 = vunpack.c.l.b16 %v128
  %v577 = vunpack.c.l.b16 %v129
  %v578 = vunpack.c.l.b16 %v130
  %v579 = vunpack.c.l.b16 %v131
  %v580 = vunpack.c.l.b16 %v132
  %v581 = vunpack.c.l.b16 %v133
  %v582 = vunpack.c.l.b16 %v134
  %v583 = vunpack.c.l.b16 %v135
  %v584 = vunpack.c.l.b16 %v136
  %v585 = vunpack.c.l.b16 %v137
  %v586 = vunpack.c.l.b16 %v138
  %v587 = vunpack.c.l.b16 %v139
  %v588 = vunpack.c.l.b16 %v140
  %v589 = vunpack.c.l.b16 %v141
  %v590 = vunpack.c.l.b16 %v142
  %v591 = vunpack.c.l.b16 %v143
  %v592 = vunpack.c.l.b16 %v144
  %v593 = vunpack.c.l.b16 %v145
  %v594 = vunpack.c.l.b16 %v146
  %v595 = vunpack.c.l.b16 %v147
  %v596 = vunpack.c.l.b16 %v148
  %v597 = vunpack.c.l.b16 %v149
  %v598 = vunpack.c.l.b16 %v150
  %v599 = vunpack.c.l.b16 %v151
  %v600 = vunpack.c.l.b16 %v152
  %v601 = vunpack.c.l.b16 %v153
  %v602 = vunpack.c.l.b16 %v154
  %v603 = vunpack.c.l.b16 %v155
  %v604 = vunpack.c.l.b16 %v156
  %v605 = vpack.c.b16 %v542, %v541
  %v606 = vpack.c.b16 %v544, %v543
  %v607 = vpack.c.b16 %v546, %v545
  %v608 = vpack.c.b16 %v548, %v547
  %v609 = vpack.c.b16 %v550, %v549
  %v610 = vpack.c.b16 %v552, %v551
  %v611 = vpack.c.b16 %v554, %v553
  %v612 = vpack.c.b16 %v556, %v555
  %v613 = vpack.c.b16 %v558, %v557
  %v614 = vpack.c.b16 %v560, %v559
  %v615 = vpack.c.b16 %v562, %v561
  %v616 = vpack.c.b16 %v564, %v563
  %v617 = vpack.c.b16 %v566, %v565
  %v618 = vpack.c.b16 %v568, %v567
  %v619 = vpack.c.b16 %v570, %v569
  %v620 = vpack.c.b16 %v572, %v571
  %v621 = vpack.c.b16 %v574, %v573
  %v622 = vpack.c.b16 %v576, %v575
  %v623 = vpack.c.b16 %v578, %v577
  %v624 = vpack.c.b16 %v580, %v579
  %v625 = vpack.c.b16 %v582, %v581
  %v626 = vpack.c.b16 %v584, %v583
  %v627 = vpack.c.b16 %v586, %v585
  %v628 = vpack.c.b16 %v588, %v587
  %v629 = vpack.c.b16 %v590, %v589
  %v630 = vpack.c.b16 %v592, %v591
  %v631 = vpack.c.b16 %v594, %v593
  %v632 = vpack.c.b16 %v596, %v595
  %v633 = vpack.c.b16 %v598, %v597
  %v634 = vpack.c.b16 %v600, %v599
  %v635 = vpack.c.b16 %v602, %v601
  %v636 = vpack.c.b16 %v604, %v603
  %669 = vmatpush.bf16.msra.mxu0 %v612
  %670 = vmatpush.bf16.msra.mxu0 %v611
  %671 = vmatpush.bf16.msra.mxu0 %v610
  %672 = vmatpush.bf16.msra.mxu0 %v609
  %673 = vmatpush.bf16.msra.mxu0 %v608
  %674 = vmatpush.bf16.msra.mxu0 %v607
  %675 = vmatpush.bf16.msra.mxu0 %v606
  %676 = vmatpush.bf16.msra.mxu0 %v605
  %677 = vmatmul.bf16.gmra.mxu0 %v349
  %v678 = vpop.f32.mrf.mxu0
  %v679 = vadd.f32 0.0, %v678
  %v680 = vpop.f32.mrf.mxu0
  %v681 = vadd.f32 0.0, %v680
  %682 = vmatmul.bf16.gmra.mxu0 %v353
  %v683 = vpop.f32.mrf.mxu0
  %v684 = vadd.f32 0.0, %v683
  %v685 = vpop.f32.mrf.mxu0
  %v686 = vadd.f32 0.0, %v685
  %687 = vmatmul.bf16.gmra.mxu0 %v357
  %v688 = vpop.f32.mrf.mxu0
  %v689 = vadd.f32 0.0, %v688
  %v690 = vpop.f32.mrf.mxu0
  %v691 = vadd.f32 0.0, %v690
  %692 = vmatmul.bf16.gmra.mxu0 %v361
  %v693 = vpop.f32.mrf.mxu0
  %v694 = vadd.f32 0.0, %v693
  %v695 = vpop.f32.mrf.mxu0
  %v696 = vadd.f32 0.0, %v695
  %697 = vmatmul.bf16.gmra.mxu0 %v365
  %v698 = vpop.f32.mrf.mxu0
  %v699 = vadd.f32 0.0, %v698
  %v700 = vpop.f32.mrf.mxu0
  %v701 = vadd.f32 0.0, %v700
  %702 = vmatmul.bf16.gmra.mxu0 %v369
  %v703 = vpop.f32.mrf.mxu0
  %v704 = vadd.f32 0.0, %v703
  %v705 = vpop.f32.mrf.mxu0
  %v706 = vadd.f32 0.0, %v705
  %707 = vmatmul.bf16.gmra.mxu0 %v373
  %v708 = vpop.f32.mrf.mxu0
  %v709 = vadd.f32 0.0, %v708
  %v710 = vpop.f32.mrf.mxu0
  %v711 = vadd.f32 0.0, %v710
  %712 = vmatmul.bf16.gmra.mxu0 %v377
  %v713 = vpop.f32.mrf.mxu0
  %v714 = vadd.f32 0.0, %v713
  %v715 = vpop.f32.mrf.mxu0
  %v716 = vadd.f32 0.0, %v715
  %717 = vmatmul.bf16.gmra.mxu0 %v381
  %v718 = vpop.f32.mrf.mxu0
  %v719 = vadd.f32 0.0, %v718
  %v720 = vpop.f32.mrf.mxu0
  %v721 = vadd.f32 0.0, %v720
  %722 = vmatmul.bf16.gmra.mxu0 %v385
  %v723 = vpop.f32.mrf.mxu0
  %v724 = vadd.f32 0.0, %v723
  %v725 = vpop.f32.mrf.mxu0
  %v726 = vadd.f32 0.0, %v725
  %727 = vmatmul.bf16.gmra.mxu0 %v389
  %v728 = vpop.f32.mrf.mxu0
  %v729 = vadd.f32 0.0, %v728
  %v730 = vpop.f32.mrf.mxu0
  %v731 = vadd.f32 0.0, %v730
  %732 = vmatmul.bf16.gmra.mxu0 %v393
  %v733 = vpop.f32.mrf.mxu0
  %v734 = vadd.f32 0.0, %v733
  %v735 = vpop.f32.mrf.mxu0
  %v736 = vadd.f32 0.0, %v735
  %737 = vmatmul.bf16.gmra.mxu0 %v397
  %v738 = vpop.f32.mrf.mxu0
  %v739 = vadd.f32 0.0, %v738
  %v740 = vpop.f32.mrf.mxu0
  %v741 = vadd.f32 0.0, %v740
  %742 = vmatmul.bf16.gmra.mxu0 %v401
  %v743 = vpop.f32.mrf.mxu0
  %v744 = vadd.f32 0.0, %v743
  %v745 = vpop.f32.mrf.mxu0
  %v746 = vadd.f32 0.0, %v745
  %747 = vmatmul.bf16.gmra.mxu0 %v405
  %v748 = vpop.f32.mrf.mxu0
  %v749 = vadd.f32 0.0, %v748
  %v750 = vpop.f32.mrf.mxu0
  %v751 = vadd.f32 0.0, %v750
  %752 = vmatmul.bf16.gmra.mxu0 %v409
  %v753 = vpop.f32.mrf.mxu0
  %v754 = vadd.f32 0.0, %v753
  %v755 = vpop.f32.mrf.mxu0
  %v756 = vadd.f32 0.0, %v755
  %757 = vdwg.mxu0
  %758 = vmatpush.bf16.msra.mxu0 %v620
  %759 = vmatpush.bf16.msra.mxu0 %v619
  %760 = vmatpush.bf16.msra.mxu0 %v618
  %761 = vmatpush.bf16.msra.mxu0 %v617
  %762 = vmatpush.bf16.msra.mxu0 %v616
  %763 = vmatpush.bf16.msra.mxu0 %v615
  %764 = vmatpush.bf16.msra.mxu0 %v614
  %765 = vmatpush.bf16.msra.mxu0 %v613
  %766 = vmatmul.bf16.gmra.mxu0 %v350
  %v767 = vpop.f32.mrf.mxu0
  %v768 = vadd.f32 %v679, %v767
  %v769 = vpop.f32.mrf.mxu0
  %v770 = vadd.f32 %v681, %v769
  %771 = vmatmul.bf16.gmra.mxu0 %v354
  %v772 = vpop.f32.mrf.mxu0
  %v773 = vadd.f32 %v684, %v772
  %v774 = vpop.f32.mrf.mxu0
  %v775 = vadd.f32 %v686, %v774
  %776 = vmatmul.bf16.gmra.mxu0 %v358
  %v777 = vpop.f32.mrf.mxu0
  %v778 = vadd.f32 %v689, %v777
  %v779 = vpop.f32.mrf.mxu0
  %v780 = vadd.f32 %v691, %v779
  %781 = vmatmul.bf16.gmra.mxu0 %v362
  %v782 = vpop.f32.mrf.mxu0
  %v783 = vadd.f32 %v694, %v782
  %v784 = vpop.f32.mrf.mxu0
  %v785 = vadd.f32 %v696, %v784
  %786 = vmatmul.bf16.gmra.mxu0 %v366
  %v787 = vpop.f32.mrf.mxu0
  %v788 = vadd.f32 %v699, %v787
  %v789 = vpop.f32.mrf.mxu0
  %v790 = vadd.f32 %v701, %v789
  %791 = vmatmul.bf16.gmra.mxu0 %v370
  %v792 = vpop.f32.mrf.mxu0
  %v793 = vadd.f32 %v704, %v792
  %v794 = vpop.f32.mrf.mxu0
  %v795 = vadd.f32 %v706, %v794
  %796 = vmatmul.bf16.gmra.mxu0 %v374
  %v797 = vpop.f32.mrf.mxu0
  %v798 = vadd.f32 %v709, %v797
  %v799 = vpop.f32.mrf.mxu0
  %v800 = vadd.f32 %v711, %v799
  %801 = vmatmul.bf16.gmra.mxu0 %v378
  %v802 = vpop.f32.mrf.mxu0
  %v803 = vadd.f32 %v714, %v802
  %v804 = vpop.f32.mrf.mxu0
  %v805 = vadd.f32 %v716, %v804
  %806 = vmatmul.bf16.gmra.mxu0 %v382
  %v807 = vpop.f32.mrf.mxu0
  %v808 = vadd.f32 %v719, %v807
  %v809 = vpop.f32.mrf.mxu0
  %v810 = vadd.f32 %v721, %v809
  %811 = vmatmul.bf16.gmra.mxu0 %v386
  %v812 = vpop.f32.mrf.mxu0
  %v813 = vadd.f32 %v724, %v812
  %v814 = vpop.f32.mrf.mxu0
  %v815 = vadd.f32 %v726, %v814
  %816 = vmatmul.bf16.gmra.mxu0 %v390
  %v817 = vpop.f32.mrf.mxu0
  %v818 = vadd.f32 %v729, %v817
  %v819 = vpop.f32.mrf.mxu0
  %v820 = vadd.f32 %v731, %v819
  %821 = vmatmul.bf16.gmra.mxu0 %v394
  %v822 = vpop.f32.mrf.mxu0
  %v823 = vadd.f32 %v734, %v822
  %v824 = vpop.f32.mrf.mxu0
  %v825 = vadd.f32 %v736, %v824
  %826 = vmatmul.bf16.gmra.mxu0 %v398
  %v827 = vpop.f32.mrf.mxu0
  %v828 = vadd.f32 %v739, %v827
  %v829 = vpop.f32.mrf.mxu0
  %v830 = vadd.f32 %v741, %v829
  %831 = vmatmul.bf16.gmra.mxu0 %v402
  %v832 = vpop.f32.mrf.mxu0
  %v833 = vadd.f32 %v744, %v832
  %v834 = vpop.f32.mrf.mxu0
  %v835 = vadd.f32 %v746, %v834
  %836 = vmatmul.bf16.gmra.mxu0 %v406
  %v837 = vpop.f32.mrf.mxu0
  %v838 = vadd.f32 %v749, %v837
  %v839 = vpop.f32.mrf.mxu0
  %v840 = vadd.f32 %v751, %v839
  %841 = vmatmul.bf16.gmra.mxu0 %v410
  %v842 = vpop.f32.mrf.mxu0
  %v843 = vadd.f32 %v754, %v842
  %v844 = vpop.f32.mrf.mxu0
  %v845 = vadd.f32 %v756, %v844
  %846 = vdwg.mxu0
  %847 = vmatpush.bf16.msra.mxu0 %v628
  %848 = vmatpush.bf16.msra.mxu0 %v627
  %849 = vmatpush.bf16.msra.mxu0 %v626
  %850 = vmatpush.bf16.msra.mxu0 %v625
  %851 = vmatpush.bf16.msra.mxu0 %v624
  %852 = vmatpush.bf16.msra.mxu0 %v623
  %853 = vmatpush.bf16.msra.mxu0 %v622
  %854 = vmatpush.bf16.msra.mxu0 %v621
  %855 = vmatmul.bf16.gmra.mxu0 %v351
  %v856 = vpop.f32.mrf.mxu0
  %v857 = vadd.f32 %v768, %v856
  %v858 = vpop.f32.mrf.mxu0
  %v859 = vadd.f32 %v770, %v858
  %860 = vmatmul.bf16.gmra.mxu0 %v355
  %v861 = vpop.f32.mrf.mxu0
  %v862 = vadd.f32 %v773, %v861
  %v863 = vpop.f32.mrf.mxu0
  %v864 = vadd.f32 %v775, %v863
  %865 = vmatmul.bf16.gmra.mxu0 %v359
  %v866 = vpop.f32.mrf.mxu0
  %v867 = vadd.f32 %v778, %v866
  %v868 = vpop.f32.mrf.mxu0
  %v869 = vadd.f32 %v780, %v868
  %870 = vmatmul.bf16.gmra.mxu0 %v363
  %v871 = vpop.f32.mrf.mxu0
  %v872 = vadd.f32 %v783, %v871
  %v873 = vpop.f32.mrf.mxu0
  %v874 = vadd.f32 %v785, %v873
  %875 = vmatmul.bf16.gmra.mxu0 %v367
  %v876 = vpop.f32.mrf.mxu0
  %v877 = vadd.f32 %v788, %v876
  %v878 = vpop.f32.mrf.mxu0
  %v879 = vadd.f32 %v790, %v878
  %880 = vmatmul.bf16.gmra.mxu0 %v371
  %v881 = vpop.f32.mrf.mxu0
  %v882 = vadd.f32 %v793, %v881
  %v883 = vpop.f32.mrf.mxu0
  %v884 = vadd.f32 %v795, %v883
  %885 = vmatmul.bf16.gmra.mxu0 %v375
  %v886 = vpop.f32.mrf.mxu0
  %v887 = vadd.f32 %v798, %v886
  %v888 = vpop.f32.mrf.mxu0
  %v889 = vadd.f32 %v800, %v888
  %890 = vmatmul.bf16.gmra.mxu0 %v379
  %v891 = vpop.f32.mrf.mxu0
  %v892 = vadd.f32 %v803, %v891
  %v893 = vpop.f32.mrf.mxu0
  %v894 = vadd.f32 %v805, %v893
  %895 = vmatmul.bf16.gmra.mxu0 %v383
  %v896 = vpop.f32.mrf.mxu0
  %v897 = vadd.f32 %v808, %v896
  %v898 = vpop.f32.mrf.mxu0
  %v899 = vadd.f32 %v810, %v898
  %900 = vmatmul.bf16.gmra.mxu0 %v387
  %v901 = vpop.f32.mrf.mxu0
  %v902 = vadd.f32 %v813, %v901
  %v903 = vpop.f32.mrf.mxu0
  %v904 = vadd.f32 %v815, %v903
  %905 = vmatmul.bf16.gmra.mxu0 %v391
  %v906 = vpop.f32.mrf.mxu0
  %v907 = vadd.f32 %v818, %v906
  %v908 = vpop.f32.mrf.mxu0
  %v909 = vadd.f32 %v820, %v908
  %910 = vmatmul.bf16.gmra.mxu0 %v395
  %v911 = vpop.f32.mrf.mxu0
  %v912 = vadd.f32 %v823, %v911
  %v913 = vpop.f32.mrf.mxu0
  %v914 = vadd.f32 %v825, %v913
  %915 = vmatmul.bf16.gmra.mxu0 %v399
  %v916 = vpop.f32.mrf.mxu0
  %v917 = vadd.f32 %v828, %v916
  %v918 = vpop.f32.mrf.mxu0
  %v919 = vadd.f32 %v830, %v918
  %920 = vmatmul.bf16.gmra.mxu0 %v403
  %v921 = vpop.f32.mrf.mxu0
  %v922 = vadd.f32 %v833, %v921
  %v923 = vpop.f32.mrf.mxu0
  %v924 = vadd.f32 %v835, %v923
  %925 = vmatmul.bf16.gmra.mxu0 %v407
  %v926 = vpop.f32.mrf.mxu0
  %v927 = vadd.f32 %v838, %v926
  %v928 = vpop.f32.mrf.mxu0
  %v929 = vadd.f32 %v840, %v928
  %930 = vmatmul.bf16.gmra.mxu0 %v411
  %v931 = vpop.f32.mrf.mxu0
  %v932 = vadd.f32 %v843, %v931
  %v933 = vpop.f32.mrf.mxu0
  %v934 = vadd.f32 %v845, %v933
  %935 = vdwg.mxu0
  %936 = vmatpush.bf16.msra.mxu0 %v636
  %937 = vmatpush.bf16.msra.mxu0 %v635
  %938 = vmatpush.bf16.msra.mxu0 %v634
  %939 = vmatpush.bf16.msra.mxu0 %v633
  %940 = vmatpush.bf16.msra.mxu0 %v632
  %941 = vmatpush.bf16.msra.mxu0 %v631
  %942 = vmatpush.bf16.msra.mxu0 %v630
  %943 = vmatpush.bf16.msra.mxu0 %v629
  %944 = vmatmul.bf16.gmra.mxu0 %v352
  %v945 = vpop.f32.mrf.mxu0
  %v946 = vadd.f32 %v857, %v945
  %v947 = vpop.f32.mrf.mxu0
  %v948 = vadd.f32 %v859, %v947
  %949 = vmatmul.bf16.gmra.mxu0 %v356
  %v950 = vpop.f32.mrf.mxu0
  %v951 = vadd.f32 %v862, %v950
  %v952 = vpop.f32.mrf.mxu0
  %v953 = vadd.f32 %v864, %v952
  %954 = vmatmul.bf16.gmra.mxu0 %v360
  %v955 = vpop.f32.mrf.mxu0
  %v956 = vadd.f32 %v867, %v955
  %v957 = vpop.f32.mrf.mxu0
  %v958 = vadd.f32 %v869, %v957
  %959 = vmatmul.bf16.gmra.mxu0 %v364
  %v960 = vpop.f32.mrf.mxu0
  %v961 = vadd.f32 %v872, %v960
  %v962 = vpop.f32.mrf.mxu0
  %v963 = vadd.f32 %v874, %v962
  %964 = vmatmul.bf16.gmra.mxu0 %v368
  %v965 = vpop.f32.mrf.mxu0
  %v966 = vadd.f32 %v877, %v965
  %v967 = vpop.f32.mrf.mxu0
  %v968 = vadd.f32 %v879, %v967
  %969 = vmatmul.bf16.gmra.mxu0 %v372
  %v970 = vpop.f32.mrf.mxu0
  %v971 = vadd.f32 %v882, %v970
  %v972 = vpop.f32.mrf.mxu0
  %v973 = vadd.f32 %v884, %v972
  %974 = vmatmul.bf16.gmra.mxu0 %v376
  %v975 = vpop.f32.mrf.mxu0
  %v976 = vadd.f32 %v887, %v975
  %v977 = vpop.f32.mrf.mxu0
  %v978 = vadd.f32 %v889, %v977
  %979 = vmatmul.bf16.gmra.mxu0 %v380
  %v980 = vpop.f32.mrf.mxu0
  %v981 = vadd.f32 %v892, %v980
  %v982 = vpop.f32.mrf.mxu0
  %v983 = vadd.f32 %v894, %v982
  %984 = vmatmul.bf16.gmra.mxu0 %v384
  %v985 = vpop.f32.mrf.mxu0
  %v986 = vadd.f32 %v897, %v985
  %v987 = vpop.f32.mrf.mxu0
  %v988 = vadd.f32 %v899, %v987
  %989 = vmatmul.bf16.gmra.mxu0 %v388
  %v990 = vpop.f32.mrf.mxu0
  %v991 = vadd.f32 %v902, %v990
  %v992 = vpop.f32.mrf.mxu0
  %v993 = vadd.f32 %v904, %v992
  %994 = vmatmul.bf16.gmra.mxu0 %v392
  %v995 = vpop.f32.mrf.mxu0
  %v996 = vadd.f32 %v907, %v995
  %v997 = vpop.f32.mrf.mxu0
  %v998 = vadd.f32 %v909, %v997
  %999 = vmatmul.bf16.gmra.mxu0 %v396
  %v1000 = vpop.f32.mrf.mxu0
  %v1001 = vadd.f32 %v912, %v1000
  %v1002 = vpop.f32.mrf.mxu0
  %v1003 = vadd.f32 %v914, %v1002
  %1004 = vmatmul.bf16.gmra.mxu0 %v400
  %v1005 = vpop.f32.mrf.mxu0
  %v1006 = vadd.f32 %v917, %v1005
  %v1007 = vpop.f32.mrf.mxu0
  %v1008 = vadd.f32 %v919, %v1007
  %1009 = vmatmul.bf16.gmra.mxu0 %v404
  %v1010 = vpop.f32.mrf.mxu0
  %v1011 = vadd.f32 %v922, %v1010
  %v1012 = vpop.f32.mrf.mxu0
  %v1013 = vadd.f32 %v924, %v1012
  %1014 = vmatmul.bf16.gmra.mxu0 %v408
  %v1015 = vpop.f32.mrf.mxu0
  %v1016 = vadd.f32 %v927, %v1015
  %v1017 = vpop.f32.mrf.mxu0
  %v1018 = vadd.f32 %v929, %v1017
  %1019 = vmatmul.bf16.gmra.mxu0 %v412
  %v1020 = vpop.f32.mrf.mxu0
  %v1021 = vadd.f32 %v932, %v1020
  %v1022 = vpop.f32.mrf.mxu0
  %v1023 = vadd.f32 %v934, %v1022
  %1024 = vdwg.mxu0
  %p1025 = scmp.eq.s32.totalorder 0, 0
  // Predicated region
  $region22: #{lightgcn_forward.3} parent=0 // pred_check
    %p1026 = pneg %p1025
  $region23: #{lightgcn_forward.3} parent=0 // pred_check_branch
    %1028 = sbr.rel (%p1026) target = $region25
  $region24: #{lightgcn_forward.3} parent=0 // pred_region
    %v1029 = vld [vmem:[%s3] sm:$0xff]
    %v1030 = vld [vmem:[%s3 + $0x8] sm:$0xff]
    %v1031 = vld [vmem:[%s3 + $0x10] sm:$0xff]
    %v1032 = vld [vmem:[%s3 + $0x18] sm:$0xff]
    %v1033 = vld [vmem:[%s3 + $0x20] sm:$0xff]
    %v1034 = vld [vmem:[%s3 + $0x28] sm:$0xff]
    %v1035 = vld [vmem:[%s3 + $0x30] sm:$0xff]
    %v1036 = vld [vmem:[%s3 + $0x38] sm:$0xff]
    %v1037 = vld [vmem:[%s3 + $0x40] sm:$0xff]
    %v1038 = vld [vmem:[%s3 + $0x48] sm:$0xff]
    %v1039 = vld [vmem:[%s3 + $0x50] sm:$0xff]
    %v1040 = vld [vmem:[%s3 + $0x58] sm:$0xff]
    %v1041 = vld [vmem:[%s3 + $0x60] sm:$0xff]
    %v1042 = vld [vmem:[%s3 + $0x68] sm:$0xff]
    %v1043 = vld [vmem:[%s3 + $0x70] sm:$0xff]
    %v1044 = vld [vmem:[%s3 + $0x78] sm:$0xff]
    %v1045 = vld [vmem:[%s3 + $0x80] sm:$0xff]
    %v1046 = vld [vmem:[%s3 + $0x88] sm:$0xff]
    %v1047 = vld [vmem:[%s3 + $0x90] sm:$0xff]
    %v1048 = vld [vmem:[%s3 + $0x98] sm:$0xff]
    %v1049 = vld [vmem:[%s3 + $0xa0] sm:$0xff]
    %v1050 = vld [vmem:[%s3 + $0xa8] sm:$0xff]
    %v1051 = vld [vmem:[%s3 + $0xb0] sm:$0xff]
    %v1052 = vld [vmem:[%s3 + $0xb8] sm:$0xff]
    %v1053 = vld [vmem:[%s3 + $0xc0] sm:$0xff]
    %v1054 = vld [vmem:[%s3 + $0xc8] sm:$0xff]
    %v1055 = vld [vmem:[%s3 + $0xd0] sm:$0xff]
    %v1056 = vld [vmem:[%s3 + $0xd8] sm:$0xff]
    %v1057 = vld [vmem:[%s3 + $0xe0] sm:$0xff]
    %v1058 = vld [vmem:[%s3 + $0xe8] sm:$0xff]
    %v1059 = vld [vmem:[%s3 + $0xf0] sm:$0xff]
    %v1060 = vld [vmem:[%s3 + $0xf8] sm:$0xff]
    %v1061 = vadd.f32 %v1029, %v946
    %v1062 = vadd.f32 %v1030, %v948
    %v1063 = vadd.f32 %v1031, %v951
    %v1064 = vadd.f32 %v1032, %v953
    %v1065 = vadd.f32 %v1033, %v956
    %v1066 = vadd.f32 %v1034, %v958
    %v1067 = vadd.f32 %v1035, %v961
    %v1068 = vadd.f32 %v1036, %v963
    %v1069 = vadd.f32 %v1037, %v966
    %v1070 = vadd.f32 %v1038, %v968
    %v1071 = vadd.f32 %v1039, %v971
    %v1072 = vadd.f32 %v1040, %v973
    %v1073 = vadd.f32 %v1041, %v976
    %v1074 = vadd.f32 %v1042, %v978
    %v1075 = vadd.f32 %v1043, %v981
    %v1076 = vadd.f32 %v1044, %v983
    %v1077 = vadd.f32 %v1045, %v986
    %v1078 = vadd.f32 %v1046, %v988
    %v1079 = vadd.f32 %v1047, %v991
    %v1080 = vadd.f32 %v1048, %v993
    %v1081 = vadd.f32 %v1049, %v996
    %v1082 = vadd.f32 %v1050, %v998
    %v1083 = vadd.f32 %v1051, %v1001
    %v1084 = vadd.f32 %v1052, %v1003
    %v1085 = vadd.f32 %v1053, %v1006
    %v1086 = vadd.f32 %v1054, %v1008
    %v1087 = vadd.f32 %v1055, %v1011
    %v1088 = vadd.f32 %v1056, %v1013
    %v1089 = vadd.f32 %v1057, %v1016
    %v1090 = vadd.f32 %v1058, %v1018
    %v1091 = vadd.f32 %v1059, %v1021
    %v1092 = vadd.f32 %v1060, %v1023
    %1093 = vst [vmem:[%s6] sm:$0xff] %v1061
    %1094 = vst [vmem:[%s6 + $0x8] sm:$0xff] %v1062
    %1095 = vst [vmem:[%s6 + $0x10] sm:$0xff] %v1063
    %1096 = vst [vmem:[%s6 + $0x18] sm:$0xff] %v1064
    %1097 = vst [vmem:[%s6 + $0x20] sm:$0xff] %v1065
    %1098 = vst [vmem:[%s6 + $0x28] sm:$0xff] %v1066
    %1099 = vst [vmem:[%s6 + $0x30] sm:$0xff] %v1067
    %1100 = vst [vmem:[%s6 + $0x38] sm:$0xff] %v1068
    %1101 = vst [vmem:[%s6 + $0x40] sm:$0xff] %v1069
    %1102 = vst [vmem:[%s6 + $0x48] sm:$0xff] %v1070
    %1103 = vst [vmem:[%s6 + $0x50] sm:$0xff] %v1071
    %1104 = vst [vmem:[%s6 + $0x58] sm:$0xff] %v1072
    %1105 = vst [vmem:[%s6 + $0x60] sm:$0xff] %v1073
    %1106 = vst [vmem:[%s6 + $0x68] sm:$0xff] %v1074
    %1107 = vst [vmem:[%s6 + $0x70] sm:$0xff] %v1075
    %1108 = vst [vmem:[%s6 + $0x78] sm:$0xff] %v1076
    %1109 = vst [vmem:[%s6 + $0x80] sm:$0xff] %v1077
    %1110 = vst [vmem:[%s6 + $0x88] sm:$0xff] %v1078
    %1111 = vst [vmem:[%s6 + $0x90] sm:$0xff] %v1079
    %1112 = vst [vmem:[%s6 + $0x98] sm:$0xff] %v1080
    %1113 = vst [vmem:[%s6 + $0xa0] sm:$0xff] %v1081
    %1114 = vst [vmem:[%s6 + $0xa8] sm:$0xff] %v1082
    %1115 = vst [vmem:[%s6 + $0xb0] sm:$0xff] %v1083
    %1116 = vst [vmem:[%s6 + $0xb8] sm:$0xff] %v1084
    %1117 = vst [vmem:[%s6 + $0xc0] sm:$0xff] %v1085
    %1118 = vst [vmem:[%s6 + $0xc8] sm:$0xff] %v1086
    %1119 = vst [vmem:[%s6 + $0xd0] sm:$0xff] %v1087
    %1120 = vst [vmem:[%s6 + $0xd8] sm:$0xff] %v1088
    %1121 = vst [vmem:[%s6 + $0xe0] sm:$0xff] %v1089
    %1122 = vst [vmem:[%s6 + $0xe8] sm:$0xff] %v1090
    %1123 = vst [vmem:[%s6 + $0xf0] sm:$0xff] %v1091
    %1124 = vst [vmem:[%s6 + $0xf8] sm:$0xff] %v1092
  $region25: #{lightgcn_forward.3} parent=0 // pred_fallthru
    _
  %p1125 = scmp.ne.s32.totalorder 0, 0
  // Predicated region
  $region26: #{lightgcn_forward.3} parent=0 // pred_check
    %p1126 = pneg %p1125
  $region27: #{lightgcn_forward.3} parent=0 // pred_check_branch
    %1128 = sbr.rel (%p1126) target = $region29
  $region28: #{lightgcn_forward.3} parent=0 // pred_region
    %v1129 = vld [vmem:[%s6] sm:$0xff]
    %v1130 = vld [vmem:[%s6 + $0x8] sm:$0xff]
    %v1131 = vld [vmem:[%s6 + $0x10] sm:$0xff]
    %v1132 = vld [vmem:[%s6 + $0x18] sm:$0xff]
    %v1133 = vld [vmem:[%s6 + $0x20] sm:$0xff]
    %v1134 = vld [vmem:[%s6 + $0x28] sm:$0xff]
    %v1135 = vld [vmem:[%s6 + $0x30] sm:$0xff]
    %v1136 = vld [vmem:[%s6 + $0x38] sm:$0xff]
    %v1137 = vld [vmem:[%s6 + $0x40] sm:$0xff]
    %v1138 = vld [vmem:[%s6 + $0x48] sm:$0xff]
    %v1139 = vld [vmem:[%s6 + $0x50] sm:$0xff]
    %v1140 = vld [vmem:[%s6 + $0x58] sm:$0xff]
    %v1141 = vld [vmem:[%s6 + $0x60] sm:$0xff]
    %v1142 = vld [vmem:[%s6 + $0x68] sm:$0xff]
    %v1143 = vld [vmem:[%s6 + $0x70] sm:$0xff]
    %v1144 = vld [vmem:[%s6 + $0x78] sm:$0xff]
    %v1145 = vld [vmem:[%s6 + $0x80] sm:$0xff]
    %v1146 = vld [vmem:[%s6 + $0x88] sm:$0xff]
    %v1147 = vld [vmem:[%s6 + $0x90] sm:$0xff]
    %v1148 = vld [vmem:[%s6 + $0x98] sm:$0xff]
    %v1149 = vld [vmem:[%s6 + $0xa0] sm:$0xff]
    %v1150 = vld [vmem:[%s6 + $0xa8] sm:$0xff]
    %v1151 = vld [vmem:[%s6 + $0xb0] sm:$0xff]
    %v1152 = vld [vmem:[%s6 + $0xb8] sm:$0xff]
    %v1153 = vld [vmem:[%s6 + $0xc0] sm:$0xff]
    %v1154 = vld [vmem:[%s6 + $0xc8] sm:$0xff]
    %v1155 = vld [vmem:[%s6 + $0xd0] sm:$0xff]
    %v1156 = vld [vmem:[%s6 + $0xd8] sm:$0xff]
    %v1157 = vld [vmem:[%s6 + $0xe0] sm:$0xff]
    %v1158 = vld [vmem:[%s6 + $0xe8] sm:$0xff]
    %v1159 = vld [vmem:[%s6 + $0xf0] sm:$0xff]
    %v1160 = vld [vmem:[%s6 + $0xf8] sm:$0xff]
    %v1161 = vadd.f32 %v1129, %v946
    %v1162 = vadd.f32 %v1130, %v948
    %v1163 = vadd.f32 %v1131, %v951
    %v1164 = vadd.f32 %v1132, %v953
    %v1165 = vadd.f32 %v1133, %v956
    %v1166 = vadd.f32 %v1134, %v958
    %v1167 = vadd.f32 %v1135, %v961
    %v1168 = vadd.f32 %v1136, %v963
    %v1169 = vadd.f32 %v1137, %v966
    %v1170 = vadd.f32 %v1138, %v968
    %v1171 = vadd.f32 %v1139, %v971
    %v1172 = vadd.f32 %v1140, %v973
    %v1173 = vadd.f32 %v1141, %v976
    %v1174 = vadd.f32 %v1142, %v978
    %v1175 = vadd.f32 %v1143, %v981
    %v1176 = vadd.f32 %v1144, %v983
    %v1177 = vadd.f32 %v1145, %v986
    %v1178 = vadd.f32 %v1146, %v988
    %v1179 = vadd.f32 %v1147, %v991
    %v1180 = vadd.f32 %v1148, %v993
    %v1181 = vadd.f32 %v1149, %v996
    %v1182 = vadd.f32 %v1150, %v998
    %v1183 = vadd.f32 %v1151, %v1001
    %v1184 = vadd.f32 %v1152, %v1003
    %v1185 = vadd.f32 %v1153, %v1006
    %v1186 = vadd.f32 %v1154, %v1008
    %v1187 = vadd.f32 %v1155, %v1011
    %v1188 = vadd.f32 %v1156, %v1013
    %v1189 = vadd.f32 %v1157, %v1016
    %v1190 = vadd.f32 %v1158, %v1018
    %v1191 = vadd.f32 %v1159, %v1021
    %v1192 = vadd.f32 %v1160, %v1023
    %1193 = vst [vmem:[%s6] sm:$0xff] %v1161
    %1194 = vst [vmem:[%s6 + $0x8] sm:$0xff] %v1162
    %1195 = vst [vmem:[%s6 + $0x10] sm:$0xff] %v1163
    %1196 = vst [vmem:[%s6 + $0x18] sm:$0xff] %v1164
    %1197 = vst [vmem:[%s6 + $0x20] sm:$0xff] %v1165
    %1198 = vst [vmem:[%s6 + $0x28] sm:$0xff] %v1166
    %1199 = vst [vmem:[%s6 + $0x30] sm:$0xff] %v1167
    %1200 = vst [vmem:[%s6 + $0x38] sm:$0xff] %v1168
    %1201 = vst [vmem:[%s6 + $0x40] sm:$0xff] %v1169
    %1202 = vst [vmem:[%s6 + $0x48] sm:$0xff] %v1170
    %1203 = vst [vmem:[%s6 + $0x50] sm:$0xff] %v1171
    %1204 = vst [vmem:[%s6 + $0x58] sm:$0xff] %v1172
    %1205 = vst [vmem:[%s6 + $0x60] sm:$0xff] %v1173
    %1206 = vst [vmem:[%s6 + $0x68] sm:$0xff] %v1174
    %1207 = vst [vmem:[%s6 + $0x70] sm:$0xff] %v1175
    %1208 = vst [vmem:[%s6 + $0x78] sm:$0xff] %v1176
    %1209 = vst [vmem:[%s6 + $0x80] sm:$0xff] %v1177
    %1210 = vst [vmem:[%s6 + $0x88] sm:$0xff] %v1178
    %1211 = vst [vmem:[%s6 + $0x90] sm:$0xff] %v1179
    %1212 = vst [vmem:[%s6 + $0x98] sm:$0xff] %v1180
    %1213 = vst [vmem:[%s6 + $0xa0] sm:$0xff] %v1181
    %1214 = vst [vmem:[%s6 + $0xa8] sm:$0xff] %v1182
    %1215 = vst [vmem:[%s6 + $0xb0] sm:$0xff] %v1183
    %1216 = vst [vmem:[%s6 + $0xb8] sm:$0xff] %v1184
    %1217 = vst [vmem:[%s6 + $0xc0] sm:$0xff] %v1185
    %1218 = vst [vmem:[%s6 + $0xc8] sm:$0xff] %v1186
    %1219 = vst [vmem:[%s6 + $0xd0] sm:$0xff] %v1187
    %1220 = vst [vmem:[%s6 + $0xd8] sm:$0xff] %v1188
    %1221 = vst [vmem:[%s6 + $0xe0] sm:$0xff] %v1189
    %1222 = vst [vmem:[%s6 + $0xe8] sm:$0xff] %v1190
    %1223 = vst [vmem:[%s6 + $0xf0] sm:$0xff] %v1191
    %1224 = vst [vmem:[%s6 + $0xf8] sm:$0xff] %v1192
  $region29: #{lightgcn_forward.3} parent=0 // pred_fallthru
    _
  // Predicated region
  $region30: #{lightgcn_forward.3} parent=0 // pred_check
    %p1225 = pneg %p1025
  $region31: #{lightgcn_forward.3} parent=0 // pred_check_branch
    %1227 = sbr.rel (%p1225) target = $region33
  $region32: #{lightgcn_forward.3} parent=0 // pred_region
    %v1228 = vld [vmem:[%s6] sm:$0xff]
    %v1229 = vld [vmem:[%s6 + $0x8] sm:$0xff]
    %v1230 = vld [vmem:[%s6 + $0x10] sm:$0xff]
    %v1231 = vld [vmem:[%s6 + $0x18] sm:$0xff]
    %v1232 = vld [vmem:[%s6 + $0x20] sm:$0xff]
    %v1233 = vld [vmem:[%s6 + $0x28] sm:$0xff]
    %v1234 = vld [vmem:[%s6 + $0x30] sm:$0xff]
    %v1235 = vld [vmem:[%s6 + $0x38] sm:$0xff]
    %v1236 = vld [vmem:[%s6 + $0x40] sm:$0xff]
    %v1237 = vld [vmem:[%s6 + $0x48] sm:$0xff]
    %v1238 = vld [vmem:[%s6 + $0x50] sm:$0xff]
    %v1239 = vld [vmem:[%s6 + $0x58] sm:$0xff]
    %v1240 = vld [vmem:[%s6 + $0x60] sm:$0xff]
    %v1241 = vld [vmem:[%s6 + $0x68] sm:$0xff]
    %v1242 = vld [vmem:[%s6 + $0x70] sm:$0xff]
    %v1243 = vld [vmem:[%s6 + $0x78] sm:$0xff]
    %v1244 = vld [vmem:[%s6 + $0x80] sm:$0xff]
    %v1245 = vld [vmem:[%s6 + $0x88] sm:$0xff]
    %v1246 = vld [vmem:[%s6 + $0x90] sm:$0xff]
    %v1247 = vld [vmem:[%s6 + $0x98] sm:$0xff]
    %v1248 = vld [vmem:[%s6 + $0xa0] sm:$0xff]
    %v1249 = vld [vmem:[%s6 + $0xa8] sm:$0xff]
    %v1250 = vld [vmem:[%s6 + $0xb0] sm:$0xff]
    %v1251 = vld [vmem:[%s6 + $0xb8] sm:$0xff]
    %v1252 = vld [vmem:[%s6 + $0xc0] sm:$0xff]
    %v1253 = vld [vmem:[%s6 + $0xc8] sm:$0xff]
    %v1254 = vld [vmem:[%s6 + $0xd0] sm:$0xff]
    %v1255 = vld [vmem:[%s6 + $0xd8] sm:$0xff]
    %v1256 = vld [vmem:[%s6 + $0xe0] sm:$0xff]
    %v1257 = vld [vmem:[%s6 + $0xe8] sm:$0xff]
    %v1258 = vld [vmem:[%s6 + $0xf0] sm:$0xff]
    %v1259 = vld [vmem:[%s6 + $0xf8] sm:$0xff]
    %v1260 = vld [vmem:[%s3] sm:$0xff]
    %v1261 = vld [vmem:[%s3 + $0x8] sm:$0xff]
    %v1262 = vld [vmem:[%s3 + $0x10] sm:$0xff]
    %v1263 = vld [vmem:[%s3 + $0x18] sm:$0xff]
    %v1264 = vld [vmem:[%s3 + $0x20] sm:$0xff]
    %v1265 = vld [vmem:[%s3 + $0x28] sm:$0xff]
    %v1266 = vld [vmem:[%s3 + $0x30] sm:$0xff]
    %v1267 = vld [vmem:[%s3 + $0x38] sm:$0xff]
    %v1268 = vld [vmem:[%s3 + $0x40] sm:$0xff]
    %v1269 = vld [vmem:[%s3 + $0x48] sm:$0xff]
    %v1270 = vld [vmem:[%s3 + $0x50] sm:$0xff]
    %v1271 = vld [vmem:[%s3 + $0x58] sm:$0xff]
    %v1272 = vld [vmem:[%s3 + $0x60] sm:$0xff]
    %v1273 = vld [vmem:[%s3 + $0x68] sm:$0xff]
    %v1274 = vld [vmem:[%s3 + $0x70] sm:$0xff]
    %v1275 = vld [vmem:[%s3 + $0x78] sm:$0xff]
    %v1276 = vld [vmem:[%s3 + $0x80] sm:$0xff]
    %v1277 = vld [vmem:[%s3 + $0x88] sm:$0xff]
    %v1278 = vld [vmem:[%s3 + $0x90] sm:$0xff]
    %v1279 = vld [vmem:[%s3 + $0x98] sm:$0xff]
    %v1280 = vld [vmem:[%s3 + $0xa0] sm:$0xff]
    %v1281 = vld [vmem:[%s3 + $0xa8] sm:$0xff]
    %v1282 = vld [vmem:[%s3 + $0xb0] sm:$0xff]
    %v1283 = vld [vmem:[%s3 + $0xb8] sm:$0xff]
    %v1284 = vld [vmem:[%s3 + $0xc0] sm:$0xff]
    %v1285 = vld [vmem:[%s3 + $0xc8] sm:$0xff]
    %v1286 = vld [vmem:[%s3 + $0xd0] sm:$0xff]
    %v1287 = vld [vmem:[%s3 + $0xd8] sm:$0xff]
    %v1288 = vld [vmem:[%s3 + $0xe0] sm:$0xff]
    %v1289 = vld [vmem:[%s3 + $0xe8] sm:$0xff]
    %v1290 = vld [vmem:[%s3 + $0xf0] sm:$0xff]
    %v1291 = vld [vmem:[%s3 + $0xf8] sm:$0xff]
    %v1292 = vsub.f32 %v1228, %v1260
    %v1293 = vsub.f32 %v1229, %v1261
    %v1294 = vsub.f32 %v1230, %v1262
    %v1295 = vsub.f32 %v1231, %v1263
    %v1296 = vsub.f32 %v1232, %v1264
    %v1297 = vsub.f32 %v1233, %v1265
    %v1298 = vsub.f32 %v1234, %v1266
    %v1299 = vsub.f32 %v1235, %v1267
    %v1300 = vsub.f32 %v1236, %v1268
    %v1301 = vsub.f32 %v1237, %v1269
    %v1302 = vsub.f32 %v1238, %v1270
    %v1303 = vsub.f32 %v1239, %v1271
    %v1304 = vsub.f32 %v1240, %v1272
    %v1305 = vsub.f32 %v1241, %v1273
    %v1306 = vsub.f32 %v1242, %v1274
    %v1307 = vsub.f32 %v1243, %v1275
    %v1308 = vsub.f32 %v1244, %v1276
    %v1309 = vsub.f32 %v1245, %v1277
    %v1310 = vsub.f32 %v1246, %v1278
    %v1311 = vsub.f32 %v1247, %v1279
    %v1312 = vsub.f32 %v1248, %v1280
    %v1313 = vsub.f32 %v1249, %v1281
    %v1314 = vsub.f32 %v1250, %v1282
    %v1315 = vsub.f32 %v1251, %v1283
    %v1316 = vsub.f32 %v1252, %v1284
    %v1317 = vsub.f32 %v1253, %v1285
    %v1318 = vsub.f32 %v1254, %v1286
    %v1319 = vsub.f32 %v1255, %v1287
    %v1320 = vsub.f32 %v1256, %v1288
    %v1321 = vsub.f32 %v1257, %v1289
    %v1322 = vsub.f32 %v1258, %v1290
    %v1323 = vsub.f32 %v1259, %v1291
    %v1324 = vpack.c.bf16 %v1292, %v1292
    %v1325 = vpack.c.bf16 %v1293, %v1293
    %v1326 = vpack.c.bf16 %v1294, %v1294
    %v1327 = vpack.c.bf16 %v1295, %v1295
    %v1328 = vpack.c.bf16 %v1296, %v1296
    %v1329 = vpack.c.bf16 %v1297, %v1297
    %v1330 = vpack.c.bf16 %v1298, %v1298
    %v1331 = vpack.c.bf16 %v1299, %v1299
    %v1332 = vpack.c.bf16 %v1300, %v1300
    %v1333 = vpack.c.bf16 %v1301, %v1301
    %v1334 = vpack.c.bf16 %v1302, %v1302
    %v1335 = vpack.c.bf16 %v1303, %v1303
    %v1336 = vpack.c.bf16 %v1304, %v1304
    %v1337 = vpack.c.bf16 %v1305, %v1305
    %v1338 = vpack.c.bf16 %v1306, %v1306
    %v1339 = vpack.c.bf16 %v1307, %v1307
    %v1340 = vpack.c.bf16 %v1308, %v1308
    %v1341 = vpack.c.bf16 %v1309, %v1309
    %v1342 = vpack.c.bf16 %v1310, %v1310
    %v1343 = vpack.c.bf16 %v1311, %v1311
    %v1344 = vpack.c.bf16 %v1312, %v1312
    %v1345 = vpack.c.bf16 %v1313, %v1313
    %v1346 = vpack.c.bf16 %v1314, %v1314
    %v1347 = vpack.c.bf16 %v1315, %v1315
    %v1348 = vpack.c.bf16 %v1316, %v1316
    %v1349 = vpack.c.bf16 %v1317, %v1317
    %v1350 = vpack.c.bf16 %v1318, %v1318
    %v1351 = vpack.c.bf16 %v1319, %v1319
    %v1352 = vpack.c.bf16 %v1320, %v1320
    %v1353 = vpack.c.bf16 %v1321, %v1321
    %v1354 = vpack.c.bf16 %v1322, %v1322
    %v1355 = vpack.c.bf16 %v1323, %v1323
    %1356 = vst [vmem:[%s5] sm:$0xf] %v1324
    %1357 = vst [vmem:[%s5 + $0x4] sm:$0xf] %v1325
    %1358 = vst [vmem:[%s5 + $0x8] sm:$0xf] %v1326
    %1359 = vst [vmem:[%s5 + $0xc] sm:$0xf] %v1327
    %1360 = vst [vmem:[%s5 + $0x10] sm:$0xf] %v1328
    %1361 = vst [vmem:[%s5 + $0x14] sm:$0xf] %v1329
    %1362 = vst [vmem:[%s5 + $0x18] sm:$0xf] %v1330
    %1363 = vst [vmem:[%s5 + $0x1c] sm:$0xf] %v1331
    %1364 = vst [vmem:[%s5 + $0x20] sm:$0xf] %v1332
    %1365 = vst [vmem:[%s5 + $0x24] sm:$0xf] %v1333
    %1366 = vst [vmem:[%s5 + $0x28] sm:$0xf] %v1334
    %1367 = vst [vmem:[%s5 + $0x2c] sm:$0xf] %v1335
    %1368 = vst [vmem:[%s5 + $0x30] sm:$0xf] %v1336
    %1369 = vst [vmem:[%s5 + $0x34] sm:$0xf] %v1337
    %1370 = vst [vmem:[%s5 + $0x38] sm:$0xf] %v1338
    %1371 = vst [vmem:[%s5 + $0x3c] sm:$0xf] %v1339
    %1372 = vst [vmem:[%s5 + $0x40] sm:$0xf] %v1340
    %1373 = vst [vmem:[%s5 + $0x44] sm:$0xf] %v1341
    %1374 = vst [vmem:[%s5 + $0x48] sm:$0xf] %v1342
    %1375 = vst [vmem:[%s5 + $0x4c] sm:$0xf] %v1343
    %1376 = vst [vmem:[%s5 + $0x50] sm:$0xf] %v1344
    %1377 = vst [vmem:[%s5 + $0x54] sm:$0xf] %v1345
    %1378 = vst [vmem:[%s5 + $0x58] sm:$0xf] %v1346
    %1379 = vst [vmem:[%s5 + $0x5c] sm:$0xf] %v1347
    %1380 = vst [vmem:[%s5 + $0x60] sm:$0xf] %v1348
    %1381 = vst [vmem:[%s5 + $0x64] sm:$0xf] %v1349
    %1382 = vst [vmem:[%s5 + $0x68] sm:$0xf] %v1350
    %1383 = vst [vmem:[%s5 + $0x6c] sm:$0xf] %v1351
    %1384 = vst [vmem:[%s5 + $0x70] sm:$0xf] %v1352
    %1385 = vst [vmem:[%s5 + $0x74] sm:$0xf] %v1353
    %1386 = vst [vmem:[%s5 + $0x78] sm:$0xf] %v1354
    %1387 = vst [vmem:[%s5 + $0x7c] sm:$0xf] %v1355
  $region33: #{lightgcn_forward.3} parent=0 // pred_fallthru
    _
  %v1388 = vld [vmem:[%s2] sm:$0xf]
  %v1389 = vld [vmem:[%s2 + $0x4] sm:$0xf]
  %v1390 = vld [vmem:[%s2 + $0x8] sm:$0xf]
  %v1391 = vld [vmem:[%s2 + $0xc] sm:$0xf]
  %v1392 = vld [vmem:[%s2 + $0x10] sm:$0xf]
  %v1393 = vld [vmem:[%s2 + $0x14] sm:$0xf]
  %v1394 = vld [vmem:[%s2 + $0x18] sm:$0xf]
  %v1395 = vld [vmem:[%s2 + $0x1c] sm:$0xf]
  %v1396 = vld [vmem:[%s2 + $0x20] sm:$0xf]
  %v1397 = vld [vmem:[%s2 + $0x24] sm:$0xf]
  %v1398 = vld [vmem:[%s2 + $0x28] sm:$0xf]
  %v1399 = vld [vmem:[%s2 + $0x2c] sm:$0xf]
  %v1400 = vld [vmem:[%s2 + $0x30] sm:$0xf]
  %v1401 = vld [vmem:[%s2 + $0x34] sm:$0xf]
  %v1402 = vld [vmem:[%s2 + $0x38] sm:$0xf]
  %v1403 = vld [vmem:[%s2 + $0x3c] sm:$0xf]
  %v1404 = vld [vmem:[%s2 + $0x40] sm:$0xf]
  %v1405 = vld [vmem:[%s2 + $0x44] sm:$0xf]
  %v1406 = vld [vmem:[%s2 + $0x48] sm:$0xf]
  %v1407 = vld [vmem:[%s2 + $0x4c] sm:$0xf]
  %v1408 = vld [vmem:[%s2 + $0x50] sm:$0xf]
  %v1409 = vld [vmem:[%s2 + $0x54] sm:$0xf]
  %v1410 = vld [vmem:[%s2 + $0x58] sm:$0xf]
  %v1411 = vld [vmem:[%s2 + $0x5c] sm:$0xf]
  %v1412 = vld [vmem:[%s2 + $0x60] sm:$0xf]
  %v1413 = vld [vmem:[%s2 + $0x64] sm:$0xf]
  %v1414 = vld [vmem:[%s2 + $0x68] sm:$0xf]
  %v1415 = vld [vmem:[%s2 + $0x6c] sm:$0xf]
  %v1416 = vld [vmem:[%s2 + $0x70] sm:$0xf]
  %v1417 = vld [vmem:[%s2 + $0x74] sm:$0xf]
  %v1418 = vld [vmem:[%s2 + $0x78] sm:$0xf]
  %v1419 = vld [vmem:[%s2 + $0x7c] sm:$0xf]
  %1420 = vxpose.binary.xlu0.c.b16.start [1/16] %v350, %v349, 128
  %1421 = vxpose.binary.xlu0.c.b16.cont [2/16] %v354, %v353, 128
  %1422 = vxpose.binary.xlu0.c.b16.cont [3/16] %v358, %v357, 128
  %1423 = vxpose.binary.xlu0.c.b16.cont [4/16] %v362, %v361, 128
  %1424 = vxpose.binary.xlu0.c.b16.cont [5/16] %v366, %v365, 128
  %1425 = vxpose.binary.xlu0.c.b16.cont [6/16] %v370, %v369, 128
  %1426 = vxpose.binary.xlu0.c.b16.cont [7/16] %v374, %v373, 128
  %1427 = vxpose.binary.xlu0.c.b16.end [8/16] %v378, %v377, 128
  %v1428 = vpop.trf.xlu0
  %v1429 = vpop.trf.xlu0
  %v1430 = vpop.trf.xlu0
  %v1431 = vpop.trf.xlu0
  %v1432 = vpop.trf.xlu0
  %v1433 = vpop.trf.xlu0
  %v1434 = vpop.trf.xlu0
  %v1435 = vpop.trf.xlu0
  %v1436 = vpop.trf.xlu0
  %v1437 = vpop.trf.xlu0
  %v1438 = vpop.trf.xlu0
  %v1439 = vpop.trf.xlu0
  %v1440 = vpop.trf.xlu0
  %v1441 = vpop.trf.xlu0
  %v1442 = vpop.trf.xlu0
  %v1443 = vpop.trf.xlu0
  %1444 = vxpose.binary.xlu0.c.b16.start [1/16] %v352, %v351, 128
  %1445 = vxpose.binary.xlu0.c.b16.cont [2/16] %v356, %v355, 128
  %1446 = vxpose.binary.xlu0.c.b16.cont [3/16] %v360, %v359, 128
  %1447 = vxpose.binary.xlu0.c.b16.cont [4/16] %v364, %v363, 128
  %1448 = vxpose.binary.xlu0.c.b16.cont [5/16] %v368, %v367, 128
  %1449 = vxpose.binary.xlu0.c.b16.cont [6/16] %v372, %v371, 128
  %1450 = vxpose.binary.xlu0.c.b16.cont [7/16] %v376, %v375, 128
  %1451 = vxpose.binary.xlu0.c.b16.end [8/16] %v380, %v379, 128
  %v1452 = vpop.trf.xlu0
  %v1453 = vpop.trf.xlu0
  %v1454 = vpop.trf.xlu0
  %v1455 = vpop.trf.xlu0
  %v1456 = vpop.trf.xlu0
  %v1457 = vpop.trf.xlu0
  %v1458 = vpop.trf.xlu0
  %v1459 = vpop.trf.xlu0
  %v1460 = vpop.trf.xlu0
  %v1461 = vpop.trf.xlu0
  %v1462 = vpop.trf.xlu0
  %v1463 = vpop.trf.xlu0
  %v1464 = vpop.trf.xlu0
  %v1465 = vpop.trf.xlu0
  %v1466 = vpop.trf.xlu0
  %v1467 = vpop.trf.xlu0
  %1468 = vxpose.binary.xlu0.c.b16.start [1/16] %v382, %v381, 128
  %1469 = vxpose.binary.xlu0.c.b16.cont [2/16] %v386, %v385, 128
  %1470 = vxpose.binary.xlu0.c.b16.cont [3/16] %v390, %v389, 128
  %1471 = vxpose.binary.xlu0.c.b16.cont [4/16] %v394, %v393, 128
  %1472 = vxpose.binary.xlu0.c.b16.cont [5/16] %v398, %v397, 128
  %1473 = vxpose.binary.xlu0.c.b16.cont [6/16] %v402, %v401, 128
  %1474 = vxpose.binary.xlu0.c.b16.cont [7/16] %v406, %v405, 128
  %1475 = vxpose.binary.xlu0.c.b16.end [8/16] %v410, %v409, 128
  %v1476 = vpop.trf.xlu0
  %v1477 = vpop.trf.xlu0
  %v1478 = vpop.trf.xlu0
  %v1479 = vpop.trf.xlu0
  %v1480 = vpop.trf.xlu0
  %v1481 = vpop.trf.xlu0
  %v1482 = vpop.trf.xlu0
  %v1483 = vpop.trf.xlu0
  %v1484 = vpop.trf.xlu0
  %v1485 = vpop.trf.xlu0
  %v1486 = vpop.trf.xlu0
  %v1487 = vpop.trf.xlu0
  %v1488 = vpop.trf.xlu0
  %v1489 = vpop.trf.xlu0
  %v1490 = vpop.trf.xlu0
  %v1491 = vpop.trf.xlu0
  %1492 = vxpose.binary.xlu0.c.b16.start [1/16] %v384, %v383, 128
  %1493 = vxpose.binary.xlu0.c.b16.cont [2/16] %v388, %v387, 128
  %1494 = vxpose.binary.xlu0.c.b16.cont [3/16] %v392, %v391, 128
  %1495 = vxpose.binary.xlu0.c.b16.cont [4/16] %v396, %v395, 128
  %1496 = vxpose.binary.xlu0.c.b16.cont [5/16] %v400, %v399, 128
  %1497 = vxpose.binary.xlu0.c.b16.cont [6/16] %v404, %v403, 128
  %1498 = vxpose.binary.xlu0.c.b16.cont [7/16] %v408, %v407, 128
  %1499 = vxpose.binary.xlu0.c.b16.end [8/16] %v412, %v411, 128
  %v1500 = vpop.trf.xlu0
  %v1501 = vpop.trf.xlu0
  %v1502 = vpop.trf.xlu0
  %v1503 = vpop.trf.xlu0
  %v1504 = vpop.trf.xlu0
  %v1505 = vpop.trf.xlu0
  %v1506 = vpop.trf.xlu0
  %v1507 = vpop.trf.xlu0
  %v1508 = vpop.trf.xlu0
  %v1509 = vpop.trf.xlu0
  %v1510 = vpop.trf.xlu0
  %v1511 = vpop.trf.xlu0
  %v1512 = vpop.trf.xlu0
  %v1513 = vpop.trf.xlu0
  %v1514 = vpop.trf.xlu0
  %v1515 = vpop.trf.xlu0
  %v1548 = vunpack.c.l.b16 %v1388
  %v1549 = vunpack.c.l.b16 %v1389
  %v1550 = vunpack.c.l.b16 %v1390
  %v1551 = vunpack.c.l.b16 %v1391
  %v1552 = vunpack.c.l.b16 %v1392
  %v1553 = vunpack.c.l.b16 %v1393
  %v1554 = vunpack.c.l.b16 %v1394
  %v1555 = vunpack.c.l.b16 %v1395
  %v1556 = vunpack.c.l.b16 %v1396
  %v1557 = vunpack.c.l.b16 %v1397
  %v1558 = vunpack.c.l.b16 %v1398
  %v1559 = vunpack.c.l.b16 %v1399
  %v1560 = vunpack.c.l.b16 %v1400
  %v1561 = vunpack.c.l.b16 %v1401
  %v1562 = vunpack.c.l.b16 %v1402
  %v1563 = vunpack.c.l.b16 %v1403
  %v1564 = vunpack.c.l.b16 %v1404
  %v1565 = vunpack.c.l.b16 %v1405
  %v1566 = vunpack.c.l.b16 %v1406
  %v1567 = vunpack.c.l.b16 %v1407
  %v1568 = vunpack.c.l.b16 %v1408
  %v1569 = vunpack.c.l.b16 %v1409
  %v1570 = vunpack.c.l.b16 %v1410
  %v1571 = vunpack.c.l.b16 %v1411
  %v1572 = vunpack.c.l.b16 %v1412
  %v1573 = vunpack.c.l.b16 %v1413
  %v1574 = vunpack.c.l.b16 %v1414
  %v1575 = vunpack.c.l.b16 %v1415
  %v1576 = vunpack.c.l.b16 %v1416
  %v1577 = vunpack.c.l.b16 %v1417
  %v1578 = vunpack.c.l.b16 %v1418
  %v1579 = vunpack.c.l.b16 %v1419
  %v1580 = vpack.c.b16 %v1549, %v1548
  %v1581 = vpack.c.b16 %v1551, %v1550
  %v1582 = vpack.c.b16 %v1553, %v1552
  %v1583 = vpack.c.b16 %v1555, %v1554
  %v1584 = vpack.c.b16 %v1557, %v1556
  %v1585 = vpack.c.b16 %v1559, %v1558
  %v1586 = vpack.c.b16 %v1561, %v1560
  %v1587 = vpack.c.b16 %v1563, %v1562
  %v1588 = vpack.c.b16 %v1565, %v1564
  %v1589 = vpack.c.b16 %v1567, %v1566
  %v1590 = vpack.c.b16 %v1569, %v1568
  %v1591 = vpack.c.b16 %v1571, %v1570
  %v1592 = vpack.c.b16 %v1573, %v1572
  %v1593 = vpack.c.b16 %v1575, %v1574
  %v1594 = vpack.c.b16 %v1577, %v1576
  %v1595 = vpack.c.b16 %v1579, %v1578
  %1612 = vmatpush.bf16.msra.mxu0 %v1587
  %1613 = vmatpush.bf16.msra.mxu0 %v1586
  %1614 = vmatpush.bf16.msra.mxu0 %v1585
  %1615 = vmatpush.bf16.msra.mxu0 %v1584
  %1616 = vmatpush.bf16.msra.mxu0 %v1583
  %1617 = vmatpush.bf16.msra.mxu0 %v1582
  %1618 = vmatpush.bf16.msra.mxu0 %v1581
  %1619 = vmatpush.bf16.msra.mxu0 %v1580
  %1620 = vmatmul.bf16.gmra.mxu0 %v1428
  %v1621 = vpop.f32.mrf.mxu0
  %v1622 = vadd.f32 0.0, %v1621
  %v1623 = vpop.f32.mrf.mxu0
  %v1624 = vadd.f32 0.0, %v1623
  %1625 = vmatmul.bf16.gmra.mxu0 %v1430
  %v1626 = vpop.f32.mrf.mxu0
  %v1627 = vadd.f32 0.0, %v1626
  %v1628 = vpop.f32.mrf.mxu0
  %v1629 = vadd.f32 0.0, %v1628
  %1630 = vmatmul.bf16.gmra.mxu0 %v1432
  %v1631 = vpop.f32.mrf.mxu0
  %v1632 = vadd.f32 0.0, %v1631
  %v1633 = vpop.f32.mrf.mxu0
  %v1634 = vadd.f32 0.0, %v1633
  %1635 = vmatmul.bf16.gmra.mxu0 %v1434
  %v1636 = vpop.f32.mrf.mxu0
  %v1637 = vadd.f32 0.0, %v1636
  %v1638 = vpop.f32.mrf.mxu0
  %v1639 = vadd.f32 0.0, %v1638
  %1640 = vmatmul.bf16.gmra.mxu0 %v1436
  %v1641 = vpop.f32.mrf.mxu0
  %v1642 = vadd.f32 0.0, %v1641
  %v1643 = vpop.f32.mrf.mxu0
  %v1644 = vadd.f32 0.0, %v1643
  %1645 = vmatmul.bf16.gmra.mxu0 %v1438
  %v1646 = vpop.f32.mrf.mxu0
  %v1647 = vadd.f32 0.0, %v1646
  %v1648 = vpop.f32.mrf.mxu0
  %v1649 = vadd.f32 0.0, %v1648
  %1650 = vmatmul.bf16.gmra.mxu0 %v1440
  %v1651 = vpop.f32.mrf.mxu0
  %v1652 = vadd.f32 0.0, %v1651
  %v1653 = vpop.f32.mrf.mxu0
  %v1654 = vadd.f32 0.0, %v1653
  %1655 = vmatmul.bf16.gmra.mxu0 %v1442
  %v1656 = vpop.f32.mrf.mxu0
  %v1657 = vadd.f32 0.0, %v1656
  %v1658 = vpop.f32.mrf.mxu0
  %v1659 = vadd.f32 0.0, %v1658
  %1660 = vmatmul.bf16.gmra.mxu0 %v1429
  %v1661 = vpop.f32.mrf.mxu0
  %v1662 = vadd.f32 0.0, %v1661
  %v1663 = vpop.f32.mrf.mxu0
  %v1664 = vadd.f32 0.0, %v1663
  %1665 = vmatmul.bf16.gmra.mxu0 %v1431
  %v1666 = vpop.f32.mrf.mxu0
  %v1667 = vadd.f32 0.0, %v1666
  %v1668 = vpop.f32.mrf.mxu0
  %v1669 = vadd.f32 0.0, %v1668
  %1670 = vmatmul.bf16.gmra.mxu0 %v1433
  %v1671 = vpop.f32.mrf.mxu0
  %v1672 = vadd.f32 0.0, %v1671
  %v1673 = vpop.f32.mrf.mxu0
  %v1674 = vadd.f32 0.0, %v1673
  %1675 = vmatmul.bf16.gmra.mxu0 %v1435
  %v1676 = vpop.f32.mrf.mxu0
  %v1677 = vadd.f32 0.0, %v1676
  %v1678 = vpop.f32.mrf.mxu0
  %v1679 = vadd.f32 0.0, %v1678
  %1680 = vmatmul.bf16.gmra.mxu0 %v1437
  %v1681 = vpop.f32.mrf.mxu0
  %v1682 = vadd.f32 0.0, %v1681
  %v1683 = vpop.f32.mrf.mxu0
  %v1684 = vadd.f32 0.0, %v1683
  %1685 = vmatmul.bf16.gmra.mxu0 %v1439
  %v1686 = vpop.f32.mrf.mxu0
  %v1687 = vadd.f32 0.0, %v1686
  %v1688 = vpop.f32.mrf.mxu0
  %v1689 = vadd.f32 0.0, %v1688
  %1690 = vmatmul.bf16.gmra.mxu0 %v1441
  %v1691 = vpop.f32.mrf.mxu0
  %v1692 = vadd.f32 0.0, %v1691
  %v1693 = vpop.f32.mrf.mxu0
  %v1694 = vadd.f32 0.0, %v1693
  %1695 = vmatmul.bf16.gmra.mxu0 %v1443
  %v1696 = vpop.f32.mrf.mxu0
  %v1697 = vadd.f32 0.0, %v1696
  %v1698 = vpop.f32.mrf.mxu0
  %v1699 = vadd.f32 0.0, %v1698
  %1700 = vmatmul.bf16.gmra.mxu0 %v1452
  %v1701 = vpop.f32.mrf.mxu0
  %v1702 = vadd.f32 0.0, %v1701
  %v1703 = vpop.f32.mrf.mxu0
  %v1704 = vadd.f32 0.0, %v1703
  %1705 = vmatmul.bf16.gmra.mxu0 %v1454
  %v1706 = vpop.f32.mrf.mxu0
  %v1707 = vadd.f32 0.0, %v1706
  %v1708 = vpop.f32.mrf.mxu0
  %v1709 = vadd.f32 0.0, %v1708
  %1710 = vmatmul.bf16.gmra.mxu0 %v1456
  %v1711 = vpop.f32.mrf.mxu0
  %v1712 = vadd.f32 0.0, %v1711
  %v1713 = vpop.f32.mrf.mxu0
  %v1714 = vadd.f32 0.0, %v1713
  %1715 = vmatmul.bf16.gmra.mxu0 %v1458
  %v1716 = vpop.f32.mrf.mxu0
  %v1717 = vadd.f32 0.0, %v1716
  %v1718 = vpop.f32.mrf.mxu0
  %v1719 = vadd.f32 0.0, %v1718
  %1720 = vmatmul.bf16.gmra.mxu0 %v1460
  %v1721 = vpop.f32.mrf.mxu0
  %v1722 = vadd.f32 0.0, %v1721
  %v1723 = vpop.f32.mrf.mxu0
  %v1724 = vadd.f32 0.0, %v1723
  %1725 = vmatmul.bf16.gmra.mxu0 %v1462
  %v1726 = vpop.f32.mrf.mxu0
  %v1727 = vadd.f32 0.0, %v1726
  %v1728 = vpop.f32.mrf.mxu0
  %v1729 = vadd.f32 0.0, %v1728
  %1730 = vmatmul.bf16.gmra.mxu0 %v1464
  %v1731 = vpop.f32.mrf.mxu0
  %v1732 = vadd.f32 0.0, %v1731
  %v1733 = vpop.f32.mrf.mxu0
  %v1734 = vadd.f32 0.0, %v1733
  %1735 = vmatmul.bf16.gmra.mxu0 %v1466
  %v1736 = vpop.f32.mrf.mxu0
  %v1737 = vadd.f32 0.0, %v1736
  %v1738 = vpop.f32.mrf.mxu0
  %v1739 = vadd.f32 0.0, %v1738
  %1740 = vmatmul.bf16.gmra.mxu0 %v1453
  %v1741 = vpop.f32.mrf.mxu0
  %v1742 = vadd.f32 0.0, %v1741
  %v1743 = vpop.f32.mrf.mxu0
  %v1744 = vadd.f32 0.0, %v1743
  %1745 = vmatmul.bf16.gmra.mxu0 %v1455
  %v1746 = vpop.f32.mrf.mxu0
  %v1747 = vadd.f32 0.0, %v1746
  %v1748 = vpop.f32.mrf.mxu0
  %v1749 = vadd.f32 0.0, %v1748
  %1750 = vmatmul.bf16.gmra.mxu0 %v1457
  %v1751 = vpop.f32.mrf.mxu0
  %v1752 = vadd.f32 0.0, %v1751
  %v1753 = vpop.f32.mrf.mxu0
  %v1754 = vadd.f32 0.0, %v1753
  %1755 = vmatmul.bf16.gmra.mxu0 %v1459
  %v1756 = vpop.f32.mrf.mxu0
  %v1757 = vadd.f32 0.0, %v1756
  %v1758 = vpop.f32.mrf.mxu0
  %v1759 = vadd.f32 0.0, %v1758
  %1760 = vmatmul.bf16.gmra.mxu0 %v1461
  %v1761 = vpop.f32.mrf.mxu0
  %v1762 = vadd.f32 0.0, %v1761
  %v1763 = vpop.f32.mrf.mxu0
  %v1764 = vadd.f32 0.0, %v1763
  %1765 = vmatmul.bf16.gmra.mxu0 %v1463
  %v1766 = vpop.f32.mrf.mxu0
  %v1767 = vadd.f32 0.0, %v1766
  %v1768 = vpop.f32.mrf.mxu0
  %v1769 = vadd.f32 0.0, %v1768
  %1770 = vmatmul.bf16.gmra.mxu0 %v1465
  %v1771 = vpop.f32.mrf.mxu0
  %v1772 = vadd.f32 0.0, %v1771
  %v1773 = vpop.f32.mrf.mxu0
  %v1774 = vadd.f32 0.0, %v1773
  %1775 = vmatmul.bf16.gmra.mxu0 %v1467
  %v1776 = vpop.f32.mrf.mxu0
  %v1777 = vadd.f32 0.0, %v1776
  %v1778 = vpop.f32.mrf.mxu0
  %v1779 = vadd.f32 0.0, %v1778
  %1780 = vdwg.mxu0
  %1781 = vmatpush.bf16.msra.mxu0 %v1595
  %1782 = vmatpush.bf16.msra.mxu0 %v1594
  %1783 = vmatpush.bf16.msra.mxu0 %v1593
  %1784 = vmatpush.bf16.msra.mxu0 %v1592
  %1785 = vmatpush.bf16.msra.mxu0 %v1591
  %1786 = vmatpush.bf16.msra.mxu0 %v1590
  %1787 = vmatpush.bf16.msra.mxu0 %v1589
  %1788 = vmatpush.bf16.msra.mxu0 %v1588
  %1789 = vmatmul.bf16.gmra.mxu0 %v1476
  %v1790 = vpop.f32.mrf.mxu0
  %v1791 = vadd.f32 %v1622, %v1790
  %v1792 = vpop.f32.mrf.mxu0
  %v1793 = vadd.f32 %v1624, %v1792
  %1794 = vmatmul.bf16.gmra.mxu0 %v1478
  %v1795 = vpop.f32.mrf.mxu0
  %v1796 = vadd.f32 %v1627, %v1795
  %v1797 = vpop.f32.mrf.mxu0
  %v1798 = vadd.f32 %v1629, %v1797
  %1799 = vmatmul.bf16.gmra.mxu0 %v1480
  %v1800 = vpop.f32.mrf.mxu0
  %v1801 = vadd.f32 %v1632, %v1800
  %v1802 = vpop.f32.mrf.mxu0
  %v1803 = vadd.f32 %v1634, %v1802
  %1804 = vmatmul.bf16.gmra.mxu0 %v1482
  %v1805 = vpop.f32.mrf.mxu0
  %v1806 = vadd.f32 %v1637, %v1805
  %v1807 = vpop.f32.mrf.mxu0
  %v1808 = vadd.f32 %v1639, %v1807
  %1809 = vmatmul.bf16.gmra.mxu0 %v1484
  %v1810 = vpop.f32.mrf.mxu0
  %v1811 = vadd.f32 %v1642, %v1810
  %v1812 = vpop.f32.mrf.mxu0
  %v1813 = vadd.f32 %v1644, %v1812
  %1814 = vmatmul.bf16.gmra.mxu0 %v1486
  %v1815 = vpop.f32.mrf.mxu0
  %v1816 = vadd.f32 %v1647, %v1815
  %v1817 = vpop.f32.mrf.mxu0
  %v1818 = vadd.f32 %v1649, %v1817
  %1819 = vmatmul.bf16.gmra.mxu0 %v1488
  %v1820 = vpop.f32.mrf.mxu0
  %v1821 = vadd.f32 %v1652, %v1820
  %v1822 = vpop.f32.mrf.mxu0
  %v1823 = vadd.f32 %v1654, %v1822
  %1824 = vmatmul.bf16.gmra.mxu0 %v1490
  %v1825 = vpop.f32.mrf.mxu0
  %v1826 = vadd.f32 %v1657, %v1825
  %v1827 = vpop.f32.mrf.mxu0
  %v1828 = vadd.f32 %v1659, %v1827
  %1829 = vmatmul.bf16.gmra.mxu0 %v1477
  %v1830 = vpop.f32.mrf.mxu0
  %v1831 = vadd.f32 %v1662, %v1830
  %v1832 = vpop.f32.mrf.mxu0
  %v1833 = vadd.f32 %v1664, %v1832
  %1834 = vmatmul.bf16.gmra.mxu0 %v1479
  %v1835 = vpop.f32.mrf.mxu0
  %v1836 = vadd.f32 %v1667, %v1835
  %v1837 = vpop.f32.mrf.mxu0
  %v1838 = vadd.f32 %v1669, %v1837
  %1839 = vmatmul.bf16.gmra.mxu0 %v1481
  %v1840 = vpop.f32.mrf.mxu0
  %v1841 = vadd.f32 %v1672, %v1840
  %v1842 = vpop.f32.mrf.mxu0
  %v1843 = vadd.f32 %v1674, %v1842
  %1844 = vmatmul.bf16.gmra.mxu0 %v1483
  %v1845 = vpop.f32.mrf.mxu0
  %v1846 = vadd.f32 %v1677, %v1845
  %v1847 = vpop.f32.mrf.mxu0
  %v1848 = vadd.f32 %v1679, %v1847
  %1849 = vmatmul.bf16.gmra.mxu0 %v1485
  %v1850 = vpop.f32.mrf.mxu0
  %v1851 = vadd.f32 %v1682, %v1850
  %v1852 = vpop.f32.mrf.mxu0
  %v1853 = vadd.f32 %v1684, %v1852
  %1854 = vmatmul.bf16.gmra.mxu0 %v1487
  %v1855 = vpop.f32.mrf.mxu0
  %v1856 = vadd.f32 %v1687, %v1855
  %v1857 = vpop.f32.mrf.mxu0
  %v1858 = vadd.f32 %v1689, %v1857
  %1859 = vmatmul.bf16.gmra.mxu0 %v1489
  %v1860 = vpop.f32.mrf.mxu0
  %v1861 = vadd.f32 %v1692, %v1860
  %v1862 = vpop.f32.mrf.mxu0
  %v1863 = vadd.f32 %v1694, %v1862
  %1864 = vmatmul.bf16.gmra.mxu0 %v1491
  %v1865 = vpop.f32.mrf.mxu0
  %v1866 = vadd.f32 %v1697, %v1865
  %v1867 = vpop.f32.mrf.mxu0
  %v1868 = vadd.f32 %v1699, %v1867
  %1869 = vmatmul.bf16.gmra.mxu0 %v1500
  %v1870 = vpop.f32.mrf.mxu0
  %v1871 = vadd.f32 %v1702, %v1870
  %v1872 = vpop.f32.mrf.mxu0
  %v1873 = vadd.f32 %v1704, %v1872
  %1874 = vmatmul.bf16.gmra.mxu0 %v1502
  %v1875 = vpop.f32.mrf.mxu0
  %v1876 = vadd.f32 %v1707, %v1875
  %v1877 = vpop.f32.mrf.mxu0
  %v1878 = vadd.f32 %v1709, %v1877
  %1879 = vmatmul.bf16.gmra.mxu0 %v1504
  %v1880 = vpop.f32.mrf.mxu0
  %v1881 = vadd.f32 %v1712, %v1880
  %v1882 = vpop.f32.mrf.mxu0
  %v1883 = vadd.f32 %v1714, %v1882
  %1884 = vmatmul.bf16.gmra.mxu0 %v1506
  %v1885 = vpop.f32.mrf.mxu0
  %v1886 = vadd.f32 %v1717, %v1885
  %v1887 = vpop.f32.mrf.mxu0
  %v1888 = vadd.f32 %v1719, %v1887
  %1889 = vmatmul.bf16.gmra.mxu0 %v1508
  %v1890 = vpop.f32.mrf.mxu0
  %v1891 = vadd.f32 %v1722, %v1890
  %v1892 = vpop.f32.mrf.mxu0
  %v1893 = vadd.f32 %v1724, %v1892
  %1894 = vmatmul.bf16.gmra.mxu0 %v1510
  %v1895 = vpop.f32.mrf.mxu0
  %v1896 = vadd.f32 %v1727, %v1895
  %v1897 = vpop.f32.mrf.mxu0
  %v1898 = vadd.f32 %v1729, %v1897
  %1899 = vmatmul.bf16.gmra.mxu0 %v1512
  %v1900 = vpop.f32.mrf.mxu0
  %v1901 = vadd.f32 %v1732, %v1900
  %v1902 = vpop.f32.mrf.mxu0
  %v1903 = vadd.f32 %v1734, %v1902
  %1904 = vmatmul.bf16.gmra.mxu0 %v1514
  %v1905 = vpop.f32.mrf.mxu0
  %v1906 = vadd.f32 %v1737, %v1905
  %v1907 = vpop.f32.mrf.mxu0
  %v1908 = vadd.f32 %v1739, %v1907
  %1909 = vmatmul.bf16.gmra.mxu0 %v1501
  %v1910 = vpop.f32.mrf.mxu0
  %v1911 = vadd.f32 %v1742, %v1910
  %v1912 = vpop.f32.mrf.mxu0
  %v1913 = vadd.f32 %v1744, %v1912
  %1914 = vmatmul.bf16.gmra.mxu0 %v1503
  %v1915 = vpop.f32.mrf.mxu0
  %v1916 = vadd.f32 %v1747, %v1915
  %v1917 = vpop.f32.mrf.mxu0
  %v1918 = vadd.f32 %v1749, %v1917
  %1919 = vmatmul.bf16.gmra.mxu0 %v1505
  %v1920 = vpop.f32.mrf.mxu0
  %v1921 = vadd.f32 %v1752, %v1920
  %v1922 = vpop.f32.mrf.mxu0
  %v1923 = vadd.f32 %v1754, %v1922
  %1924 = vmatmul.bf16.gmra.mxu0 %v1507
  %v1925 = vpop.f32.mrf.mxu0
  %v1926 = vadd.f32 %v1757, %v1925
  %v1927 = vpop.f32.mrf.mxu0
  %v1928 = vadd.f32 %v1759, %v1927
  %1929 = vmatmul.bf16.gmra.mxu0 %v1509
  %v1930 = vpop.f32.mrf.mxu0
  %v1931 = vadd.f32 %v1762, %v1930
  %v1932 = vpop.f32.mrf.mxu0
  %v1933 = vadd.f32 %v1764, %v1932
  %1934 = vmatmul.bf16.gmra.mxu0 %v1511
  %v1935 = vpop.f32.mrf.mxu0
  %v1936 = vadd.f32 %v1767, %v1935
  %v1937 = vpop.f32.mrf.mxu0
  %v1938 = vadd.f32 %v1769, %v1937
  %1939 = vmatmul.bf16.gmra.mxu0 %v1513
  %v1940 = vpop.f32.mrf.mxu0
  %v1941 = vadd.f32 %v1772, %v1940
  %v1942 = vpop.f32.mrf.mxu0
  %v1943 = vadd.f32 %v1774, %v1942
  %1944 = vmatmul.bf16.gmra.mxu0 %v1515
  %v1945 = vpop.f32.mrf.mxu0
  %v1946 = vadd.f32 %v1777, %v1945
  %v1947 = vpop.f32.mrf.mxu0
  %v1948 = vadd.f32 %v1779, %v1947
  %1949 = vdwg.mxu0
  %p1950 = scmp.eq.s32.totalorder 0, 0
  // Predicated region
  $region34: #{lightgcn_forward.3} parent=0 // pred_check
    %p1951 = pneg %p1950
  $region35: #{lightgcn_forward.3} parent=0 // pred_check_branch
    %1953 = sbr.rel (%p1951) target = $region37
  $region36: #{lightgcn_forward.3} parent=0 // pred_region
    %s1954 = scalar_lea.vmem %s4, %s88
    %v1955 = vld [vmem:[%s1954] sm:$0xff]
    %v1956 = vld [vmem:[%s1954 + $0x8] sm:$0xff]
    %v1957 = vld [vmem:[%s1954 + $0x10] sm:$0xff]
    %v1958 = vld [vmem:[%s1954 + $0x18] sm:$0xff]
    %v1959 = vld [vmem:[%s1954 + $0x20] sm:$0xff]
    %v1960 = vld [vmem:[%s1954 + $0x28] sm:$0xff]
    %v1961 = vld [vmem:[%s1954 + $0x30] sm:$0xff]
    %v1962 = vld [vmem:[%s1954 + $0x38] sm:$0xff]
    %v1963 = vld [vmem:[%s1954 + $0x40] sm:$0xff]
    %v1964 = vld [vmem:[%s1954 + $0x48] sm:$0xff]
    %v1965 = vld [vmem:[%s1954 + $0x50] sm:$0xff]
    %v1966 = vld [vmem:[%s1954 + $0x58] sm:$0xff]
    %v1967 = vld [vmem:[%s1954 + $0x60] sm:$0xff]
    %v1968 = vld [vmem:[%s1954 + $0x68] sm:$0xff]
    %v1969 = vld [vmem:[%s1954 + $0x70] sm:$0xff]
    %v1970 = vld [vmem:[%s1954 + $0x78] sm:$0xff]
    %v1971 = vld [vmem:[%s1954 + $0x80] sm:$0xff]
    %v1972 = vld [vmem:[%s1954 + $0x88] sm:$0xff]
    %v1973 = vld [vmem:[%s1954 + $0x90] sm:$0xff]
    %v1974 = vld [vmem:[%s1954 + $0x98] sm:$0xff]
    %v1975 = vld [vmem:[%s1954 + $0xa0] sm:$0xff]
    %v1976 = vld [vmem:[%s1954 + $0xa8] sm:$0xff]
    %v1977 = vld [vmem:[%s1954 + $0xb0] sm:$0xff]
    %v1978 = vld [vmem:[%s1954 + $0xb8] sm:$0xff]
    %v1979 = vld [vmem:[%s1954 + $0xc0] sm:$0xff]
    %v1980 = vld [vmem:[%s1954 + $0xc8] sm:$0xff]
    %v1981 = vld [vmem:[%s1954 + $0xd0] sm:$0xff]
    %v1982 = vld [vmem:[%s1954 + $0xd8] sm:$0xff]
    %v1983 = vld [vmem:[%s1954 + $0xe0] sm:$0xff]
    %v1984 = vld [vmem:[%s1954 + $0xe8] sm:$0xff]
    %v1985 = vld [vmem:[%s1954 + $0xf0] sm:$0xff]
    %v1986 = vld [vmem:[%s1954 + $0xf8] sm:$0xff]
    %v1987 = vld [vmem:[%s1954 + $0x100] sm:$0xff]
    %v1988 = vld [vmem:[%s1954 + $0x108] sm:$0xff]
    %v1989 = vld [vmem:[%s1954 + $0x110] sm:$0xff]
    %v1990 = vld [vmem:[%s1954 + $0x118] sm:$0xff]
    %v1991 = vld [vmem:[%s1954 + $0x120] sm:$0xff]
    %v1992 = vld [vmem:[%s1954 + $0x128] sm:$0xff]
    %v1993 = vld [vmem:[%s1954 + $0x130] sm:$0xff]
    %v1994 = vld [vmem:[%s1954 + $0x138] sm:$0xff]
    %v1995 = vld [vmem:[%s1954 + $0x140] sm:$0xff]
    %v1996 = vld [vmem:[%s1954 + $0x148] sm:$0xff]
    %v1997 = vld [vmem:[%s1954 + $0x150] sm:$0xff]
    %v1998 = vld [vmem:[%s1954 + $0x158] sm:$0xff]
    %v1999 = vld [vmem:[%s1954 + $0x160] sm:$0xff]
    %v2000 = vld [vmem:[%s1954 + $0x168] sm:$0xff]
    %v2001 = vld [vmem:[%s1954 + $0x170] sm:$0xff]
    %v2002 = vld [vmem:[%s1954 + $0x178] sm:$0xff]
    %v2003 = vld [vmem:[%s1954 + $0x180] sm:$0xff]
    %v2004 = vld [vmem:[%s1954 + $0x188] sm:$0xff]
    %v2005 = vld [vmem:[%s1954 + $0x190] sm:$0xff]
    %v2006 = vld [vmem:[%s1954 + $0x198] sm:$0xff]
    %v2007 = vld [vmem:[%s1954 + $0x1a0] sm:$0xff]
    %v2008 = vld [vmem:[%s1954 + $0x1a8] sm:$0xff]
    %v2009 = vld [vmem:[%s1954 + $0x1b0] sm:$0xff]
    %v2010 = vld [vmem:[%s1954 + $0x1b8] sm:$0xff]
    %v2011 = vld [vmem:[%s1954 + $0x1c0] sm:$0xff]
    %v2012 = vld [vmem:[%s1954 + $0x1c8] sm:$0xff]
    %v2013 = vld [vmem:[%s1954 + $0x1d0] sm:$0xff]
    %v2014 = vld [vmem:[%s1954 + $0x1d8] sm:$0xff]
    %v2015 = vld [vmem:[%s1954 + $0x1e0] sm:$0xff]
    %v2016 = vld [vmem:[%s1954 + $0x1e8] sm:$0xff]
    %v2017 = vld [vmem:[%s1954 + $0x1f0] sm:$0xff]
    %v2018 = vld [vmem:[%s1954 + $0x1f8] sm:$0xff]
    %v2019 = vadd.f32 %v1955, %v1791
    %v2020 = vadd.f32 %v1956, %v1793
    %v2021 = vadd.f32 %v1957, %v1796
    %v2022 = vadd.f32 %v1958, %v1798
    %v2023 = vadd.f32 %v1959, %v1801
    %v2024 = vadd.f32 %v1960, %v1803
    %v2025 = vadd.f32 %v1961, %v1806
    %v2026 = vadd.f32 %v1962, %v1808
    %v2027 = vadd.f32 %v1963, %v1811
    %v2028 = vadd.f32 %v1964, %v1813
    %v2029 = vadd.f32 %v1965, %v1816
    %v2030 = vadd.f32 %v1966, %v1818
    %v2031 = vadd.f32 %v1967, %v1821
    %v2032 = vadd.f32 %v1968, %v1823
    %v2033 = vadd.f32 %v1969, %v1826
    %v2034 = vadd.f32 %v1970, %v1828
    %v2035 = vadd.f32 %v1971, %v1831
    %v2036 = vadd.f32 %v1972, %v1833
    %v2037 = vadd.f32 %v1973, %v1836
    %v2038 = vadd.f32 %v1974, %v1838
    %v2039 = vadd.f32 %v1975, %v1841
    %v2040 = vadd.f32 %v1976, %v1843
    %v2041 = vadd.f32 %v1977, %v1846
    %v2042 = vadd.f32 %v1978, %v1848
    %v2043 = vadd.f32 %v1979, %v1851
    %v2044 = vadd.f32 %v1980, %v1853
    %v2045 = vadd.f32 %v1981, %v1856
    %v2046 = vadd.f32 %v1982, %v1858
    %v2047 = vadd.f32 %v1983, %v1861
    %v2048 = vadd.f32 %v1984, %v1863
    %v2049 = vadd.f32 %v1985, %v1866
    %v2050 = vadd.f32 %v1986, %v1868
    %v2051 = vadd.f32 %v1987, %v1871
    %v2052 = vadd.f32 %v1988, %v1873
    %v2053 = vadd.f32 %v1989, %v1876
    %v2054 = vadd.f32 %v1990, %v1878
    %v2055 = vadd.f32 %v1991, %v1881
    %v2056 = vadd.f32 %v1992, %v1883
    %v2057 = vadd.f32 %v1993, %v1886
    %v2058 = vadd.f32 %v1994, %v1888
    %v2059 = vadd.f32 %v1995, %v1891
    %v2060 = vadd.f32 %v1996, %v1893
    %v2061 = vadd.f32 %v1997, %v1896
    %v2062 = vadd.f32 %v1998, %v1898
    %v2063 = vadd.f32 %v1999, %v1901
    %v2064 = vadd.f32 %v2000, %v1903
    %v2065 = vadd.f32 %v2001, %v1906
    %v2066 = vadd.f32 %v2002, %v1908
    %v2067 = vadd.f32 %v2003, %v1911
    %v2068 = vadd.f32 %v2004, %v1913
    %v2069 = vadd.f32 %v2005, %v1916
    %v2070 = vadd.f32 %v2006, %v1918
    %v2071 = vadd.f32 %v2007, %v1921
    %v2072 = vadd.f32 %v2008, %v1923
    %v2073 = vadd.f32 %v2009, %v1926
    %v2074 = vadd.f32 %v2010, %v1928
    %v2075 = vadd.f32 %v2011, %v1931
    %v2076 = vadd.f32 %v2012, %v1933
    %v2077 = vadd.f32 %v2013, %v1936
    %v2078 = vadd.f32 %v2014, %v1938
    %v2079 = vadd.f32 %v2015, %v1941
    %v2080 = vadd.f32 %v2016, %v1943
    %v2081 = vadd.f32 %v2017, %v1946
    %v2082 = vadd.f32 %v2018, %v1948
    %s2083 = scalar_lea.vmem %s8, %s88
    %2084 = vst [vmem:[%s2083] sm:$0xff] %v2019
    %2085 = vst [vmem:[%s2083 + $0x8] sm:$0xff] %v2020
    %2086 = vst [vmem:[%s2083 + $0x10] sm:$0xff] %v2021
    %2087 = vst [vmem:[%s2083 + $0x18] sm:$0xff] %v2022
    %2088 = vst [vmem:[%s2083 + $0x20] sm:$0xff] %v2023
    %2089 = vst [vmem:[%s2083 + $0x28] sm:$0xff] %v2024
    %2090 = vst [vmem:[%s2083 + $0x30] sm:$0xff] %v2025
    %2091 = vst [vmem:[%s2083 + $0x38] sm:$0xff] %v2026
    %2092 = vst [vmem:[%s2083 + $0x40] sm:$0xff] %v2027
    %2093 = vst [vmem:[%s2083 + $0x48] sm:$0xff] %v2028
    %2094 = vst [vmem:[%s2083 + $0x50] sm:$0xff] %v2029
    %2095 = vst [vmem:[%s2083 + $0x58] sm:$0xff] %v2030
    %2096 = vst [vmem:[%s2083 + $0x60] sm:$0xff] %v2031
    %2097 = vst [vmem:[%s2083 + $0x68] sm:$0xff] %v2032
    %2098 = vst [vmem:[%s2083 + $0x70] sm:$0xff] %v2033
    %2099 = vst [vmem:[%s2083 + $0x78] sm:$0xff] %v2034
    %2100 = vst [vmem:[%s2083 + $0x80] sm:$0xff] %v2035
    %2101 = vst [vmem:[%s2083 + $0x88] sm:$0xff] %v2036
    %2102 = vst [vmem:[%s2083 + $0x90] sm:$0xff] %v2037
    %2103 = vst [vmem:[%s2083 + $0x98] sm:$0xff] %v2038
    %2104 = vst [vmem:[%s2083 + $0xa0] sm:$0xff] %v2039
    %2105 = vst [vmem:[%s2083 + $0xa8] sm:$0xff] %v2040
    %2106 = vst [vmem:[%s2083 + $0xb0] sm:$0xff] %v2041
    %2107 = vst [vmem:[%s2083 + $0xb8] sm:$0xff] %v2042
    %2108 = vst [vmem:[%s2083 + $0xc0] sm:$0xff] %v2043
    %2109 = vst [vmem:[%s2083 + $0xc8] sm:$0xff] %v2044
    %2110 = vst [vmem:[%s2083 + $0xd0] sm:$0xff] %v2045
    %2111 = vst [vmem:[%s2083 + $0xd8] sm:$0xff] %v2046
    %2112 = vst [vmem:[%s2083 + $0xe0] sm:$0xff] %v2047
    %2113 = vst [vmem:[%s2083 + $0xe8] sm:$0xff] %v2048
    %2114 = vst [vmem:[%s2083 + $0xf0] sm:$0xff] %v2049
    %2115 = vst [vmem:[%s2083 + $0xf8] sm:$0xff] %v2050
    %2116 = vst [vmem:[%s2083 + $0x100] sm:$0xff] %v2051
    %2117 = vst [vmem:[%s2083 + $0x108] sm:$0xff] %v2052
    %2118 = vst [vmem:[%s2083 + $0x110] sm:$0xff] %v2053
    %2119 = vst [vmem:[%s2083 + $0x118] sm:$0xff] %v2054
    %2120 = vst [vmem:[%s2083 + $0x120] sm:$0xff] %v2055
    %2121 = vst [vmem:[%s2083 + $0x128] sm:$0xff] %v2056
    %2122 = vst [vmem:[%s2083 + $0x130] sm:$0xff] %v2057
    %2123 = vst [vmem:[%s2083 + $0x138] sm:$0xff] %v2058
    %2124 = vst [vmem:[%s2083 + $0x140] sm:$0xff] %v2059
    %2125 = vst [vmem:[%s2083 + $0x148] sm:$0xff] %v2060
    %2126 = vst [vmem:[%s2083 + $0x150] sm:$0xff] %v2061
    %2127 = vst [vmem:[%s2083 + $0x158] sm:$0xff] %v2062
    %2128 = vst [vmem:[%s2083 + $0x160] sm:$0xff] %v2063
    %2129 = vst [vmem:[%s2083 + $0x168] sm:$0xff] %v2064
    %2130 = vst [vmem:[%s2083 + $0x170] sm:$0xff] %v2065
    %2131 = vst [vmem:[%s2083 + $0x178] sm:$0xff] %v2066
    %2132 = vst [vmem:[%s2083 + $0x180] sm:$0xff] %v2067
    %2133 = vst [vmem:[%s2083 + $0x188] sm:$0xff] %v2068
    %2134 = vst [vmem:[%s2083 + $0x190] sm:$0xff] %v2069
    %2135 = vst [vmem:[%s2083 + $0x198] sm:$0xff] %v2070
    %2136 = vst [vmem:[%s2083 + $0x1a0] sm:$0xff] %v2071
    %2137 = vst [vmem:[%s2083 + $0x1a8] sm:$0xff] %v2072
    %2138 = vst [vmem:[%s2083 + $0x1b0] sm:$0xff] %v2073
    %2139 = vst [vmem:[%s2083 + $0x1b8] sm:$0xff] %v2074
    %2140 = vst [vmem:[%s2083 + $0x1c0] sm:$0xff] %v2075
    %2141 = vst [vmem:[%s2083 + $0x1c8] sm:$0xff] %v2076
    %2142 = vst [vmem:[%s2083 + $0x1d0] sm:$0xff] %v2077
    %2143 = vst [vmem:[%s2083 + $0x1d8] sm:$0xff] %v2078
    %2144 = vst [vmem:[%s2083 + $0x1e0] sm:$0xff] %v2079
    %2145 = vst [vmem:[%s2083 + $0x1e8] sm:$0xff] %v2080
    %2146 = vst [vmem:[%s2083 + $0x1f0] sm:$0xff] %v2081
    %2147 = vst [vmem:[%s2083 + $0x1f8] sm:$0xff] %v2082
  $region37: #{lightgcn_forward.3} parent=0 // pred_fallthru
    _
  %p2148 = scmp.ne.s32.totalorder 0, 0
  // Predicated region
  $region38: #{lightgcn_forward.3} parent=0 // pred_check
    %p2149 = pneg %p2148
  $region39: #{lightgcn_forward.3} parent=0 // pred_check_branch
    %2151 = sbr.rel (%p2149) target = $region41
  $region40: #{lightgcn_forward.3} parent=0 // pred_region
    %s2152 = scalar_lea.vmem %s8, %s88
    %v2153 = vld [vmem:[%s2152] sm:$0xff]
    %v2154 = vld [vmem:[%s2152 + $0x8] sm:$0xff]
    %v2155 = vld [vmem:[%s2152 + $0x10] sm:$0xff]
    %v2156 = vld [vmem:[%s2152 + $0x18] sm:$0xff]
    %v2157 = vld [vmem:[%s2152 + $0x20] sm:$0xff]
    %v2158 = vld [vmem:[%s2152 + $0x28] sm:$0xff]
    %v2159 = vld [vmem:[%s2152 + $0x30] sm:$0xff]
    %v2160 = vld [vmem:[%s2152 + $0x38] sm:$0xff]
    %v2161 = vld [vmem:[%s2152 + $0x40] sm:$0xff]
    %v2162 = vld [vmem:[%s2152 + $0x48] sm:$0xff]
    %v2163 = vld [vmem:[%s2152 + $0x50] sm:$0xff]
    %v2164 = vld [vmem:[%s2152 + $0x58] sm:$0xff]
    %v2165 = vld [vmem:[%s2152 + $0x60] sm:$0xff]
    %v2166 = vld [vmem:[%s2152 + $0x68] sm:$0xff]
    %v2167 = vld [vmem:[%s2152 + $0x70] sm:$0xff]
    %v2168 = vld [vmem:[%s2152 + $0x78] sm:$0xff]
    %v2169 = vld [vmem:[%s2152 + $0x80] sm:$0xff]
    %v2170 = vld [vmem:[%s2152 + $0x88] sm:$0xff]
    %v2171 = vld [vmem:[%s2152 + $0x90] sm:$0xff]
    %v2172 = vld [vmem:[%s2152 + $0x98] sm:$0xff]
    %v2173 = vld [vmem:[%s2152 + $0xa0] sm:$0xff]
    %v2174 = vld [vmem:[%s2152 + $0xa8] sm:$0xff]
    %v2175 = vld [vmem:[%s2152 + $0xb0] sm:$0xff]
    %v2176 = vld [vmem:[%s2152 + $0xb8] sm:$0xff]
    %v2177 = vld [vmem:[%s2152 + $0xc0] sm:$0xff]
    %v2178 = vld [vmem:[%s2152 + $0xc8] sm:$0xff]
    %v2179 = vld [vmem:[%s2152 + $0xd0] sm:$0xff]
    %v2180 = vld [vmem:[%s2152 + $0xd8] sm:$0xff]
    %v2181 = vld [vmem:[%s2152 + $0xe0] sm:$0xff]
    %v2182 = vld [vmem:[%s2152 + $0xe8] sm:$0xff]
    %v2183 = vld [vmem:[%s2152 + $0xf0] sm:$0xff]
    %v2184 = vld [vmem:[%s2152 + $0xf8] sm:$0xff]
    %v2185 = vld [vmem:[%s2152 + $0x100] sm:$0xff]
    %v2186 = vld [vmem:[%s2152 + $0x108] sm:$0xff]
    %v2187 = vld [vmem:[%s2152 + $0x110] sm:$0xff]
    %v2188 = vld [vmem:[%s2152 + $0x118] sm:$0xff]
    %v2189 = vld [vmem:[%s2152 + $0x120] sm:$0xff]
    %v2190 = vld [vmem:[%s2152 + $0x128] sm:$0xff]
    %v2191 = vld [vmem:[%s2152 + $0x130] sm:$0xff]
    %v2192 = vld [vmem:[%s2152 + $0x138] sm:$0xff]
    %v2193 = vld [vmem:[%s2152 + $0x140] sm:$0xff]
    %v2194 = vld [vmem:[%s2152 + $0x148] sm:$0xff]
    %v2195 = vld [vmem:[%s2152 + $0x150] sm:$0xff]
    %v2196 = vld [vmem:[%s2152 + $0x158] sm:$0xff]
    %v2197 = vld [vmem:[%s2152 + $0x160] sm:$0xff]
    %v2198 = vld [vmem:[%s2152 + $0x168] sm:$0xff]
    %v2199 = vld [vmem:[%s2152 + $0x170] sm:$0xff]
    %v2200 = vld [vmem:[%s2152 + $0x178] sm:$0xff]
    %v2201 = vld [vmem:[%s2152 + $0x180] sm:$0xff]
    %v2202 = vld [vmem:[%s2152 + $0x188] sm:$0xff]
    %v2203 = vld [vmem:[%s2152 + $0x190] sm:$0xff]
    %v2204 = vld [vmem:[%s2152 + $0x198] sm:$0xff]
    %v2205 = vld [vmem:[%s2152 + $0x1a0] sm:$0xff]
    %v2206 = vld [vmem:[%s2152 + $0x1a8] sm:$0xff]
    %v2207 = vld [vmem:[%s2152 + $0x1b0] sm:$0xff]
    %v2208 = vld [vmem:[%s2152 + $0x1b8] sm:$0xff]
    %v2209 = vld [vmem:[%s2152 + $0x1c0] sm:$0xff]
    %v2210 = vld [vmem:[%s2152 + $0x1c8] sm:$0xff]
    %v2211 = vld [vmem:[%s2152 + $0x1d0] sm:$0xff]
    %v2212 = vld [vmem:[%s2152 + $0x1d8] sm:$0xff]
    %v2213 = vld [vmem:[%s2152 + $0x1e0] sm:$0xff]
    %v2214 = vld [vmem:[%s2152 + $0x1e8] sm:$0xff]
    %v2215 = vld [vmem:[%s2152 + $0x1f0] sm:$0xff]
    %v2216 = vld [vmem:[%s2152 + $0x1f8] sm:$0xff]
    %v2217 = vadd.f32 %v2153, %v1791
    %v2218 = vadd.f32 %v2154, %v1793
    %v2219 = vadd.f32 %v2155, %v1796
    %v2220 = vadd.f32 %v2156, %v1798
    %v2221 = vadd.f32 %v2157, %v1801
    %v2222 = vadd.f32 %v2158, %v1803
    %v2223 = vadd.f32 %v2159, %v1806
    %v2224 = vadd.f32 %v2160, %v1808
    %v2225 = vadd.f32 %v2161, %v1811
    %v2226 = vadd.f32 %v2162, %v1813
    %v2227 = vadd.f32 %v2163, %v1816
    %v2228 = vadd.f32 %v2164, %v1818
    %v2229 = vadd.f32 %v2165, %v1821
    %v2230 = vadd.f32 %v2166, %v1823
    %v2231 = vadd.f32 %v2167, %v1826
    %v2232 = vadd.f32 %v2168, %v1828
    %v2233 = vadd.f32 %v2169, %v1831
    %v2234 = vadd.f32 %v2170, %v1833
    %v2235 = vadd.f32 %v2171, %v1836
    %v2236 = vadd.f32 %v2172, %v1838
    %v2237 = vadd.f32 %v2173, %v1841
    %v2238 = vadd.f32 %v2174, %v1843
    %v2239 = vadd.f32 %v2175, %v1846
    %v2240 = vadd.f32 %v2176, %v1848
    %v2241 = vadd.f32 %v2177, %v1851
    %v2242 = vadd.f32 %v2178, %v1853
    %v2243 = vadd.f32 %v2179, %v1856
    %v2244 = vadd.f32 %v2180, %v1858
    %v2245 = vadd.f32 %v2181, %v1861
    %v2246 = vadd.f32 %v2182, %v1863
    %v2247 = vadd.f32 %v2183, %v1866
    %v2248 = vadd.f32 %v2184, %v1868
    %v2249 = vadd.f32 %v2185, %v1871
    %v2250 = vadd.f32 %v2186, %v1873
    %v2251 = vadd.f32 %v2187, %v1876
    %v2252 = vadd.f32 %v2188, %v1878
    %v2253 = vadd.f32 %v2189, %v1881
    %v2254 = vadd.f32 %v2190, %v1883
    %v2255 = vadd.f32 %v2191, %v1886
    %v2256 = vadd.f32 %v2192, %v1888
    %v2257 = vadd.f32 %v2193, %v1891
    %v2258 = vadd.f32 %v2194, %v1893
    %v2259 = vadd.f32 %v2195, %v1896
    %v2260 = vadd.f32 %v2196, %v1898
    %v2261 = vadd.f32 %v2197, %v1901
    %v2262 = vadd.f32 %v2198, %v1903
    %v2263 = vadd.f32 %v2199, %v1906
    %v2264 = vadd.f32 %v2200, %v1908
    %v2265 = vadd.f32 %v2201, %v1911
    %v2266 = vadd.f32 %v2202, %v1913
    %v2267 = vadd.f32 %v2203, %v1916
    %v2268 = vadd.f32 %v2204, %v1918
    %v2269 = vadd.f32 %v2205, %v1921
    %v2270 = vadd.f32 %v2206, %v1923
    %v2271 = vadd.f32 %v2207, %v1926
    %v2272 = vadd.f32 %v2208, %v1928
    %v2273 = vadd.f32 %v2209, %v1931
    %v2274 = vadd.f32 %v2210, %v1933
    %v2275 = vadd.f32 %v2211, %v1936
    %v2276 = vadd.f32 %v2212, %v1938
    %v2277 = vadd.f32 %v2213, %v1941
    %v2278 = vadd.f32 %v2214, %v1943
    %v2279 = vadd.f32 %v2215, %v1946
    %v2280 = vadd.f32 %v2216, %v1948
    %2281 = vst [vmem:[%s2152] sm:$0xff] %v2217
    %2282 = vst [vmem:[%s2152 + $0x8] sm:$0xff] %v2218
    %2283 = vst [vmem:[%s2152 + $0x10] sm:$0xff] %v2219
    %2284 = vst [vmem:[%s2152 + $0x18] sm:$0xff] %v2220
    %2285 = vst [vmem:[%s2152 + $0x20] sm:$0xff] %v2221
    %2286 = vst [vmem:[%s2152 + $0x28] sm:$0xff] %v2222
    %2287 = vst [vmem:[%s2152 + $0x30] sm:$0xff] %v2223
    %2288 = vst [vmem:[%s2152 + $0x38] sm:$0xff] %v2224
    %2289 = vst [vmem:[%s2152 + $0x40] sm:$0xff] %v2225
    %2290 = vst [vmem:[%s2152 + $0x48] sm:$0xff] %v2226
    %2291 = vst [vmem:[%s2152 + $0x50] sm:$0xff] %v2227
    %2292 = vst [vmem:[%s2152 + $0x58] sm:$0xff] %v2228
    %2293 = vst [vmem:[%s2152 + $0x60] sm:$0xff] %v2229
    %2294 = vst [vmem:[%s2152 + $0x68] sm:$0xff] %v2230
    %2295 = vst [vmem:[%s2152 + $0x70] sm:$0xff] %v2231
    %2296 = vst [vmem:[%s2152 + $0x78] sm:$0xff] %v2232
    %2297 = vst [vmem:[%s2152 + $0x80] sm:$0xff] %v2233
    %2298 = vst [vmem:[%s2152 + $0x88] sm:$0xff] %v2234
    %2299 = vst [vmem:[%s2152 + $0x90] sm:$0xff] %v2235
    %2300 = vst [vmem:[%s2152 + $0x98] sm:$0xff] %v2236
    %2301 = vst [vmem:[%s2152 + $0xa0] sm:$0xff] %v2237
    %2302 = vst [vmem:[%s2152 + $0xa8] sm:$0xff] %v2238
    %2303 = vst [vmem:[%s2152 + $0xb0] sm:$0xff] %v2239
    %2304 = vst [vmem:[%s2152 + $0xb8] sm:$0xff] %v2240
    %2305 = vst [vmem:[%s2152 + $0xc0] sm:$0xff] %v2241
    %2306 = vst [vmem:[%s2152 + $0xc8] sm:$0xff] %v2242
    %2307 = vst [vmem:[%s2152 + $0xd0] sm:$0xff] %v2243
    %2308 = vst [vmem:[%s2152 + $0xd8] sm:$0xff] %v2244
    %2309 = vst [vmem:[%s2152 + $0xe0] sm:$0xff] %v2245
    %2310 = vst [vmem:[%s2152 + $0xe8] sm:$0xff] %v2246
    %2311 = vst [vmem:[%s2152 + $0xf0] sm:$0xff] %v2247
    %2312 = vst [vmem:[%s2152 + $0xf8] sm:$0xff] %v2248
    %2313 = vst [vmem:[%s2152 + $0x100] sm:$0xff] %v2249
    %2314 = vst [vmem:[%s2152 + $0x108] sm:$0xff] %v2250
    %2315 = vst [vmem:[%s2152 + $0x110] sm:$0xff] %v2251
    %2316 = vst [vmem:[%s2152 + $0x118] sm:$0xff] %v2252
    %2317 = vst [vmem:[%s2152 + $0x120] sm:$0xff] %v2253
    %2318 = vst [vmem:[%s2152 + $0x128] sm:$0xff] %v2254
    %2319 = vst [vmem:[%s2152 + $0x130] sm:$0xff] %v2255
    %2320 = vst [vmem:[%s2152 + $0x138] sm:$0xff] %v2256
    %2321 = vst [vmem:[%s2152 + $0x140] sm:$0xff] %v2257
    %2322 = vst [vmem:[%s2152 + $0x148] sm:$0xff] %v2258
    %2323 = vst [vmem:[%s2152 + $0x150] sm:$0xff] %v2259
    %2324 = vst [vmem:[%s2152 + $0x158] sm:$0xff] %v2260
    %2325 = vst [vmem:[%s2152 + $0x160] sm:$0xff] %v2261
    %2326 = vst [vmem:[%s2152 + $0x168] sm:$0xff] %v2262
    %2327 = vst [vmem:[%s2152 + $0x170] sm:$0xff] %v2263
    %2328 = vst [vmem:[%s2152 + $0x178] sm:$0xff] %v2264
    %2329 = vst [vmem:[%s2152 + $0x180] sm:$0xff] %v2265
    %2330 = vst [vmem:[%s2152 + $0x188] sm:$0xff] %v2266
    %2331 = vst [vmem:[%s2152 + $0x190] sm:$0xff] %v2267
    %2332 = vst [vmem:[%s2152 + $0x198] sm:$0xff] %v2268
    %2333 = vst [vmem:[%s2152 + $0x1a0] sm:$0xff] %v2269
    %2334 = vst [vmem:[%s2152 + $0x1a8] sm:$0xff] %v2270
    %2335 = vst [vmem:[%s2152 + $0x1b0] sm:$0xff] %v2271
    %2336 = vst [vmem:[%s2152 + $0x1b8] sm:$0xff] %v2272
    %2337 = vst [vmem:[%s2152 + $0x1c0] sm:$0xff] %v2273
    %2338 = vst [vmem:[%s2152 + $0x1c8] sm:$0xff] %v2274
    %2339 = vst [vmem:[%s2152 + $0x1d0] sm:$0xff] %v2275
    %2340 = vst [vmem:[%s2152 + $0x1d8] sm:$0xff] %v2276
    %2341 = vst [vmem:[%s2152 + $0x1e0] sm:$0xff] %v2277
    %2342 = vst [vmem:[%s2152 + $0x1e8] sm:$0xff] %v2278
    %2343 = vst [vmem:[%s2152 + $0x1f0] sm:$0xff] %v2279
    %2344 = vst [vmem:[%s2152 + $0x1f8] sm:$0xff] %v2280
  $region41: #{lightgcn_forward.3} parent=0 // pred_fallthru
    _
  // Predicated region
  $region42: #{lightgcn_forward.3} parent=0 // pred_check
    %p2345 = pneg %p1950
  $region43: #{lightgcn_forward.3} parent=0 // pred_check_branch
    %2347 = sbr.rel (%p2345) target = $region45
  $region44: #{lightgcn_forward.3} parent=0 // pred_region
    %s2348 = scalar_lea.vmem %s8, %s88
    %v2349 = vld [vmem:[%s2348] sm:$0xff]
    %v2350 = vld [vmem:[%s2348 + $0x8] sm:$0xff]
    %v2351 = vld [vmem:[%s2348 + $0x10] sm:$0xff]
    %v2352 = vld [vmem:[%s2348 + $0x18] sm:$0xff]
    %v2353 = vld [vmem:[%s2348 + $0x20] sm:$0xff]
    %v2354 = vld [vmem:[%s2348 + $0x28] sm:$0xff]
    %v2355 = vld [vmem:[%s2348 + $0x30] sm:$0xff]
    %v2356 = vld [vmem:[%s2348 + $0x38] sm:$0xff]
    %v2357 = vld [vmem:[%s2348 + $0x40] sm:$0xff]
    %v2358 = vld [vmem:[%s2348 + $0x48] sm:$0xff]
    %v2359 = vld [vmem:[%s2348 + $0x50] sm:$0xff]
    %v2360 = vld [vmem:[%s2348 + $0x58] sm:$0xff]
    %v2361 = vld [vmem:[%s2348 + $0x60] sm:$0xff]
    %v2362 = vld [vmem:[%s2348 + $0x68] sm:$0xff]
    %v2363 = vld [vmem:[%s2348 + $0x70] sm:$0xff]
    %v2364 = vld [vmem:[%s2348 + $0x78] sm:$0xff]
    %v2365 = vld [vmem:[%s2348 + $0x80] sm:$0xff]
    %v2366 = vld [vmem:[%s2348 + $0x88] sm:$0xff]
    %v2367 = vld [vmem:[%s2348 + $0x90] sm:$0xff]
    %v2368 = vld [vmem:[%s2348 + $0x98] sm:$0xff]
    %v2369 = vld [vmem:[%s2348 + $0xa0] sm:$0xff]
    %v2370 = vld [vmem:[%s2348 + $0xa8] sm:$0xff]
    %v2371 = vld [vmem:[%s2348 + $0xb0] sm:$0xff]
    %v2372 = vld [vmem:[%s2348 + $0xb8] sm:$0xff]
    %v2373 = vld [vmem:[%s2348 + $0xc0] sm:$0xff]
    %v2374 = vld [vmem:[%s2348 + $0xc8] sm:$0xff]
    %v2375 = vld [vmem:[%s2348 + $0xd0] sm:$0xff]
    %v2376 = vld [vmem:[%s2348 + $0xd8] sm:$0xff]
    %v2377 = vld [vmem:[%s2348 + $0xe0] sm:$0xff]
    %v2378 = vld [vmem:[%s2348 + $0xe8] sm:$0xff]
    %v2379 = vld [vmem:[%s2348 + $0xf0] sm:$0xff]
    %v2380 = vld [vmem:[%s2348 + $0xf8] sm:$0xff]
    %v2381 = vld [vmem:[%s2348 + $0x100] sm:$0xff]
    %v2382 = vld [vmem:[%s2348 + $0x108] sm:$0xff]
    %v2383 = vld [vmem:[%s2348 + $0x110] sm:$0xff]
    %v2384 = vld [vmem:[%s2348 + $0x118] sm:$0xff]
    %v2385 = vld [vmem:[%s2348 + $0x120] sm:$0xff]
    %v2386 = vld [vmem:[%s2348 + $0x128] sm:$0xff]
    %v2387 = vld [vmem:[%s2348 + $0x130] sm:$0xff]
    %v2388 = vld [vmem:[%s2348 + $0x138] sm:$0xff]
    %v2389 = vld [vmem:[%s2348 + $0x140] sm:$0xff]
    %v2390 = vld [vmem:[%s2348 + $0x148] sm:$0xff]
    %v2391 = vld [vmem:[%s2348 + $0x150] sm:$0xff]
    %v2392 = vld [vmem:[%s2348 + $0x158] sm:$0xff]
    %v2393 = vld [vmem:[%s2348 + $0x160] sm:$0xff]
    %v2394 = vld [vmem:[%s2348 + $0x168] sm:$0xff]
    %v2395 = vld [vmem:[%s2348 + $0x170] sm:$0xff]
    %v2396 = vld [vmem:[%s2348 + $0x178] sm:$0xff]
    %v2397 = vld [vmem:[%s2348 + $0x180] sm:$0xff]
    %v2398 = vld [vmem:[%s2348 + $0x188] sm:$0xff]
    %v2399 = vld [vmem:[%s2348 + $0x190] sm:$0xff]
    %v2400 = vld [vmem:[%s2348 + $0x198] sm:$0xff]
    %v2401 = vld [vmem:[%s2348 + $0x1a0] sm:$0xff]
    %v2402 = vld [vmem:[%s2348 + $0x1a8] sm:$0xff]
    %v2403 = vld [vmem:[%s2348 + $0x1b0] sm:$0xff]
    %v2404 = vld [vmem:[%s2348 + $0x1b8] sm:$0xff]
    %v2405 = vld [vmem:[%s2348 + $0x1c0] sm:$0xff]
    %v2406 = vld [vmem:[%s2348 + $0x1c8] sm:$0xff]
    %v2407 = vld [vmem:[%s2348 + $0x1d0] sm:$0xff]
    %v2408 = vld [vmem:[%s2348 + $0x1d8] sm:$0xff]
    %v2409 = vld [vmem:[%s2348 + $0x1e0] sm:$0xff]
    %v2410 = vld [vmem:[%s2348 + $0x1e8] sm:$0xff]
    %v2411 = vld [vmem:[%s2348 + $0x1f0] sm:$0xff]
    %v2412 = vld [vmem:[%s2348 + $0x1f8] sm:$0xff]
    %s2413 = scalar_lea.vmem %s4, %s88
    %v2414 = vld [vmem:[%s2413] sm:$0xff]
    %v2415 = vld [vmem:[%s2413 + $0x8] sm:$0xff]
    %v2416 = vld [vmem:[%s2413 + $0x10] sm:$0xff]
    %v2417 = vld [vmem:[%s2413 + $0x18] sm:$0xff]
    %v2418 = vld [vmem:[%s2413 + $0x20] sm:$0xff]
    %v2419 = vld [vmem:[%s2413 + $0x28] sm:$0xff]
    %v2420 = vld [vmem:[%s2413 + $0x30] sm:$0xff]
    %v2421 = vld [vmem:[%s2413 + $0x38] sm:$0xff]
    %v2422 = vld [vmem:[%s2413 + $0x40] sm:$0xff]
    %v2423 = vld [vmem:[%s2413 + $0x48] sm:$0xff]
    %v2424 = vld [vmem:[%s2413 + $0x50] sm:$0xff]
    %v2425 = vld [vmem:[%s2413 + $0x58] sm:$0xff]
    %v2426 = vld [vmem:[%s2413 + $0x60] sm:$0xff]
    %v2427 = vld [vmem:[%s2413 + $0x68] sm:$0xff]
    %v2428 = vld [vmem:[%s2413 + $0x70] sm:$0xff]
    %v2429 = vld [vmem:[%s2413 + $0x78] sm:$0xff]
    %v2430 = vld [vmem:[%s2413 + $0x80] sm:$0xff]
    %v2431 = vld [vmem:[%s2413 + $0x88] sm:$0xff]
    %v2432 = vld [vmem:[%s2413 + $0x90] sm:$0xff]
    %v2433 = vld [vmem:[%s2413 + $0x98] sm:$0xff]
    %v2434 = vld [vmem:[%s2413 + $0xa0] sm:$0xff]
    %v2435 = vld [vmem:[%s2413 + $0xa8] sm:$0xff]
    %v2436 = vld [vmem:[%s2413 + $0xb0] sm:$0xff]
    %v2437 = vld [vmem:[%s2413 + $0xb8] sm:$0xff]
    %v2438 = vld [vmem:[%s2413 + $0xc0] sm:$0xff]
    %v2439 = vld [vmem:[%s2413 + $0xc8] sm:$0xff]
    %v2440 = vld [vmem:[%s2413 + $0xd0] sm:$0xff]
    %v2441 = vld [vmem:[%s2413 + $0xd8] sm:$0xff]
    %v2442 = vld [vmem:[%s2413 + $0xe0] sm:$0xff]
    %v2443 = vld [vmem:[%s2413 + $0xe8] sm:$0xff]
    %v2444 = vld [vmem:[%s2413 + $0xf0] sm:$0xff]
    %v2445 = vld [vmem:[%s2413 + $0xf8] sm:$0xff]
    %v2446 = vld [vmem:[%s2413 + $0x100] sm:$0xff]
    %v2447 = vld [vmem:[%s2413 + $0x108] sm:$0xff]
    %v2448 = vld [vmem:[%s2413 + $0x110] sm:$0xff]
    %v2449 = vld [vmem:[%s2413 + $0x118] sm:$0xff]
    %v2450 = vld [vmem:[%s2413 + $0x120] sm:$0xff]
    %v2451 = vld [vmem:[%s2413 + $0x128] sm:$0xff]
    %v2452 = vld [vmem:[%s2413 + $0x130] sm:$0xff]
    %v2453 = vld [vmem:[%s2413 + $0x138] sm:$0xff]
    %v2454 = vld [vmem:[%s2413 + $0x140] sm:$0xff]
    %v2455 = vld [vmem:[%s2413 + $0x148] sm:$0xff]
    %v2456 = vld [vmem:[%s2413 + $0x150] sm:$0xff]
    %v2457 = vld [vmem:[%s2413 + $0x158] sm:$0xff]
    %v2458 = vld [vmem:[%s2413 + $0x160] sm:$0xff]
    %v2459 = vld [vmem:[%s2413 + $0x168] sm:$0xff]
    %v2460 = vld [vmem:[%s2413 + $0x170] sm:$0xff]
    %v2461 = vld [vmem:[%s2413 + $0x178] sm:$0xff]
    %v2462 = vld [vmem:[%s2413 + $0x180] sm:$0xff]
    %v2463 = vld [vmem:[%s2413 + $0x188] sm:$0xff]
    %v2464 = vld [vmem:[%s2413 + $0x190] sm:$0xff]
    %v2465 = vld [vmem:[%s2413 + $0x198] sm:$0xff]
    %v2466 = vld [vmem:[%s2413 + $0x1a0] sm:$0xff]
    %v2467 = vld [vmem:[%s2413 + $0x1a8] sm:$0xff]
    %v2468 = vld [vmem:[%s2413 + $0x1b0] sm:$0xff]
    %v2469 = vld [vmem:[%s2413 + $0x1b8] sm:$0xff]
    %v2470 = vld [vmem:[%s2413 + $0x1c0] sm:$0xff]
    %v2471 = vld [vmem:[%s2413 + $0x1c8] sm:$0xff]
    %v2472 = vld [vmem:[%s2413 + $0x1d0] sm:$0xff]
    %v2473 = vld [vmem:[%s2413 + $0x1d8] sm:$0xff]
    %v2474 = vld [vmem:[%s2413 + $0x1e0] sm:$0xff]
    %v2475 = vld [vmem:[%s2413 + $0x1e8] sm:$0xff]
    %v2476 = vld [vmem:[%s2413 + $0x1f0] sm:$0xff]
    %v2477 = vld [vmem:[%s2413 + $0x1f8] sm:$0xff]
    %v2478 = vsub.f32 %v2349, %v2414
    %v2479 = vsub.f32 %v2350, %v2415
    %v2480 = vsub.f32 %v2351, %v2416
    %v2481 = vsub.f32 %v2352, %v2417
    %v2482 = vsub.f32 %v2353, %v2418
    %v2483 = vsub.f32 %v2354, %v2419
    %v2484 = vsub.f32 %v2355, %v2420
    %v2485 = vsub.f32 %v2356, %v2421
    %v2486 = vsub.f32 %v2357, %v2422
    %v2487 = vsub.f32 %v2358, %v2423
    %v2488 = vsub.f32 %v2359, %v2424
    %v2489 = vsub.f32 %v2360, %v2425
    %v2490 = vsub.f32 %v2361, %v2426
    %v2491 = vsub.f32 %v2362, %v2427
    %v2492 = vsub.f32 %v2363, %v2428
    %v2493 = vsub.f32 %v2364, %v2429
    %v2494 = vsub.f32 %v2365, %v2430
    %v2495 = vsub.f32 %v2366, %v2431
    %v2496 = vsub.f32 %v2367, %v2432
    %v2497 = vsub.f32 %v2368, %v2433
    %v2498 = vsub.f32 %v2369, %v2434
    %v2499 = vsub.f32 %v2370, %v2435
    %v2500 = vsub.f32 %v2371, %v2436
    %v2501 = vsub.f32 %v2372, %v2437
    %v2502 = vsub.f32 %v2373, %v2438
    %v2503 = vsub.f32 %v2374, %v2439
    %v2504 = vsub.f32 %v2375, %v2440
    %v2505 = vsub.f32 %v2376, %v2441
    %v2506 = vsub.f32 %v2377, %v2442
    %v2507 = vsub.f32 %v2378, %v2443
    %v2508 = vsub.f32 %v2379, %v2444
    %v2509 = vsub.f32 %v2380, %v2445
    %v2510 = vsub.f32 %v2381, %v2446
    %v2511 = vsub.f32 %v2382, %v2447
    %v2512 = vsub.f32 %v2383, %v2448
    %v2513 = vsub.f32 %v2384, %v2449
    %v2514 = vsub.f32 %v2385, %v2450
    %v2515 = vsub.f32 %v2386, %v2451
    %v2516 = vsub.f32 %v2387, %v2452
    %v2517 = vsub.f32 %v2388, %v2453
    %v2518 = vsub.f32 %v2389, %v2454
    %v2519 = vsub.f32 %v2390, %v2455
    %v2520 = vsub.f32 %v2391, %v2456
    %v2521 = vsub.f32 %v2392, %v2457
    %v2522 = vsub.f32 %v2393, %v2458
    %v2523 = vsub.f32 %v2394, %v2459
    %v2524 = vsub.f32 %v2395, %v2460
    %v2525 = vsub.f32 %v2396, %v2461
    %v2526 = vsub.f32 %v2397, %v2462
    %v2527 = vsub.f32 %v2398, %v2463
    %v2528 = vsub.f32 %v2399, %v2464
    %v2529 = vsub.f32 %v2400, %v2465
    %v2530 = vsub.f32 %v2401, %v2466
    %v2531 = vsub.f32 %v2402, %v2467
    %v2532 = vsub.f32 %v2403, %v2468
    %v2533 = vsub.f32 %v2404, %v2469
    %v2534 = vsub.f32 %v2405, %v2470
    %v2535 = vsub.f32 %v2406, %v2471
    %v2536 = vsub.f32 %v2407, %v2472
    %v2537 = vsub.f32 %v2408, %v2473
    %v2538 = vsub.f32 %v2409, %v2474
    %v2539 = vsub.f32 %v2410, %v2475
    %v2540 = vsub.f32 %v2411, %v2476
    %v2541 = vsub.f32 %v2412, %v2477
    %v2542 = vpack.c.bf16 %v2478, %v2478
    %v2543 = vpack.c.bf16 %v2479, %v2479
    %v2544 = vpack.c.bf16 %v2480, %v2480
    %v2545 = vpack.c.bf16 %v2481, %v2481
    %v2546 = vpack.c.bf16 %v2482, %v2482
    %v2547 = vpack.c.bf16 %v2483, %v2483
    %v2548 = vpack.c.bf16 %v2484, %v2484
    %v2549 = vpack.c.bf16 %v2485, %v2485
    %v2550 = vpack.c.bf16 %v2486, %v2486
    %v2551 = vpack.c.bf16 %v2487, %v2487
    %v2552 = vpack.c.bf16 %v2488, %v2488
    %v2553 = vpack.c.bf16 %v2489, %v2489
    %v2554 = vpack.c.bf16 %v2490, %v2490
    %v2555 = vpack.c.bf16 %v2491, %v2491
    %v2556 = vpack.c.bf16 %v2492, %v2492
    %v2557 = vpack.c.bf16 %v2493, %v2493
    %v2558 = vpack.c.bf16 %v2494, %v2494
    %v2559 = vpack.c.bf16 %v2495, %v2495
    %v2560 = vpack.c.bf16 %v2496, %v2496
    %v2561 = vpack.c.bf16 %v2497, %v2497
    %v2562 = vpack.c.bf16 %v2498, %v2498
    %v2563 = vpack.c.bf16 %v2499, %v2499
    %v2564 = vpack.c.bf16 %v2500, %v2500
    %v2565 = vpack.c.bf16 %v2501, %v2501
    %v2566 = vpack.c.bf16 %v2502, %v2502
    %v2567 = vpack.c.bf16 %v2503, %v2503
    %v2568 = vpack.c.bf16 %v2504, %v2504
    %v2569 = vpack.c.bf16 %v2505, %v2505
    %v2570 = vpack.c.bf16 %v2506, %v2506
    %v2571 = vpack.c.bf16 %v2507, %v2507
    %v2572 = vpack.c.bf16 %v2508, %v2508
    %v2573 = vpack.c.bf16 %v2509, %v2509
    %v2574 = vpack.c.bf16 %v2510, %v2510
    %v2575 = vpack.c.bf16 %v2511, %v2511
    %v2576 = vpack.c.bf16 %v2512, %v2512
    %v2577 = vpack.c.bf16 %v2513, %v2513
    %v2578 = vpack.c.bf16 %v2514, %v2514
    %v2579 = vpack.c.bf16 %v2515, %v2515
    %v2580 = vpack.c.bf16 %v2516, %v2516
    %v2581 = vpack.c.bf16 %v2517, %v2517
    %v2582 = vpack.c.bf16 %v2518, %v2518
    %v2583 = vpack.c.bf16 %v2519, %v2519
    %v2584 = vpack.c.bf16 %v2520, %v2520
    %v2585 = vpack.c.bf16 %v2521, %v2521
    %v2586 = vpack.c.bf16 %v2522, %v2522
    %v2587 = vpack.c.bf16 %v2523, %v2523
    %v2588 = vpack.c.bf16 %v2524, %v2524
    %v2589 = vpack.c.bf16 %v2525, %v2525
    %v2590 = vpack.c.bf16 %v2526, %v2526
    %v2591 = vpack.c.bf16 %v2527, %v2527
    %v2592 = vpack.c.bf16 %v2528, %v2528
    %v2593 = vpack.c.bf16 %v2529, %v2529
    %v2594 = vpack.c.bf16 %v2530, %v2530
    %v2595 = vpack.c.bf16 %v2531, %v2531
    %v2596 = vpack.c.bf16 %v2532, %v2532
    %v2597 = vpack.c.bf16 %v2533, %v2533
    %v2598 = vpack.c.bf16 %v2534, %v2534
    %v2599 = vpack.c.bf16 %v2535, %v2535
    %v2600 = vpack.c.bf16 %v2536, %v2536
    %v2601 = vpack.c.bf16 %v2537, %v2537
    %v2602 = vpack.c.bf16 %v2538, %v2538
    %v2603 = vpack.c.bf16 %v2539, %v2539
    %v2604 = vpack.c.bf16 %v2540, %v2540
    %v2605 = vpack.c.bf16 %v2541, %v2541
    %s2606 = smul.addr %s89, 4
    %s2607 = scalar_lea.vmem %s7, %s2606
    %2608 = vst [vmem:[%s2607] sm:$0xf] %v2542
    %2609 = vst [vmem:[%s2607 + $0x4] sm:$0xf] %v2543
    %2610 = vst [vmem:[%s2607 + $0x8] sm:$0xf] %v2544
    %2611 = vst [vmem:[%s2607 + $0xc] sm:$0xf] %v2545
    %2612 = vst [vmem:[%s2607 + $0x10] sm:$0xf] %v2546
    %2613 = vst [vmem:[%s2607 + $0x14] sm:$0xf] %v2547
    %2614 = vst [vmem:[%s2607 + $0x18] sm:$0xf] %v2548
    %2615 = vst [vmem:[%s2607 + $0x1c] sm:$0xf] %v2549
    %2616 = vst [vmem:[%s2607 + $0x20] sm:$0xf] %v2550
    %2617 = vst [vmem:[%s2607 + $0x24] sm:$0xf] %v2551
    %2618 = vst [vmem:[%s2607 + $0x28] sm:$0xf] %v2552
    %2619 = vst [vmem:[%s2607 + $0x2c] sm:$0xf] %v2553
    %2620 = vst [vmem:[%s2607 + $0x30] sm:$0xf] %v2554
    %2621 = vst [vmem:[%s2607 + $0x34] sm:$0xf] %v2555
    %2622 = vst [vmem:[%s2607 + $0x38] sm:$0xf] %v2556
    %2623 = vst [vmem:[%s2607 + $0x3c] sm:$0xf] %v2557
    %2624 = vst [vmem:[%s2607 + $0x40] sm:$0xf] %v2558
    %2625 = vst [vmem:[%s2607 + $0x44] sm:$0xf] %v2559
    %2626 = vst [vmem:[%s2607 + $0x48] sm:$0xf] %v2560
    %2627 = vst [vmem:[%s2607 + $0x4c] sm:$0xf] %v2561
    %2628 = vst [vmem:[%s2607 + $0x50] sm:$0xf] %v2562
    %2629 = vst [vmem:[%s2607 + $0x54] sm:$0xf] %v2563
    %2630 = vst [vmem:[%s2607 + $0x58] sm:$0xf] %v2564
    %2631 = vst [vmem:[%s2607 + $0x5c] sm:$0xf] %v2565
    %2632 = vst [vmem:[%s2607 + $0x60] sm:$0xf] %v2566
    %2633 = vst [vmem:[%s2607 + $0x64] sm:$0xf] %v2567
    %2634 = vst [vmem:[%s2607 + $0x68] sm:$0xf] %v2568
    %2635 = vst [vmem:[%s2607 + $0x6c] sm:$0xf] %v2569
    %2636 = vst [vmem:[%s2607 + $0x70] sm:$0xf] %v2570
    %2637 = vst [vmem:[%s2607 + $0x74] sm:$0xf] %v2571
    %2638 = vst [vmem:[%s2607 + $0x78] sm:$0xf] %v2572
    %2639 = vst [vmem:[%s2607 + $0x7c] sm:$0xf] %v2573
    %2640 = vst [vmem:[%s2607 + $0x80] sm:$0xf] %v2574
    %2641 = vst [vmem:[%s2607 + $0x84] sm:$0xf] %v2575
    %2642 = vst [vmem:[%s2607 + $0x88] sm:$0xf] %v2576
    %2643 = vst [vmem:[%s2607 + $0x8c] sm:$0xf] %v2577
    %2644 = vst [vmem:[%s2607 + $0x90] sm:$0xf] %v2578
    %2645 = vst [vmem:[%s2607 + $0x94] sm:$0xf] %v2579
    %2646 = vst [vmem:[%s2607 + $0x98] sm:$0xf] %v2580
    %2647 = vst [vmem:[%s2607 + $0x9c] sm:$0xf] %v2581
    %2648 = vst [vmem:[%s2607 + $0xa0] sm:$0xf] %v2582
    %2649 = vst [vmem:[%s2607 + $0xa4] sm:$0xf] %v2583
    %2650 = vst [vmem:[%s2607 + $0xa8] sm:$0xf] %v2584
    %2651 = vst [vmem:[%s2607 + $0xac] sm:$0xf] %v2585
    %2652 = vst [vmem:[%s2607 + $0xb0] sm:$0xf] %v2586
    %2653 = vst [vmem:[%s2607 + $0xb4] sm:$0xf] %v2587
    %2654 = vst [vmem:[%s2607 + $0xb8] sm:$0xf] %v2588
    %2655 = vst [vmem:[%s2607 + $0xbc] sm:$0xf] %v2589
    %2656 = vst [vmem:[%s2607 + $0xc0] sm:$0xf] %v2590
    %2657 = vst [vmem:[%s2607 + $0xc4] sm:$0xf] %v2591
    %2658 = vst [vmem:[%s2607 + $0xc8] sm:$0xf] %v2592
    %2659 = vst [vmem:[%s2607 + $0xcc] sm:$0xf] %v2593
    %2660 = vst [vmem:[%s2607 + $0xd0] sm:$0xf] %v2594
    %2661 = vst [vmem:[%s2607 + $0xd4] sm:$0xf] %v2595
    %2662 = vst [vmem:[%s2607 + $0xd8] sm:$0xf] %v2596
    %2663 = vst [vmem:[%s2607 + $0xdc] sm:$0xf] %v2597
    %2664 = vst [vmem:[%s2607 + $0xe0] sm:$0xf] %v2598
    %2665 = vst [vmem:[%s2607 + $0xe4] sm:$0xf] %v2599
    %2666 = vst [vmem:[%s2607 + $0xe8] sm:$0xf] %v2600
    %2667 = vst [vmem:[%s2607 + $0xec] sm:$0xf] %v2601
    %2668 = vst [vmem:[%s2607 + $0xf0] sm:$0xf] %v2602
    %2669 = vst [vmem:[%s2607 + $0xf4] sm:$0xf] %v2603
    %2670 = vst [vmem:[%s2607 + $0xf8] sm:$0xf] %v2604
    %2671 = vst [vmem:[%s2607 + $0xfc] sm:$0xf] %v2605
  $region45: #{lightgcn_forward.3} parent=0 // pred_fallthru
    _
  // Predicated region
  $region46: #{lightgcn_forward.3} parent=0 // pred_check
    _
  $region47: #{lightgcn_forward.3} parent=0 // pred_check_branch
    %2673 = sbr.rel (0) target = $region49
  $region48: #{lightgcn_forward.3} parent=0 // pred_region
    _
  $region49: #{lightgcn_forward.3} parent=0 // pred_fallthru
    _
  // Predicated region
  $region50: #{lightgcn_forward.3} parent=0 // pred_check
    _
  $region51: #{lightgcn_forward.3} parent=0 // pred_check_branch
    %2675 = sbr.rel (0) target = $region53
  $region52: #{lightgcn_forward.3} parent=0 // pred_region
    _
  $region53: #{lightgcn_forward.3} parent=0 // pred_fallthru
    _
  // Predicated region
  $region54: #{lightgcn_forward.3} parent=0 // pred_check
    _
  $region55: #{lightgcn_forward.3} parent=0 // pred_check_branch
    %2677 = sbr.rel (0) target = $region57
  $region56: #{lightgcn_forward.3} parent=0 // pred_region
    _
  $region57: #{lightgcn_forward.3} parent=0 // pred_fallthru
    _
  // Predicated region
  $region58: #{lightgcn_forward.3} parent=0 // pred_check
    _
  $region59: #{lightgcn_forward.3} parent=0 // pred_check_branch
    %2679 = sbr.rel (0) target = $region61
  $region60: #{lightgcn_forward.3} parent=0 // pred_region
    _
  $region61: #{lightgcn_forward.3} parent=0 // pred_fallthru
    _
  // Predicated region
  $region62: #{lightgcn_forward.3} parent=0 // pred_check
    _
  $region63: #{lightgcn_forward.3} parent=0 // pred_check_branch
    %2681 = sbr.rel (0) target = $region65
  $region64: #{lightgcn_forward.3} parent=0 // pred_region
    _
  $region65: #{lightgcn_forward.3} parent=0 // pred_fallthru
    _
  // Predicated region
  $region66: #{lightgcn_forward.3} parent=0 // pred_check
    _
  $region67: #{lightgcn_forward.3} parent=0 // pred_check_branch
    %2683 = sbr.rel (0) target = $region69
  $region68: #{lightgcn_forward.3} parent=0 // pred_region
    _
  $region69: #{lightgcn_forward.3} parent=0 // pred_fallthru
    _
  // Predicated region
  $region70: #{lightgcn_forward.3} parent=0 // pred_check
    _
  $region71: #{lightgcn_forward.3} parent=0 // pred_check_branch
    %2685 = sbr.rel (0) target = $region73
  $region72: #{lightgcn_forward.3} parent=0 // pred_region
    _
  $region73: #{lightgcn_forward.3} parent=0 // pred_fallthru
    _
  // Predicated region
  $region74: #{lightgcn_forward.3} parent=0 // pred_check
    _
  $region75: #{lightgcn_forward.3} parent=0 // pred_check_branch
    %2687 = sbr.rel (0) target = $region77
  $region76: #{lightgcn_forward.3} parent=0 // pred_region
    _
  $region77: #{lightgcn_forward.3} parent=0 // pred_fallthru
    _

</llo_original>
